<compile_context>
chip_gen: v7x
topology: tpu7x:2x2x1
jax: 0.10.0
libtpu: 0.0.40
codegen_flags: <defaults>
</compile_context>

<pallas_src>
import functools

import numpy as np

import jax
import jax.numpy as jnp
from jax.experimental import pallas as pl
from jax.experimental.pallas import tpu as pltpu


# -----------------------------------------------------------------------------
# Fused forward kernel: everything VMEM-resident, only matmuls + elementwise.
# -----------------------------------------------------------------------------
def _fused_forward_kernel(x_ref, y_ref, g1_ref, g2_ref, efc_ref,
                          w1_ref, b1_ref, w2_ref, b2_ref,
                          wfc_ref, bfc_ref, wfc1_ref, bfc1_ref,
                          wfc2a_ref, wfc2b_ref, bfc2_ref, o_ref):
    f32 = jnp.float32
    x2d = x_ref[...]                                     # (B*H*W, C)

    # ---- conv1 (C -> 14, k3, s2, p1) + LeakyReLU -------------------------------
    acc1 = jnp.zeros((g1_ref.shape[1], w1_ref.shape[2]), f32)    # (B*64, 14)
    for t in range(g1_ref.shape[0]):                             # 9 taps, static unroll
        rows = jnp.dot(g1_ref[t], x2d, preferred_element_type=f32)       # im2col gather
        acc1 = acc1 + jnp.dot(rows, w1_ref[t], preferred_element_type=f32)
    acc1 = acc1 + b1_ref[...]
    h1 = jnp.where(acc1 > 0, acc1, f32(0.01) * acc1)
    # Dropout2d(p=0.5): identity at inference.

    # ---- conv2 (14 -> 14, k3, s2, p1) + LeakyReLU ------------------------------
    acc2 = jnp.zeros((g2_ref.shape[1], w2_ref.shape[2]), f32)    # (B*16, 14)
    for t in range(g2_ref.shape[0]):
        rows = jnp.dot(g2_ref[t], h1, preferred_element_type=f32)
        acc2 = acc2 + jnp.dot(rows, w2_ref[t], preferred_element_type=f32)
    acc2 = acc2 + b2_ref[...]
    h2 = jnp.where(acc2 > 0, acc2, f32(0.01) * acc2)
    # Dropout2d(p=0.5): identity at inference.

    # ---- Flatten (NCHW order folded into wfc layout) + Linear(224, inter) + ReLU
    accf = jnp.zeros((efc_ref.shape[1], wfc_ref.shape[2]), f32)  # (B, inter)
    for s in range(efc_ref.shape[0]):                            # 16 spatial positions
        rows = jnp.dot(efc_ref[s], h2, preferred_element_type=f32)        # (B, 14)
        accf = accf + jnp.dot(rows, wfc_ref[s], preferred_element_type=f32)
    action1 = jnp.maximum(accf + bfc_ref[...], 0.0)

    # ---- fc1: Linear(7, inter) -------------------------------------------------
    action2 = jnp.dot(y_ref[...], wfc1_ref[...], preferred_element_type=f32) + bfc1_ref[...]

    # ---- fc2 on concat (concat eliminated by splitting fc2's weight) -----------
    o_ref[...] = (jnp.dot(action1, wfc2a_ref[...], preferred_element_type=f32)
                  + jnp.dot(action2, wfc2b_ref[...], preferred_element_type=f32)
                  + bfc2_ref[...])


# -----------------------------------------------------------------------------
# Constant 0/1 gather matrices (im2col + zero padding as matmuls). Built once.
# -----------------------------------------------------------------------------
@functools.lru_cache(maxsize=None)
def _gather_consts(batch, in_dim):
    H = W = in_dim
    OH1 = (H + 2 - 3) // 2 + 1          # 8 for in_dim=16
    OH2 = (OH1 + 2 - 3) // 2 + 1        # 4

    g1 = np.zeros((9, batch * OH1 * OH1, batch * H * W), np.float32)
    for b in range(batch):
        for oh in range(OH1):
            for ow in range(OH1):
                p = b * OH1 * OH1 + oh * OH1 + ow
                for kh in range(3):
                    for kw in range(3):
                        ih, iw = 2 * oh + kh - 1, 2 * ow + kw - 1
                        if 0 <= ih < H and 0 <= iw < W:
                            g1[kh * 3 + kw, p, b * H * W + ih * W + iw] = 1.0

    g2 = np.zeros((9, batch * OH2 * OH2, batch * OH1 * OH1), np.float32)
    for b in range(batch):
        for oh in range(OH2):
            for ow in range(OH2):
                p = b * OH2 * OH2 + oh * OH2 + ow
                for kh in range(3):
                    for kw in range(3):
                        ih, iw = 2 * oh + kh - 1, 2 * ow + kw - 1
                        if 0 <= ih < OH1 and 0 <= iw < OH1:
                            g2[kh * 3 + kw, p, b * OH1 * OH1 + ih * OH1 + iw] = 1.0

    S = OH2 * OH2
    efc = np.zeros((S, batch, batch * S), np.float32)
    for s in range(S):
        for b in range(batch):
            efc[s, b, b * S + s] = 1.0

    return jnp.asarray(g1), jnp.asarray(g2), jnp.asarray(efc)


# -----------------------------------------------------------------------------
# Parameters: torch-layout init + one-time kernel-layout preparation.
# -----------------------------------------------------------------------------
def init_params(key, n_channels, intermediate_size, action_num):
    ks = jax.random.split(key, 10)

    def w(k, shape, fan_in):
        return (jax.random.normal(k, shape, jnp.float32) / jnp.sqrt(fan_in)).astype(jnp.float32)

    return {
        "conv1_w": w(ks[0], (14, n_channels, 3, 3), n_channels * 9),
        "conv1_b": w(ks[1], (14,), 1.0),
        "conv2_w": w(ks[2], (14, 14, 3, 3), 14 * 9),
        "conv2_b": w(ks[3], (14,), 1.0),
        "fc_w":   w(ks[4], (intermediate_size, 14 * 16), 14 * 16),
        "fc_b":   w(ks[5], (intermediate_size,), 1.0),
        "fc1_w":  w(ks[6], (intermediate_size, 7), 7),
        "fc1_b":  w(ks[7], (intermediate_size,), 1.0),
        "fc2_w":  w(ks[8], (action_num, 2 * intermediate_size), 2 * intermediate_size),
        "fc2_b":  w(ks[9], (action_num,), 1.0),
    }


def prepare_params(params):
    """One-time re-layout of torch-layout params into kernel-consumable form."""
    f32 = jnp.float32
    C = params["conv1_w"].shape[1]
    inter = params["fc_w"].shape[0]
    A = params["fc2_w"].shape[0]
    # conv weights: (co, ci, kh, kw) -> (tap=kh*3+kw, ci, co)
    w1k = jnp.transpose(params["conv1_w"], (2, 3, 1, 0)).reshape(9, C, 14)
    w2k = jnp.transpose(params["conv2_w"], (2, 3, 1, 0)).reshape(9, 14, 14)
    # fc weight: fold the PyTorch NCHW flatten (index = co*16 + s) -> (s, co, n)
    wfc3 = jnp.transpose(params["fc_w"].reshape(inter, 14, 16), (2, 1, 0))
    return {
        "w1k": w1k.astype(f32),
        "b1": params["conv1_b"].reshape(1, 14).astype(f32),
        "w2k": w2k.astype(f32),
        "b2": params["conv2_b"].reshape(1, 14).astype(f32),
        "wfc3": wfc3.astype(f32),
        "bfc": params["fc_b"].reshape(1, inter).astype(f32),
        "wfc1": params["fc1_w"].T.astype(f32),
        "bfc1": params["fc1_b"].reshape(1, inter).astype(f32),
        "wfc2a": params["fc2_w"][:, :inter].T.astype(f32),
        "wfc2b": params["fc2_w"][:, inter:].T.astype(f32),
        "bfc2": params["fc2_b"].reshape(1, A).astype(f32),
    }


# -----------------------------------------------------------------------------
# Forward: one transpose/cast of x, then a single fused pallas_call.
# -----------------------------------------------------------------------------
def _full_spec(arr):
    return pl.BlockSpec(arr.shape, lambda i, _n=arr.ndim: (0,) * _n)


@jax.jit
def forward(kparams, x_nchw, y):
    """x_nchw: (B, C, 16, 16), y: (B, 7)  ->  (B, action_num)."""
    B, C, H, W = x_nchw.shape
    assert H == 16 and W == 16, "Linear(14*16, inter) requires 16x16 input"
    g1, g2, efc = _gather_consts(B, H)

    x2d = jnp.transpose(x_nchw.astype(jnp.float32), (0, 2, 3, 1)).reshape(B * H * W, C)
    y2 = y.astype(jnp.float32)
    A = kparams["bfc2"].shape[1]

    operands = (x2d, y2, g1, g2, efc,
                kparams["w1k"], kparams["b1"], kparams["w2k"], kparams["b2"],
                kparams["wfc3"], kparams["bfc"], kparams["wfc1"], kparams["bfc1"],
                kparams["wfc2a"], kparams["wfc2b"], kparams["bfc2"])

    return pl.pallas_call(
        _fused_forward_kernel,
        out_shape=jax.ShapeDtypeStruct((B, A), jnp.float32),
        grid=(1,),
        in_specs=[_full_spec(a) for a in operands],
        out_specs=pl.BlockSpec((B, A), lambda i: (0, 0)),
        compiler_params=pltpu.CompilerParams(
            dimension_semantics=("arbitrary",)),
    )(*operands)


# -----------------------------------------------------------------------------
# Pure-JAX reference (mirrors the PyTorch module exactly) for a sanity check
# -----------------------------------------------------------------------------
def reference(params, x_nchw, y):
    def conv(h, w, b):
        o = jax.lax.conv_general_dilated(
            h, w, window_strides=(2, 2), padding=((1, 1), (1, 1)),
            dimension_numbers=("NCHW", "OIHW", "NCHW"))
        return o + b[None, :, None, None]

    h = x_nchw.astype(jnp.float32)
    h = conv(h, params["conv1_w"], params["conv1_b"])
    h = jnp.where(h > 0, h, 0.01 * h)
    h = conv(h, params["conv2_w"], params["conv2_b"])
    h = jnp.where(h > 0, h, 0.01 * h)
    flat = h.reshape(h.shape[0], -1)
    a1 = jnp.maximum(flat @ params["fc_w"].T + params["fc_b"], 0.0)
    a2 = y.astype(jnp.float32) @ params["fc1_w"].T + params["fc1_b"]
    cat = jnp.concatenate([a1, a2], axis=1)
    return cat @ params["fc2_w"].T + params["fc2_b"]


if __name__ == "__main__":
    batch = 2
    n_channels = 4
    in_dim = 16               # fixed by the module (Linear expects 14*16 features)
    intermediate_size = 32
    action_num = 4

    key = jax.random.PRNGKey(0)
    k_param, k_x, k_y = jax.random.split(key, 3)

    params = init_params(k_param, n_channels, intermediate_size, action_num)
    kparams = prepare_params(params)          # one-time weight re-layout
    x = jax.random.normal(k_x, (batch, n_channels, in_dim, in_dim), jnp.float32)
    y = jax.random.normal(k_y, (batch, 7), jnp.float32)

    out = jax.block_until_ready(forward(kparams, x, y))
    ref = jax.block_until_ready(reference(params, x, y))

    assert out.shape == (batch, action_num), out.shape
    assert jnp.allclose(out, ref, rtol=1e-4, atol=1e-4), (
        f"max abs diff {jnp.max(jnp.abs(out - ref))}")
    print("KERNEL_OK")
</pallas_src>

<mosaic_0001>
module attributes {stable_mosaic.version = 11 : i64} {
  func.func @_fused_forward_kernel(%arg0: i32, %arg1: memref<512x4xf32, #tpu.memory_space<vmem>>, %arg2: memref<2x7xf32, #tpu.memory_space<vmem>>, %arg3: memref<9x128x512xf32, #tpu.memory_space<vmem>>, %arg4: memref<9x32x128xf32, #tpu.memory_space<vmem>>, %arg5: memref<16x2x32xf32, #tpu.memory_space<vmem>>, %arg6: memref<9x4x14xf32, #tpu.memory_space<vmem>>, %arg7: memref<1x14xf32, #tpu.memory_space<vmem>>, %arg8: memref<9x14x14xf32, #tpu.memory_space<vmem>>, %arg9: memref<1x14xf32, #tpu.memory_space<vmem>>, %arg10: memref<16x14x32xf32, #tpu.memory_space<vmem>>, %arg11: memref<1x32xf32, #tpu.memory_space<vmem>>, %arg12: memref<7x32xf32, #tpu.memory_space<vmem>>, %arg13: memref<1x32xf32, #tpu.memory_space<vmem>>, %arg14: memref<32x4xf32, #tpu.memory_space<vmem>>, %arg15: memref<32x4xf32, #tpu.memory_space<vmem>>, %arg16: memref<1x4xf32, #tpu.memory_space<vmem>>, %arg17: memref<2x4xf32, #tpu.memory_space<vmem>>) attributes {dimension_semantics = [#tpu.dimension_semantics<arbitrary>], iteration_bounds = array<i64: 1>, scalar_prefetch = 0 : i64, scratch_operands = 0 : i64, tpu.core_type = #tpu.core_type<tc>, window_params = [{pipeline_mode = #tpu.pipeline_mode<synchronous>, transform_indices = @transform_0, window_bounds = array<i64: 512, 4>}, {pipeline_mode = #tpu.pipeline_mode<synchronous>, transform_indices = @transform_1, window_bounds = array<i64: 2, 7>}, {pipeline_mode = #tpu.pipeline_mode<synchronous>, transform_indices = @transform_2, window_bounds = array<i64: 9, 128, 512>}, {pipeline_mode = #tpu.pipeline_mode<synchronous>, transform_indices = @transform_3, window_bounds = array<i64: 9, 32, 128>}, {pipeline_mode = #tpu.pipeline_mode<synchronous>, transform_indices = @transform_4, window_bounds = array<i64: 16, 2, 32>}, {pipeline_mode = #tpu.pipeline_mode<synchronous>, transform_indices = @transform_5, window_bounds = array<i64: 9, 4, 14>}, {pipeline_mode = #tpu.pipeline_mode<synchronous>, transform_indices = @transform_6, window_bounds = array<i64: 1, 14>}, {pipeline_mode = #tpu.pipeline_mode<synchronous>, transform_indices = @transform_7, window_bounds = array<i64: 9, 14, 14>}, {pipeline_mode = #tpu.pipeline_mode<synchronous>, transform_indices = @transform_8, window_bounds = array<i64: 1, 14>}, {pipeline_mode = #tpu.pipeline_mode<synchronous>, transform_indices = @transform_9, window_bounds = array<i64: 16, 14, 32>}, {pipeline_mode = #tpu.pipeline_mode<synchronous>, transform_indices = @transform_10, window_bounds = array<i64: 1, 32>}, {pipeline_mode = #tpu.pipeline_mode<synchronous>, transform_indices = @transform_11, window_bounds = array<i64: 7, 32>}, {pipeline_mode = #tpu.pipeline_mode<synchronous>, transform_indices = @transform_12, window_bounds = array<i64: 1, 32>}, {pipeline_mode = #tpu.pipeline_mode<synchronous>, transform_indices = @transform_13, window_bounds = array<i64: 32, 4>}, {pipeline_mode = #tpu.pipeline_mode<synchronous>, transform_indices = @transform_14, window_bounds = array<i64: 32, 4>}, {pipeline_mode = #tpu.pipeline_mode<synchronous>, transform_indices = @transform_15, window_bounds = array<i64: 1, 4>}, {pipeline_mode = #tpu.pipeline_mode<synchronous>, transform_indices = @transform_16, window_bounds = array<i64: 2, 4>}]} {
    %c0 = arith.constant 0 : index
    %c0_0 = arith.constant 0 : index
    %0 = vector.load %arg1[%c0, %c0_0] : memref<512x4xf32, #tpu.memory_space<vmem>>, vector<512x4xf32>
    %cst = arith.constant 0.000000e+00 : f32
    %1 = vector.broadcast %cst : f32 to vector<128x14xf32>
    %c0_1 = arith.constant 0 : index
    %c0_2 = arith.constant 0 : index
    %c0_3 = arith.constant 0 : index
    %2 = vector.load %arg3[%c0_1, %c0_2, %c0_3] : memref<9x128x512xf32, #tpu.memory_space<vmem>>, vector<1x128x512xf32>
    %3 = vector.shape_cast %2 : vector<1x128x512xf32> to vector<128x512xf32>
    %cst_4 = arith.constant dense<0.000000e+00> : vector<128x4xf32>
    %4 = tpu.matmul %3, %0, %cst_4 {dimension_numbers = #tpu.dot_dimension_numbers<[1], [0], [0], [1], [0, 0, 1, 1], [], []>} : vector<128x512xf32>, vector<512x4xf32>, vector<128x4xf32> -> vector<128x4xf32>
    %c0_5 = arith.constant 0 : index
    %c0_6 = arith.constant 0 : index
    %c0_7 = arith.constant 0 : index
    %5 = vector.load %arg6[%c0_5, %c0_6, %c0_7] : memref<9x4x14xf32, #tpu.memory_space<vmem>>, vector<1x4x14xf32>
    %6 = vector.shape_cast %5 : vector<1x4x14xf32> to vector<4x14xf32>
    %cst_8 = arith.constant dense<0.000000e+00> : vector<128x14xf32>
    %7 = tpu.matmul %4, %6, %cst_8 {dimension_numbers = #tpu.dot_dimension_numbers<[1], [0], [0], [1], [0, 0, 1, 1], [], []>} : vector<128x4xf32>, vector<4x14xf32>, vector<128x14xf32> -> vector<128x14xf32>
    %8 = arith.addf %1, %7 : vector<128x14xf32>
    %c1 = arith.constant 1 : index
    %c0_9 = arith.constant 0 : index
    %c0_10 = arith.constant 0 : index
    %9 = vector.load %arg3[%c1, %c0_9, %c0_10] : memref<9x128x512xf32, #tpu.memory_space<vmem>>, vector<1x128x512xf32>
    %10 = vector.shape_cast %9 : vector<1x128x512xf32> to vector<128x512xf32>
    %cst_11 = arith.constant dense<0.000000e+00> : vector<128x4xf32>
    %11 = tpu.matmul %10, %0, %cst_11 {dimension_numbers = #tpu.dot_dimension_numbers<[1], [0], [0], [1], [0, 0, 1, 1], [], []>} : vector<128x512xf32>, vector<512x4xf32>, vector<128x4xf32> -> vector<128x4xf32>
    %c1_12 = arith.constant 1 : index
    %c0_13 = arith.constant 0 : index
    %c0_14 = arith.constant 0 : index
    %12 = vector.load %arg6[%c1_12, %c0_13, %c0_14] : memref<9x4x14xf32, #tpu.memory_space<vmem>>, vector<1x4x14xf32>
    %13 = vector.shape_cast %12 : vector<1x4x14xf32> to vector<4x14xf32>
    %cst_15 = arith.constant dense<0.000000e+00> : vector<128x14xf32>
    %14 = tpu.matmul %11, %13, %cst_15 {dimension_numbers = #tpu.dot_dimension_numbers<[1], [0], [0], [1], [0, 0, 1, 1], [], []>} : vector<128x4xf32>, vector<4x14xf32>, vector<128x14xf32> -> vector<128x14xf32>
    %15 = arith.addf %8, %14 : vector<128x14xf32>
    %c2 = arith.constant 2 : index
    %c0_16 = arith.constant 0 : index
    %c0_17 = arith.constant 0 : index
    %16 = vector.load %arg3[%c2, %c0_16, %c0_17] : memref<9x128x512xf32, #tpu.memory_space<vmem>>, vector<1x128x512xf32>
    %17 = vector.shape_cast %16 : vector<1x128x512xf32> to vector<128x512xf32>
    %cst_18 = arith.constant dense<0.000000e+00> : vector<128x4xf32>
    %18 = tpu.matmul %17, %0, %cst_18 {dimension_numbers = #tpu.dot_dimension_numbers<[1], [0], [0], [1], [0, 0, 1, 1], [], []>} : vector<128x512xf32>, vector<512x4xf32>, vector<128x4xf32> -> vector<128x4xf32>
    %c2_19 = arith.constant 2 : index
    %c0_20 = arith.constant 0 : index
    %c0_21 = arith.constant 0 : index
    %19 = vector.load %arg6[%c2_19, %c0_20, %c0_21] : memref<9x4x14xf32, #tpu.memory_space<vmem>>, vector<1x4x14xf32>
    %20 = vector.shape_cast %19 : vector<1x4x14xf32> to vector<4x14xf32>
    %cst_22 = arith.constant dense<0.000000e+00> : vector<128x14xf32>
    %21 = tpu.matmul %18, %20, %cst_22 {dimension_numbers = #tpu.dot_dimension_numbers<[1], [0], [0], [1], [0, 0, 1, 1], [], []>} : vector<128x4xf32>, vector<4x14xf32>, vector<128x14xf32> -> vector<128x14xf32>
    %22 = arith.addf %15, %21 : vector<128x14xf32>
    %c3 = arith.constant 3 : index
    %c0_23 = arith.constant 0 : index
    %c0_24 = arith.constant 0 : index
    %23 = vector.load %arg3[%c3, %c0_23, %c0_24] : memref<9x128x512xf32, #tpu.memory_space<vmem>>, vector<1x128x512xf32>
    %24 = vector.shape_cast %23 : vector<1x128x512xf32> to vector<128x512xf32>
    %cst_25 = arith.constant dense<0.000000e+00> : vector<128x4xf32>
    %25 = tpu.matmul %24, %0, %cst_25 {dimension_numbers = #tpu.dot_dimension_numbers<[1], [0], [0], [1], [0, 0, 1, 1], [], []>} : vector<128x512xf32>, vector<512x4xf32>, vector<128x4xf32> -> vector<128x4xf32>
    %c3_26 = arith.constant 3 : index
    %c0_27 = arith.constant 0 : index
    %c0_28 = arith.constant 0 : index
    %26 = vector.load %arg6[%c3_26, %c0_27, %c0_28] : memref<9x4x14xf32, #tpu.memory_space<vmem>>, vector<1x4x14xf32>
    %27 = vector.shape_cast %26 : vector<1x4x14xf32> to vector<4x14xf32>
    %cst_29 = arith.constant dense<0.000000e+00> : vector<128x14xf32>
    %28 = tpu.matmul %25, %27, %cst_29 {dimension_numbers = #tpu.dot_dimension_numbers<[1], [0], [0], [1], [0, 0, 1, 1], [], []>} : vector<128x4xf32>, vector<4x14xf32>, vector<128x14xf32> -> vector<128x14xf32>
    %29 = arith.addf %22, %28 : vector<128x14xf32>
    %c4 = arith.constant 4 : index
    %c0_30 = arith.constant 0 : index
    %c0_31 = arith.constant 0 : index
    %30 = vector.load %arg3[%c4, %c0_30, %c0_31] : memref<9x128x512xf32, #tpu.memory_space<vmem>>, vector<1x128x512xf32>
    %31 = vector.shape_cast %30 : vector<1x128x512xf32> to vector<128x512xf32>
    %cst_32 = arith.constant dense<0.000000e+00> : vector<128x4xf32>
    %32 = tpu.matmul %31, %0, %cst_32 {dimension_numbers = #tpu.dot_dimension_numbers<[1], [0], [0], [1], [0, 0, 1, 1], [], []>} : vector<128x512xf32>, vector<512x4xf32>, vector<128x4xf32> -> vector<128x4xf32>
    %c4_33 = arith.constant 4 : index
    %c0_34 = arith.constant 0 : index
    %c0_35 = arith.constant 0 : index
    %33 = vector.load %arg6[%c4_33, %c0_34, %c0_35] : memref<9x4x14xf32, #tpu.memory_space<vmem>>, vector<1x4x14xf32>
    %34 = vector.shape_cast %33 : vector<1x4x14xf32> to vector<4x14xf32>
    %cst_36 = arith.constant dense<0.000000e+00> : vector<128x14xf32>
    %35 = tpu.matmul %32, %34, %cst_36 {dimension_numbers = #tpu.dot_dimension_numbers<[1], [0], [0], [1], [0, 0, 1, 1], [], []>} : vector<128x4xf32>, vector<4x14xf32>, vector<128x14xf32> -> vector<128x14xf32>
    %36 = arith.addf %29, %35 : vector<128x14xf32>
    %c5 = arith.constant 5 : index
    %c0_37 = arith.constant 0 : index
    %c0_38 = arith.constant 0 : index
    %37 = vector.load %arg3[%c5, %c0_37, %c0_38] : memref<9x128x512xf32, #tpu.memory_space<vmem>>, vector<1x128x512xf32>
    %38 = vector.shape_cast %37 : vector<1x128x512xf32> to vector<128x512xf32>
    %cst_39 = arith.constant dense<0.000000e+00> : vector<128x4xf32>
    %39 = tpu.matmul %38, %0, %cst_39 {dimension_numbers = #tpu.dot_dimension_numbers<[1], [0], [0], [1], [0, 0, 1, 1], [], []>} : vector<128x512xf32>, vector<512x4xf32>, vector<128x4xf32> -> vector<128x4xf32>
    %c5_40 = arith.constant 5 : index
    %c0_41 = arith.constant 0 : index
    %c0_42 = arith.constant 0 : index
    %40 = vector.load %arg6[%c5_40, %c0_41, %c0_42] : memref<9x4x14xf32, #tpu.memory_space<vmem>>, vector<1x4x14xf32>
    %41 = vector.shape_cast %40 : vector<1x4x14xf32> to vector<4x14xf32>
    %cst_43 = arith.constant dense<0.000000e+00> : vector<128x14xf32>
    %42 = tpu.matmul %39, %41, %cst_43 {dimension_numbers = #tpu.dot_dimension_numbers<[1], [0], [0], [1], [0, 0, 1, 1], [], []>} : vector<128x4xf32>, vector<4x14xf32>, vector<128x14xf32> -> vector<128x14xf32>
    %43 = arith.addf %36, %42 : vector<128x14xf32>
    %c6 = arith.constant 6 : index
    %c0_44 = arith.constant 0 : index
    %c0_45 = arith.constant 0 : index
    %44 = vector.load %arg3[%c6, %c0_44, %c0_45] : memref<9x128x512xf32, #tpu.memory_space<vmem>>, vector<1x128x512xf32>
    %45 = vector.shape_cast %44 : vector<1x128x512xf32> to vector<128x512xf32>
    %cst_46 = arith.constant dense<0.000000e+00> : vector<128x4xf32>
    %46 = tpu.matmul %45, %0, %cst_46 {dimension_numbers = #tpu.dot_dimension_numbers<[1], [0], [0], [1], [0, 0, 1, 1], [], []>} : vector<128x512xf32>, vector<512x4xf32>, vector<128x4xf32> -> vector<128x4xf32>
    %c6_47 = arith.constant 6 : index
    %c0_48 = arith.constant 0 : index
    %c0_49 = arith.constant 0 : index
    %47 = vector.load %arg6[%c6_47, %c0_48, %c0_49] : memref<9x4x14xf32, #tpu.memory_space<vmem>>, vector<1x4x14xf32>
    %48 = vector.shape_cast %47 : vector<1x4x14xf32> to vector<4x14xf32>
    %cst_50 = arith.constant dense<0.000000e+00> : vector<128x14xf32>
    %49 = tpu.matmul %46, %48, %cst_50 {dimension_numbers = #tpu.dot_dimension_numbers<[1], [0], [0], [1], [0, 0, 1, 1], [], []>} : vector<128x4xf32>, vector<4x14xf32>, vector<128x14xf32> -> vector<128x14xf32>
    %50 = arith.addf %43, %49 : vector<128x14xf32>
    %c7 = arith.constant 7 : index
    %c0_51 = arith.constant 0 : index
    %c0_52 = arith.constant 0 : index
    %51 = vector.load %arg3[%c7, %c0_51, %c0_52] : memref<9x128x512xf32, #tpu.memory_space<vmem>>, vector<1x128x512xf32>
    %52 = vector.shape_cast %51 : vector<1x128x512xf32> to vector<128x512xf32>
    %cst_53 = arith.constant dense<0.000000e+00> : vector<128x4xf32>
    %53 = tpu.matmul %52, %0, %cst_53 {dimension_numbers = #tpu.dot_dimension_numbers<[1], [0], [0], [1], [0, 0, 1, 1], [], []>} : vector<128x512xf32>, vector<512x4xf32>, vector<128x4xf32> -> vector<128x4xf32>
    %c7_54 = arith.constant 7 : index
    %c0_55 = arith.constant 0 : index
    %c0_56 = arith.constant 0 : index
    %54 = vector.load %arg6[%c7_54, %c0_55, %c0_56] : memref<9x4x14xf32, #tpu.memory_space<vmem>>, vector<1x4x14xf32>
    %55 = vector.shape_cast %54 : vector<1x4x14xf32> to vector<4x14xf32>
    %cst_57 = arith.constant dense<0.000000e+00> : vector<128x14xf32>
    %56 = tpu.matmul %53, %55, %cst_57 {dimension_numbers = #tpu.dot_dimension_numbers<[1], [0], [0], [1], [0, 0, 1, 1], [], []>} : vector<128x4xf32>, vector<4x14xf32>, vector<128x14xf32> -> vector<128x14xf32>
    %57 = arith.addf %50, %56 : vector<128x14xf32>
    %c8 = arith.constant 8 : index
    %c0_58 = arith.constant 0 : index
    %c0_59 = arith.constant 0 : index
    %58 = vector.load %arg3[%c8, %c0_58, %c0_59] : memref<9x128x512xf32, #tpu.memory_space<vmem>>, vector<1x128x512xf32>
    %59 = vector.shape_cast %58 : vector<1x128x512xf32> to vector<128x512xf32>
    %cst_60 = arith.constant dense<0.000000e+00> : vector<128x4xf32>
    %60 = tpu.matmul %59, %0, %cst_60 {dimension_numbers = #tpu.dot_dimension_numbers<[1], [0], [0], [1], [0, 0, 1, 1], [], []>} : vector<128x512xf32>, vector<512x4xf32>, vector<128x4xf32> -> vector<128x4xf32>
    %c8_61 = arith.constant 8 : index
    %c0_62 = arith.constant 0 : index
    %c0_63 = arith.constant 0 : index
    %61 = vector.load %arg6[%c8_61, %c0_62, %c0_63] : memref<9x4x14xf32, #tpu.memory_space<vmem>>, vector<1x4x14xf32>
    %62 = vector.shape_cast %61 : vector<1x4x14xf32> to vector<4x14xf32>
    %cst_64 = arith.constant dense<0.000000e+00> : vector<128x14xf32>
    %63 = tpu.matmul %60, %62, %cst_64 {dimension_numbers = #tpu.dot_dimension_numbers<[1], [0], [0], [1], [0, 0, 1, 1], [], []>} : vector<128x4xf32>, vector<4x14xf32>, vector<128x14xf32> -> vector<128x14xf32>
    %64 = arith.addf %57, %63 : vector<128x14xf32>
    %c0_65 = arith.constant 0 : index
    %c0_66 = arith.constant 0 : index
    %65 = vector.load %arg7[%c0_65, %c0_66] : memref<1x14xf32, #tpu.memory_space<vmem>>, vector<1x14xf32>
    %66 = vector.broadcast %65 : vector<1x14xf32> to vector<128x14xf32>
    %67 = arith.addf %64, %66 : vector<128x14xf32>
    %cst_67 = arith.constant 0.000000e+00 : f32
    %68 = vector.broadcast %cst_67 : f32 to vector<128x14xf32>
    %69 = arith.cmpf ogt, %67, %68 : vector<128x14xf32>
    %cst_68 = arith.constant 0.00999999977 : f32
    %70 = vector.broadcast %cst_68 : f32 to vector<128x14xf32>
    %71 = arith.mulf %70, %67 : vector<128x14xf32>
    %72 = arith.select %69, %67, %71 : vector<128x14xi1>, vector<128x14xf32>
    %cst_69 = arith.constant 0.000000e+00 : f32
    %73 = vector.broadcast %cst_69 : f32 to vector<32x14xf32>
    %c0_70 = arith.constant 0 : index
    %c0_71 = arith.constant 0 : index
    %c0_72 = arith.constant 0 : index
    %74 = vector.load %arg4[%c0_70, %c0_71, %c0_72] : memref<9x32x128xf32, #tpu.memory_space<vmem>>, vector<1x32x128xf32>
    %75 = vector.shape_cast %74 : vector<1x32x128xf32> to vector<32x128xf32>
    %cst_73 = arith.constant dense<0.000000e+00> : vector<32x14xf32>
    %76 = tpu.matmul %75, %72, %cst_73 {dimension_numbers = #tpu.dot_dimension_numbers<[1], [0], [0], [1], [0, 0, 1, 1], [], []>} : vector<32x128xf32>, vector<128x14xf32>, vector<32x14xf32> -> vector<32x14xf32>
    %c0_74 = arith.constant 0 : index
    %c0_75 = arith.constant 0 : index
    %c0_76 = arith.constant 0 : index
    %77 = vector.load %arg8[%c0_74, %c0_75, %c0_76] : memref<9x14x14xf32, #tpu.memory_space<vmem>>, vector<1x14x14xf32>
    %78 = vector.shape_cast %77 : vector<1x14x14xf32> to vector<14x14xf32>
    %cst_77 = arith.constant dense<0.000000e+00> : vector<32x14xf32>
    %79 = tpu.matmul %76, %78, %cst_77 {dimension_numbers = #tpu.dot_dimension_numbers<[1], [0], [0], [1], [0, 0, 1, 1], [], []>} : vector<32x14xf32>, vector<14x14xf32>, vector<32x14xf32> -> vector<32x14xf32>
    %80 = arith.addf %73, %79 : vector<32x14xf32>
    %c1_78 = arith.constant 1 : index
    %c0_79 = arith.constant 0 : index
    %c0_80 = arith.constant 0 : index
    %81 = vector.load %arg4[%c1_78, %c0_79, %c0_80] : memref<9x32x128xf32, #tpu.memory_space<vmem>>, vector<1x32x128xf32>
    %82 = vector.shape_cast %81 : vector<1x32x128xf32> to vector<32x128xf32>
    %cst_81 = arith.constant dense<0.000000e+00> : vector<32x14xf32>
    %83 = tpu.matmul %82, %72, %cst_81 {dimension_numbers = #tpu.dot_dimension_numbers<[1], [0], [0], [1], [0, 0, 1, 1], [], []>} : vector<32x128xf32>, vector<128x14xf32>, vector<32x14xf32> -> vector<32x14xf32>
    %c1_82 = arith.constant 1 : index
    %c0_83 = arith.constant 0 : index
    %c0_84 = arith.constant 0 : index
    %84 = vector.load %arg8[%c1_82, %c0_83, %c0_84] : memref<9x14x14xf32, #tpu.memory_space<vmem>>, vector<1x14x14xf32>
    %85 = vector.shape_cast %84 : vector<1x14x14xf32> to vector<14x14xf32>
    %cst_85 = arith.constant dense<0.000000e+00> : vector<32x14xf32>
    %86 = tpu.matmul %83, %85, %cst_85 {dimension_numbers = #tpu.dot_dimension_numbers<[1], [0], [0], [1], [0, 0, 1, 1], [], []>} : vector<32x14xf32>, vector<14x14xf32>, vector<32x14xf32> -> vector<32x14xf32>
    %87 = arith.addf %80, %86 : vector<32x14xf32>
    %c2_86 = arith.constant 2 : index
    %c0_87 = arith.constant 0 : index
    %c0_88 = arith.constant 0 : index
    %88 = vector.load %arg4[%c2_86, %c0_87, %c0_88] : memref<9x32x128xf32, #tpu.memory_space<vmem>>, vector<1x32x128xf32>
    %89 = vector.shape_cast %88 : vector<1x32x128xf32> to vector<32x128xf32>
    %cst_89 = arith.constant dense<0.000000e+00> : vector<32x14xf32>
    %90 = tpu.matmul %89, %72, %cst_89 {dimension_numbers = #tpu.dot_dimension_numbers<[1], [0], [0], [1], [0, 0, 1, 1], [], []>} : vector<32x128xf32>, vector<128x14xf32>, vector<32x14xf32> -> vector<32x14xf32>
    %c2_90 = arith.constant 2 : index
    %c0_91 = arith.constant 0 : index
    %c0_92 = arith.constant 0 : index
    %91 = vector.load %arg8[%c2_90, %c0_91, %c0_92] : memref<9x14x14xf32, #tpu.memory_space<vmem>>, vector<1x14x14xf32>
    %92 = vector.shape_cast %91 : vector<1x14x14xf32> to vector<14x14xf32>
    %cst_93 = arith.constant dense<0.000000e+00> : vector<32x14xf32>
    %93 = tpu.matmul %90, %92, %cst_93 {dimension_numbers = #tpu.dot_dimension_numbers<[1], [0], [0], [1], [0, 0, 1, 1], [], []>} : vector<32x14xf32>, vector<14x14xf32>, vector<32x14xf32> -> vector<32x14xf32>
    %94 = arith.addf %87, %93 : vector<32x14xf32>
    %c3_94 = arith.constant 3 : index
    %c0_95 = arith.constant 0 : index
    %c0_96 = arith.constant 0 : index
    %95 = vector.load %arg4[%c3_94, %c0_95, %c0_96] : memref<9x32x128xf32, #tpu.memory_space<vmem>>, vector<1x32x128xf32>
    %96 = vector.shape_cast %95 : vector<1x32x128xf32> to vector<32x128xf32>
    %cst_97 = arith.constant dense<0.000000e+00> : vector<32x14xf32>
    %97 = tpu.matmul %96, %72, %cst_97 {dimension_numbers = #tpu.dot_dimension_numbers<[1], [0], [0], [1], [0, 0, 1, 1], [], []>} : vector<32x128xf32>, vector<128x14xf32>, vector<32x14xf32> -> vector<32x14xf32>
    %c3_98 = arith.constant 3 : index
    %c0_99 = arith.constant 0 : index
    %c0_100 = arith.constant 0 : index
    %98 = vector.load %arg8[%c3_98, %c0_99, %c0_100] : memref<9x14x14xf32, #tpu.memory_space<vmem>>, vector<1x14x14xf32>
    %99 = vector.shape_cast %98 : vector<1x14x14xf32> to vector<14x14xf32>
    %cst_101 = arith.constant dense<0.000000e+00> : vector<32x14xf32>
    %100 = tpu.matmul %97, %99, %cst_101 {dimension_numbers = #tpu.dot_dimension_numbers<[1], [0], [0], [1], [0, 0, 1, 1], [], []>} : vector<32x14xf32>, vector<14x14xf32>, vector<32x14xf32> -> vector<32x14xf32>
    %101 = arith.addf %94, %100 : vector<32x14xf32>
    %c4_102 = arith.constant 4 : index
    %c0_103 = arith.constant 0 : index
    %c0_104 = arith.constant 0 : index
    %102 = vector.load %arg4[%c4_102, %c0_103, %c0_104] : memref<9x32x128xf32, #tpu.memory_space<vmem>>, vector<1x32x128xf32>
    %103 = vector.shape_cast %102 : vector<1x32x128xf32> to vector<32x128xf32>
    %cst_105 = arith.constant dense<0.000000e+00> : vector<32x14xf32>
    %104 = tpu.matmul %103, %72, %cst_105 {dimension_numbers = #tpu.dot_dimension_numbers<[1], [0], [0], [1], [0, 0, 1, 1], [], []>} : vector<32x128xf32>, vector<128x14xf32>, vector<32x14xf32> -> vector<32x14xf32>
    %c4_106 = arith.constant 4 : index
    %c0_107 = arith.constant 0 : index
    %c0_108 = arith.constant 0 : index
    %105 = vector.load %arg8[%c4_106, %c0_107, %c0_108] : memref<9x14x14xf32, #tpu.memory_space<vmem>>, vector<1x14x14xf32>
    %106 = vector.shape_cast %105 : vector<1x14x14xf32> to vector<14x14xf32>
    %cst_109 = arith.constant dense<0.000000e+00> : vector<32x14xf32>
    %107 = tpu.matmul %104, %106, %cst_109 {dimension_numbers = #tpu.dot_dimension_numbers<[1], [0], [0], [1], [0, 0, 1, 1], [], []>} : vector<32x14xf32>, vector<14x14xf32>, vector<32x14xf32> -> vector<32x14xf32>
    %108 = arith.addf %101, %107 : vector<32x14xf32>
    %c5_110 = arith.constant 5 : index
    %c0_111 = arith.constant 0 : index
    %c0_112 = arith.constant 0 : index
    %109 = vector.load %arg4[%c5_110, %c0_111, %c0_112] : memref<9x32x128xf32, #tpu.memory_space<vmem>>, vector<1x32x128xf32>
    %110 = vector.shape_cast %109 : vector<1x32x128xf32> to vector<32x128xf32>
    %cst_113 = arith.constant dense<0.000000e+00> : vector<32x14xf32>
    %111 = tpu.matmul %110, %72, %cst_113 {dimension_numbers = #tpu.dot_dimension_numbers<[1], [0], [0], [1], [0, 0, 1, 1], [], []>} : vector<32x128xf32>, vector<128x14xf32>, vector<32x14xf32> -> vector<32x14xf32>
    %c5_114 = arith.constant 5 : index
    %c0_115 = arith.constant 0 : index
    %c0_116 = arith.constant 0 : index
    %112 = vector.load %arg8[%c5_114, %c0_115, %c0_116] : memref<9x14x14xf32, #tpu.memory_space<vmem>>, vector<1x14x14xf32>
    %113 = vector.shape_cast %112 : vector<1x14x14xf32> to vector<14x14xf32>
    %cst_117 = arith.constant dense<0.000000e+00> : vector<32x14xf32>
    %114 = tpu.matmul %111, %113, %cst_117 {dimension_numbers = #tpu.dot_dimension_numbers<[1], [0], [0], [1], [0, 0, 1, 1], [], []>} : vector<32x14xf32>, vector<14x14xf32>, vector<32x14xf32> -> vector<32x14xf32>
    %115 = arith.addf %108, %114 : vector<32x14xf32>
    %c6_118 = arith.constant 6 : index
    %c0_119 = arith.constant 0 : index
    %c0_120 = arith.constant 0 : index
    %116 = vector.load %arg4[%c6_118, %c0_119, %c0_120] : memref<9x32x128xf32, #tpu.memory_space<vmem>>, vector<1x32x128xf32>
    %117 = vector.shape_cast %116 : vector<1x32x128xf32> to vector<32x128xf32>
    %cst_121 = arith.constant dense<0.000000e+00> : vector<32x14xf32>
    %118 = tpu.matmul %117, %72, %cst_121 {dimension_numbers = #tpu.dot_dimension_numbers<[1], [0], [0], [1], [0, 0, 1, 1], [], []>} : vector<32x128xf32>, vector<128x14xf32>, vector<32x14xf32> -> vector<32x14xf32>
    %c6_122 = arith.constant 6 : index
    %c0_123 = arith.constant 0 : index
    %c0_124 = arith.constant 0 : index
    %119 = vector.load %arg8[%c6_122, %c0_123, %c0_124] : memref<9x14x14xf32, #tpu.memory_space<vmem>>, vector<1x14x14xf32>
    %120 = vector.shape_cast %119 : vector<1x14x14xf32> to vector<14x14xf32>
    %cst_125 = arith.constant dense<0.000000e+00> : vector<32x14xf32>
    %121 = tpu.matmul %118, %120, %cst_125 {dimension_numbers = #tpu.dot_dimension_numbers<[1], [0], [0], [1], [0, 0, 1, 1], [], []>} : vector<32x14xf32>, vector<14x14xf32>, vector<32x14xf32> -> vector<32x14xf32>
    %122 = arith.addf %115, %121 : vector<32x14xf32>
    %c7_126 = arith.constant 7 : index
    %c0_127 = arith.constant 0 : index
    %c0_128 = arith.constant 0 : index
    %123 = vector.load %arg4[%c7_126, %c0_127, %c0_128] : memref<9x32x128xf32, #tpu.memory_space<vmem>>, vector<1x32x128xf32>
    %124 = vector.shape_cast %123 : vector<1x32x128xf32> to vector<32x128xf32>
    %cst_129 = arith.constant dense<0.000000e+00> : vector<32x14xf32>
    %125 = tpu.matmul %124, %72, %cst_129 {dimension_numbers = #tpu.dot_dimension_numbers<[1], [0], [0], [1], [0, 0, 1, 1], [], []>} : vector<32x128xf32>, vector<128x14xf32>, vector<32x14xf32> -> vector<32x14xf32>
    %c7_130 = arith.constant 7 : index
    %c0_131 = arith.constant 0 : index
    %c0_132 = arith.constant 0 : index
    %126 = vector.load %arg8[%c7_130, %c0_131, %c0_132] : memref<9x14x14xf32, #tpu.memory_space<vmem>>, vector<1x14x14xf32>
    %127 = vector.shape_cast %126 : vector<1x14x14xf32> to vector<14x14xf32>
    %cst_133 = arith.constant dense<0.000000e+00> : vector<32x14xf32>
    %128 = tpu.matmul %125, %127, %cst_133 {dimension_numbers = #tpu.dot_dimension_numbers<[1], [0], [0], [1], [0, 0, 1, 1], [], []>} : vector<32x14xf32>, vector<14x14xf32>, vector<32x14xf32> -> vector<32x14xf32>
    %129 = arith.addf %122, %128 : vector<32x14xf32>
    %c8_134 = arith.constant 8 : index
    %c0_135 = arith.constant 0 : index
    %c0_136 = arith.constant 0 : index
    %130 = vector.load %arg4[%c8_134, %c0_135, %c0_136] : memref<9x32x128xf32, #tpu.memory_space<vmem>>, vector<1x32x128xf32>
    %131 = vector.shape_cast %130 : vector<1x32x128xf32> to vector<32x128xf32>
    %cst_137 = arith.constant dense<0.000000e+00> : vector<32x14xf32>
    %132 = tpu.matmul %131, %72, %cst_137 {dimension_numbers = #tpu.dot_dimension_numbers<[1], [0], [0], [1], [0, 0, 1, 1], [], []>} : vector<32x128xf32>, vector<128x14xf32>, vector<32x14xf32> -> vector<32x14xf32>
    %c8_138 = arith.constant 8 : index
    %c0_139 = arith.constant 0 : index
    %c0_140 = arith.constant 0 : index
    %133 = vector.load %arg8[%c8_138, %c0_139, %c0_140] : memref<9x14x14xf32, #tpu.memory_space<vmem>>, vector<1x14x14xf32>
    %134 = vector.shape_cast %133 : vector<1x14x14xf32> to vector<14x14xf32>
    %cst_141 = arith.constant dense<0.000000e+00> : vector<32x14xf32>
    %135 = tpu.matmul %132, %134, %cst_141 {dimension_numbers = #tpu.dot_dimension_numbers<[1], [0], [0], [1], [0, 0, 1, 1], [], []>} : vector<32x14xf32>, vector<14x14xf32>, vector<32x14xf32> -> vector<32x14xf32>
    %136 = arith.addf %129, %135 : vector<32x14xf32>
    %c0_142 = arith.constant 0 : index
    %c0_143 = arith.constant 0 : index
    %137 = vector.load %arg9[%c0_142, %c0_143] : memref<1x14xf32, #tpu.memory_space<vmem>>, vector<1x14xf32>
    %138 = vector.broadcast %137 : vector<1x14xf32> to vector<32x14xf32>
    %139 = arith.addf %136, %138 : vector<32x14xf32>
    %cst_144 = arith.constant 0.000000e+00 : f32
    %140 = vector.broadcast %cst_144 : f32 to vector<32x14xf32>
    %141 = arith.cmpf ogt, %139, %140 : vector<32x14xf32>
    %cst_145 = arith.constant 0.00999999977 : f32
    %142 = vector.broadcast %cst_145 : f32 to vector<32x14xf32>
    %143 = arith.mulf %142, %139 : vector<32x14xf32>
    %144 = arith.select %141, %139, %143 : vector<32x14xi1>, vector<32x14xf32>
    %cst_146 = arith.constant 0.000000e+00 : f32
    %145 = vector.broadcast %cst_146 : f32 to vector<2x32xf32>
    %c0_147 = arith.constant 0 : index
    %c0_148 = arith.constant 0 : index
    %c0_149 = arith.constant 0 : index
    %146 = vector.load %arg5[%c0_147, %c0_148, %c0_149] : memref<16x2x32xf32, #tpu.memory_space<vmem>>, vector<1x2x32xf32>
    %147 = vector.shape_cast %146 : vector<1x2x32xf32> to vector<2x32xf32>
    %cst_150 = arith.constant dense<0.000000e+00> : vector<2x14xf32>
    %148 = tpu.matmul %147, %144, %cst_150 {dimension_numbers = #tpu.dot_dimension_numbers<[1], [0], [0], [1], [0, 0, 1, 1], [], []>} : vector<2x32xf32>, vector<32x14xf32>, vector<2x14xf32> -> vector<2x14xf32>
    %c0_151 = arith.constant 0 : index
    %c0_152 = arith.constant 0 : index
    %c0_153 = arith.constant 0 : index
    %149 = vector.load %arg10[%c0_151, %c0_152, %c0_153] : memref<16x14x32xf32, #tpu.memory_space<vmem>>, vector<1x14x32xf32>
    %150 = vector.shape_cast %149 : vector<1x14x32xf32> to vector<14x32xf32>
    %cst_154 = arith.constant dense<0.000000e+00> : vector<2x32xf32>
    %151 = tpu.matmul %148, %150, %cst_154 {dimension_numbers = #tpu.dot_dimension_numbers<[1], [0], [0], [1], [0, 0, 1, 1], [], []>} : vector<2x14xf32>, vector<14x32xf32>, vector<2x32xf32> -> vector<2x32xf32>
    %152 = arith.addf %145, %151 : vector<2x32xf32>
    %c1_155 = arith.constant 1 : index
    %c0_156 = arith.constant 0 : index
    %c0_157 = arith.constant 0 : index
    %153 = vector.load %arg5[%c1_155, %c0_156, %c0_157] : memref<16x2x32xf32, #tpu.memory_space<vmem>>, vector<1x2x32xf32>
    %154 = vector.shape_cast %153 : vector<1x2x32xf32> to vector<2x32xf32>
    %cst_158 = arith.constant dense<0.000000e+00> : vector<2x14xf32>
    %155 = tpu.matmul %154, %144, %cst_158 {dimension_numbers = #tpu.dot_dimension_numbers<[1], [0], [0], [1], [0, 0, 1, 1], [], []>} : vector<2x32xf32>, vector<32x14xf32>, vector<2x14xf32> -> vector<2x14xf32>
    %c1_159 = arith.constant 1 : index
    %c0_160 = arith.constant 0 : index
    %c0_161 = arith.constant 0 : index
    %156 = vector.load %arg10[%c1_159, %c0_160, %c0_161] : memref<16x14x32xf32, #tpu.memory_space<vmem>>, vector<1x14x32xf32>
    %157 = vector.shape_cast %156 : vector<1x14x32xf32> to vector<14x32xf32>
    %cst_162 = arith.constant dense<0.000000e+00> : vector<2x32xf32>
    %158 = tpu.matmul %155, %157, %cst_162 {dimension_numbers = #tpu.dot_dimension_numbers<[1], [0], [0], [1], [0, 0, 1, 1], [], []>} : vector<2x14xf32>, vector<14x32xf32>, vector<2x32xf32> -> vector<2x32xf32>
    %159 = arith.addf %152, %158 : vector<2x32xf32>
    %c2_163 = arith.constant 2 : index
    %c0_164 = arith.constant 0 : index
    %c0_165 = arith.constant 0 : index
    %160 = vector.load %arg5[%c2_163, %c0_164, %c0_165] : memref<16x2x32xf32, #tpu.memory_space<vmem>>, vector<1x2x32xf32>
    %161 = vector.shape_cast %160 : vector<1x2x32xf32> to vector<2x32xf32>
    %cst_166 = arith.constant dense<0.000000e+00> : vector<2x14xf32>
    %162 = tpu.matmul %161, %144, %cst_166 {dimension_numbers = #tpu.dot_dimension_numbers<[1], [0], [0], [1], [0, 0, 1, 1], [], []>} : vector<2x32xf32>, vector<32x14xf32>, vector<2x14xf32> -> vector<2x14xf32>
    %c2_167 = arith.constant 2 : index
    %c0_168 = arith.constant 0 : index
    %c0_169 = arith.constant 0 : index
    %163 = vector.load %arg10[%c2_167, %c0_168, %c0_169] : memref<16x14x32xf32, #tpu.memory_space<vmem>>, vector<1x14x32xf32>
    %164 = vector.shape_cast %163 : vector<1x14x32xf32> to vector<14x32xf32>
    %cst_170 = arith.constant dense<0.000000e+00> : vector<2x32xf32>
    %165 = tpu.matmul %162, %164, %cst_170 {dimension_numbers = #tpu.dot_dimension_numbers<[1], [0], [0], [1], [0, 0, 1, 1], [], []>} : vector<2x14xf32>, vector<14x32xf32>, vector<2x32xf32> -> vector<2x32xf32>
    %166 = arith.addf %159, %165 : vector<2x32xf32>
    %c3_171 = arith.constant 3 : index
    %c0_172 = arith.constant 0 : index
    %c0_173 = arith.constant 0 : index
    %167 = vector.load %arg5[%c3_171, %c0_172, %c0_173] : memref<16x2x32xf32, #tpu.memory_space<vmem>>, vector<1x2x32xf32>
    %168 = vector.shape_cast %167 : vector<1x2x32xf32> to vector<2x32xf32>
    %cst_174 = arith.constant dense<0.000000e+00> : vector<2x14xf32>
    %169 = tpu.matmul %168, %144, %cst_174 {dimension_numbers = #tpu.dot_dimension_numbers<[1], [0], [0], [1], [0, 0, 1, 1], [], []>} : vector<2x32xf32>, vector<32x14xf32>, vector<2x14xf32> -> vector<2x14xf32>
    %c3_175 = arith.constant 3 : index
    %c0_176 = arith.constant 0 : index
    %c0_177 = arith.constant 0 : index
    %170 = vector.load %arg10[%c3_175, %c0_176, %c0_177] : memref<16x14x32xf32, #tpu.memory_space<vmem>>, vector<1x14x32xf32>
    %171 = vector.shape_cast %170 : vector<1x14x32xf32> to vector<14x32xf32>
    %cst_178 = arith.constant dense<0.000000e+00> : vector<2x32xf32>
    %172 = tpu.matmul %169, %171, %cst_178 {dimension_numbers = #tpu.dot_dimension_numbers<[1], [0], [0], [1], [0, 0, 1, 1], [], []>} : vector<2x14xf32>, vector<14x32xf32>, vector<2x32xf32> -> vector<2x32xf32>
    %173 = arith.addf %166, %172 : vector<2x32xf32>
    %c4_179 = arith.constant 4 : index
    %c0_180 = arith.constant 0 : index
    %c0_181 = arith.constant 0 : index
    %174 = vector.load %arg5[%c4_179, %c0_180, %c0_181] : memref<16x2x32xf32, #tpu.memory_space<vmem>>, vector<1x2x32xf32>
    %175 = vector.shape_cast %174 : vector<1x2x32xf32> to vector<2x32xf32>
    %cst_182 = arith.constant dense<0.000000e+00> : vector<2x14xf32>
    %176 = tpu.matmul %175, %144, %cst_182 {dimension_numbers = #tpu.dot_dimension_numbers<[1], [0], [0], [1], [0, 0, 1, 1], [], []>} : vector<2x32xf32>, vector<32x14xf32>, vector<2x14xf32> -> vector<2x14xf32>
    %c4_183 = arith.constant 4 : index
    %c0_184 = arith.constant 0 : index
    %c0_185 = arith.constant 0 : index
    %177 = vector.load %arg10[%c4_183, %c0_184, %c0_185] : memref<16x14x32xf32, #tpu.memory_space<vmem>>, vector<1x14x32xf32>
    %178 = vector.shape_cast %177 : vector<1x14x32xf32> to vector<14x32xf32>
    %cst_186 = arith.constant dense<0.000000e+00> : vector<2x32xf32>
    %179 = tpu.matmul %176, %178, %cst_186 {dimension_numbers = #tpu.dot_dimension_numbers<[1], [0], [0], [1], [0, 0, 1, 1], [], []>} : vector<2x14xf32>, vector<14x32xf32>, vector<2x32xf32> -> vector<2x32xf32>
    %180 = arith.addf %173, %179 : vector<2x32xf32>
    %c5_187 = arith.constant 5 : index
    %c0_188 = arith.constant 0 : index
    %c0_189 = arith.constant 0 : index
    %181 = vector.load %arg5[%c5_187, %c0_188, %c0_189] : memref<16x2x32xf32, #tpu.memory_space<vmem>>, vector<1x2x32xf32>
    %182 = vector.shape_cast %181 : vector<1x2x32xf32> to vector<2x32xf32>
    %cst_190 = arith.constant dense<0.000000e+00> : vector<2x14xf32>
    %183 = tpu.matmul %182, %144, %cst_190 {dimension_numbers = #tpu.dot_dimension_numbers<[1], [0], [0], [1], [0, 0, 1, 1], [], []>} : vector<2x32xf32>, vector<32x14xf32>, vector<2x14xf32> -> vector<2x14xf32>
    %c5_191 = arith.constant 5 : index
    %c0_192 = arith.constant 0 : index
    %c0_193 = arith.constant 0 : index
    %184 = vector.load %arg10[%c5_191, %c0_192, %c0_193] : memref<16x14x32xf32, #tpu.memory_space<vmem>>, vector<1x14x32xf32>
    %185 = vector.shape_cast %184 : vector<1x14x32xf32> to vector<14x32xf32>
    %cst_194 = arith.constant dense<0.000000e+00> : vector<2x32xf32>
    %186 = tpu.matmul %183, %185, %cst_194 {dimension_numbers = #tpu.dot_dimension_numbers<[1], [0], [0], [1], [0, 0, 1, 1], [], []>} : vector<2x14xf32>, vector<14x32xf32>, vector<2x32xf32> -> vector<2x32xf32>
    %187 = arith.addf %180, %186 : vector<2x32xf32>
    %c6_195 = arith.constant 6 : index
    %c0_196 = arith.constant 0 : index
    %c0_197 = arith.constant 0 : index
    %188 = vector.load %arg5[%c6_195, %c0_196, %c0_197] : memref<16x2x32xf32, #tpu.memory_space<vmem>>, vector<1x2x32xf32>
    %189 = vector.shape_cast %188 : vector<1x2x32xf32> to vector<2x32xf32>
    %cst_198 = arith.constant dense<0.000000e+00> : vector<2x14xf32>
    %190 = tpu.matmul %189, %144, %cst_198 {dimension_numbers = #tpu.dot_dimension_numbers<[1], [0], [0], [1], [0, 0, 1, 1], [], []>} : vector<2x32xf32>, vector<32x14xf32>, vector<2x14xf32> -> vector<2x14xf32>
    %c6_199 = arith.constant 6 : index
    %c0_200 = arith.constant 0 : index
    %c0_201 = arith.constant 0 : index
    %191 = vector.load %arg10[%c6_199, %c0_200, %c0_201] : memref<16x14x32xf32, #tpu.memory_space<vmem>>, vector<1x14x32xf32>
    %192 = vector.shape_cast %191 : vector<1x14x32xf32> to vector<14x32xf32>
    %cst_202 = arith.constant dense<0.000000e+00> : vector<2x32xf32>
    %193 = tpu.matmul %190, %192, %cst_202 {dimension_numbers = #tpu.dot_dimension_numbers<[1], [0], [0], [1], [0, 0, 1, 1], [], []>} : vector<2x14xf32>, vector<14x32xf32>, vector<2x32xf32> -> vector<2x32xf32>
    %194 = arith.addf %187, %193 : vector<2x32xf32>
    %c7_203 = arith.constant 7 : index
    %c0_204 = arith.constant 0 : index
    %c0_205 = arith.constant 0 : index
    %195 = vector.load %arg5[%c7_203, %c0_204, %c0_205] : memref<16x2x32xf32, #tpu.memory_space<vmem>>, vector<1x2x32xf32>
    %196 = vector.shape_cast %195 : vector<1x2x32xf32> to vector<2x32xf32>
    %cst_206 = arith.constant dense<0.000000e+00> : vector<2x14xf32>
    %197 = tpu.matmul %196, %144, %cst_206 {dimension_numbers = #tpu.dot_dimension_numbers<[1], [0], [0], [1], [0, 0, 1, 1], [], []>} : vector<2x32xf32>, vector<32x14xf32>, vector<2x14xf32> -> vector<2x14xf32>
    %c7_207 = arith.constant 7 : index
    %c0_208 = arith.constant 0 : index
    %c0_209 = arith.constant 0 : index
    %198 = vector.load %arg10[%c7_207, %c0_208, %c0_209] : memref<16x14x32xf32, #tpu.memory_space<vmem>>, vector<1x14x32xf32>
    %199 = vector.shape_cast %198 : vector<1x14x32xf32> to vector<14x32xf32>
    %cst_210 = arith.constant dense<0.000000e+00> : vector<2x32xf32>
    %200 = tpu.matmul %197, %199, %cst_210 {dimension_numbers = #tpu.dot_dimension_numbers<[1], [0], [0], [1], [0, 0, 1, 1], [], []>} : vector<2x14xf32>, vector<14x32xf32>, vector<2x32xf32> -> vector<2x32xf32>
    %201 = arith.addf %194, %200 : vector<2x32xf32>
    %c8_211 = arith.constant 8 : index
    %c0_212 = arith.constant 0 : index
    %c0_213 = arith.constant 0 : index
    %202 = vector.load %arg5[%c8_211, %c0_212, %c0_213] : memref<16x2x32xf32, #tpu.memory_space<vmem>>, vector<1x2x32xf32>
    %203 = vector.shape_cast %202 : vector<1x2x32xf32> to vector<2x32xf32>
    %cst_214 = arith.constant dense<0.000000e+00> : vector<2x14xf32>
    %204 = tpu.matmul %203, %144, %cst_214 {dimension_numbers = #tpu.dot_dimension_numbers<[1], [0], [0], [1], [0, 0, 1, 1], [], []>} : vector<2x32xf32>, vector<32x14xf32>, vector<2x14xf32> -> vector<2x14xf32>
    %c8_215 = arith.constant 8 : index
    %c0_216 = arith.constant 0 : index
    %c0_217 = arith.constant 0 : index
    %205 = vector.load %arg10[%c8_215, %c0_216, %c0_217] : memref<16x14x32xf32, #tpu.memory_space<vmem>>, vector<1x14x32xf32>
    %206 = vector.shape_cast %205 : vector<1x14x32xf32> to vector<14x32xf32>
    %cst_218 = arith.constant dense<0.000000e+00> : vector<2x32xf32>
    %207 = tpu.matmul %204, %206, %cst_218 {dimension_numbers = #tpu.dot_dimension_numbers<[1], [0], [0], [1], [0, 0, 1, 1], [], []>} : vector<2x14xf32>, vector<14x32xf32>, vector<2x32xf32> -> vector<2x32xf32>
    %208 = arith.addf %201, %207 : vector<2x32xf32>
    %c9 = arith.constant 9 : index
    %c0_219 = arith.constant 0 : index
    %c0_220 = arith.constant 0 : index
    %209 = vector.load %arg5[%c9, %c0_219, %c0_220] : memref<16x2x32xf32, #tpu.memory_space<vmem>>, vector<1x2x32xf32>
    %210 = vector.shape_cast %209 : vector<1x2x32xf32> to vector<2x32xf32>
    %cst_221 = arith.constant dense<0.000000e+00> : vector<2x14xf32>
    %211 = tpu.matmul %210, %144, %cst_221 {dimension_numbers = #tpu.dot_dimension_numbers<[1], [0], [0], [1], [0, 0, 1, 1], [], []>} : vector<2x32xf32>, vector<32x14xf32>, vector<2x14xf32> -> vector<2x14xf32>
    %c9_222 = arith.constant 9 : index
    %c0_223 = arith.constant 0 : index
    %c0_224 = arith.constant 0 : index
    %212 = vector.load %arg10[%c9_222, %c0_223, %c0_224] : memref<16x14x32xf32, #tpu.memory_space<vmem>>, vector<1x14x32xf32>
    %213 = vector.shape_cast %212 : vector<1x14x32xf32> to vector<14x32xf32>
    %cst_225 = arith.constant dense<0.000000e+00> : vector<2x32xf32>
    %214 = tpu.matmul %211, %213, %cst_225 {dimension_numbers = #tpu.dot_dimension_numbers<[1], [0], [0], [1], [0, 0, 1, 1], [], []>} : vector<2x14xf32>, vector<14x32xf32>, vector<2x32xf32> -> vector<2x32xf32>
    %215 = arith.addf %208, %214 : vector<2x32xf32>
    %c10 = arith.constant 10 : index
    %c0_226 = arith.constant 0 : index
    %c0_227 = arith.constant 0 : index
    %216 = vector.load %arg5[%c10, %c0_226, %c0_227] : memref<16x2x32xf32, #tpu.memory_space<vmem>>, vector<1x2x32xf32>
    %217 = vector.shape_cast %216 : vector<1x2x32xf32> to vector<2x32xf32>
    %cst_228 = arith.constant dense<0.000000e+00> : vector<2x14xf32>
    %218 = tpu.matmul %217, %144, %cst_228 {dimension_numbers = #tpu.dot_dimension_numbers<[1], [0], [0], [1], [0, 0, 1, 1], [], []>} : vector<2x32xf32>, vector<32x14xf32>, vector<2x14xf32> -> vector<2x14xf32>
    %c10_229 = arith.constant 10 : index
    %c0_230 = arith.constant 0 : index
    %c0_231 = arith.constant 0 : index
    %219 = vector.load %arg10[%c10_229, %c0_230, %c0_231] : memref<16x14x32xf32, #tpu.memory_space<vmem>>, vector<1x14x32xf32>
    %220 = vector.shape_cast %219 : vector<1x14x32xf32> to vector<14x32xf32>
    %cst_232 = arith.constant dense<0.000000e+00> : vector<2x32xf32>
    %221 = tpu.matmul %218, %220, %cst_232 {dimension_numbers = #tpu.dot_dimension_numbers<[1], [0], [0], [1], [0, 0, 1, 1], [], []>} : vector<2x14xf32>, vector<14x32xf32>, vector<2x32xf32> -> vector<2x32xf32>
    %222 = arith.addf %215, %221 : vector<2x32xf32>
    %c11 = arith.constant 11 : index
    %c0_233 = arith.constant 0 : index
    %c0_234 = arith.constant 0 : index
    %223 = vector.load %arg5[%c11, %c0_233, %c0_234] : memref<16x2x32xf32, #tpu.memory_space<vmem>>, vector<1x2x32xf32>
    %224 = vector.shape_cast %223 : vector<1x2x32xf32> to vector<2x32xf32>
    %cst_235 = arith.constant dense<0.000000e+00> : vector<2x14xf32>
    %225 = tpu.matmul %224, %144, %cst_235 {dimension_numbers = #tpu.dot_dimension_numbers<[1], [0], [0], [1], [0, 0, 1, 1], [], []>} : vector<2x32xf32>, vector<32x14xf32>, vector<2x14xf32> -> vector<2x14xf32>
    %c11_236 = arith.constant 11 : index
    %c0_237 = arith.constant 0 : index
    %c0_238 = arith.constant 0 : index
    %226 = vector.load %arg10[%c11_236, %c0_237, %c0_238] : memref<16x14x32xf32, #tpu.memory_space<vmem>>, vector<1x14x32xf32>
    %227 = vector.shape_cast %226 : vector<1x14x32xf32> to vector<14x32xf32>
    %cst_239 = arith.constant dense<0.000000e+00> : vector<2x32xf32>
    %228 = tpu.matmul %225, %227, %cst_239 {dimension_numbers = #tpu.dot_dimension_numbers<[1], [0], [0], [1], [0, 0, 1, 1], [], []>} : vector<2x14xf32>, vector<14x32xf32>, vector<2x32xf32> -> vector<2x32xf32>
    %229 = arith.addf %222, %228 : vector<2x32xf32>
    %c12 = arith.constant 12 : index
    %c0_240 = arith.constant 0 : index
    %c0_241 = arith.constant 0 : index
    %230 = vector.load %arg5[%c12, %c0_240, %c0_241] : memref<16x2x32xf32, #tpu.memory_space<vmem>>, vector<1x2x32xf32>
    %231 = vector.shape_cast %230 : vector<1x2x32xf32> to vector<2x32xf32>
    %cst_242 = arith.constant dense<0.000000e+00> : vector<2x14xf32>
    %232 = tpu.matmul %231, %144, %cst_242 {dimension_numbers = #tpu.dot_dimension_numbers<[1], [0], [0], [1], [0, 0, 1, 1], [], []>} : vector<2x32xf32>, vector<32x14xf32>, vector<2x14xf32> -> vector<2x14xf32>
    %c12_243 = arith.constant 12 : index
    %c0_244 = arith.constant 0 : index
    %c0_245 = arith.constant 0 : index
    %233 = vector.load %arg10[%c12_243, %c0_244, %c0_245] : memref<16x14x32xf32, #tpu.memory_space<vmem>>, vector<1x14x32xf32>
    %234 = vector.shape_cast %233 : vector<1x14x32xf32> to vector<14x32xf32>
    %cst_246 = arith.constant dense<0.000000e+00> : vector<2x32xf32>
    %235 = tpu.matmul %232, %234, %cst_246 {dimension_numbers = #tpu.dot_dimension_numbers<[1], [0], [0], [1], [0, 0, 1, 1], [], []>} : vector<2x14xf32>, vector<14x32xf32>, vector<2x32xf32> -> vector<2x32xf32>
    %236 = arith.addf %229, %235 : vector<2x32xf32>
    %c13 = arith.constant 13 : index
    %c0_247 = arith.constant 0 : index
    %c0_248 = arith.constant 0 : index
    %237 = vector.load %arg5[%c13, %c0_247, %c0_248] : memref<16x2x32xf32, #tpu.memory_space<vmem>>, vector<1x2x32xf32>
    %238 = vector.shape_cast %237 : vector<1x2x32xf32> to vector<2x32xf32>
    %cst_249 = arith.constant dense<0.000000e+00> : vector<2x14xf32>
    %239 = tpu.matmul %238, %144, %cst_249 {dimension_numbers = #tpu.dot_dimension_numbers<[1], [0], [0], [1], [0, 0, 1, 1], [], []>} : vector<2x32xf32>, vector<32x14xf32>, vector<2x14xf32> -> vector<2x14xf32>
    %c13_250 = arith.constant 13 : index
    %c0_251 = arith.constant 0 : index
    %c0_252 = arith.constant 0 : index
    %240 = vector.load %arg10[%c13_250, %c0_251, %c0_252] : memref<16x14x32xf32, #tpu.memory_space<vmem>>, vector<1x14x32xf32>
    %241 = vector.shape_cast %240 : vector<1x14x32xf32> to vector<14x32xf32>
    %cst_253 = arith.constant dense<0.000000e+00> : vector<2x32xf32>
    %242 = tpu.matmul %239, %241, %cst_253 {dimension_numbers = #tpu.dot_dimension_numbers<[1], [0], [0], [1], [0, 0, 1, 1], [], []>} : vector<2x14xf32>, vector<14x32xf32>, vector<2x32xf32> -> vector<2x32xf32>
    %243 = arith.addf %236, %242 : vector<2x32xf32>
    %c14 = arith.constant 14 : index
    %c0_254 = arith.constant 0 : index
    %c0_255 = arith.constant 0 : index
    %244 = vector.load %arg5[%c14, %c0_254, %c0_255] : memref<16x2x32xf32, #tpu.memory_space<vmem>>, vector<1x2x32xf32>
    %245 = vector.shape_cast %244 : vector<1x2x32xf32> to vector<2x32xf32>
    %cst_256 = arith.constant dense<0.000000e+00> : vector<2x14xf32>
    %246 = tpu.matmul %245, %144, %cst_256 {dimension_numbers = #tpu.dot_dimension_numbers<[1], [0], [0], [1], [0, 0, 1, 1], [], []>} : vector<2x32xf32>, vector<32x14xf32>, vector<2x14xf32> -> vector<2x14xf32>
    %c14_257 = arith.constant 14 : index
    %c0_258 = arith.constant 0 : index
    %c0_259 = arith.constant 0 : index
    %247 = vector.load %arg10[%c14_257, %c0_258, %c0_259] : memref<16x14x32xf32, #tpu.memory_space<vmem>>, vector<1x14x32xf32>
    %248 = vector.shape_cast %247 : vector<1x14x32xf32> to vector<14x32xf32>
    %cst_260 = arith.constant dense<0.000000e+00> : vector<2x32xf32>
    %249 = tpu.matmul %246, %248, %cst_260 {dimension_numbers = #tpu.dot_dimension_numbers<[1], [0], [0], [1], [0, 0, 1, 1], [], []>} : vector<2x14xf32>, vector<14x32xf32>, vector<2x32xf32> -> vector<2x32xf32>
    %250 = arith.addf %243, %249 : vector<2x32xf32>
    %c15 = arith.constant 15 : index
    %c0_261 = arith.constant 0 : index
    %c0_262 = arith.constant 0 : index
    %251 = vector.load %arg5[%c15, %c0_261, %c0_262] : memref<16x2x32xf32, #tpu.memory_space<vmem>>, vector<1x2x32xf32>
    %252 = vector.shape_cast %251 : vector<1x2x32xf32> to vector<2x32xf32>
    %cst_263 = arith.constant dense<0.000000e+00> : vector<2x14xf32>
    %253 = tpu.matmul %252, %144, %cst_263 {dimension_numbers = #tpu.dot_dimension_numbers<[1], [0], [0], [1], [0, 0, 1, 1], [], []>} : vector<2x32xf32>, vector<32x14xf32>, vector<2x14xf32> -> vector<2x14xf32>
    %c15_264 = arith.constant 15 : index
    %c0_265 = arith.constant 0 : index
    %c0_266 = arith.constant 0 : index
    %254 = vector.load %arg10[%c15_264, %c0_265, %c0_266] : memref<16x14x32xf32, #tpu.memory_space<vmem>>, vector<1x14x32xf32>
    %255 = vector.shape_cast %254 : vector<1x14x32xf32> to vector<14x32xf32>
    %cst_267 = arith.constant dense<0.000000e+00> : vector<2x32xf32>
    %256 = tpu.matmul %253, %255, %cst_267 {dimension_numbers = #tpu.dot_dimension_numbers<[1], [0], [0], [1], [0, 0, 1, 1], [], []>} : vector<2x14xf32>, vector<14x32xf32>, vector<2x32xf32> -> vector<2x32xf32>
    %257 = arith.addf %250, %256 : vector<2x32xf32>
    %c0_268 = arith.constant 0 : index
    %c0_269 = arith.constant 0 : index
    %258 = vector.load %arg11[%c0_268, %c0_269] : memref<1x32xf32, #tpu.memory_space<vmem>>, vector<1x32xf32>
    %259 = vector.broadcast %258 : vector<1x32xf32> to vector<2x32xf32>
    %260 = arith.addf %257, %259 : vector<2x32xf32>
    %cst_270 = arith.constant 0.000000e+00 : f32
    %261 = vector.broadcast %cst_270 : f32 to vector<2x32xf32>
    %262 = arith.maximumf %260, %261 : vector<2x32xf32>
    %c0_271 = arith.constant 0 : index
    %c0_272 = arith.constant 0 : index
    %263 = vector.load %arg2[%c0_271, %c0_272] : memref<2x7xf32, #tpu.memory_space<vmem>>, vector<2x7xf32>
    %c0_273 = arith.constant 0 : index
    %c0_274 = arith.constant 0 : index
    %264 = vector.load %arg12[%c0_273, %c0_274] : memref<7x32xf32, #tpu.memory_space<vmem>>, vector<7x32xf32>
    %cst_275 = arith.constant dense<0.000000e+00> : vector<2x32xf32>
    %265 = tpu.matmul %263, %264, %cst_275 {dimension_numbers = #tpu.dot_dimension_numbers<[1], [0], [0], [1], [0, 0, 1, 1], [], []>} : vector<2x7xf32>, vector<7x32xf32>, vector<2x32xf32> -> vector<2x32xf32>
    %c0_276 = arith.constant 0 : index
    %c0_277 = arith.constant 0 : index
    %266 = vector.load %arg13[%c0_276, %c0_277] : memref<1x32xf32, #tpu.memory_space<vmem>>, vector<1x32xf32>
    %267 = vector.broadcast %266 : vector<1x32xf32> to vector<2x32xf32>
    %268 = arith.addf %265, %267 : vector<2x32xf32>
    %c0_278 = arith.constant 0 : index
    %c0_279 = arith.constant 0 : index
    %269 = vector.load %arg14[%c0_278, %c0_279] : memref<32x4xf32, #tpu.memory_space<vmem>>, vector<32x4xf32>
    %cst_280 = arith.constant dense<0.000000e+00> : vector<2x4xf32>
    %270 = tpu.matmul %262, %269, %cst_280 {dimension_numbers = #tpu.dot_dimension_numbers<[1], [0], [0], [1], [0, 0, 1, 1], [], []>} : vector<2x32xf32>, vector<32x4xf32>, vector<2x4xf32> -> vector<2x4xf32>
    %c0_281 = arith.constant 0 : index
    %c0_282 = arith.constant 0 : index
    %271 = vector.load %arg15[%c0_281, %c0_282] : memref<32x4xf32, #tpu.memory_space<vmem>>, vector<32x4xf32>
    %cst_283 = arith.constant dense<0.000000e+00> : vector<2x4xf32>
    %272 = tpu.matmul %268, %271, %cst_283 {dimension_numbers = #tpu.dot_dimension_numbers<[1], [0], [0], [1], [0, 0, 1, 1], [], []>} : vector<2x32xf32>, vector<32x4xf32>, vector<2x4xf32> -> vector<2x4xf32>
    %273 = arith.addf %270, %272 : vector<2x4xf32>
    %c0_284 = arith.constant 0 : index
    %c0_285 = arith.constant 0 : index
    %274 = vector.load %arg16[%c0_284, %c0_285] : memref<1x4xf32, #tpu.memory_space<vmem>>, vector<1x4xf32>
    %275 = vector.broadcast %274 : vector<1x4xf32> to vector<2x4xf32>
    %276 = arith.addf %273, %275 : vector<2x4xf32>
    %c0_286 = arith.constant 0 : index
    %c0_287 = arith.constant 0 : index
    %277 = vector.load %arg17[%c0_286, %c0_287] : memref<2x4xf32, #tpu.memory_space<vmem>>, vector<2x4xf32>
    tpu.vector_store %arg17[%c0_286, %c0_287], %276 {strides = array<i32>} : memref<2x4xf32, #tpu.memory_space<vmem>>, vector<2x4xf32>,
    return
  }
  func.func @transform_0(%arg0: i32) -> (i32, i32) {
    %c0_i32 = arith.constant 0 : i32
    %c0_i32_0 = arith.constant 0 : i32
    %c0_i32_1 = arith.constant 0 : i32
    return %c0_i32, %c0_i32_0 : i32, i32
  }
  func.func @transform_1(%arg0: i32) -> (i32, i32) {
    %c0_i32 = arith.constant 0 : i32
    %c0_i32_0 = arith.constant 0 : i32
    %c0_i32_1 = arith.constant 0 : i32
    return %c0_i32, %c0_i32_0 : i32, i32
  }
  func.func @transform_2(%arg0: i32) -> (i32, i32, i32) {
    %c0_i32 = arith.constant 0 : i32
    %c0_i32_0 = arith.constant 0 : i32
    %c0_i32_1 = arith.constant 0 : i32
    %c0_i32_2 = arith.constant 0 : i32
    return %c0_i32, %c0_i32_0, %c0_i32_1 : i32, i32, i32
  }
  func.func @transform_3(%arg0: i32) -> (i32, i32, i32) {
    %c0_i32 = arith.constant 0 : i32
    %c0_i32_0 = arith.constant 0 : i32
    %c0_i32_1 = arith.constant 0 : i32
    %c0_i32_2 = arith.constant 0 : i32
    return %c0_i32, %c0_i32_0, %c0_i32_1 : i32, i32, i32
  }
  func.func @transform_4(%arg0: i32) -> (i32, i32, i32) {
    %c0_i32 = arith.constant 0 : i32
    %c0_i32_0 = arith.constant 0 : i32
    %c0_i32_1 = arith.constant 0 : i32
    %c0_i32_2 = arith.constant 0 : i32
    return %c0_i32, %c0_i32_0, %c0_i32_1 : i32, i32, i32
  }
  func.func @transform_5(%arg0: i32) -> (i32, i32, i32) {
    %c0_i32 = arith.constant 0 : i32
    %c0_i32_0 = arith.constant 0 : i32
    %c0_i32_1 = arith.constant 0 : i32
    %c0_i32_2 = arith.constant 0 : i32
    return %c0_i32, %c0_i32_0, %c0_i32_1 : i32, i32, i32
  }
  func.func @transform_6(%arg0: i32) -> (i32, i32) {
    %c0_i32 = arith.constant 0 : i32
    %c0_i32_0 = arith.constant 0 : i32
    %c0_i32_1 = arith.constant 0 : i32
    return %c0_i32, %c0_i32_0 : i32, i32
  }
  func.func @transform_7(%arg0: i32) -> (i32, i32, i32) {
    %c0_i32 = arith.constant 0 : i32
    %c0_i32_0 = arith.constant 0 : i32
    %c0_i32_1 = arith.constant 0 : i32
    %c0_i32_2 = arith.constant 0 : i32
    return %c0_i32, %c0_i32_0, %c0_i32_1 : i32, i32, i32
  }
  func.func @transform_8(%arg0: i32) -> (i32, i32) {
    %c0_i32 = arith.constant 0 : i32
    %c0_i32_0 = arith.constant 0 : i32
    %c0_i32_1 = arith.constant 0 : i32
    return %c0_i32, %c0_i32_0 : i32, i32
  }
  func.func @transform_9(%arg0: i32) -> (i32, i32, i32) {
    %c0_i32 = arith.constant 0 : i32
    %c0_i32_0 = arith.constant 0 : i32
    %c0_i32_1 = arith.constant 0 : i32
    %c0_i32_2 = arith.constant 0 : i32
    return %c0_i32, %c0_i32_0, %c0_i32_1 : i32, i32, i32
  }
  func.func @transform_10(%arg0: i32) -> (i32, i32) {
    %c0_i32 = arith.constant 0 : i32
    %c0_i32_0 = arith.constant 0 : i32
    %c0_i32_1 = arith.constant 0 : i32
    return %c0_i32, %c0_i32_0 : i32, i32
  }
  func.func @transform_11(%arg0: i32) -> (i32, i32) {
    %c0_i32 = arith.constant 0 : i32
    %c0_i32_0 = arith.constant 0 : i32
    %c0_i32_1 = arith.constant 0 : i32
    return %c0_i32, %c0_i32_0 : i32, i32
  }
  func.func @transform_12(%arg0: i32) -> (i32, i32) {
    %c0_i32 = arith.constant 0 : i32
    %c0_i32_0 = arith.constant 0 : i32
    %c0_i32_1 = arith.constant 0 : i32
    return %c0_i32, %c0_i32_0 : i32, i32
  }
  func.func @transform_13(%arg0: i32) -> (i32, i32) {
    %c0_i32 = arith.constant 0 : i32
    %c0_i32_0 = arith.constant 0 : i32
    %c0_i32_1 = arith.constant 0 : i32
    return %c0_i32, %c0_i32_0 : i32, i32
  }
  func.func @transform_14(%arg0: i32) -> (i32, i32) {
    %c0_i32 = arith.constant 0 : i32
    %c0_i32_0 = arith.constant 0 : i32
    %c0_i32_1 = arith.constant 0 : i32
    return %c0_i32, %c0_i32_0 : i32, i32
  }
  func.func @transform_15(%arg0: i32) -> (i32, i32) {
    %c0_i32 = arith.constant 0 : i32
    %c0_i32_0 = arith.constant 0 : i32
    %c0_i32_1 = arith.constant 0 : i32
    return %c0_i32, %c0_i32_0 : i32, i32
  }
  func.func @transform_16(%arg0: i32) -> (i32, i32) {
    %c0_i32 = arith.constant 0 : i32
    %c0_i32_0 = arith.constant 0 : i32
    %c0_i32_1 = arith.constant 0 : i32
    return %c0_i32, %c0_i32_0 : i32, i32
  }
}

</mosaic_0001>

<llo_original>
// kernel: forward.1
$region0: #{forward.1}
  #allocation0 [shape = 'u32[]', space=smem, size = 0x4, offset = 0x4, fixed_abs, tag = 'smem constant byte address 0x4 - core index']
  #allocation1 [shape = 'u32[144,128]{1,0:T(1,128)}', space=vmem, size = 0x12000, scoped, tag = 'internal scratch']
  %s0 = inlined_call_operand.vmem [shape: f32[512,4], index: 0, kind: input, shape index: {}]
  %s1 = inlined_call_operand.hbm [shape: f32[2,7], index: 1, kind: input, shape index: {}]
  %s2 = inlined_call_operand.hbm [shape: f32[9,128,512], index: 2, kind: input, shape index: {}]
  %s3 = inlined_call_operand.hbm [shape: f32[9,32,128], index: 3, kind: input, shape index: {}]
  %s4 = inlined_call_operand.hbm [shape: f32[16,2,32], index: 4, kind: input, shape index: {}]
  %s5 = inlined_call_operand.hbm [shape: f32[9,4,14], index: 5, kind: input, shape index: {}]
  %s6 = inlined_call_operand.hbm [shape: f32[1,14], index: 6, kind: input, shape index: {}]
  %s7 = inlined_call_operand.hbm [shape: f32[9,14,14], index: 7, kind: input, shape index: {}]
  %s8 = inlined_call_operand.hbm [shape: f32[1,14], index: 8, kind: input, shape index: {}]
  %s9 = inlined_call_operand.vmem [shape: f32[16,14,32], index: 9, kind: input, shape index: {}]
  %s10 = inlined_call_operand.hbm [shape: f32[1,32], index: 10, kind: input, shape index: {}]
  %s11 = inlined_call_operand.hbm [shape: f32[7,32], index: 11, kind: input, shape index: {}]
  %s12 = inlined_call_operand.hbm [shape: f32[1,32], index: 12, kind: input, shape index: {}]
  %s13 = inlined_call_operand.vmem [shape: f32[32,4], index: 13, kind: input, shape index: {}]
  %s14 = inlined_call_operand.vmem [shape: f32[32,4], index: 14, kind: input, shape index: {}]
  %s15 = inlined_call_operand.hbm [shape: f32[1,4], index: 15, kind: input, shape index: {}]
  %s16 = inlined_call_operand.hbm [shape: f32[2,4], index: 16, kind: output, shape index: {}]
  %s17 = sld [smem:[#allocation0]]
  $region122: #{forward.1} parent=0
    _
  %s19 = ssub.s32 1, %s17
  %s20 = scalar_select 0, %s19, %s17
  $region1: #{forward.1} parent=0
    #allocation2 [shape = 'u8[1024]{0}', space=vmem, size = 0x400, scoped, tag = 'input window, operand 1, single buffered']
    #allocation3 [shape = 's32[1]{0}', space=sflag, size = 0x4, scoped, tag = 'scoped memory for forward.1']
    #allocation4 [shape = 's32[1]{0}', space=sflag, size = 0x4, scoped, tag = 'scoped memory for forward.1']
    #allocation5 [shape = 'u8[2359296]{0}', space=vmem, size = 0x240000, scoped, tag = 'input window, operand 2, single buffered']
    #allocation6 [shape = 's32[1]{0}', space=sflag, size = 0x4, scoped, tag = 'scoped memory for forward.1']
    #allocation7 [shape = 'u8[147456]{0}', space=vmem, size = 0x24000, scoped, tag = 'input window, operand 3, single buffered']
    #allocation8 [shape = 'u8[16384]{0}', space=vmem, size = 0x4000, scoped, tag = 'input window, operand 4, single buffered']
    #allocation9 [shape = 's32[1]{0}', space=sflag, size = 0x4, scoped, tag = 'scoped memory for forward.1']
    #allocation10 [shape = 'u8[18432]{0}', space=vmem, size = 0x4800, scoped, tag = 'input window, operand 5, single buffered']
    #allocation11 [shape = 'u8[512]{0}', space=vmem, size = 0x400, scoped, tag = 'input window, operand 6, single buffered']
    #allocation12 [shape = 's32[1]{0}', space=sflag, size = 0x4, scoped, tag = 'scoped memory for forward.1']
    #allocation13 [shape = 'u8[73728]{0}', space=vmem, size = 0x12000, scoped, tag = 'input window, operand 7, single buffered']
    #allocation14 [shape = 'u8[512]{0}', space=vmem, size = 0x400, scoped, tag = 'input window, operand 8, single buffered']
    #allocation15 [shape = 's32[1]{0}', space=sflag, size = 0x4, scoped, tag = 'scoped memory for forward.1']
    #allocation16 [shape = 'u8[512]{0}', space=vmem, size = 0x400, scoped, tag = 'input window, operand 10, single buffered']
    #allocation17 [shape = 'u8[4096]{0}', space=vmem, size = 0x1000, scoped, tag = 'input window, operand 11, single buffered']
    #allocation18 [shape = 's32[1]{0}', space=sflag, size = 0x4, scoped, tag = 'scoped memory for forward.1']
    #allocation19 [shape = 'u8[512]{0}', space=vmem, size = 0x400, scoped, tag = 'input window, operand 12, single buffered']
    #allocation20 [shape = 'u8[512]{0}', space=vmem, size = 0x400, scoped, tag = 'input window, operand 15, single buffered']
    #allocation21 [shape = 's32[1]{0}', space=sflag, size = 0x4, scoped, tag = 'scoped memory for forward.1']
    #allocation22 [shape = 'u8[1024]{0}', space=vmem, size = 0x400, scoped, tag = 'output window, operand 0, single buffered']
    %21 = vsyncpa [#allocation3], 0
    %22 = vsyncpa [#allocation6], 0
    %23 = vsyncpa [#allocation9], 0
    %24 = vsyncpa [#allocation12], 0
    %25 = vsyncpa [#allocation15], 0
    %26 = vsyncpa [#allocation18], 0
    %27 = vsyncpa [#allocation21], 0
    %28 = vsyncpa [#allocation4], 0
    // Predicated region
    $region2: #{forward.1} parent=1 // pred_check
      _
    $region3: #{forward.1} parent=1 // pred_check_branch
      %30 = sbr.rel (0) target = $region5
    $region4: #{forward.1} parent=1 // pred_region
      _
    $region5: #{forward.1} parent=1 // pred_fallthru
      _
    // Predicated region
    $region6: #{forward.1} parent=1 // pred_check
      _
    $region7: #{forward.1} parent=1 // pred_check_branch
      %32 = sbr.rel (0) target = $region9
    $region8: #{forward.1} parent=1 // pred_region
      %s34 = ssub.s32 32, 32
      %35 = vsyncadd [#allocation3], %s34
      %s37 = sshll.u32 [#allocation2], 4
      %s38 = int_to_ptr.vmem [resolvable:$true] %s37
      %40 = dma.hbm_to_vmem [thread:$0]  %s1, 32, %s38, [#allocation3]
    $region9: #{forward.1} parent=1 // pred_fallthru
      _
    // Predicated region
    $region10: #{forward.1} parent=1 // pred_check
      _
    $region11: #{forward.1} parent=1 // pred_check_branch
      %42 = sbr.rel (0) target = $region13
    $region12: #{forward.1} parent=1 // pred_region
      %s44 = ssub.s32 73728, 73728
      %45 = vsyncadd [#allocation6], %s44
      %s46 = sshll.u32 [#allocation5], 4
      %s47 = int_to_ptr.vmem [resolvable:$true] %s46
      %52 = dma.hbm_to_vmem [thread:$0]  %s2, 73728, %s47, [#allocation6], 512, 512, 32
    $region13: #{forward.1} parent=1 // pred_fallthru
      _
    // Predicated region
    $region14: #{forward.1} parent=1 // pred_check
      _
    $region15: #{forward.1} parent=1 // pred_check_branch
      %54 = sbr.rel (0) target = $region17
    $region16: #{forward.1} parent=1 // pred_region
      %s56 = ssub.s32 4608, 4608
      %57 = vsyncadd [#allocation6], %s56
      %s58 = sshll.u32 [#allocation7], 4
      %s59 = int_to_ptr.vmem [resolvable:$true] %s58
      %64 = dma.hbm_to_vmem [thread:$0]  %s3, 4608, %s59, [#allocation6], 128, 128, 8
    $region17: #{forward.1} parent=1 // pred_fallthru
      _
    // Predicated region
    $region18: #{forward.1} parent=1 // pred_check
      _
    $region19: #{forward.1} parent=1 // pred_check_branch
      %66 = sbr.rel (0) target = $region21
    $region20: #{forward.1} parent=1 // pred_region
      %s68 = ssub.s32 512, 512
      %69 = vsyncadd [#allocation9], %s68
      %s70 = sshll.u32 [#allocation8], 4
      %s71 = int_to_ptr.vmem [resolvable:$true] %s70
      %76 = dma.hbm_to_vmem [thread:$0]  %s4, 512, %s71, [#allocation9], 32, 32, 2
    $region21: #{forward.1} parent=1 // pred_fallthru
      _
    // Predicated region
    $region22: #{forward.1} parent=1 // pred_check
      _
    $region23: #{forward.1} parent=1 // pred_check_branch
      %78 = sbr.rel (0) target = $region25
    $region24: #{forward.1} parent=1 // pred_region
      %s80 = ssub.s32 576, 576
      %81 = vsyncadd [#allocation9], %s80
      %s82 = sshll.u32 [#allocation10], 4
      %s83 = int_to_ptr.vmem [resolvable:$true] %s82
      %88 = dma.hbm_to_vmem [thread:$0]  %s5, 576, %s83, [#allocation9], 64, 64, 4
    $region25: #{forward.1} parent=1 // pred_fallthru
      _
    // Predicated region
    $region26: #{forward.1} parent=1 // pred_check
      _
    $region27: #{forward.1} parent=1 // pred_check_branch
      %90 = sbr.rel (0) target = $region29
    $region28: #{forward.1} parent=1 // pred_region
      %s92 = ssub.s32 16, 16
      %93 = vsyncadd [#allocation12], %s92
      %s95 = sshll.u32 [#allocation11], 4
      %s96 = int_to_ptr.vmem [resolvable:$true] %s95
      %98 = dma.hbm_to_vmem [thread:$0]  %s6, 16, %s96, [#allocation12]
    $region29: #{forward.1} parent=1 // pred_fallthru
      _
    // Predicated region
    $region30: #{forward.1} parent=1 // pred_check
      _
    $region31: #{forward.1} parent=1 // pred_check_branch
      %100 = sbr.rel (0) target = $region33
    $region32: #{forward.1} parent=1 // pred_region
      %s102 = ssub.s32 2304, 2304
      %103 = vsyncadd [#allocation12], %s102
      %s104 = sshll.u32 [#allocation13], 4
      %s105 = int_to_ptr.vmem [resolvable:$true] %s104
      %110 = dma.hbm_to_vmem [thread:$0]  %s7, 2304, %s105, [#allocation12], 128, 128, 8
    $region33: #{forward.1} parent=1 // pred_fallthru
      _
    // Predicated region
    $region34: #{forward.1} parent=1 // pred_check
      _
    $region35: #{forward.1} parent=1 // pred_check_branch
      %112 = sbr.rel (0) target = $region37
    $region36: #{forward.1} parent=1 // pred_region
      %s114 = ssub.s32 16, 16
      %115 = vsyncadd [#allocation15], %s114
      %s117 = sshll.u32 [#allocation14], 4
      %s118 = int_to_ptr.vmem [resolvable:$true] %s117
      %120 = dma.hbm_to_vmem [thread:$0]  %s8, 16, %s118, [#allocation15]
    $region37: #{forward.1} parent=1 // pred_fallthru
      _
    // Predicated region
    $region38: #{forward.1} parent=1 // pred_check
      _
    $region39: #{forward.1} parent=1 // pred_check_branch
      %122 = sbr.rel (0) target = $region41
    $region40: #{forward.1} parent=1 // pred_region
      _
    $region41: #{forward.1} parent=1 // pred_fallthru
      _
    // Predicated region
    $region42: #{forward.1} parent=1 // pred_check
      _
    $region43: #{forward.1} parent=1 // pred_check_branch
      %124 = sbr.rel (0) target = $region45
    $region44: #{forward.1} parent=1 // pred_region
      %s126 = ssub.s32 16, 16
      %127 = vsyncadd [#allocation15], %s126
      %s129 = sshll.u32 [#allocation16], 4
      %s130 = int_to_ptr.vmem [resolvable:$true] %s129
      %132 = dma.hbm_to_vmem [thread:$0]  %s10, 16, %s130, [#allocation15]
    $region45: #{forward.1} parent=1 // pred_fallthru
      _
    // Predicated region
    $region46: #{forward.1} parent=1 // pred_check
      _
    $region47: #{forward.1} parent=1 // pred_check_branch
      %134 = sbr.rel (0) target = $region49
    $region48: #{forward.1} parent=1 // pred_region
      %s136 = ssub.s32 128, 128
      %137 = vsyncadd [#allocation18], %s136
      %s139 = sshll.u32 [#allocation17], 4
      %s140 = int_to_ptr.vmem [resolvable:$true] %s139
      %142 = dma.hbm_to_vmem [thread:$0]  %s11, 128, %s140, [#allocation18]
    $region49: #{forward.1} parent=1 // pred_fallthru
      _
    // Predicated region
    $region50: #{forward.1} parent=1 // pred_check
      _
    $region51: #{forward.1} parent=1 // pred_check_branch
      %144 = sbr.rel (0) target = $region53
    $region52: #{forward.1} parent=1 // pred_region
      %s146 = ssub.s32 16, 16
      %147 = vsyncadd [#allocation18], %s146
      %s149 = sshll.u32 [#allocation19], 4
      %s150 = int_to_ptr.vmem [resolvable:$true] %s149
      %152 = dma.hbm_to_vmem [thread:$0]  %s12, 16, %s150, [#allocation18]
    $region53: #{forward.1} parent=1 // pred_fallthru
      _
    // Predicated region
    $region54: #{forward.1} parent=1 // pred_check
      _
    $region55: #{forward.1} parent=1 // pred_check_branch
      %154 = sbr.rel (0) target = $region57
    $region56: #{forward.1} parent=1 // pred_region
      _
    $region57: #{forward.1} parent=1 // pred_fallthru
      _
    // Predicated region
    $region58: #{forward.1} parent=1 // pred_check
      _
    $region59: #{forward.1} parent=1 // pred_check_branch
      %156 = sbr.rel (0) target = $region61
    $region60: #{forward.1} parent=1 // pred_region
      _
    $region61: #{forward.1} parent=1 // pred_fallthru
      _
    // Predicated region
    $region62: #{forward.1} parent=1 // pred_check
      _
    $region63: #{forward.1} parent=1 // pred_check_branch
      %158 = sbr.rel (0) target = $region65
    $region64: #{forward.1} parent=1 // pred_region
      %s160 = ssub.s32 16, 16
      %161 = vsyncadd [#allocation21], %s160
      %s163 = sshll.u32 [#allocation20], 4
      %s164 = int_to_ptr.vmem [resolvable:$true] %s163
      %166 = dma.hbm_to_vmem [thread:$0]  %s15, 16, %s164, [#allocation21]
    $region65: #{forward.1} parent=1 // pred_fallthru
      _
    // Predicated region
    $region66: #{forward.1} parent=1 // pred_check
      _
    $region67: #{forward.1} parent=1 // pred_check_branch
      %168 = sbr.rel (0) target = $region69
    $region68: #{forward.1} parent=1 // pred_region
      %169 = dma.done [#allocation3], 32
    $region69: #{forward.1} parent=1 // pred_fallthru
      _
    // Predicated region
    $region70: #{forward.1} parent=1 // pred_check
      _
    $region71: #{forward.1} parent=1 // pred_check_branch
      %171 = sbr.rel (0) target = $region73
    $region72: #{forward.1} parent=1 // pred_region
      %172 = dma.done [#allocation6], 73728
    $region73: #{forward.1} parent=1 // pred_fallthru
      _
    // Predicated region
    $region74: #{forward.1} parent=1 // pred_check
      _
    $region75: #{forward.1} parent=1 // pred_check_branch
      %174 = sbr.rel (0) target = $region77
    $region76: #{forward.1} parent=1 // pred_region
      %175 = dma.done [#allocation6], 4608
    $region77: #{forward.1} parent=1 // pred_fallthru
      _
    // Predicated region
    $region78: #{forward.1} parent=1 // pred_check
      _
    $region79: #{forward.1} parent=1 // pred_check_branch
      %177 = sbr.rel (0) target = $region81
    $region80: #{forward.1} parent=1 // pred_region
      %178 = dma.done [#allocation9], 512
    $region81: #{forward.1} parent=1 // pred_fallthru
      _
    // Predicated region
    $region82: #{forward.1} parent=1 // pred_check
      _
    $region83: #{forward.1} parent=1 // pred_check_branch
      %180 = sbr.rel (0) target = $region85
    $region84: #{forward.1} parent=1 // pred_region
      %181 = dma.done [#allocation9], 576
    $region85: #{forward.1} parent=1 // pred_fallthru
      _
    // Predicated region
    $region86: #{forward.1} parent=1 // pred_check
      _
    $region87: #{forward.1} parent=1 // pred_check_branch
      %183 = sbr.rel (0) target = $region89
    $region88: #{forward.1} parent=1 // pred_region
      %184 = dma.done [#allocation12], 16
    $region89: #{forward.1} parent=1 // pred_fallthru
      _
    // Predicated region
    $region90: #{forward.1} parent=1 // pred_check
      _
    $region91: #{forward.1} parent=1 // pred_check_branch
      %186 = sbr.rel (0) target = $region93
    $region92: #{forward.1} parent=1 // pred_region
      %187 = dma.done [#allocation12], 2304
    $region93: #{forward.1} parent=1 // pred_fallthru
      _
    // Predicated region
    $region94: #{forward.1} parent=1 // pred_check
      _
    $region95: #{forward.1} parent=1 // pred_check_branch
      %189 = sbr.rel (0) target = $region97
    $region96: #{forward.1} parent=1 // pred_region
      %190 = dma.done [#allocation15], 16
    $region97: #{forward.1} parent=1 // pred_fallthru
      _
    // Predicated region
    $region98: #{forward.1} parent=1 // pred_check
      _
    $region99: #{forward.1} parent=1 // pred_check_branch
      %192 = sbr.rel (0) target = $region101
    $region100: #{forward.1} parent=1 // pred_region
      %193 = dma.done [#allocation15], 16
    $region101: #{forward.1} parent=1 // pred_fallthru
      _
    // Predicated region
    $region102: #{forward.1} parent=1 // pred_check
      _
    $region103: #{forward.1} parent=1 // pred_check_branch
      %195 = sbr.rel (0) target = $region105
    $region104: #{forward.1} parent=1 // pred_region
      %196 = dma.done [#allocation18], 128
    $region105: #{forward.1} parent=1 // pred_fallthru
      _
    // Predicated region
    $region106: #{forward.1} parent=1 // pred_check
      _
    $region107: #{forward.1} parent=1 // pred_check_branch
      %198 = sbr.rel (0) target = $region109
    $region108: #{forward.1} parent=1 // pred_region
      %199 = dma.done [#allocation18], 16
    $region109: #{forward.1} parent=1 // pred_fallthru
      _
    // Predicated region
    $region110: #{forward.1} parent=1 // pred_check
      _
    $region111: #{forward.1} parent=1 // pred_check_branch
      %201 = sbr.rel (0) target = $region113
    $region112: #{forward.1} parent=1 // pred_region
      %202 = dma.done [#allocation21], 16
    $region113: #{forward.1} parent=1 // pred_fallthru
      _
    %v203 = vld [vmem:[%s0] sm:$0xff]
    %v204 = vld [vmem:[%s0 + $0x8] sm:$0xff]
    %v205 = vld [vmem:[%s0 + $0x10] sm:$0xff]
    %v206 = vld [vmem:[%s0 + $0x18] sm:$0xff]
    %v207 = vld [vmem:[%s0 + $0x20] sm:$0xff]
    %v208 = vld [vmem:[%s0 + $0x28] sm:$0xff]
    %v209 = vld [vmem:[%s0 + $0x30] sm:$0xff]
    %v210 = vld [vmem:[%s0 + $0x38] sm:$0xff]
    %v211 = vld [vmem:[%s0 + $0x40] sm:$0xff]
    %v212 = vld [vmem:[%s0 + $0x48] sm:$0xff]
    %v213 = vld [vmem:[%s0 + $0x50] sm:$0xff]
    %v214 = vld [vmem:[%s0 + $0x58] sm:$0xff]
    %v215 = vld [vmem:[%s0 + $0x60] sm:$0xff]
    %v216 = vld [vmem:[%s0 + $0x68] sm:$0xff]
    %v217 = vld [vmem:[%s0 + $0x70] sm:$0xff]
    %v218 = vld [vmem:[%s0 + $0x78] sm:$0xff]
    %v219 = vld [vmem:[%s0 + $0x80] sm:$0xff]
    %v220 = vld [vmem:[%s0 + $0x88] sm:$0xff]
    %v221 = vld [vmem:[%s0 + $0x90] sm:$0xff]
    %v222 = vld [vmem:[%s0 + $0x98] sm:$0xff]
    %v223 = vld [vmem:[%s0 + $0xa0] sm:$0xff]
    %v224 = vld [vmem:[%s0 + $0xa8] sm:$0xff]
    %v225 = vld [vmem:[%s0 + $0xb0] sm:$0xff]
    %v226 = vld [vmem:[%s0 + $0xb8] sm:$0xff]
    %v227 = vld [vmem:[%s0 + $0xc0] sm:$0xff]
    %v228 = vld [vmem:[%s0 + $0xc8] sm:$0xff]
    %v229 = vld [vmem:[%s0 + $0xd0] sm:$0xff]
    %v230 = vld [vmem:[%s0 + $0xd8] sm:$0xff]
    %v231 = vld [vmem:[%s0 + $0xe0] sm:$0xff]
    %v232 = vld [vmem:[%s0 + $0xe8] sm:$0xff]
    %v233 = vld [vmem:[%s0 + $0xf0] sm:$0xff]
    %v234 = vld [vmem:[%s0 + $0xf8] sm:$0xff]
    %v235 = vld [vmem:[%s0 + $0x100] sm:$0xff]
    %v236 = vld [vmem:[%s0 + $0x108] sm:$0xff]
    %v237 = vld [vmem:[%s0 + $0x110] sm:$0xff]
    %v238 = vld [vmem:[%s0 + $0x118] sm:$0xff]
    %v239 = vld [vmem:[%s0 + $0x120] sm:$0xff]
    %v240 = vld [vmem:[%s0 + $0x128] sm:$0xff]
    %v241 = vld [vmem:[%s0 + $0x130] sm:$0xff]
    %v242 = vld [vmem:[%s0 + $0x138] sm:$0xff]
    %v243 = vld [vmem:[%s0 + $0x140] sm:$0xff]
    %v244 = vld [vmem:[%s0 + $0x148] sm:$0xff]
    %v245 = vld [vmem:[%s0 + $0x150] sm:$0xff]
    %v246 = vld [vmem:[%s0 + $0x158] sm:$0xff]
    %v247 = vld [vmem:[%s0 + $0x160] sm:$0xff]
    %v248 = vld [vmem:[%s0 + $0x168] sm:$0xff]
    %v249 = vld [vmem:[%s0 + $0x170] sm:$0xff]
    %v250 = vld [vmem:[%s0 + $0x178] sm:$0xff]
    %v251 = vld [vmem:[%s0 + $0x180] sm:$0xff]
    %v252 = vld [vmem:[%s0 + $0x188] sm:$0xff]
    %v253 = vld [vmem:[%s0 + $0x190] sm:$0xff]
    %v254 = vld [vmem:[%s0 + $0x198] sm:$0xff]
    %v255 = vld [vmem:[%s0 + $0x1a0] sm:$0xff]
    %v256 = vld [vmem:[%s0 + $0x1a8] sm:$0xff]
    %v257 = vld [vmem:[%s0 + $0x1b0] sm:$0xff]
    %v258 = vld [vmem:[%s0 + $0x1b8] sm:$0xff]
    %v259 = vld [vmem:[%s0 + $0x1c0] sm:$0xff]
    %v260 = vld [vmem:[%s0 + $0x1c8] sm:$0xff]
    %v261 = vld [vmem:[%s0 + $0x1d0] sm:$0xff]
    %v262 = vld [vmem:[%s0 + $0x1d8] sm:$0xff]
    %v263 = vld [vmem:[%s0 + $0x1e0] sm:$0xff]
    %v264 = vld [vmem:[%s0 + $0x1e8] sm:$0xff]
    %v265 = vld [vmem:[%s0 + $0x1f0] sm:$0xff]
    %v266 = vld [vmem:[%s0 + $0x1f8] sm:$0xff]
    %v267 = vld [vmem:[#allocation5] sm:$0xff]
    %v268 = vld [vmem:[#allocation5 + $0x8] sm:$0xff]
    %v269 = vld [vmem:[#allocation5 + $0x10] sm:$0xff]
    %v270 = vld [vmem:[#allocation5 + $0x18] sm:$0xff]
    %v271 = vld [vmem:[#allocation5 + $0x20] sm:$0xff]
    %v272 = vld [vmem:[#allocation5 + $0x28] sm:$0xff]
    %v273 = vld [vmem:[#allocation5 + $0x30] sm:$0xff]
    %v274 = vld [vmem:[#allocation5 + $0x38] sm:$0xff]
    %v275 = vld [vmem:[#allocation5 + $0x40] sm:$0xff]
    %v276 = vld [vmem:[#allocation5 + $0x48] sm:$0xff]
    %v277 = vld [vmem:[#allocation5 + $0x50] sm:$0xff]
    %v278 = vld [vmem:[#allocation5 + $0x58] sm:$0xff]
    %v279 = vld [vmem:[#allocation5 + $0x60] sm:$0xff]
    %v280 = vld [vmem:[#allocation5 + $0x68] sm:$0xff]
    %v281 = vld [vmem:[#allocation5 + $0x70] sm:$0xff]
    %v282 = vld [vmem:[#allocation5 + $0x78] sm:$0xff]
    %v283 = vld [vmem:[#allocation5 + $0x80] sm:$0xff]
    %v284 = vld [vmem:[#allocation5 + $0x88] sm:$0xff]
    %v285 = vld [vmem:[#allocation5 + $0x90] sm:$0xff]
    %v286 = vld [vmem:[#allocation5 + $0x98] sm:$0xff]
    %v287 = vld [vmem:[#allocation5 + $0xa0] sm:$0xff]
    %v288 = vld [vmem:[#allocation5 + $0xa8] sm:$0xff]
    %v289 = vld [vmem:[#allocation5 + $0xb0] sm:$0xff]
    %v290 = vld [vmem:[#allocation5 + $0xb8] sm:$0xff]
    %v291 = vld [vmem:[#allocation5 + $0xc0] sm:$0xff]
    %v292 = vld [vmem:[#allocation5 + $0xc8] sm:$0xff]
    %v293 = vld [vmem:[#allocation5 + $0xd0] sm:$0xff]
    %v294 = vld [vmem:[#allocation5 + $0xd8] sm:$0xff]
    %v295 = vld [vmem:[#allocation5 + $0xe0] sm:$0xff]
    %v296 = vld [vmem:[#allocation5 + $0xe8] sm:$0xff]
    %v297 = vld [vmem:[#allocation5 + $0xf0] sm:$0xff]
    %v298 = vld [vmem:[#allocation5 + $0xf8] sm:$0xff]
    %v299 = vld [vmem:[#allocation5 + $0x100] sm:$0xff]
    %v300 = vld [vmem:[#allocation5 + $0x108] sm:$0xff]
    %v301 = vld [vmem:[#allocation5 + $0x110] sm:$0xff]
    %v302 = vld [vmem:[#allocation5 + $0x118] sm:$0xff]
    %v303 = vld [vmem:[#allocation5 + $0x120] sm:$0xff]
    %v304 = vld [vmem:[#allocation5 + $0x128] sm:$0xff]
    %v305 = vld [vmem:[#allocation5 + $0x130] sm:$0xff]
    %v306 = vld [vmem:[#allocation5 + $0x138] sm:$0xff]
    %v307 = vld [vmem:[#allocation5 + $0x140] sm:$0xff]
    %v308 = vld [vmem:[#allocation5 + $0x148] sm:$0xff]
    %v309 = vld [vmem:[#allocation5 + $0x150] sm:$0xff]
    %v310 = vld [vmem:[#allocation5 + $0x158] sm:$0xff]
    %v311 = vld [vmem:[#allocation5 + $0x160] sm:$0xff]
    %v312 = vld [vmem:[#allocation5 + $0x168] sm:$0xff]
    %v313 = vld [vmem:[#allocation5 + $0x170] sm:$0xff]
    %v314 = vld [vmem:[#allocation5 + $0x178] sm:$0xff]
    %v315 = vld [vmem:[#allocation5 + $0x180] sm:$0xff]
    %v316 = vld [vmem:[#allocation5 + $0x188] sm:$0xff]
    %v317 = vld [vmem:[#allocation5 + $0x190] sm:$0xff]
    %v318 = vld [vmem:[#allocation5 + $0x198] sm:$0xff]
    %v319 = vld [vmem:[#allocation5 + $0x1a0] sm:$0xff]
    %v320 = vld [vmem:[#allocation5 + $0x1a8] sm:$0xff]
    %v321 = vld [vmem:[#allocation5 + $0x1b0] sm:$0xff]
    %v322 = vld [vmem:[#allocation5 + $0x1b8] sm:$0xff]
    %v323 = vld [vmem:[#allocation5 + $0x1c0] sm:$0xff]
    %v324 = vld [vmem:[#allocation5 + $0x1c8] sm:$0xff]
    %v325 = vld [vmem:[#allocation5 + $0x1d0] sm:$0xff]
    %v326 = vld [vmem:[#allocation5 + $0x1d8] sm:$0xff]
    %v327 = vld [vmem:[#allocation5 + $0x1e0] sm:$0xff]
    %v328 = vld [vmem:[#allocation5 + $0x1e8] sm:$0xff]
    %v329 = vld [vmem:[#allocation5 + $0x1f0] sm:$0xff]
    %v330 = vld [vmem:[#allocation5 + $0x1f8] sm:$0xff]
    %331 = vmatprep.subr.mxu0 0.0
    %332 = vmatpush1.msra.mxu0 %v203
    %333 = vmatprep.subr.mxu0 0.0
    %334 = vmatpush1.msra.mxu0 %v204
    %335 = vmatprep.subr.mxu0 0.0
    %336 = vmatpush1.msra.mxu0 %v205
    %337 = vmatprep.subr.mxu0 0.0
    %338 = vmatpush1.msra.mxu0 %v206
    %339 = vmatprep.subr.mxu0 0.0
    %340 = vmatpush1.msra.mxu0 %v207
    %341 = vmatprep.subr.mxu0 0.0
    %342 = vmatpush1.msra.mxu0 %v208
    %343 = vmatprep.subr.mxu0 0.0
    %344 = vmatpush1.msra.mxu0 %v209
    %345 = vmatprep.subr.mxu0 0.0
    %346 = vmatpush1.msra.mxu0 %v210
    %347 = vmatprep.subr.mxu0 0.0
    %348 = vmatpush1.msra.mxu0 %v211
    %349 = vmatprep.subr.mxu0 0.0
    %350 = vmatpush1.msra.mxu0 %v212
    %351 = vmatprep.subr.mxu0 0.0
    %352 = vmatpush1.msra.mxu0 %v213
    %353 = vmatprep.subr.mxu0 0.0
    %354 = vmatpush1.msra.mxu0 %v214
    %355 = vmatprep.subr.mxu0 0.0
    %356 = vmatpush1.msra.mxu0 %v215
    %357 = vmatprep.subr.mxu0 0.0
    %358 = vmatpush1.msra.mxu0 %v216
    %359 = vmatprep.subr.mxu0 0.0
    %360 = vmatpush1.msra.mxu0 %v217
    %361 = vmatprep.subr.mxu0 0.0
    %362 = vmatpush1.msra.mxu0 %v218
    %363 = vmatprep.subr.mxu0 0.0
    %364 = vmatpush1.msra.mxu0 %v219
    %365 = vmatprep.subr.mxu0 0.0
    %366 = vmatpush1.msra.mxu0 %v220
    %367 = vmatprep.subr.mxu0 0.0
    %368 = vmatpush1.msra.mxu0 %v221
    %369 = vmatprep.subr.mxu0 0.0
    %370 = vmatpush1.msra.mxu0 %v222
    %371 = vmatprep.subr.mxu0 0.0
    %372 = vmatpush1.msra.mxu0 %v223
    %373 = vmatprep.subr.mxu0 0.0
    %374 = vmatpush1.msra.mxu0 %v224
    %375 = vmatprep.subr.mxu0 0.0
    %376 = vmatpush1.msra.mxu0 %v225
    %377 = vmatprep.subr.mxu0 0.0
    %378 = vmatpush1.msra.mxu0 %v226
    %379 = vmatprep.subr.mxu0 0.0
    %380 = vmatpush1.msra.mxu0 %v227
    %381 = vmatprep.subr.mxu0 0.0
    %382 = vmatpush1.msra.mxu0 %v228
    %383 = vmatprep.subr.mxu0 0.0
    %384 = vmatpush1.msra.mxu0 %v229
    %385 = vmatprep.subr.mxu0 0.0
    %386 = vmatpush1.msra.mxu0 %v230
    %387 = vmatprep.subr.mxu0 0.0
    %388 = vmatpush1.msra.mxu0 %v231
    %389 = vmatprep.subr.mxu0 0.0
    %390 = vmatpush1.msra.mxu0 %v232
    %391 = vmatprep.subr.mxu0 0.0
    %392 = vmatpush1.msra.mxu0 %v233
    %393 = vmatprep.subr.mxu0 0.0
    %394 = vmatpush1.msra.mxu0 %v234
    %395 = vmatprep.mubr.f32.mxu0 %v268
    %396 = vmatmul.mubr.f32.gmra.mrb[0].mxu0 %v267
    %v397 = vpop.f32.mrb[0].mxu0
    %v398 = vadd.f32 0.0, %v397
    %v399 = vpop.f32.mrb[0].mxu0
    %400 = vmatprep.mubr.f32.mxu0 %v272
    %401 = vmatmul.mubr.f32.gmra.mrb[0].mxu0 %v271
    %v402 = vpop.f32.mrb[0].mxu0
    %v403 = vadd.f32 0.0, %v402
    %v404 = vpop.f32.mrb[0].mxu0
    %405 = vmatprep.mubr.f32.mxu0 %v276
    %406 = vmatmul.mubr.f32.gmra.mrb[0].mxu0 %v275
    %v407 = vpop.f32.mrb[0].mxu0
    %v408 = vadd.f32 0.0, %v407
    %v409 = vpop.f32.mrb[0].mxu0
    %410 = vmatprep.mubr.f32.mxu0 %v280
    %411 = vmatmul.mubr.f32.gmra.mrb[0].mxu0 %v279
    %v412 = vpop.f32.mrb[0].mxu0
    %v413 = vadd.f32 0.0, %v412
    %v414 = vpop.f32.mrb[0].mxu0
    %415 = vmatprep.mubr.f32.mxu0 %v284
    %416 = vmatmul.mubr.f32.gmra.mrb[0].mxu0 %v283
    %v417 = vpop.f32.mrb[0].mxu0
    %v418 = vadd.f32 0.0, %v417
    %v419 = vpop.f32.mrb[0].mxu0
    %420 = vmatprep.mubr.f32.mxu0 %v288
    %421 = vmatmul.mubr.f32.gmra.mrb[0].mxu0 %v287
    %v422 = vpop.f32.mrb[0].mxu0
    %v423 = vadd.f32 0.0, %v422
    %v424 = vpop.f32.mrb[0].mxu0
    %425 = vmatprep.mubr.f32.mxu0 %v292
    %426 = vmatmul.mubr.f32.gmra.mrb[0].mxu0 %v291
    %v427 = vpop.f32.mrb[0].mxu0
    %v428 = vadd.f32 0.0, %v427
    %v429 = vpop.f32.mrb[0].mxu0
    %430 = vmatprep.mubr.f32.mxu0 %v296
    %431 = vmatmul.mubr.f32.gmra.mrb[0].mxu0 %v295
    %v432 = vpop.f32.mrb[0].mxu0
    %v433 = vadd.f32 0.0, %v432
    %v434 = vpop.f32.mrb[0].mxu0
    %435 = vmatprep.mubr.f32.mxu0 %v300
    %436 = vmatmul.mubr.f32.gmra.mrb[0].mxu0 %v299
    %v437 = vpop.f32.mrb[0].mxu0
    %v438 = vadd.f32 0.0, %v437
    %v439 = vpop.f32.mrb[0].mxu0
    %440 = vmatprep.mubr.f32.mxu0 %v304
    %441 = vmatmul.mubr.f32.gmra.mrb[0].mxu0 %v303
    %v442 = vpop.f32.mrb[0].mxu0
    %v443 = vadd.f32 0.0, %v442
    %v444 = vpop.f32.mrb[0].mxu0
    %445 = vmatprep.mubr.f32.mxu0 %v308
    %446 = vmatmul.mubr.f32.gmra.mrb[0].mxu0 %v307
    %v447 = vpop.f32.mrb[0].mxu0
    %v448 = vadd.f32 0.0, %v447
    %v449 = vpop.f32.mrb[0].mxu0
    %450 = vmatprep.mubr.f32.mxu0 %v312
    %451 = vmatmul.mubr.f32.gmra.mrb[0].mxu0 %v311
    %v452 = vpop.f32.mrb[0].mxu0
    %v453 = vadd.f32 0.0, %v452
    %v454 = vpop.f32.mrb[0].mxu0
    %455 = vmatprep.mubr.f32.mxu0 %v316
    %456 = vmatmul.mubr.f32.gmra.mrb[0].mxu0 %v315
    %v457 = vpop.f32.mrb[0].mxu0
    %v458 = vadd.f32 0.0, %v457
    %v459 = vpop.f32.mrb[0].mxu0
    %460 = vmatprep.mubr.f32.mxu0 %v320
    %461 = vmatmul.mubr.f32.gmra.mrb[0].mxu0 %v319
    %v462 = vpop.f32.mrb[0].mxu0
    %v463 = vadd.f32 0.0, %v462
    %v464 = vpop.f32.mrb[0].mxu0
    %465 = vmatprep.mubr.f32.mxu0 %v324
    %466 = vmatmul.mubr.f32.gmra.mrb[0].mxu0 %v323
    %v467 = vpop.f32.mrb[0].mxu0
    %v468 = vadd.f32 0.0, %v467
    %v469 = vpop.f32.mrb[0].mxu0
    %470 = vmatprep.mubr.f32.mxu0 %v328
    %471 = vmatmul.mubr.f32.gmra.mrb[0].mxu0 %v327
    %v472 = vpop.f32.mrb[0].mxu0
    %v473 = vadd.f32 0.0, %v472
    %v474 = vpop.f32.mrb[0].mxu0
    %475 = vdwg.mxu0
    %476 = vmatprep.subr.mxu0 0.0
    %477 = vmatpush1.msra.mxu0 %v235
    %478 = vmatprep.subr.mxu0 0.0
    %479 = vmatpush1.msra.mxu0 %v236
    %480 = vmatprep.subr.mxu0 0.0
    %481 = vmatpush1.msra.mxu0 %v237
    %482 = vmatprep.subr.mxu0 0.0
    %483 = vmatpush1.msra.mxu0 %v238
    %484 = vmatprep.subr.mxu0 0.0
    %485 = vmatpush1.msra.mxu0 %v239
    %486 = vmatprep.subr.mxu0 0.0
    %487 = vmatpush1.msra.mxu0 %v240
    %488 = vmatprep.subr.mxu0 0.0
    %489 = vmatpush1.msra.mxu0 %v241
    %490 = vmatprep.subr.mxu0 0.0
    %491 = vmatpush1.msra.mxu0 %v242
    %492 = vmatprep.subr.mxu0 0.0
    %493 = vmatpush1.msra.mxu0 %v243
    %494 = vmatprep.subr.mxu0 0.0
    %495 = vmatpush1.msra.mxu0 %v244
    %496 = vmatprep.subr.mxu0 0.0
    %497 = vmatpush1.msra.mxu0 %v245
    %498 = vmatprep.subr.mxu0 0.0
    %499 = vmatpush1.msra.mxu0 %v246
    %500 = vmatprep.subr.mxu0 0.0
    %501 = vmatpush1.msra.mxu0 %v247
    %502 = vmatprep.subr.mxu0 0.0
    %503 = vmatpush1.msra.mxu0 %v248
    %504 = vmatprep.subr.mxu0 0.0
    %505 = vmatpush1.msra.mxu0 %v249
    %506 = vmatprep.subr.mxu0 0.0
    %507 = vmatpush1.msra.mxu0 %v250
    %508 = vmatprep.subr.mxu0 0.0
    %509 = vmatpush1.msra.mxu0 %v251
    %510 = vmatprep.subr.mxu0 0.0
    %511 = vmatpush1.msra.mxu0 %v252
    %512 = vmatprep.subr.mxu0 0.0
    %513 = vmatpush1.msra.mxu0 %v253
    %514 = vmatprep.subr.mxu0 0.0
    %515 = vmatpush1.msra.mxu0 %v254
    %516 = vmatprep.subr.mxu0 0.0
    %517 = vmatpush1.msra.mxu0 %v255
    %518 = vmatprep.subr.mxu0 0.0
    %519 = vmatpush1.msra.mxu0 %v256
    %520 = vmatprep.subr.mxu0 0.0
    %521 = vmatpush1.msra.mxu0 %v257
    %522 = vmatprep.subr.mxu0 0.0
    %523 = vmatpush1.msra.mxu0 %v258
    %524 = vmatprep.subr.mxu0 0.0
    %525 = vmatpush1.msra.mxu0 %v259
    %526 = vmatprep.subr.mxu0 0.0
    %527 = vmatpush1.msra.mxu0 %v260
    %528 = vmatprep.subr.mxu0 0.0
    %529 = vmatpush1.msra.mxu0 %v261
    %530 = vmatprep.subr.mxu0 0.0
    %531 = vmatpush1.msra.mxu0 %v262
    %532 = vmatprep.subr.mxu0 0.0
    %533 = vmatpush1.msra.mxu0 %v263
    %534 = vmatprep.subr.mxu0 0.0
    %535 = vmatpush1.msra.mxu0 %v264
    %536 = vmatprep.subr.mxu0 0.0
    %537 = vmatpush1.msra.mxu0 %v265
    %538 = vmatprep.subr.mxu0 0.0
    %539 = vmatpush1.msra.mxu0 %v266
    %540 = vmatprep.mubr.f32.mxu0 %v270
    %541 = vmatmul.mubr.f32.gmra.mrb[0].mxu0 %v269
    %v542 = vpop.f32.mrb[0].mxu0
    %v543 = vadd.f32 %v398, %v542
    %v544 = vpop.f32.mrb[0].mxu0
    %545 = vmatprep.mubr.f32.mxu0 %v274
    %546 = vmatmul.mubr.f32.gmra.mrb[0].mxu0 %v273
    %v547 = vpop.f32.mrb[0].mxu0
    %v548 = vadd.f32 %v403, %v547
    %v549 = vpop.f32.mrb[0].mxu0
    %550 = vmatprep.mubr.f32.mxu0 %v278
    %551 = vmatmul.mubr.f32.gmra.mrb[0].mxu0 %v277
    %v552 = vpop.f32.mrb[0].mxu0
    %v553 = vadd.f32 %v408, %v552
    %v554 = vpop.f32.mrb[0].mxu0
    %555 = vmatprep.mubr.f32.mxu0 %v282
    %556 = vmatmul.mubr.f32.gmra.mrb[0].mxu0 %v281
    %v557 = vpop.f32.mrb[0].mxu0
    %v558 = vadd.f32 %v413, %v557
    %v559 = vpop.f32.mrb[0].mxu0
    %560 = vmatprep.mubr.f32.mxu0 %v286
    %561 = vmatmul.mubr.f32.gmra.mrb[0].mxu0 %v285
    %v562 = vpop.f32.mrb[0].mxu0
    %v563 = vadd.f32 %v418, %v562
    %v564 = vpop.f32.mrb[0].mxu0
    %565 = vmatprep.mubr.f32.mxu0 %v290
    %566 = vmatmul.mubr.f32.gmra.mrb[0].mxu0 %v289
    %v567 = vpop.f32.mrb[0].mxu0
    %v568 = vadd.f32 %v423, %v567
    %v569 = vpop.f32.mrb[0].mxu0
    %570 = vmatprep.mubr.f32.mxu0 %v294
    %571 = vmatmul.mubr.f32.gmra.mrb[0].mxu0 %v293
    %v572 = vpop.f32.mrb[0].mxu0
    %v573 = vadd.f32 %v428, %v572
    %v574 = vpop.f32.mrb[0].mxu0
    %575 = vmatprep.mubr.f32.mxu0 %v298
    %576 = vmatmul.mubr.f32.gmra.mrb[0].mxu0 %v297
    %v577 = vpop.f32.mrb[0].mxu0
    %v578 = vadd.f32 %v433, %v577
    %v579 = vpop.f32.mrb[0].mxu0
    %580 = vmatprep.mubr.f32.mxu0 %v302
    %581 = vmatmul.mubr.f32.gmra.mrb[0].mxu0 %v301
    %v582 = vpop.f32.mrb[0].mxu0
    %v583 = vadd.f32 %v438, %v582
    %v584 = vpop.f32.mrb[0].mxu0
    %585 = vmatprep.mubr.f32.mxu0 %v306
    %586 = vmatmul.mubr.f32.gmra.mrb[0].mxu0 %v305
    %v587 = vpop.f32.mrb[0].mxu0
    %v588 = vadd.f32 %v443, %v587
    %v589 = vpop.f32.mrb[0].mxu0
    %590 = vmatprep.mubr.f32.mxu0 %v310
    %591 = vmatmul.mubr.f32.gmra.mrb[0].mxu0 %v309
    %v592 = vpop.f32.mrb[0].mxu0
    %v593 = vadd.f32 %v448, %v592
    %v594 = vpop.f32.mrb[0].mxu0
    %595 = vmatprep.mubr.f32.mxu0 %v314
    %596 = vmatmul.mubr.f32.gmra.mrb[0].mxu0 %v313
    %v597 = vpop.f32.mrb[0].mxu0
    %v598 = vadd.f32 %v453, %v597
    %v599 = vpop.f32.mrb[0].mxu0
    %600 = vmatprep.mubr.f32.mxu0 %v318
    %601 = vmatmul.mubr.f32.gmra.mrb[0].mxu0 %v317
    %v602 = vpop.f32.mrb[0].mxu0
    %v603 = vadd.f32 %v458, %v602
    %v604 = vpop.f32.mrb[0].mxu0
    %605 = vmatprep.mubr.f32.mxu0 %v322
    %606 = vmatmul.mubr.f32.gmra.mrb[0].mxu0 %v321
    %v607 = vpop.f32.mrb[0].mxu0
    %v608 = vadd.f32 %v463, %v607
    %v609 = vpop.f32.mrb[0].mxu0
    %610 = vmatprep.mubr.f32.mxu0 %v326
    %611 = vmatmul.mubr.f32.gmra.mrb[0].mxu0 %v325
    %v612 = vpop.f32.mrb[0].mxu0
    %v613 = vadd.f32 %v468, %v612
    %v614 = vpop.f32.mrb[0].mxu0
    %615 = vmatprep.mubr.f32.mxu0 %v330
    %616 = vmatmul.mubr.f32.gmra.mrb[0].mxu0 %v329
    %v617 = vpop.f32.mrb[0].mxu0
    %v618 = vadd.f32 %v473, %v617
    %v619 = vpop.f32.mrb[0].mxu0
    %620 = vdwg.mxu0
    %v621 = vld [vmem:[#allocation10] sm:$0xf]
    %s622 = scalar_lea.vmem [#allocation5], 512
    %v623 = vld [vmem:[%s622] sm:$0xff]
    %v624 = vld [vmem:[%s622 + $0x8] sm:$0xff]
    %v625 = vld [vmem:[%s622 + $0x10] sm:$0xff]
    %v626 = vld [vmem:[%s622 + $0x18] sm:$0xff]
    %v627 = vld [vmem:[%s622 + $0x20] sm:$0xff]
    %v628 = vld [vmem:[%s622 + $0x28] sm:$0xff]
    %v629 = vld [vmem:[%s622 + $0x30] sm:$0xff]
    %v630 = vld [vmem:[%s622 + $0x38] sm:$0xff]
    %v631 = vld [vmem:[%s622 + $0x40] sm:$0xff]
    %v632 = vld [vmem:[%s622 + $0x48] sm:$0xff]
    %v633 = vld [vmem:[%s622 + $0x50] sm:$0xff]
    %v634 = vld [vmem:[%s622 + $0x58] sm:$0xff]
    %v635 = vld [vmem:[%s622 + $0x60] sm:$0xff]
    %v636 = vld [vmem:[%s622 + $0x68] sm:$0xff]
    %v637 = vld [vmem:[%s622 + $0x70] sm:$0xff]
    %v638 = vld [vmem:[%s622 + $0x78] sm:$0xff]
    %v639 = vld [vmem:[%s622 + $0x80] sm:$0xff]
    %v640 = vld [vmem:[%s622 + $0x88] sm:$0xff]
    %v641 = vld [vmem:[%s622 + $0x90] sm:$0xff]
    %v642 = vld [vmem:[%s622 + $0x98] sm:$0xff]
    %v643 = vld [vmem:[%s622 + $0xa0] sm:$0xff]
    %v644 = vld [vmem:[%s622 + $0xa8] sm:$0xff]
    %v645 = vld [vmem:[%s622 + $0xb0] sm:$0xff]
    %v646 = vld [vmem:[%s622 + $0xb8] sm:$0xff]
    %v647 = vld [vmem:[%s622 + $0xc0] sm:$0xff]
    %v648 = vld [vmem:[%s622 + $0xc8] sm:$0xff]
    %v649 = vld [vmem:[%s622 + $0xd0] sm:$0xff]
    %v650 = vld [vmem:[%s622 + $0xd8] sm:$0xff]
    %v651 = vld [vmem:[%s622 + $0xe0] sm:$0xff]
    %v652 = vld [vmem:[%s622 + $0xe8] sm:$0xff]
    %v653 = vld [vmem:[%s622 + $0xf0] sm:$0xff]
    %v654 = vld [vmem:[%s622 + $0xf8] sm:$0xff]
    %v655 = vld [vmem:[%s622 + $0x100] sm:$0xff]
    %v656 = vld [vmem:[%s622 + $0x108] sm:$0xff]
    %v657 = vld [vmem:[%s622 + $0x110] sm:$0xff]
    %v658 = vld [vmem:[%s622 + $0x118] sm:$0xff]
    %v659 = vld [vmem:[%s622 + $0x120] sm:$0xff]
    %v660 = vld [vmem:[%s622 + $0x128] sm:$0xff]
    %v661 = vld [vmem:[%s622 + $0x130] sm:$0xff]
    %v662 = vld [vmem:[%s622 + $0x138] sm:$0xff]
    %v663 = vld [vmem:[%s622 + $0x140] sm:$0xff]
    %v664 = vld [vmem:[%s622 + $0x148] sm:$0xff]
    %v665 = vld [vmem:[%s622 + $0x150] sm:$0xff]
    %v666 = vld [vmem:[%s622 + $0x158] sm:$0xff]
    %v667 = vld [vmem:[%s622 + $0x160] sm:$0xff]
    %v668 = vld [vmem:[%s622 + $0x168] sm:$0xff]
    %v669 = vld [vmem:[%s622 + $0x170] sm:$0xff]
    %v670 = vld [vmem:[%s622 + $0x178] sm:$0xff]
    %v671 = vld [vmem:[%s622 + $0x180] sm:$0xff]
    %v672 = vld [vmem:[%s622 + $0x188] sm:$0xff]
    %v673 = vld [vmem:[%s622 + $0x190] sm:$0xff]
    %v674 = vld [vmem:[%s622 + $0x198] sm:$0xff]
    %v675 = vld [vmem:[%s622 + $0x1a0] sm:$0xff]
    %v676 = vld [vmem:[%s622 + $0x1a8] sm:$0xff]
    %v677 = vld [vmem:[%s622 + $0x1b0] sm:$0xff]
    %v678 = vld [vmem:[%s622 + $0x1b8] sm:$0xff]
    %v679 = vld [vmem:[%s622 + $0x1c0] sm:$0xff]
    %v680 = vld [vmem:[%s622 + $0x1c8] sm:$0xff]
    %v681 = vld [vmem:[%s622 + $0x1d0] sm:$0xff]
    %v682 = vld [vmem:[%s622 + $0x1d8] sm:$0xff]
    %v683 = vld [vmem:[%s622 + $0x1e0] sm:$0xff]
    %v684 = vld [vmem:[%s622 + $0x1e8] sm:$0xff]
    %v685 = vld [vmem:[%s622 + $0x1f0] sm:$0xff]
    %v686 = vld [vmem:[%s622 + $0x1f8] sm:$0xff]
    %687 = vmatprep.subr.mxu0 0.0
    %688 = vmatpush1.msra.mxu0 %v203
    %689 = vmatprep.subr.mxu0 0.0
    %690 = vmatpush1.msra.mxu0 %v204
    %691 = vmatprep.subr.mxu0 0.0
    %692 = vmatpush1.msra.mxu0 %v205
    %693 = vmatprep.subr.mxu0 0.0
    %694 = vmatpush1.msra.mxu0 %v206
    %695 = vmatprep.subr.mxu0 0.0
    %696 = vmatpush1.msra.mxu0 %v207
    %697 = vmatprep.subr.mxu0 0.0
    %698 = vmatpush1.msra.mxu0 %v208
    %699 = vmatprep.subr.mxu0 0.0
    %700 = vmatpush1.msra.mxu0 %v209
    %701 = vmatprep.subr.mxu0 0.0
    %702 = vmatpush1.msra.mxu0 %v210
    %703 = vmatprep.subr.mxu0 0.0
    %704 = vmatpush1.msra.mxu0 %v211
    %705 = vmatprep.subr.mxu0 0.0
    %706 = vmatpush1.msra.mxu0 %v212
    %707 = vmatprep.subr.mxu0 0.0
    %708 = vmatpush1.msra.mxu0 %v213
    %709 = vmatprep.subr.mxu0 0.0
    %710 = vmatpush1.msra.mxu0 %v214
    %711 = vmatprep.subr.mxu0 0.0
    %712 = vmatpush1.msra.mxu0 %v215
    %713 = vmatprep.subr.mxu0 0.0
    %714 = vmatpush1.msra.mxu0 %v216
    %715 = vmatprep.subr.mxu0 0.0
    %716 = vmatpush1.msra.mxu0 %v217
    %717 = vmatprep.subr.mxu0 0.0
    %718 = vmatpush1.msra.mxu0 %v218
    %719 = vmatprep.subr.mxu0 0.0
    %720 = vmatpush1.msra.mxu0 %v219
    %721 = vmatprep.subr.mxu0 0.0
    %722 = vmatpush1.msra.mxu0 %v220
    %723 = vmatprep.subr.mxu0 0.0
    %724 = vmatpush1.msra.mxu0 %v221
    %725 = vmatprep.subr.mxu0 0.0
    %726 = vmatpush1.msra.mxu0 %v222
    %727 = vmatprep.subr.mxu0 0.0
    %728 = vmatpush1.msra.mxu0 %v223
    %729 = vmatprep.subr.mxu0 0.0
    %730 = vmatpush1.msra.mxu0 %v224
    %731 = vmatprep.subr.mxu0 0.0
    %732 = vmatpush1.msra.mxu0 %v225
    %733 = vmatprep.subr.mxu0 0.0
    %734 = vmatpush1.msra.mxu0 %v226
    %735 = vmatprep.subr.mxu0 0.0
    %736 = vmatpush1.msra.mxu0 %v227
    %737 = vmatprep.subr.mxu0 0.0
    %738 = vmatpush1.msra.mxu0 %v228
    %739 = vmatprep.subr.mxu0 0.0
    %740 = vmatpush1.msra.mxu0 %v229
    %741 = vmatprep.subr.mxu0 0.0
    %742 = vmatpush1.msra.mxu0 %v230
    %743 = vmatprep.subr.mxu0 0.0
    %744 = vmatpush1.msra.mxu0 %v231
    %745 = vmatprep.subr.mxu0 0.0
    %746 = vmatpush1.msra.mxu0 %v232
    %747 = vmatprep.subr.mxu0 0.0
    %748 = vmatpush1.msra.mxu0 %v233
    %749 = vmatprep.subr.mxu0 0.0
    %750 = vmatpush1.msra.mxu0 %v234
    %751 = vmatprep.mubr.f32.mxu0 %v624
    %752 = vmatmul.mubr.f32.gmra.mrb[0].mxu0 %v623
    %v753 = vpop.f32.mrb[0].mxu0
    %v754 = vadd.f32 0.0, %v753
    %v755 = vpop.f32.mrb[0].mxu0
    %756 = vmatprep.mubr.f32.mxu0 %v628
    %757 = vmatmul.mubr.f32.gmra.mrb[0].mxu0 %v627
    %v758 = vpop.f32.mrb[0].mxu0
    %v759 = vadd.f32 0.0, %v758
    %v760 = vpop.f32.mrb[0].mxu0
    %761 = vmatprep.mubr.f32.mxu0 %v632
    %762 = vmatmul.mubr.f32.gmra.mrb[0].mxu0 %v631
    %v763 = vpop.f32.mrb[0].mxu0
    %v764 = vadd.f32 0.0, %v763
    %v765 = vpop.f32.mrb[0].mxu0
    %766 = vmatprep.mubr.f32.mxu0 %v636
    %767 = vmatmul.mubr.f32.gmra.mrb[0].mxu0 %v635
    %v768 = vpop.f32.mrb[0].mxu0
    %v769 = vadd.f32 0.0, %v768
    %v770 = vpop.f32.mrb[0].mxu0
    %771 = vmatprep.mubr.f32.mxu0 %v640
    %772 = vmatmul.mubr.f32.gmra.mrb[0].mxu0 %v639
    %v773 = vpop.f32.mrb[0].mxu0
    %v774 = vadd.f32 0.0, %v773
    %v775 = vpop.f32.mrb[0].mxu0
    %776 = vmatprep.mubr.f32.mxu0 %v644
    %777 = vmatmul.mubr.f32.gmra.mrb[0].mxu0 %v643
    %v778 = vpop.f32.mrb[0].mxu0
    %v779 = vadd.f32 0.0, %v778
    %v780 = vpop.f32.mrb[0].mxu0
    %781 = vmatprep.mubr.f32.mxu0 %v648
    %782 = vmatmul.mubr.f32.gmra.mrb[0].mxu0 %v647
    %v783 = vpop.f32.mrb[0].mxu0
    %v784 = vadd.f32 0.0, %v783
    %v785 = vpop.f32.mrb[0].mxu0
    %786 = vmatprep.mubr.f32.mxu0 %v652
    %787 = vmatmul.mubr.f32.gmra.mrb[0].mxu0 %v651
    %v788 = vpop.f32.mrb[0].mxu0
    %v789 = vadd.f32 0.0, %v788
    %v790 = vpop.f32.mrb[0].mxu0
    %791 = vmatprep.mubr.f32.mxu0 %v656
    %792 = vmatmul.mubr.f32.gmra.mrb[0].mxu0 %v655
    %v793 = vpop.f32.mrb[0].mxu0
    %v794 = vadd.f32 0.0, %v793
    %v795 = vpop.f32.mrb[0].mxu0
    %796 = vmatprep.mubr.f32.mxu0 %v660
    %797 = vmatmul.mubr.f32.gmra.mrb[0].mxu0 %v659
    %v798 = vpop.f32.mrb[0].mxu0
    %v799 = vadd.f32 0.0, %v798
    %v800 = vpop.f32.mrb[0].mxu0
    %801 = vmatprep.mubr.f32.mxu0 %v664
    %802 = vmatmul.mubr.f32.gmra.mrb[0].mxu0 %v663
    %v803 = vpop.f32.mrb[0].mxu0
    %v804 = vadd.f32 0.0, %v803
    %v805 = vpop.f32.mrb[0].mxu0
    %806 = vmatprep.mubr.f32.mxu0 %v668
    %807 = vmatmul.mubr.f32.gmra.mrb[0].mxu0 %v667
    %v808 = vpop.f32.mrb[0].mxu0
    %v809 = vadd.f32 0.0, %v808
    %v810 = vpop.f32.mrb[0].mxu0
    %811 = vmatprep.mubr.f32.mxu0 %v672
    %812 = vmatmul.mubr.f32.gmra.mrb[0].mxu0 %v671
    %v813 = vpop.f32.mrb[0].mxu0
    %v814 = vadd.f32 0.0, %v813
    %v815 = vpop.f32.mrb[0].mxu0
    %816 = vmatprep.mubr.f32.mxu0 %v676
    %817 = vmatmul.mubr.f32.gmra.mrb[0].mxu0 %v675
    %v818 = vpop.f32.mrb[0].mxu0
    %v819 = vadd.f32 0.0, %v818
    %v820 = vpop.f32.mrb[0].mxu0
    %821 = vmatprep.mubr.f32.mxu0 %v680
    %822 = vmatmul.mubr.f32.gmra.mrb[0].mxu0 %v679
    %v823 = vpop.f32.mrb[0].mxu0
    %v824 = vadd.f32 0.0, %v823
    %v825 = vpop.f32.mrb[0].mxu0
    %826 = vmatprep.mubr.f32.mxu0 %v684
    %827 = vmatmul.mubr.f32.gmra.mrb[0].mxu0 %v683
    %v828 = vpop.f32.mrb[0].mxu0
    %v829 = vadd.f32 0.0, %v828
    %v830 = vpop.f32.mrb[0].mxu0
    %831 = vdwg.mxu0
    %832 = vmatprep.subr.mxu0 0.0
    %833 = vmatpush1.msra.mxu0 %v235
    %834 = vmatprep.subr.mxu0 0.0
    %835 = vmatpush1.msra.mxu0 %v236
    %836 = vmatprep.subr.mxu0 0.0
    %837 = vmatpush1.msra.mxu0 %v237
    %838 = vmatprep.subr.mxu0 0.0
    %839 = vmatpush1.msra.mxu0 %v238
    %840 = vmatprep.subr.mxu0 0.0
    %841 = vmatpush1.msra.mxu0 %v239
    %842 = vmatprep.subr.mxu0 0.0
    %843 = vmatpush1.msra.mxu0 %v240
    %844 = vmatprep.subr.mxu0 0.0
    %845 = vmatpush1.msra.mxu0 %v241
    %846 = vmatprep.subr.mxu0 0.0
    %847 = vmatpush1.msra.mxu0 %v242
    %848 = vmatprep.subr.mxu0 0.0
    %849 = vmatpush1.msra.mxu0 %v243
    %850 = vmatprep.subr.mxu0 0.0
    %851 = vmatpush1.msra.mxu0 %v244
    %852 = vmatprep.subr.mxu0 0.0
    %853 = vmatpush1.msra.mxu0 %v245
    %854 = vmatprep.subr.mxu0 0.0
    %855 = vmatpush1.msra.mxu0 %v246
    %856 = vmatprep.subr.mxu0 0.0
    %857 = vmatpush1.msra.mxu0 %v247
    %858 = vmatprep.subr.mxu0 0.0
    %859 = vmatpush1.msra.mxu0 %v248
    %860 = vmatprep.subr.mxu0 0.0
    %861 = vmatpush1.msra.mxu0 %v249
    %862 = vmatprep.subr.mxu0 0.0
    %863 = vmatpush1.msra.mxu0 %v250
    %864 = vmatprep.subr.mxu0 0.0
    %865 = vmatpush1.msra.mxu0 %v251
    %866 = vmatprep.subr.mxu0 0.0
    %867 = vmatpush1.msra.mxu0 %v252
    %868 = vmatprep.subr.mxu0 0.0
    %869 = vmatpush1.msra.mxu0 %v253
    %870 = vmatprep.subr.mxu0 0.0
    %871 = vmatpush1.msra.mxu0 %v254
    %872 = vmatprep.subr.mxu0 0.0
    %873 = vmatpush1.msra.mxu0 %v255
    %874 = vmatprep.subr.mxu0 0.0
    %875 = vmatpush1.msra.mxu0 %v256
    %876 = vmatprep.subr.mxu0 0.0
    %877 = vmatpush1.msra.mxu0 %v257
    %878 = vmatprep.subr.mxu0 0.0
    %879 = vmatpush1.msra.mxu0 %v258
    %880 = vmatprep.subr.mxu0 0.0
    %881 = vmatpush1.msra.mxu0 %v259
    %882 = vmatprep.subr.mxu0 0.0
    %883 = vmatpush1.msra.mxu0 %v260
    %884 = vmatprep.subr.mxu0 0.0
    %885 = vmatpush1.msra.mxu0 %v261
    %886 = vmatprep.subr.mxu0 0.0
    %887 = vmatpush1.msra.mxu0 %v262
    %888 = vmatprep.subr.mxu0 0.0
    %889 = vmatpush1.msra.mxu0 %v263
    %890 = vmatprep.subr.mxu0 0.0
    %891 = vmatpush1.msra.mxu0 %v264
    %892 = vmatprep.subr.mxu0 0.0
    %893 = vmatpush1.msra.mxu0 %v265
    %894 = vmatprep.subr.mxu0 0.0
    %895 = vmatpush1.msra.mxu0 %v266
    %896 = vmatprep.mubr.f32.mxu0 %v626
    %897 = vmatmul.mubr.f32.gmra.mrb[0].mxu0 %v625
    %v898 = vpop.f32.mrb[0].mxu0
    %v899 = vadd.f32 %v754, %v898
    %v900 = vpop.f32.mrb[0].mxu0
    %901 = vmatprep.mubr.f32.mxu0 %v630
    %902 = vmatmul.mubr.f32.gmra.mrb[0].mxu0 %v629
    %v903 = vpop.f32.mrb[0].mxu0
    %v904 = vadd.f32 %v759, %v903
    %v905 = vpop.f32.mrb[0].mxu0
    %906 = vmatprep.mubr.f32.mxu0 %v634
    %907 = vmatmul.mubr.f32.gmra.mrb[0].mxu0 %v633
    %v908 = vpop.f32.mrb[0].mxu0
    %v909 = vadd.f32 %v764, %v908
    %v910 = vpop.f32.mrb[0].mxu0
    %911 = vmatprep.mubr.f32.mxu0 %v638
    %912 = vmatmul.mubr.f32.gmra.mrb[0].mxu0 %v637
    %v913 = vpop.f32.mrb[0].mxu0
    %v914 = vadd.f32 %v769, %v913
    %v915 = vpop.f32.mrb[0].mxu0
    %916 = vmatprep.mubr.f32.mxu0 %v642
    %917 = vmatmul.mubr.f32.gmra.mrb[0].mxu0 %v641
    %v918 = vpop.f32.mrb[0].mxu0
    %v919 = vadd.f32 %v774, %v918
    %v920 = vpop.f32.mrb[0].mxu0
    %921 = vmatprep.mubr.f32.mxu0 %v646
    %922 = vmatmul.mubr.f32.gmra.mrb[0].mxu0 %v645
    %v923 = vpop.f32.mrb[0].mxu0
    %v924 = vadd.f32 %v779, %v923
    %v925 = vpop.f32.mrb[0].mxu0
    %926 = vmatprep.mubr.f32.mxu0 %v650
    %927 = vmatmul.mubr.f32.gmra.mrb[0].mxu0 %v649
    %v928 = vpop.f32.mrb[0].mxu0
    %v929 = vadd.f32 %v784, %v928
    %v930 = vpop.f32.mrb[0].mxu0
    %931 = vmatprep.mubr.f32.mxu0 %v654
    %932 = vmatmul.mubr.f32.gmra.mrb[0].mxu0 %v653
    %v933 = vpop.f32.mrb[0].mxu0
    %v934 = vadd.f32 %v789, %v933
    %v935 = vpop.f32.mrb[0].mxu0
    %936 = vmatprep.mubr.f32.mxu0 %v658
    %937 = vmatmul.mubr.f32.gmra.mrb[0].mxu0 %v657
    %v938 = vpop.f32.mrb[0].mxu0
    %v939 = vadd.f32 %v794, %v938
    %v940 = vpop.f32.mrb[0].mxu0
    %941 = vmatprep.mubr.f32.mxu0 %v662
    %942 = vmatmul.mubr.f32.gmra.mrb[0].mxu0 %v661
    %v943 = vpop.f32.mrb[0].mxu0
    %v944 = vadd.f32 %v799, %v943
    %v945 = vpop.f32.mrb[0].mxu0
    %946 = vmatprep.mubr.f32.mxu0 %v666
    %947 = vmatmul.mubr.f32.gmra.mrb[0].mxu0 %v665
    %v948 = vpop.f32.mrb[0].mxu0
    %v949 = vadd.f32 %v804, %v948
    %v950 = vpop.f32.mrb[0].mxu0
    %951 = vmatprep.mubr.f32.mxu0 %v670
    %952 = vmatmul.mubr.f32.gmra.mrb[0].mxu0 %v669
    %v953 = vpop.f32.mrb[0].mxu0
    %v954 = vadd.f32 %v809, %v953
    %v955 = vpop.f32.mrb[0].mxu0
    %956 = vmatprep.mubr.f32.mxu0 %v674
    %957 = vmatmul.mubr.f32.gmra.mrb[0].mxu0 %v673
    %v958 = vpop.f32.mrb[0].mxu0
    %v959 = vadd.f32 %v814, %v958
    %v960 = vpop.f32.mrb[0].mxu0
    %961 = vmatprep.mubr.f32.mxu0 %v678
    %962 = vmatmul.mubr.f32.gmra.mrb[0].mxu0 %v677
    %v963 = vpop.f32.mrb[0].mxu0
    %v964 = vadd.f32 %v819, %v963
    %v965 = vpop.f32.mrb[0].mxu0
    %966 = vmatprep.mubr.f32.mxu0 %v682
    %967 = vmatmul.mubr.f32.gmra.mrb[0].mxu0 %v681
    %v968 = vpop.f32.mrb[0].mxu0
    %v969 = vadd.f32 %v824, %v968
    %v970 = vpop.f32.mrb[0].mxu0
    %971 = vmatprep.mubr.f32.mxu0 %v686
    %972 = vmatmul.mubr.f32.gmra.mrb[0].mxu0 %v685
    %v973 = vpop.f32.mrb[0].mxu0
    %v974 = vadd.f32 %v829, %v973
    %v975 = vpop.f32.mrb[0].mxu0
    %976 = vdwg.mxu0
    %s977 = scalar_lea.vmem [#allocation10], 4
    %v978 = vld [vmem:[%s977] sm:$0xf]
    %vm979 = vcmask 31744
    %v981 = vsel %vm979, %v899, 0
    %v984 = vsel %vm979, %v904, 0
    %v987 = vsel %vm979, %v909, 0
    %v990 = vsel %vm979, %v914, 0
    %v993 = vsel %vm979, %v919, 0
    %v996 = vsel %vm979, %v924, 0
    %v999 = vsel %vm979, %v929, 0
    %v1002 = vsel %vm979, %v934, 0
    %v1005 = vsel %vm979, %v939, 0
    %v1008 = vsel %vm979, %v944, 0
    %v1011 = vsel %vm979, %v949, 0
    %v1014 = vsel %vm979, %v954, 0
    %v1017 = vsel %vm979, %v959, 0
    %v1020 = vsel %vm979, %v964, 0
    %v1023 = vsel %vm979, %v969, 0
    %v1026 = vsel %vm979, %v974, 0
    %vm1028 = vcmask 1043456
    %v1030 = vsel %vm1028, %v978, 0
    %1032 = vmatprep.subr.mxu0 0.0
    %1033 = vmatpush1.msra.mxu0 %v1030
    %1034 = vmatprep.subr.mxu0 0.0
    %1035 = vmatpush1.msra.mxu0 0.0
    %1036 = vmatprep.subr.mxu0 0.0
    %1037 = vmatpush1.msra.mxu0 0.0
    %1038 = vmatprep.subr.mxu0 0.0
    %1039 = vmatpush1.msra.mxu0 0.0
    %1040 = vmatprep.subr.mxu0 0.0
    %1041 = vmatpush1.msra.mxu0 0.0
    %1042 = vmatprep.subr.mxu0 0.0
    %1043 = vmatpush1.msra.mxu0 0.0
    %1044 = vmatprep.subr.mxu0 0.0
    %1045 = vmatpush1.msra.mxu0 0.0
    %1046 = vmatprep.subr.mxu0 0.0
    %1047 = vmatpush1.msra.mxu0 0.0
    %1048 = vmatprep.subr.mxu0 0.0
    %1049 = vmatpush1.msra.mxu0 0.0
    %1050 = vmatprep.subr.mxu0 0.0
    %1051 = vmatpush1.msra.mxu0 0.0
    %1052 = vmatprep.subr.mxu0 0.0
    %1053 = vmatpush1.msra.mxu0 0.0
    %1054 = vmatprep.subr.mxu0 0.0
    %1055 = vmatpush1.msra.mxu0 0.0
    %1056 = vmatprep.subr.mxu0 0.0
    %1057 = vmatpush1.msra.mxu0 0.0
    %1058 = vmatprep.subr.mxu0 0.0
    %1059 = vmatpush1.msra.mxu0 0.0
    %1060 = vmatprep.subr.mxu0 0.0
    %1061 = vmatpush1.msra.mxu0 0.0
    %1062 = vmatprep.subr.mxu0 0.0
    %1063 = vmatpush1.msra.mxu0 0.0
    %1064 = vmatprep.subr.mxu0 0.0
    %1065 = vmatpush1.msra.mxu0 0.0
    %1066 = vmatprep.subr.mxu0 0.0
    %1067 = vmatpush1.msra.mxu0 0.0
    %1068 = vmatprep.subr.mxu0 0.0
    %1069 = vmatpush1.msra.mxu0 0.0
    %1070 = vmatprep.subr.mxu0 0.0
    %1071 = vmatpush1.msra.mxu0 0.0
    %1072 = vmatprep.subr.mxu0 0.0
    %1073 = vmatpush1.msra.mxu0 0.0
    %1074 = vmatprep.subr.mxu0 0.0
    %1075 = vmatpush1.msra.mxu0 0.0
    %1076 = vmatprep.subr.mxu0 0.0
    %1077 = vmatpush1.msra.mxu0 0.0
    %1078 = vmatprep.subr.mxu0 0.0
    %1079 = vmatpush1.msra.mxu0 0.0
    %1080 = vmatprep.subr.mxu0 0.0
    %1081 = vmatpush1.msra.mxu0 0.0
    %1082 = vmatprep.subr.mxu0 0.0
    %1083 = vmatpush1.msra.mxu0 0.0
    %1084 = vmatprep.subr.mxu0 0.0
    %1085 = vmatpush1.msra.mxu0 0.0
    %1086 = vmatprep.subr.mxu0 0.0
    %1087 = vmatpush1.msra.mxu0 0.0
    %1088 = vmatprep.subr.mxu0 0.0
    %1089 = vmatpush1.msra.mxu0 0.0
    %1090 = vmatprep.subr.mxu0 0.0
    %1091 = vmatpush1.msra.mxu0 0.0
    %1092 = vmatprep.subr.mxu0 0.0
    %1093 = vmatpush1.msra.mxu0 0.0
    %1094 = vmatprep.subr.mxu0 0.0
    %1095 = vmatpush1.msra.mxu0 0.0
    %1096 = vmatprep.mubr.f32.mxu0 0.0
    %1097 = vmatmul.mubr.f32.gmra.mrb[0].mxu0 %v981
    %v1098 = vpop.f32.mrb[0].mxu0
    %v1099 = vadd.f32 0.0, %v1098
    %v1100 = vpop.f32.mrb[0].mxu0
    %1101 = vmatprep.mubr.f32.mxu0 0.0
    %1102 = vmatmul.mubr.f32.gmra.mrb[0].mxu0 %v984
    %v1103 = vpop.f32.mrb[0].mxu0
    %v1104 = vadd.f32 0.0, %v1103
    %v1105 = vpop.f32.mrb[0].mxu0
    %1106 = vmatprep.mubr.f32.mxu0 0.0
    %1107 = vmatmul.mubr.f32.gmra.mrb[0].mxu0 %v987
    %v1108 = vpop.f32.mrb[0].mxu0
    %v1109 = vadd.f32 0.0, %v1108
    %v1110 = vpop.f32.mrb[0].mxu0
    %1111 = vmatprep.mubr.f32.mxu0 0.0
    %1112 = vmatmul.mubr.f32.gmra.mrb[0].mxu0 %v990
    %v1113 = vpop.f32.mrb[0].mxu0
    %v1114 = vadd.f32 0.0, %v1113
    %v1115 = vpop.f32.mrb[0].mxu0
    %1116 = vmatprep.mubr.f32.mxu0 0.0
    %1117 = vmatmul.mubr.f32.gmra.mrb[0].mxu0 %v993
    %v1118 = vpop.f32.mrb[0].mxu0
    %v1119 = vadd.f32 0.0, %v1118
    %v1120 = vpop.f32.mrb[0].mxu0
    %1121 = vmatprep.mubr.f32.mxu0 0.0
    %1122 = vmatmul.mubr.f32.gmra.mrb[0].mxu0 %v996
    %v1123 = vpop.f32.mrb[0].mxu0
    %v1124 = vadd.f32 0.0, %v1123
    %v1125 = vpop.f32.mrb[0].mxu0
    %1126 = vmatprep.mubr.f32.mxu0 0.0
    %1127 = vmatmul.mubr.f32.gmra.mrb[0].mxu0 %v999
    %v1128 = vpop.f32.mrb[0].mxu0
    %v1129 = vadd.f32 0.0, %v1128
    %v1130 = vpop.f32.mrb[0].mxu0
    %1131 = vmatprep.mubr.f32.mxu0 0.0
    %1132 = vmatmul.mubr.f32.gmra.mrb[0].mxu0 %v1002
    %v1133 = vpop.f32.mrb[0].mxu0
    %v1134 = vadd.f32 0.0, %v1133
    %v1135 = vpop.f32.mrb[0].mxu0
    %1136 = vmatprep.mubr.f32.mxu0 0.0
    %1137 = vmatmul.mubr.f32.gmra.mrb[0].mxu0 %v1005
    %v1138 = vpop.f32.mrb[0].mxu0
    %v1139 = vadd.f32 0.0, %v1138
    %v1140 = vpop.f32.mrb[0].mxu0
    %1141 = vmatprep.mubr.f32.mxu0 0.0
    %1142 = vmatmul.mubr.f32.gmra.mrb[0].mxu0 %v1008
    %v1143 = vpop.f32.mrb[0].mxu0
    %v1144 = vadd.f32 0.0, %v1143
    %v1145 = vpop.f32.mrb[0].mxu0
    %1146 = vmatprep.mubr.f32.mxu0 0.0
    %1147 = vmatmul.mubr.f32.gmra.mrb[0].mxu0 %v1011
    %v1148 = vpop.f32.mrb[0].mxu0
    %v1149 = vadd.f32 0.0, %v1148
    %v1150 = vpop.f32.mrb[0].mxu0
    %1151 = vmatprep.mubr.f32.mxu0 0.0
    %1152 = vmatmul.mubr.f32.gmra.mrb[0].mxu0 %v1014
    %v1153 = vpop.f32.mrb[0].mxu0
    %v1154 = vadd.f32 0.0, %v1153
    %v1155 = vpop.f32.mrb[0].mxu0
    %1156 = vmatprep.mubr.f32.mxu0 0.0
    %1157 = vmatmul.mubr.f32.gmra.mrb[0].mxu0 %v1017
    %v1158 = vpop.f32.mrb[0].mxu0
    %v1159 = vadd.f32 0.0, %v1158
    %v1160 = vpop.f32.mrb[0].mxu0
    %1161 = vmatprep.mubr.f32.mxu0 0.0
    %1162 = vmatmul.mubr.f32.gmra.mrb[0].mxu0 %v1020
    %v1163 = vpop.f32.mrb[0].mxu0
    %v1164 = vadd.f32 0.0, %v1163
    %v1165 = vpop.f32.mrb[0].mxu0
    %1166 = vmatprep.mubr.f32.mxu0 0.0
    %1167 = vmatmul.mubr.f32.gmra.mrb[0].mxu0 %v1023
    %v1168 = vpop.f32.mrb[0].mxu0
    %v1169 = vadd.f32 0.0, %v1168
    %v1170 = vpop.f32.mrb[0].mxu0
    %1171 = vmatprep.mubr.f32.mxu0 0.0
    %1172 = vmatmul.mubr.f32.gmra.mrb[0].mxu0 %v1026
    %v1173 = vpop.f32.mrb[0].mxu0
    %v1174 = vadd.f32 0.0, %v1173
    %v1175 = vpop.f32.mrb[0].mxu0
    %1176 = vdwg.mxu0
    %v1178 = vsel %vm979, %v543, 0
    %v1181 = vsel %vm979, %v548, 0
    %v1184 = vsel %vm979, %v553, 0
    %v1187 = vsel %vm979, %v558, 0
    %v1190 = vsel %vm979, %v563, 0
    %v1193 = vsel %vm979, %v568, 0
    %v1196 = vsel %vm979, %v573, 0
    %v1199 = vsel %vm979, %v578, 0
    %v1202 = vsel %vm979, %v583, 0
    %v1205 = vsel %vm979, %v588, 0
    %v1208 = vsel %vm979, %v593, 0
    %v1211 = vsel %vm979, %v598, 0
    %v1214 = vsel %vm979, %v603, 0
    %v1217 = vsel %vm979, %v608, 0
    %v1220 = vsel %vm979, %v613, 0
    %v1223 = vsel %vm979, %v618, 0
    %v1226 = vsel %vm1028, %v621, 0
    %1228 = vmatprep.subr.mxu0 0.0
    %1229 = vmatpush1.msra.mxu0 %v1226
    %1230 = vmatprep.subr.mxu0 0.0
    %1231 = vmatpush1.msra.mxu0 0.0
    %1232 = vmatprep.subr.mxu0 0.0
    %1233 = vmatpush1.msra.mxu0 0.0
    %1234 = vmatprep.subr.mxu0 0.0
    %1235 = vmatpush1.msra.mxu0 0.0
    %1236 = vmatprep.subr.mxu0 0.0
    %1237 = vmatpush1.msra.mxu0 0.0
    %1238 = vmatprep.subr.mxu0 0.0
    %1239 = vmatpush1.msra.mxu0 0.0
    %1240 = vmatprep.subr.mxu0 0.0
    %1241 = vmatpush1.msra.mxu0 0.0
    %1242 = vmatprep.subr.mxu0 0.0
    %1243 = vmatpush1.msra.mxu0 0.0
    %1244 = vmatprep.subr.mxu0 0.0
    %1245 = vmatpush1.msra.mxu0 0.0
    %1246 = vmatprep.subr.mxu0 0.0
    %1247 = vmatpush1.msra.mxu0 0.0
    %1248 = vmatprep.subr.mxu0 0.0
    %1249 = vmatpush1.msra.mxu0 0.0
    %1250 = vmatprep.subr.mxu0 0.0
    %1251 = vmatpush1.msra.mxu0 0.0
    %1252 = vmatprep.subr.mxu0 0.0
    %1253 = vmatpush1.msra.mxu0 0.0
    %1254 = vmatprep.subr.mxu0 0.0
    %1255 = vmatpush1.msra.mxu0 0.0
    %1256 = vmatprep.subr.mxu0 0.0
    %1257 = vmatpush1.msra.mxu0 0.0
    %1258 = vmatprep.subr.mxu0 0.0
    %1259 = vmatpush1.msra.mxu0 0.0
    %1260 = vmatprep.subr.mxu0 0.0
    %1261 = vmatpush1.msra.mxu0 0.0
    %1262 = vmatprep.subr.mxu0 0.0
    %1263 = vmatpush1.msra.mxu0 0.0
    %1264 = vmatprep.subr.mxu0 0.0
    %1265 = vmatpush1.msra.mxu0 0.0
    %1266 = vmatprep.subr.mxu0 0.0
    %1267 = vmatpush1.msra.mxu0 0.0
    %1268 = vmatprep.subr.mxu0 0.0
    %1269 = vmatpush1.msra.mxu0 0.0
    %1270 = vmatprep.subr.mxu0 0.0
    %1271 = vmatpush1.msra.mxu0 0.0
    %1272 = vmatprep.subr.mxu0 0.0
    %1273 = vmatpush1.msra.mxu0 0.0
    %1274 = vmatprep.subr.mxu0 0.0
    %1275 = vmatpush1.msra.mxu0 0.0
    %1276 = vmatprep.subr.mxu0 0.0
    %1277 = vmatpush1.msra.mxu0 0.0
    %1278 = vmatprep.subr.mxu0 0.0
    %1279 = vmatpush1.msra.mxu0 0.0
    %1280 = vmatprep.subr.mxu0 0.0
    %1281 = vmatpush1.msra.mxu0 0.0
    %1282 = vmatprep.subr.mxu0 0.0
    %1283 = vmatpush1.msra.mxu0 0.0
    %1284 = vmatprep.subr.mxu0 0.0
    %1285 = vmatpush1.msra.mxu0 0.0
    %1286 = vmatprep.subr.mxu0 0.0
    %1287 = vmatpush1.msra.mxu0 0.0
    %1288 = vmatprep.subr.mxu0 0.0
    %1289 = vmatpush1.msra.mxu0 0.0
    %1290 = vmatprep.subr.mxu0 0.0
    %1291 = vmatpush1.msra.mxu0 0.0
    %1292 = vmatprep.mubr.f32.mxu0 0.0
    %1293 = vmatmul.mubr.f32.gmra.mrb[0].mxu0 %v1178
    %v1294 = vpop.f32.mrb[0].mxu0
    %v1295 = vadd.f32 %v1099, %v1294
    %v1296 = vpop.f32.mrb[0].mxu0
    %1297 = vmatprep.mubr.f32.mxu0 0.0
    %1298 = vmatmul.mubr.f32.gmra.mrb[0].mxu0 %v1181
    %v1299 = vpop.f32.mrb[0].mxu0
    %v1300 = vadd.f32 %v1104, %v1299
    %v1301 = vpop.f32.mrb[0].mxu0
    %1302 = vmatprep.mubr.f32.mxu0 0.0
    %1303 = vmatmul.mubr.f32.gmra.mrb[0].mxu0 %v1184
    %v1304 = vpop.f32.mrb[0].mxu0
    %v1305 = vadd.f32 %v1109, %v1304
    %v1306 = vpop.f32.mrb[0].mxu0
    %1307 = vmatprep.mubr.f32.mxu0 0.0
    %1308 = vmatmul.mubr.f32.gmra.mrb[0].mxu0 %v1187
    %v1309 = vpop.f32.mrb[0].mxu0
    %v1310 = vadd.f32 %v1114, %v1309
    %v1311 = vpop.f32.mrb[0].mxu0
    %1312 = vmatprep.mubr.f32.mxu0 0.0
    %1313 = vmatmul.mubr.f32.gmra.mrb[0].mxu0 %v1190
    %v1314 = vpop.f32.mrb[0].mxu0
    %v1315 = vadd.f32 %v1119, %v1314
    %v1316 = vpop.f32.mrb[0].mxu0
    %1317 = vmatprep.mubr.f32.mxu0 0.0
    %1318 = vmatmul.mubr.f32.gmra.mrb[0].mxu0 %v1193
    %v1319 = vpop.f32.mrb[0].mxu0
    %v1320 = vadd.f32 %v1124, %v1319
    %v1321 = vpop.f32.mrb[0].mxu0
    %1322 = vmatprep.mubr.f32.mxu0 0.0
    %1323 = vmatmul.mubr.f32.gmra.mrb[0].mxu0 %v1196
    %v1324 = vpop.f32.mrb[0].mxu0
    %v1325 = vadd.f32 %v1129, %v1324
    %v1326 = vpop.f32.mrb[0].mxu0
    %1327 = vmatprep.mubr.f32.mxu0 0.0
    %1328 = vmatmul.mubr.f32.gmra.mrb[0].mxu0 %v1199
    %v1329 = vpop.f32.mrb[0].mxu0
    %v1330 = vadd.f32 %v1134, %v1329
    %v1331 = vpop.f32.mrb[0].mxu0
    %1332 = vmatprep.mubr.f32.mxu0 0.0
    %1333 = vmatmul.mubr.f32.gmra.mrb[0].mxu0 %v1202
    %v1334 = vpop.f32.mrb[0].mxu0
    %v1335 = vadd.f32 %v1139, %v1334
    %v1336 = vpop.f32.mrb[0].mxu0
    %1337 = vmatprep.mubr.f32.mxu0 0.0
    %1338 = vmatmul.mubr.f32.gmra.mrb[0].mxu0 %v1205
    %v1339 = vpop.f32.mrb[0].mxu0
    %v1340 = vadd.f32 %v1144, %v1339
    %v1341 = vpop.f32.mrb[0].mxu0
    %1342 = vmatprep.mubr.f32.mxu0 0.0
    %1343 = vmatmul.mubr.f32.gmra.mrb[0].mxu0 %v1208
    %v1344 = vpop.f32.mrb[0].mxu0
    %v1345 = vadd.f32 %v1149, %v1344
    %v1346 = vpop.f32.mrb[0].mxu0
    %1347 = vmatprep.mubr.f32.mxu0 0.0
    %1348 = vmatmul.mubr.f32.gmra.mrb[0].mxu0 %v1211
    %v1349 = vpop.f32.mrb[0].mxu0
    %v1350 = vadd.f32 %v1154, %v1349
    %v1351 = vpop.f32.mrb[0].mxu0
    %1352 = vmatprep.mubr.f32.mxu0 0.0
    %1353 = vmatmul.mubr.f32.gmra.mrb[0].mxu0 %v1214
    %v1354 = vpop.f32.mrb[0].mxu0
    %v1355 = vadd.f32 %v1159, %v1354
    %v1356 = vpop.f32.mrb[0].mxu0
    %1357 = vmatprep.mubr.f32.mxu0 0.0
    %1358 = vmatmul.mubr.f32.gmra.mrb[0].mxu0 %v1217
    %v1359 = vpop.f32.mrb[0].mxu0
    %v1360 = vadd.f32 %v1164, %v1359
    %v1361 = vpop.f32.mrb[0].mxu0
    %1362 = vmatprep.mubr.f32.mxu0 0.0
    %1363 = vmatmul.mubr.f32.gmra.mrb[0].mxu0 %v1220
    %v1364 = vpop.f32.mrb[0].mxu0
    %v1365 = vadd.f32 %v1169, %v1364
    %v1366 = vpop.f32.mrb[0].mxu0
    %1367 = vmatprep.mubr.f32.mxu0 0.0
    %1368 = vmatmul.mubr.f32.gmra.mrb[0].mxu0 %v1223
    %v1369 = vpop.f32.mrb[0].mxu0
    %v1370 = vadd.f32 %v1174, %v1369
    %v1371 = vpop.f32.mrb[0].mxu0
    %1372 = vdwg.mxu0
    %s1373 = scalar_lea.vmem [#allocation5], 1024
    %v1374 = vld [vmem:[%s1373] sm:$0xff]
    %v1375 = vld [vmem:[%s1373 + $0x8] sm:$0xff]
    %v1376 = vld [vmem:[%s1373 + $0x10] sm:$0xff]
    %v1377 = vld [vmem:[%s1373 + $0x18] sm:$0xff]
    %v1378 = vld [vmem:[%s1373 + $0x20] sm:$0xff]
    %v1379 = vld [vmem:[%s1373 + $0x28] sm:$0xff]
    %v1380 = vld [vmem:[%s1373 + $0x30] sm:$0xff]
    %v1381 = vld [vmem:[%s1373 + $0x38] sm:$0xff]
    %v1382 = vld [vmem:[%s1373 + $0x40] sm:$0xff]
    %v1383 = vld [vmem:[%s1373 + $0x48] sm:$0xff]
    %v1384 = vld [vmem:[%s1373 + $0x50] sm:$0xff]
    %v1385 = vld [vmem:[%s1373 + $0x58] sm:$0xff]
    %v1386 = vld [vmem:[%s1373 + $0x60] sm:$0xff]
    %v1387 = vld [vmem:[%s1373 + $0x68] sm:$0xff]
    %v1388 = vld [vmem:[%s1373 + $0x70] sm:$0xff]
    %v1389 = vld [vmem:[%s1373 + $0x78] sm:$0xff]
    %v1390 = vld [vmem:[%s1373 + $0x80] sm:$0xff]
    %v1391 = vld [vmem:[%s1373 + $0x88] sm:$0xff]
    %v1392 = vld [vmem:[%s1373 + $0x90] sm:$0xff]
    %v1393 = vld [vmem:[%s1373 + $0x98] sm:$0xff]
    %v1394 = vld [vmem:[%s1373 + $0xa0] sm:$0xff]
    %v1395 = vld [vmem:[%s1373 + $0xa8] sm:$0xff]
    %v1396 = vld [vmem:[%s1373 + $0xb0] sm:$0xff]
    %v1397 = vld [vmem:[%s1373 + $0xb8] sm:$0xff]
    %v1398 = vld [vmem:[%s1373 + $0xc0] sm:$0xff]
    %v1399 = vld [vmem:[%s1373 + $0xc8] sm:$0xff]
    %v1400 = vld [vmem:[%s1373 + $0xd0] sm:$0xff]
    %v1401 = vld [vmem:[%s1373 + $0xd8] sm:$0xff]
    %v1402 = vld [vmem:[%s1373 + $0xe0] sm:$0xff]
    %v1403 = vld [vmem:[%s1373 + $0xe8] sm:$0xff]
    %v1404 = vld [vmem:[%s1373 + $0xf0] sm:$0xff]
    %v1405 = vld [vmem:[%s1373 + $0xf8] sm:$0xff]
    %v1406 = vld [vmem:[%s1373 + $0x100] sm:$0xff]
    %v1407 = vld [vmem:[%s1373 + $0x108] sm:$0xff]
    %v1408 = vld [vmem:[%s1373 + $0x110] sm:$0xff]
    %v1409 = vld [vmem:[%s1373 + $0x118] sm:$0xff]
    %v1410 = vld [vmem:[%s1373 + $0x120] sm:$0xff]
    %v1411 = vld [vmem:[%s1373 + $0x128] sm:$0xff]
    %v1412 = vld [vmem:[%s1373 + $0x130] sm:$0xff]
    %v1413 = vld [vmem:[%s1373 + $0x138] sm:$0xff]
    %v1414 = vld [vmem:[%s1373 + $0x140] sm:$0xff]
    %v1415 = vld [vmem:[%s1373 + $0x148] sm:$0xff]
    %v1416 = vld [vmem:[%s1373 + $0x150] sm:$0xff]
    %v1417 = vld [vmem:[%s1373 + $0x158] sm:$0xff]
    %v1418 = vld [vmem:[%s1373 + $0x160] sm:$0xff]
    %v1419 = vld [vmem:[%s1373 + $0x168] sm:$0xff]
    %v1420 = vld [vmem:[%s1373 + $0x170] sm:$0xff]
    %v1421 = vld [vmem:[%s1373 + $0x178] sm:$0xff]
    %v1422 = vld [vmem:[%s1373 + $0x180] sm:$0xff]
    %v1423 = vld [vmem:[%s1373 + $0x188] sm:$0xff]
    %v1424 = vld [vmem:[%s1373 + $0x190] sm:$0xff]
    %v1425 = vld [vmem:[%s1373 + $0x198] sm:$0xff]
    %v1426 = vld [vmem:[%s1373 + $0x1a0] sm:$0xff]
    %v1427 = vld [vmem:[%s1373 + $0x1a8] sm:$0xff]
    %v1428 = vld [vmem:[%s1373 + $0x1b0] sm:$0xff]
    %v1429 = vld [vmem:[%s1373 + $0x1b8] sm:$0xff]
    %v1430 = vld [vmem:[%s1373 + $0x1c0] sm:$0xff]
    %v1431 = vld [vmem:[%s1373 + $0x1c8] sm:$0xff]
    %v1432 = vld [vmem:[%s1373 + $0x1d0] sm:$0xff]
    %v1433 = vld [vmem:[%s1373 + $0x1d8] sm:$0xff]
    %v1434 = vld [vmem:[%s1373 + $0x1e0] sm:$0xff]
    %v1435 = vld [vmem:[%s1373 + $0x1e8] sm:$0xff]
    %v1436 = vld [vmem:[%s1373 + $0x1f0] sm:$0xff]
    %v1437 = vld [vmem:[%s1373 + $0x1f8] sm:$0xff]
    %1438 = vmatprep.subr.mxu0 0.0
    %1439 = vmatpush1.msra.mxu0 %v203
    %1440 = vmatprep.subr.mxu0 0.0
    %1441 = vmatpush1.msra.mxu0 %v204
    %1442 = vmatprep.subr.mxu0 0.0
    %1443 = vmatpush1.msra.mxu0 %v205
    %1444 = vmatprep.subr.mxu0 0.0
    %1445 = vmatpush1.msra.mxu0 %v206
    %1446 = vmatprep.subr.mxu0 0.0
    %1447 = vmatpush1.msra.mxu0 %v207
    %1448 = vmatprep.subr.mxu0 0.0
    %1449 = vmatpush1.msra.mxu0 %v208
    %1450 = vmatprep.subr.mxu0 0.0
    %1451 = vmatpush1.msra.mxu0 %v209
    %1452 = vmatprep.subr.mxu0 0.0
    %1453 = vmatpush1.msra.mxu0 %v210
    %1454 = vmatprep.subr.mxu0 0.0
    %1455 = vmatpush1.msra.mxu0 %v211
    %1456 = vmatprep.subr.mxu0 0.0
    %1457 = vmatpush1.msra.mxu0 %v212
    %1458 = vmatprep.subr.mxu0 0.0
    %1459 = vmatpush1.msra.mxu0 %v213
    %1460 = vmatprep.subr.mxu0 0.0
    %1461 = vmatpush1.msra.mxu0 %v214
    %1462 = vmatprep.subr.mxu0 0.0
    %1463 = vmatpush1.msra.mxu0 %v215
    %1464 = vmatprep.subr.mxu0 0.0
    %1465 = vmatpush1.msra.mxu0 %v216
    %1466 = vmatprep.subr.mxu0 0.0
    %1467 = vmatpush1.msra.mxu0 %v217
    %1468 = vmatprep.subr.mxu0 0.0
    %1469 = vmatpush1.msra.mxu0 %v218
    %1470 = vmatprep.subr.mxu0 0.0
    %1471 = vmatpush1.msra.mxu0 %v219
    %1472 = vmatprep.subr.mxu0 0.0
    %1473 = vmatpush1.msra.mxu0 %v220
    %1474 = vmatprep.subr.mxu0 0.0
    %1475 = vmatpush1.msra.mxu0 %v221
    %1476 = vmatprep.subr.mxu0 0.0
    %1477 = vmatpush1.msra.mxu0 %v222
    %1478 = vmatprep.subr.mxu0 0.0
    %1479 = vmatpush1.msra.mxu0 %v223
    %1480 = vmatprep.subr.mxu0 0.0
    %1481 = vmatpush1.msra.mxu0 %v224
    %1482 = vmatprep.subr.mxu0 0.0
    %1483 = vmatpush1.msra.mxu0 %v225
    %1484 = vmatprep.subr.mxu0 0.0
    %1485 = vmatpush1.msra.mxu0 %v226
    %1486 = vmatprep.subr.mxu0 0.0
    %1487 = vmatpush1.msra.mxu0 %v227
    %1488 = vmatprep.subr.mxu0 0.0
    %1489 = vmatpush1.msra.mxu0 %v228
    %1490 = vmatprep.subr.mxu0 0.0
    %1491 = vmatpush1.msra.mxu0 %v229
    %1492 = vmatprep.subr.mxu0 0.0
    %1493 = vmatpush1.msra.mxu0 %v230
    %1494 = vmatprep.subr.mxu0 0.0
    %1495 = vmatpush1.msra.mxu0 %v231
    %1496 = vmatprep.subr.mxu0 0.0
    %1497 = vmatpush1.msra.mxu0 %v232
    %1498 = vmatprep.subr.mxu0 0.0
    %1499 = vmatpush1.msra.mxu0 %v233
    %1500 = vmatprep.subr.mxu0 0.0
    %1501 = vmatpush1.msra.mxu0 %v234
    %1502 = vmatprep.mubr.f32.mxu0 %v1375
    %1503 = vmatmul.mubr.f32.gmra.mrb[0].mxu0 %v1374
    %v1504 = vpop.f32.mrb[0].mxu0
    %v1505 = vadd.f32 0.0, %v1504
    %v1506 = vpop.f32.mrb[0].mxu0
    %1507 = vmatprep.mubr.f32.mxu0 %v1379
    %1508 = vmatmul.mubr.f32.gmra.mrb[0].mxu0 %v1378
    %v1509 = vpop.f32.mrb[0].mxu0
    %v1510 = vadd.f32 0.0, %v1509
    %v1511 = vpop.f32.mrb[0].mxu0
    %1512 = vmatprep.mubr.f32.mxu0 %v1383
    %1513 = vmatmul.mubr.f32.gmra.mrb[0].mxu0 %v1382
    %v1514 = vpop.f32.mrb[0].mxu0
    %v1515 = vadd.f32 0.0, %v1514
    %v1516 = vpop.f32.mrb[0].mxu0
    %1517 = vmatprep.mubr.f32.mxu0 %v1387
    %1518 = vmatmul.mubr.f32.gmra.mrb[0].mxu0 %v1386
    %v1519 = vpop.f32.mrb[0].mxu0
    %v1520 = vadd.f32 0.0, %v1519
    %v1521 = vpop.f32.mrb[0].mxu0
    %1522 = vmatprep.mubr.f32.mxu0 %v1391
    %1523 = vmatmul.mubr.f32.gmra.mrb[0].mxu0 %v1390
    %v1524 = vpop.f32.mrb[0].mxu0
    %v1525 = vadd.f32 0.0, %v1524
    %v1526 = vpop.f32.mrb[0].mxu0
    %1527 = vmatprep.mubr.f32.mxu0 %v1395
    %1528 = vmatmul.mubr.f32.gmra.mrb[0].mxu0 %v1394
    %v1529 = vpop.f32.mrb[0].mxu0
    %v1530 = vadd.f32 0.0, %v1529
    %v1531 = vpop.f32.mrb[0].mxu0
    %1532 = vmatprep.mubr.f32.mxu0 %v1399
    %1533 = vmatmul.mubr.f32.gmra.mrb[0].mxu0 %v1398
    %v1534 = vpop.f32.mrb[0].mxu0
    %v1535 = vadd.f32 0.0, %v1534
    %v1536 = vpop.f32.mrb[0].mxu0
    %1537 = vmatprep.mubr.f32.mxu0 %v1403
    %1538 = vmatmul.mubr.f32.gmra.mrb[0].mxu0 %v1402
    %v1539 = vpop.f32.mrb[0].mxu0
    %v1540 = vadd.f32 0.0, %v1539
    %v1541 = vpop.f32.mrb[0].mxu0
    %1542 = vmatprep.mubr.f32.mxu0 %v1407
    %1543 = vmatmul.mubr.f32.gmra.mrb[0].mxu0 %v1406
    %v1544 = vpop.f32.mrb[0].mxu0
    %v1545 = vadd.f32 0.0, %v1544
    %v1546 = vpop.f32.mrb[0].mxu0
    %1547 = vmatprep.mubr.f32.mxu0 %v1411
    %1548 = vmatmul.mubr.f32.gmra.mrb[0].mxu0 %v1410
    %v1549 = vpop.f32.mrb[0].mxu0
    %v1550 = vadd.f32 0.0, %v1549
    %v1551 = vpop.f32.mrb[0].mxu0
    %1552 = vmatprep.mubr.f32.mxu0 %v1415
    %1553 = vmatmul.mubr.f32.gmra.mrb[0].mxu0 %v1414
    %v1554 = vpop.f32.mrb[0].mxu0
    %v1555 = vadd.f32 0.0, %v1554
    %v1556 = vpop.f32.mrb[0].mxu0
    %1557 = vmatprep.mubr.f32.mxu0 %v1419
    %1558 = vmatmul.mubr.f32.gmra.mrb[0].mxu0 %v1418
    %v1559 = vpop.f32.mrb[0].mxu0
    %v1560 = vadd.f32 0.0, %v1559
    %v1561 = vpop.f32.mrb[0].mxu0
    %1562 = vmatprep.mubr.f32.mxu0 %v1423
    %1563 = vmatmul.mubr.f32.gmra.mrb[0].mxu0 %v1422
    %v1564 = vpop.f32.mrb[0].mxu0
    %v1565 = vadd.f32 0.0, %v1564
    %v1566 = vpop.f32.mrb[0].mxu0
    %1567 = vmatprep.mubr.f32.mxu0 %v1427
    %1568 = vmatmul.mubr.f32.gmra.mrb[0].mxu0 %v1426
    %v1569 = vpop.f32.mrb[0].mxu0
    %v1570 = vadd.f32 0.0, %v1569
    %v1571 = vpop.f32.mrb[0].mxu0
    %1572 = vmatprep.mubr.f32.mxu0 %v1431
    %1573 = vmatmul.mubr.f32.gmra.mrb[0].mxu0 %v1430
    %v1574 = vpop.f32.mrb[0].mxu0
    %v1575 = vadd.f32 0.0, %v1574
    %v1576 = vpop.f32.mrb[0].mxu0
    %1577 = vmatprep.mubr.f32.mxu0 %v1435
    %1578 = vmatmul.mubr.f32.gmra.mrb[0].mxu0 %v1434
    %v1579 = vpop.f32.mrb[0].mxu0
    %v1580 = vadd.f32 0.0, %v1579
    %v1581 = vpop.f32.mrb[0].mxu0
    %1582 = vdwg.mxu0
    %1583 = vmatprep.subr.mxu0 0.0
    %1584 = vmatpush1.msra.mxu0 %v235
    %1585 = vmatprep.subr.mxu0 0.0
    %1586 = vmatpush1.msra.mxu0 %v236
    %1587 = vmatprep.subr.mxu0 0.0
    %1588 = vmatpush1.msra.mxu0 %v237
    %1589 = vmatprep.subr.mxu0 0.0
    %1590 = vmatpush1.msra.mxu0 %v238
    %1591 = vmatprep.subr.mxu0 0.0
    %1592 = vmatpush1.msra.mxu0 %v239
    %1593 = vmatprep.subr.mxu0 0.0
    %1594 = vmatpush1.msra.mxu0 %v240
    %1595 = vmatprep.subr.mxu0 0.0
    %1596 = vmatpush1.msra.mxu0 %v241
    %1597 = vmatprep.subr.mxu0 0.0
    %1598 = vmatpush1.msra.mxu0 %v242
    %1599 = vmatprep.subr.mxu0 0.0
    %1600 = vmatpush1.msra.mxu0 %v243
    %1601 = vmatprep.subr.mxu0 0.0
    %1602 = vmatpush1.msra.mxu0 %v244
    %1603 = vmatprep.subr.mxu0 0.0
    %1604 = vmatpush1.msra.mxu0 %v245
    %1605 = vmatprep.subr.mxu0 0.0
    %1606 = vmatpush1.msra.mxu0 %v246
    %1607 = vmatprep.subr.mxu0 0.0
    %1608 = vmatpush1.msra.mxu0 %v247
    %1609 = vmatprep.subr.mxu0 0.0
    %1610 = vmatpush1.msra.mxu0 %v248
    %1611 = vmatprep.subr.mxu0 0.0
    %1612 = vmatpush1.msra.mxu0 %v249
    %1613 = vmatprep.subr.mxu0 0.0
    %1614 = vmatpush1.msra.mxu0 %v250
    %1615 = vmatprep.subr.mxu0 0.0
    %1616 = vmatpush1.msra.mxu0 %v251
    %1617 = vmatprep.subr.mxu0 0.0
    %1618 = vmatpush1.msra.mxu0 %v252
    %1619 = vmatprep.subr.mxu0 0.0
    %1620 = vmatpush1.msra.mxu0 %v253
    %1621 = vmatprep.subr.mxu0 0.0
    %1622 = vmatpush1.msra.mxu0 %v254
    %1623 = vmatprep.subr.mxu0 0.0
    %1624 = vmatpush1.msra.mxu0 %v255
    %1625 = vmatprep.subr.mxu0 0.0
    %1626 = vmatpush1.msra.mxu0 %v256
    %1627 = vmatprep.subr.mxu0 0.0
    %1628 = vmatpush1.msra.mxu0 %v257
    %1629 = vmatprep.subr.mxu0 0.0
    %1630 = vmatpush1.msra.mxu0 %v258
    %1631 = vmatprep.subr.mxu0 0.0
    %1632 = vmatpush1.msra.mxu0 %v259
    %1633 = vmatprep.subr.mxu0 0.0
    %1634 = vmatpush1.msra.mxu0 %v260
    %1635 = vmatprep.subr.mxu0 0.0
    %1636 = vmatpush1.msra.mxu0 %v261
    %1637 = vmatprep.subr.mxu0 0.0
    %1638 = vmatpush1.msra.mxu0 %v262
    %1639 = vmatprep.subr.mxu0 0.0
    %1640 = vmatpush1.msra.mxu0 %v263
    %1641 = vmatprep.subr.mxu0 0.0
    %1642 = vmatpush1.msra.mxu0 %v264
    %1643 = vmatprep.subr.mxu0 0.0
    %1644 = vmatpush1.msra.mxu0 %v265
    %1645 = vmatprep.subr.mxu0 0.0
    %1646 = vmatpush1.msra.mxu0 %v266
    %1647 = vmatprep.mubr.f32.mxu0 %v1377
    %1648 = vmatmul.mubr.f32.gmra.mrb[0].mxu0 %v1376
    %v1649 = vpop.f32.mrb[0].mxu0
    %v1650 = vadd.f32 %v1505, %v1649
    %v1651 = vpop.f32.mrb[0].mxu0
    %1652 = vmatprep.mubr.f32.mxu0 %v1381
    %1653 = vmatmul.mubr.f32.gmra.mrb[0].mxu0 %v1380
    %v1654 = vpop.f32.mrb[0].mxu0
    %v1655 = vadd.f32 %v1510, %v1654
    %v1656 = vpop.f32.mrb[0].mxu0
    %1657 = vmatprep.mubr.f32.mxu0 %v1385
    %1658 = vmatmul.mubr.f32.gmra.mrb[0].mxu0 %v1384
    %v1659 = vpop.f32.mrb[0].mxu0
    %v1660 = vadd.f32 %v1515, %v1659
    %v1661 = vpop.f32.mrb[0].mxu0
    %1662 = vmatprep.mubr.f32.mxu0 %v1389
    %1663 = vmatmul.mubr.f32.gmra.mrb[0].mxu0 %v1388
    %v1664 = vpop.f32.mrb[0].mxu0
    %v1665 = vadd.f32 %v1520, %v1664
    %v1666 = vpop.f32.mrb[0].mxu0
    %1667 = vmatprep.mubr.f32.mxu0 %v1393
    %1668 = vmatmul.mubr.f32.gmra.mrb[0].mxu0 %v1392
    %v1669 = vpop.f32.mrb[0].mxu0
    %v1670 = vadd.f32 %v1525, %v1669
    %v1671 = vpop.f32.mrb[0].mxu0
    %1672 = vmatprep.mubr.f32.mxu0 %v1397
    %1673 = vmatmul.mubr.f32.gmra.mrb[0].mxu0 %v1396
    %v1674 = vpop.f32.mrb[0].mxu0
    %v1675 = vadd.f32 %v1530, %v1674
    %v1676 = vpop.f32.mrb[0].mxu0
    %1677 = vmatprep.mubr.f32.mxu0 %v1401
    %1678 = vmatmul.mubr.f32.gmra.mrb[0].mxu0 %v1400
    %v1679 = vpop.f32.mrb[0].mxu0
    %v1680 = vadd.f32 %v1535, %v1679
    %v1681 = vpop.f32.mrb[0].mxu0
    %1682 = vmatprep.mubr.f32.mxu0 %v1405
    %1683 = vmatmul.mubr.f32.gmra.mrb[0].mxu0 %v1404
    %v1684 = vpop.f32.mrb[0].mxu0
    %v1685 = vadd.f32 %v1540, %v1684
    %v1686 = vpop.f32.mrb[0].mxu0
    %1687 = vmatprep.mubr.f32.mxu0 %v1409
    %1688 = vmatmul.mubr.f32.gmra.mrb[0].mxu0 %v1408
    %v1689 = vpop.f32.mrb[0].mxu0
    %v1690 = vadd.f32 %v1545, %v1689
    %v1691 = vpop.f32.mrb[0].mxu0
    %1692 = vmatprep.mubr.f32.mxu0 %v1413
    %1693 = vmatmul.mubr.f32.gmra.mrb[0].mxu0 %v1412
    %v1694 = vpop.f32.mrb[0].mxu0
    %v1695 = vadd.f32 %v1550, %v1694
    %v1696 = vpop.f32.mrb[0].mxu0
    %1697 = vmatprep.mubr.f32.mxu0 %v1417
    %1698 = vmatmul.mubr.f32.gmra.mrb[0].mxu0 %v1416
    %v1699 = vpop.f32.mrb[0].mxu0
    %v1700 = vadd.f32 %v1555, %v1699
    %v1701 = vpop.f32.mrb[0].mxu0
    %1702 = vmatprep.mubr.f32.mxu0 %v1421
    %1703 = vmatmul.mubr.f32.gmra.mrb[0].mxu0 %v1420
    %v1704 = vpop.f32.mrb[0].mxu0
    %v1705 = vadd.f32 %v1560, %v1704
    %v1706 = vpop.f32.mrb[0].mxu0
    %1707 = vmatprep.mubr.f32.mxu0 %v1425
    %1708 = vmatmul.mubr.f32.gmra.mrb[0].mxu0 %v1424
    %v1709 = vpop.f32.mrb[0].mxu0
    %v1710 = vadd.f32 %v1565, %v1709
    %v1711 = vpop.f32.mrb[0].mxu0
    %1712 = vmatprep.mubr.f32.mxu0 %v1429
    %1713 = vmatmul.mubr.f32.gmra.mrb[0].mxu0 %v1428
    %v1714 = vpop.f32.mrb[0].mxu0
    %v1715 = vadd.f32 %v1570, %v1714
    %v1716 = vpop.f32.mrb[0].mxu0
    %1717 = vmatprep.mubr.f32.mxu0 %v1433
    %1718 = vmatmul.mubr.f32.gmra.mrb[0].mxu0 %v1432
    %v1719 = vpop.f32.mrb[0].mxu0
    %v1720 = vadd.f32 %v1575, %v1719
    %v1721 = vpop.f32.mrb[0].mxu0
    %1722 = vmatprep.mubr.f32.mxu0 %v1437
    %1723 = vmatmul.mubr.f32.gmra.mrb[0].mxu0 %v1436
    %v1724 = vpop.f32.mrb[0].mxu0
    %v1725 = vadd.f32 %v1580, %v1724
    %v1726 = vpop.f32.mrb[0].mxu0
    %1727 = vdwg.mxu0
    %s1728 = scalar_lea.vmem [#allocation10], 8
    %v1729 = vld [vmem:[%s1728] sm:$0xf]
    %v1731 = vsel %vm979, %v1650, 0
    %v1734 = vsel %vm979, %v1655, 0
    %v1737 = vsel %vm979, %v1660, 0
    %v1740 = vsel %vm979, %v1665, 0
    %v1743 = vsel %vm979, %v1670, 0
    %v1746 = vsel %vm979, %v1675, 0
    %v1749 = vsel %vm979, %v1680, 0
    %v1752 = vsel %vm979, %v1685, 0
    %v1755 = vsel %vm979, %v1690, 0
    %v1758 = vsel %vm979, %v1695, 0
    %v1761 = vsel %vm979, %v1700, 0
    %v1764 = vsel %vm979, %v1705, 0
    %v1767 = vsel %vm979, %v1710, 0
    %v1770 = vsel %vm979, %v1715, 0
    %v1773 = vsel %vm979, %v1720, 0
    %v1776 = vsel %vm979, %v1725, 0
    %v1779 = vsel %vm1028, %v1729, 0
    %1781 = vmatprep.subr.mxu0 0.0
    %1782 = vmatpush1.msra.mxu0 %v1779
    %1783 = vmatprep.subr.mxu0 0.0
    %1784 = vmatpush1.msra.mxu0 0.0
    %1785 = vmatprep.subr.mxu0 0.0
    %1786 = vmatpush1.msra.mxu0 0.0
    %1787 = vmatprep.subr.mxu0 0.0
    %1788 = vmatpush1.msra.mxu0 0.0
    %1789 = vmatprep.subr.mxu0 0.0
    %1790 = vmatpush1.msra.mxu0 0.0
    %1791 = vmatprep.subr.mxu0 0.0
    %1792 = vmatpush1.msra.mxu0 0.0
    %1793 = vmatprep.subr.mxu0 0.0
    %1794 = vmatpush1.msra.mxu0 0.0
    %1795 = vmatprep.subr.mxu0 0.0
    %1796 = vmatpush1.msra.mxu0 0.0
    %1797 = vmatprep.subr.mxu0 0.0
    %1798 = vmatpush1.msra.mxu0 0.0
    %1799 = vmatprep.subr.mxu0 0.0
    %1800 = vmatpush1.msra.mxu0 0.0
    %1801 = vmatprep.subr.mxu0 0.0
    %1802 = vmatpush1.msra.mxu0 0.0
    %1803 = vmatprep.subr.mxu0 0.0
    %1804 = vmatpush1.msra.mxu0 0.0
    %1805 = vmatprep.subr.mxu0 0.0
    %1806 = vmatpush1.msra.mxu0 0.0
    %1807 = vmatprep.subr.mxu0 0.0
    %1808 = vmatpush1.msra.mxu0 0.0
    %1809 = vmatprep.subr.mxu0 0.0
    %1810 = vmatpush1.msra.mxu0 0.0
    %1811 = vmatprep.subr.mxu0 0.0
    %1812 = vmatpush1.msra.mxu0 0.0
    %1813 = vmatprep.subr.mxu0 0.0
    %1814 = vmatpush1.msra.mxu0 0.0
    %1815 = vmatprep.subr.mxu0 0.0
    %1816 = vmatpush1.msra.mxu0 0.0
    %1817 = vmatprep.subr.mxu0 0.0
    %1818 = vmatpush1.msra.mxu0 0.0
    %1819 = vmatprep.subr.mxu0 0.0
    %1820 = vmatpush1.msra.mxu0 0.0
    %1821 = vmatprep.subr.mxu0 0.0
    %1822 = vmatpush1.msra.mxu0 0.0
    %1823 = vmatprep.subr.mxu0 0.0
    %1824 = vmatpush1.msra.mxu0 0.0
    %1825 = vmatprep.subr.mxu0 0.0
    %1826 = vmatpush1.msra.mxu0 0.0
    %1827 = vmatprep.subr.mxu0 0.0
    %1828 = vmatpush1.msra.mxu0 0.0
    %1829 = vmatprep.subr.mxu0 0.0
    %1830 = vmatpush1.msra.mxu0 0.0
    %1831 = vmatprep.subr.mxu0 0.0
    %1832 = vmatpush1.msra.mxu0 0.0
    %1833 = vmatprep.subr.mxu0 0.0
    %1834 = vmatpush1.msra.mxu0 0.0
    %1835 = vmatprep.subr.mxu0 0.0
    %1836 = vmatpush1.msra.mxu0 0.0
    %1837 = vmatprep.subr.mxu0 0.0
    %1838 = vmatpush1.msra.mxu0 0.0
    %1839 = vmatprep.subr.mxu0 0.0
    %1840 = vmatpush1.msra.mxu0 0.0
    %1841 = vmatprep.subr.mxu0 0.0
    %1842 = vmatpush1.msra.mxu0 0.0
    %1843 = vmatprep.subr.mxu0 0.0
    %1844 = vmatpush1.msra.mxu0 0.0
    %1845 = vmatprep.mubr.f32.mxu0 0.0
    %1846 = vmatmul.mubr.f32.gmra.mrb[0].mxu0 %v1731
    %v1847 = vpop.f32.mrb[0].mxu0
    %v1848 = vadd.f32 0.0, %v1847
    %v1849 = vpop.f32.mrb[0].mxu0
    %1850 = vmatprep.mubr.f32.mxu0 0.0
    %1851 = vmatmul.mubr.f32.gmra.mrb[0].mxu0 %v1734
    %v1852 = vpop.f32.mrb[0].mxu0
    %v1853 = vadd.f32 0.0, %v1852
    %v1854 = vpop.f32.mrb[0].mxu0
    %1855 = vmatprep.mubr.f32.mxu0 0.0
    %1856 = vmatmul.mubr.f32.gmra.mrb[0].mxu0 %v1737
    %v1857 = vpop.f32.mrb[0].mxu0
    %v1858 = vadd.f32 0.0, %v1857
    %v1859 = vpop.f32.mrb[0].mxu0
    %1860 = vmatprep.mubr.f32.mxu0 0.0
    %1861 = vmatmul.mubr.f32.gmra.mrb[0].mxu0 %v1740
    %v1862 = vpop.f32.mrb[0].mxu0
    %v1863 = vadd.f32 0.0, %v1862
    %v1864 = vpop.f32.mrb[0].mxu0
    %1865 = vmatprep.mubr.f32.mxu0 0.0
    %1866 = vmatmul.mubr.f32.gmra.mrb[0].mxu0 %v1743
    %v1867 = vpop.f32.mrb[0].mxu0
    %v1868 = vadd.f32 0.0, %v1867
    %v1869 = vpop.f32.mrb[0].mxu0
    %1870 = vmatprep.mubr.f32.mxu0 0.0
    %1871 = vmatmul.mubr.f32.gmra.mrb[0].mxu0 %v1746
    %v1872 = vpop.f32.mrb[0].mxu0
    %v1873 = vadd.f32 0.0, %v1872
    %v1874 = vpop.f32.mrb[0].mxu0
    %1875 = vmatprep.mubr.f32.mxu0 0.0
    %1876 = vmatmul.mubr.f32.gmra.mrb[0].mxu0 %v1749
    %v1877 = vpop.f32.mrb[0].mxu0
    %v1878 = vadd.f32 0.0, %v1877
    %v1879 = vpop.f32.mrb[0].mxu0
    %1880 = vmatprep.mubr.f32.mxu0 0.0
    %1881 = vmatmul.mubr.f32.gmra.mrb[0].mxu0 %v1752
    %v1882 = vpop.f32.mrb[0].mxu0
    %v1883 = vadd.f32 0.0, %v1882
    %v1884 = vpop.f32.mrb[0].mxu0
    %1885 = vmatprep.mubr.f32.mxu0 0.0
    %1886 = vmatmul.mubr.f32.gmra.mrb[0].mxu0 %v1755
    %v1887 = vpop.f32.mrb[0].mxu0
    %v1888 = vadd.f32 0.0, %v1887
    %v1889 = vpop.f32.mrb[0].mxu0
    %1890 = vmatprep.mubr.f32.mxu0 0.0
    %1891 = vmatmul.mubr.f32.gmra.mrb[0].mxu0 %v1758
    %v1892 = vpop.f32.mrb[0].mxu0
    %v1893 = vadd.f32 0.0, %v1892
    %v1894 = vpop.f32.mrb[0].mxu0
    %1895 = vmatprep.mubr.f32.mxu0 0.0
    %1896 = vmatmul.mubr.f32.gmra.mrb[0].mxu0 %v1761
    %v1897 = vpop.f32.mrb[0].mxu0
    %v1898 = vadd.f32 0.0, %v1897
    %v1899 = vpop.f32.mrb[0].mxu0
    %1900 = vmatprep.mubr.f32.mxu0 0.0
    %1901 = vmatmul.mubr.f32.gmra.mrb[0].mxu0 %v1764
    %v1902 = vpop.f32.mrb[0].mxu0
    %v1903 = vadd.f32 0.0, %v1902
    %v1904 = vpop.f32.mrb[0].mxu0
    %1905 = vmatprep.mubr.f32.mxu0 0.0
    %1906 = vmatmul.mubr.f32.gmra.mrb[0].mxu0 %v1767
    %v1907 = vpop.f32.mrb[0].mxu0
    %v1908 = vadd.f32 0.0, %v1907
    %v1909 = vpop.f32.mrb[0].mxu0
    %1910 = vmatprep.mubr.f32.mxu0 0.0
    %1911 = vmatmul.mubr.f32.gmra.mrb[0].mxu0 %v1770
    %v1912 = vpop.f32.mrb[0].mxu0
    %v1913 = vadd.f32 0.0, %v1912
    %v1914 = vpop.f32.mrb[0].mxu0
    %1915 = vmatprep.mubr.f32.mxu0 0.0
    %1916 = vmatmul.mubr.f32.gmra.mrb[0].mxu0 %v1773
    %v1917 = vpop.f32.mrb[0].mxu0
    %v1918 = vadd.f32 0.0, %v1917
    %v1919 = vpop.f32.mrb[0].mxu0
    %1920 = vmatprep.mubr.f32.mxu0 0.0
    %1921 = vmatmul.mubr.f32.gmra.mrb[0].mxu0 %v1776
    %v1922 = vpop.f32.mrb[0].mxu0
    %v1923 = vadd.f32 0.0, %v1922
    %v1924 = vpop.f32.mrb[0].mxu0
    %1925 = vdwg.mxu0
    %v1926 = vadd.f32 %v1295, %v1848
    %v1927 = vadd.f32 %v1300, %v1853
    %v1928 = vadd.f32 %v1305, %v1858
    %v1929 = vadd.f32 %v1310, %v1863
    %v1930 = vadd.f32 %v1315, %v1868
    %v1931 = vadd.f32 %v1320, %v1873
    %v1932 = vadd.f32 %v1325, %v1878
    %v1933 = vadd.f32 %v1330, %v1883
    %v1934 = vadd.f32 %v1335, %v1888
    %v1935 = vadd.f32 %v1340, %v1893
    %v1936 = vadd.f32 %v1345, %v1898
    %v1937 = vadd.f32 %v1350, %v1903
    %v1938 = vadd.f32 %v1355, %v1908
    %v1939 = vadd.f32 %v1360, %v1913
    %v1940 = vadd.f32 %v1365, %v1918
    %v1941 = vadd.f32 %v1370, %v1923
    %s1942 = scalar_lea.vmem [#allocation5], 1536
    %v1943 = vld [vmem:[%s1942] sm:$0xff]
    %v1944 = vld [vmem:[%s1942 + $0x8] sm:$0xff]
    %v1945 = vld [vmem:[%s1942 + $0x10] sm:$0xff]
    %v1946 = vld [vmem:[%s1942 + $0x18] sm:$0xff]
    %v1947 = vld [vmem:[%s1942 + $0x20] sm:$0xff]
    %v1948 = vld [vmem:[%s1942 + $0x28] sm:$0xff]
    %v1949 = vld [vmem:[%s1942 + $0x30] sm:$0xff]
    %v1950 = vld [vmem:[%s1942 + $0x38] sm:$0xff]
    %v1951 = vld [vmem:[%s1942 + $0x40] sm:$0xff]
    %v1952 = vld [vmem:[%s1942 + $0x48] sm:$0xff]
    %v1953 = vld [vmem:[%s1942 + $0x50] sm:$0xff]
    %v1954 = vld [vmem:[%s1942 + $0x58] sm:$0xff]
    %v1955 = vld [vmem:[%s1942 + $0x60] sm:$0xff]
    %v1956 = vld [vmem:[%s1942 + $0x68] sm:$0xff]
    %v1957 = vld [vmem:[%s1942 + $0x70] sm:$0xff]
    %v1958 = vld [vmem:[%s1942 + $0x78] sm:$0xff]
    %v1959 = vld [vmem:[%s1942 + $0x80] sm:$0xff]
    %v1960 = vld [vmem:[%s1942 + $0x88] sm:$0xff]
    %v1961 = vld [vmem:[%s1942 + $0x90] sm:$0xff]
    %v1962 = vld [vmem:[%s1942 + $0x98] sm:$0xff]
    %v1963 = vld [vmem:[%s1942 + $0xa0] sm:$0xff]
    %v1964 = vld [vmem:[%s1942 + $0xa8] sm:$0xff]
    %v1965 = vld [vmem:[%s1942 + $0xb0] sm:$0xff]
    %v1966 = vld [vmem:[%s1942 + $0xb8] sm:$0xff]
    %v1967 = vld [vmem:[%s1942 + $0xc0] sm:$0xff]
    %v1968 = vld [vmem:[%s1942 + $0xc8] sm:$0xff]
    %v1969 = vld [vmem:[%s1942 + $0xd0] sm:$0xff]
    %v1970 = vld [vmem:[%s1942 + $0xd8] sm:$0xff]
    %v1971 = vld [vmem:[%s1942 + $0xe0] sm:$0xff]
    %v1972 = vld [vmem:[%s1942 + $0xe8] sm:$0xff]
    %v1973 = vld [vmem:[%s1942 + $0xf0] sm:$0xff]
    %v1974 = vld [vmem:[%s1942 + $0xf8] sm:$0xff]
    %v1975 = vld [vmem:[%s1942 + $0x100] sm:$0xff]
    %v1976 = vld [vmem:[%s1942 + $0x108] sm:$0xff]
    %v1977 = vld [vmem:[%s1942 + $0x110] sm:$0xff]
    %v1978 = vld [vmem:[%s1942 + $0x118] sm:$0xff]
    %v1979 = vld [vmem:[%s1942 + $0x120] sm:$0xff]
    %v1980 = vld [vmem:[%s1942 + $0x128] sm:$0xff]
    %v1981 = vld [vmem:[%s1942 + $0x130] sm:$0xff]
    %v1982 = vld [vmem:[%s1942 + $0x138] sm:$0xff]
    %v1983 = vld [vmem:[%s1942 + $0x140] sm:$0xff]
    %v1984 = vld [vmem:[%s1942 + $0x148] sm:$0xff]
    %v1985 = vld [vmem:[%s1942 + $0x150] sm:$0xff]
    %v1986 = vld [vmem:[%s1942 + $0x158] sm:$0xff]
    %v1987 = vld [vmem:[%s1942 + $0x160] sm:$0xff]
    %v1988 = vld [vmem:[%s1942 + $0x168] sm:$0xff]
    %v1989 = vld [vmem:[%s1942 + $0x170] sm:$0xff]
    %v1990 = vld [vmem:[%s1942 + $0x178] sm:$0xff]
    %v1991 = vld [vmem:[%s1942 + $0x180] sm:$0xff]
    %v1992 = vld [vmem:[%s1942 + $0x188] sm:$0xff]
    %v1993 = vld [vmem:[%s1942 + $0x190] sm:$0xff]
    %v1994 = vld [vmem:[%s1942 + $0x198] sm:$0xff]
    %v1995 = vld [vmem:[%s1942 + $0x1a0] sm:$0xff]
    %v1996 = vld [vmem:[%s1942 + $0x1a8] sm:$0xff]
    %v1997 = vld [vmem:[%s1942 + $0x1b0] sm:$0xff]
    %v1998 = vld [vmem:[%s1942 + $0x1b8] sm:$0xff]
    %v1999 = vld [vmem:[%s1942 + $0x1c0] sm:$0xff]
    %v2000 = vld [vmem:[%s1942 + $0x1c8] sm:$0xff]
    %v2001 = vld [vmem:[%s1942 + $0x1d0] sm:$0xff]
    %v2002 = vld [vmem:[%s1942 + $0x1d8] sm:$0xff]
    %v2003 = vld [vmem:[%s1942 + $0x1e0] sm:$0xff]
    %v2004 = vld [vmem:[%s1942 + $0x1e8] sm:$0xff]
    %v2005 = vld [vmem:[%s1942 + $0x1f0] sm:$0xff]
    %v2006 = vld [vmem:[%s1942 + $0x1f8] sm:$0xff]
    %2007 = vmatprep.subr.mxu0 0.0
    %2008 = vmatpush1.msra.mxu0 %v203
    %2009 = vmatprep.subr.mxu0 0.0
    %2010 = vmatpush1.msra.mxu0 %v204
    %2011 = vmatprep.subr.mxu0 0.0
    %2012 = vmatpush1.msra.mxu0 %v205
    %2013 = vmatprep.subr.mxu0 0.0
    %2014 = vmatpush1.msra.mxu0 %v206
    %2015 = vmatprep.subr.mxu0 0.0
    %2016 = vmatpush1.msra.mxu0 %v207
    %2017 = vmatprep.subr.mxu0 0.0
    %2018 = vmatpush1.msra.mxu0 %v208
    %2019 = vmatprep.subr.mxu0 0.0
    %2020 = vmatpush1.msra.mxu0 %v209
    %2021 = vmatprep.subr.mxu0 0.0
    %2022 = vmatpush1.msra.mxu0 %v210
    %2023 = vmatprep.subr.mxu0 0.0
    %2024 = vmatpush1.msra.mxu0 %v211
    %2025 = vmatprep.subr.mxu0 0.0
    %2026 = vmatpush1.msra.mxu0 %v212
    %2027 = vmatprep.subr.mxu0 0.0
    %2028 = vmatpush1.msra.mxu0 %v213
    %2029 = vmatprep.subr.mxu0 0.0
    %2030 = vmatpush1.msra.mxu0 %v214
    %2031 = vmatprep.subr.mxu0 0.0
    %2032 = vmatpush1.msra.mxu0 %v215
    %2033 = vmatprep.subr.mxu0 0.0
    %2034 = vmatpush1.msra.mxu0 %v216
    %2035 = vmatprep.subr.mxu0 0.0
    %2036 = vmatpush1.msra.mxu0 %v217
    %2037 = vmatprep.subr.mxu0 0.0
    %2038 = vmatpush1.msra.mxu0 %v218
    %2039 = vmatprep.subr.mxu0 0.0
    %2040 = vmatpush1.msra.mxu0 %v219
    %2041 = vmatprep.subr.mxu0 0.0
    %2042 = vmatpush1.msra.mxu0 %v220
    %2043 = vmatprep.subr.mxu0 0.0
    %2044 = vmatpush1.msra.mxu0 %v221
    %2045 = vmatprep.subr.mxu0 0.0
    %2046 = vmatpush1.msra.mxu0 %v222
    %2047 = vmatprep.subr.mxu0 0.0
    %2048 = vmatpush1.msra.mxu0 %v223
    %2049 = vmatprep.subr.mxu0 0.0
    %2050 = vmatpush1.msra.mxu0 %v224
    %2051 = vmatprep.subr.mxu0 0.0
    %2052 = vmatpush1.msra.mxu0 %v225
    %2053 = vmatprep.subr.mxu0 0.0
    %2054 = vmatpush1.msra.mxu0 %v226
    %2055 = vmatprep.subr.mxu0 0.0
    %2056 = vmatpush1.msra.mxu0 %v227
    %2057 = vmatprep.subr.mxu0 0.0
    %2058 = vmatpush1.msra.mxu0 %v228
    %2059 = vmatprep.subr.mxu0 0.0
    %2060 = vmatpush1.msra.mxu0 %v229
    %2061 = vmatprep.subr.mxu0 0.0
    %2062 = vmatpush1.msra.mxu0 %v230
    %2063 = vmatprep.subr.mxu0 0.0
    %2064 = vmatpush1.msra.mxu0 %v231
    %2065 = vmatprep.subr.mxu0 0.0
    %2066 = vmatpush1.msra.mxu0 %v232
    %2067 = vmatprep.subr.mxu0 0.0
    %2068 = vmatpush1.msra.mxu0 %v233
    %2069 = vmatprep.subr.mxu0 0.0
    %2070 = vmatpush1.msra.mxu0 %v234
    %2071 = vmatprep.mubr.f32.mxu0 %v1944
    %2072 = vmatmul.mubr.f32.gmra.mrb[0].mxu0 %v1943
    %v2073 = vpop.f32.mrb[0].mxu0
    %v2074 = vadd.f32 0.0, %v2073
    %v2075 = vpop.f32.mrb[0].mxu0
    %2076 = vmatprep.mubr.f32.mxu0 %v1948
    %2077 = vmatmul.mubr.f32.gmra.mrb[0].mxu0 %v1947
    %v2078 = vpop.f32.mrb[0].mxu0
    %v2079 = vadd.f32 0.0, %v2078
    %v2080 = vpop.f32.mrb[0].mxu0
    %2081 = vmatprep.mubr.f32.mxu0 %v1952
    %2082 = vmatmul.mubr.f32.gmra.mrb[0].mxu0 %v1951
    %v2083 = vpop.f32.mrb[0].mxu0
    %v2084 = vadd.f32 0.0, %v2083
    %v2085 = vpop.f32.mrb[0].mxu0
    %2086 = vmatprep.mubr.f32.mxu0 %v1956
    %2087 = vmatmul.mubr.f32.gmra.mrb[0].mxu0 %v1955
    %v2088 = vpop.f32.mrb[0].mxu0
    %v2089 = vadd.f32 0.0, %v2088
    %v2090 = vpop.f32.mrb[0].mxu0
    %2091 = vmatprep.mubr.f32.mxu0 %v1960
    %2092 = vmatmul.mubr.f32.gmra.mrb[0].mxu0 %v1959
    %v2093 = vpop.f32.mrb[0].mxu0
    %v2094 = vadd.f32 0.0, %v2093
    %v2095 = vpop.f32.mrb[0].mxu0
    %2096 = vmatprep.mubr.f32.mxu0 %v1964
    %2097 = vmatmul.mubr.f32.gmra.mrb[0].mxu0 %v1963
    %v2098 = vpop.f32.mrb[0].mxu0
    %v2099 = vadd.f32 0.0, %v2098
    %v2100 = vpop.f32.mrb[0].mxu0
    %2101 = vmatprep.mubr.f32.mxu0 %v1968
    %2102 = vmatmul.mubr.f32.gmra.mrb[0].mxu0 %v1967
    %v2103 = vpop.f32.mrb[0].mxu0
    %v2104 = vadd.f32 0.0, %v2103
    %v2105 = vpop.f32.mrb[0].mxu0
    %2106 = vmatprep.mubr.f32.mxu0 %v1972
    %2107 = vmatmul.mubr.f32.gmra.mrb[0].mxu0 %v1971
    %v2108 = vpop.f32.mrb[0].mxu0
    %v2109 = vadd.f32 0.0, %v2108
    %v2110 = vpop.f32.mrb[0].mxu0
    %2111 = vmatprep.mubr.f32.mxu0 %v1976
    %2112 = vmatmul.mubr.f32.gmra.mrb[0].mxu0 %v1975
    %v2113 = vpop.f32.mrb[0].mxu0
    %v2114 = vadd.f32 0.0, %v2113
    %v2115 = vpop.f32.mrb[0].mxu0
    %2116 = vmatprep.mubr.f32.mxu0 %v1980
    %2117 = vmatmul.mubr.f32.gmra.mrb[0].mxu0 %v1979
    %v2118 = vpop.f32.mrb[0].mxu0
    %v2119 = vadd.f32 0.0, %v2118
    %v2120 = vpop.f32.mrb[0].mxu0
    %2121 = vmatprep.mubr.f32.mxu0 %v1984
    %2122 = vmatmul.mubr.f32.gmra.mrb[0].mxu0 %v1983
    %v2123 = vpop.f32.mrb[0].mxu0
    %v2124 = vadd.f32 0.0, %v2123
    %v2125 = vpop.f32.mrb[0].mxu0
    %2126 = vmatprep.mubr.f32.mxu0 %v1988
    %2127 = vmatmul.mubr.f32.gmra.mrb[0].mxu0 %v1987
    %v2128 = vpop.f32.mrb[0].mxu0
    %v2129 = vadd.f32 0.0, %v2128
    %v2130 = vpop.f32.mrb[0].mxu0
    %2131 = vmatprep.mubr.f32.mxu0 %v1992
    %2132 = vmatmul.mubr.f32.gmra.mrb[0].mxu0 %v1991
    %v2133 = vpop.f32.mrb[0].mxu0
    %v2134 = vadd.f32 0.0, %v2133
    %v2135 = vpop.f32.mrb[0].mxu0
    %2136 = vmatprep.mubr.f32.mxu0 %v1996
    %2137 = vmatmul.mubr.f32.gmra.mrb[0].mxu0 %v1995
    %v2138 = vpop.f32.mrb[0].mxu0
    %v2139 = vadd.f32 0.0, %v2138
    %v2140 = vpop.f32.mrb[0].mxu0
    %2141 = vmatprep.mubr.f32.mxu0 %v2000
    %2142 = vmatmul.mubr.f32.gmra.mrb[0].mxu0 %v1999
    %v2143 = vpop.f32.mrb[0].mxu0
    %v2144 = vadd.f32 0.0, %v2143
    %v2145 = vpop.f32.mrb[0].mxu0
    %2146 = vmatprep.mubr.f32.mxu0 %v2004
    %2147 = vmatmul.mubr.f32.gmra.mrb[0].mxu0 %v2003
    %v2148 = vpop.f32.mrb[0].mxu0
    %v2149 = vadd.f32 0.0, %v2148
    %v2150 = vpop.f32.mrb[0].mxu0
    %2151 = vdwg.mxu0
    %2152 = vmatprep.subr.mxu0 0.0
    %2153 = vmatpush1.msra.mxu0 %v235
    %2154 = vmatprep.subr.mxu0 0.0
    %2155 = vmatpush1.msra.mxu0 %v236
    %2156 = vmatprep.subr.mxu0 0.0
    %2157 = vmatpush1.msra.mxu0 %v237
    %2158 = vmatprep.subr.mxu0 0.0
    %2159 = vmatpush1.msra.mxu0 %v238
    %2160 = vmatprep.subr.mxu0 0.0
    %2161 = vmatpush1.msra.mxu0 %v239
    %2162 = vmatprep.subr.mxu0 0.0
    %2163 = vmatpush1.msra.mxu0 %v240
    %2164 = vmatprep.subr.mxu0 0.0
    %2165 = vmatpush1.msra.mxu0 %v241
    %2166 = vmatprep.subr.mxu0 0.0
    %2167 = vmatpush1.msra.mxu0 %v242
    %2168 = vmatprep.subr.mxu0 0.0
    %2169 = vmatpush1.msra.mxu0 %v243
    %2170 = vmatprep.subr.mxu0 0.0
    %2171 = vmatpush1.msra.mxu0 %v244
    %2172 = vmatprep.subr.mxu0 0.0
    %2173 = vmatpush1.msra.mxu0 %v245
    %2174 = vmatprep.subr.mxu0 0.0
    %2175 = vmatpush1.msra.mxu0 %v246
    %2176 = vmatprep.subr.mxu0 0.0
    %2177 = vmatpush1.msra.mxu0 %v247
    %2178 = vmatprep.subr.mxu0 0.0
    %2179 = vmatpush1.msra.mxu0 %v248
    %2180 = vmatprep.subr.mxu0 0.0
    %2181 = vmatpush1.msra.mxu0 %v249
    %2182 = vmatprep.subr.mxu0 0.0
    %2183 = vmatpush1.msra.mxu0 %v250
    %2184 = vmatprep.subr.mxu0 0.0
    %2185 = vmatpush1.msra.mxu0 %v251
    %2186 = vmatprep.subr.mxu0 0.0
    %2187 = vmatpush1.msra.mxu0 %v252
    %2188 = vmatprep.subr.mxu0 0.0
    %2189 = vmatpush1.msra.mxu0 %v253
    %2190 = vmatprep.subr.mxu0 0.0
    %2191 = vmatpush1.msra.mxu0 %v254
    %2192 = vmatprep.subr.mxu0 0.0
    %2193 = vmatpush1.msra.mxu0 %v255
    %2194 = vmatprep.subr.mxu0 0.0
    %2195 = vmatpush1.msra.mxu0 %v256
    %2196 = vmatprep.subr.mxu0 0.0
    %2197 = vmatpush1.msra.mxu0 %v257
    %2198 = vmatprep.subr.mxu0 0.0
    %2199 = vmatpush1.msra.mxu0 %v258
    %2200 = vmatprep.subr.mxu0 0.0
    %2201 = vmatpush1.msra.mxu0 %v259
    %2202 = vmatprep.subr.mxu0 0.0
    %2203 = vmatpush1.msra.mxu0 %v260
    %2204 = vmatprep.subr.mxu0 0.0
    %2205 = vmatpush1.msra.mxu0 %v261
    %2206 = vmatprep.subr.mxu0 0.0
    %2207 = vmatpush1.msra.mxu0 %v262
    %2208 = vmatprep.subr.mxu0 0.0
    %2209 = vmatpush1.msra.mxu0 %v263
    %2210 = vmatprep.subr.mxu0 0.0
    %2211 = vmatpush1.msra.mxu0 %v264
    %2212 = vmatprep.subr.mxu0 0.0
    %2213 = vmatpush1.msra.mxu0 %v265
    %2214 = vmatprep.subr.mxu0 0.0
    %2215 = vmatpush1.msra.mxu0 %v266
    %2216 = vmatprep.mubr.f32.mxu0 %v1946
    %2217 = vmatmul.mubr.f32.gmra.mrb[0].mxu0 %v1945
    %v2218 = vpop.f32.mrb[0].mxu0
    %v2219 = vadd.f32 %v2074, %v2218
    %v2220 = vpop.f32.mrb[0].mxu0
    %2221 = vmatprep.mubr.f32.mxu0 %v1950
    %2222 = vmatmul.mubr.f32.gmra.mrb[0].mxu0 %v1949
    %v2223 = vpop.f32.mrb[0].mxu0
    %v2224 = vadd.f32 %v2079, %v2223
    %v2225 = vpop.f32.mrb[0].mxu0
    %2226 = vmatprep.mubr.f32.mxu0 %v1954
    %2227 = vmatmul.mubr.f32.gmra.mrb[0].mxu0 %v1953
    %v2228 = vpop.f32.mrb[0].mxu0
    %v2229 = vadd.f32 %v2084, %v2228
    %v2230 = vpop.f32.mrb[0].mxu0
    %2231 = vmatprep.mubr.f32.mxu0 %v1958
    %2232 = vmatmul.mubr.f32.gmra.mrb[0].mxu0 %v1957
    %v2233 = vpop.f32.mrb[0].mxu0
    %v2234 = vadd.f32 %v2089, %v2233
    %v2235 = vpop.f32.mrb[0].mxu0
    %2236 = vmatprep.mubr.f32.mxu0 %v1962
    %2237 = vmatmul.mubr.f32.gmra.mrb[0].mxu0 %v1961
    %v2238 = vpop.f32.mrb[0].mxu0
    %v2239 = vadd.f32 %v2094, %v2238
    %v2240 = vpop.f32.mrb[0].mxu0
    %2241 = vmatprep.mubr.f32.mxu0 %v1966
    %2242 = vmatmul.mubr.f32.gmra.mrb[0].mxu0 %v1965
    %v2243 = vpop.f32.mrb[0].mxu0
    %v2244 = vadd.f32 %v2099, %v2243
    %v2245 = vpop.f32.mrb[0].mxu0
    %2246 = vmatprep.mubr.f32.mxu0 %v1970
    %2247 = vmatmul.mubr.f32.gmra.mrb[0].mxu0 %v1969
    %v2248 = vpop.f32.mrb[0].mxu0
    %v2249 = vadd.f32 %v2104, %v2248
    %v2250 = vpop.f32.mrb[0].mxu0
    %2251 = vmatprep.mubr.f32.mxu0 %v1974
    %2252 = vmatmul.mubr.f32.gmra.mrb[0].mxu0 %v1973
    %v2253 = vpop.f32.mrb[0].mxu0
    %v2254 = vadd.f32 %v2109, %v2253
    %v2255 = vpop.f32.mrb[0].mxu0
    %2256 = vmatprep.mubr.f32.mxu0 %v1978
    %2257 = vmatmul.mubr.f32.gmra.mrb[0].mxu0 %v1977
    %v2258 = vpop.f32.mrb[0].mxu0
    %v2259 = vadd.f32 %v2114, %v2258
    %v2260 = vpop.f32.mrb[0].mxu0
    %2261 = vmatprep.mubr.f32.mxu0 %v1982
    %2262 = vmatmul.mubr.f32.gmra.mrb[0].mxu0 %v1981
    %v2263 = vpop.f32.mrb[0].mxu0
    %v2264 = vadd.f32 %v2119, %v2263
    %v2265 = vpop.f32.mrb[0].mxu0
    %2266 = vmatprep.mubr.f32.mxu0 %v1986
    %2267 = vmatmul.mubr.f32.gmra.mrb[0].mxu0 %v1985
    %v2268 = vpop.f32.mrb[0].mxu0
    %v2269 = vadd.f32 %v2124, %v2268
    %v2270 = vpop.f32.mrb[0].mxu0
    %2271 = vmatprep.mubr.f32.mxu0 %v1990
    %2272 = vmatmul.mubr.f32.gmra.mrb[0].mxu0 %v1989
    %v2273 = vpop.f32.mrb[0].mxu0
    %v2274 = vadd.f32 %v2129, %v2273
    %v2275 = vpop.f32.mrb[0].mxu0
    %2276 = vmatprep.mubr.f32.mxu0 %v1994
    %2277 = vmatmul.mubr.f32.gmra.mrb[0].mxu0 %v1993
    %v2278 = vpop.f32.mrb[0].mxu0
    %v2279 = vadd.f32 %v2134, %v2278
    %v2280 = vpop.f32.mrb[0].mxu0
    %2281 = vmatprep.mubr.f32.mxu0 %v1998
    %2282 = vmatmul.mubr.f32.gmra.mrb[0].mxu0 %v1997
    %v2283 = vpop.f32.mrb[0].mxu0
    %v2284 = vadd.f32 %v2139, %v2283
    %v2285 = vpop.f32.mrb[0].mxu0
    %2286 = vmatprep.mubr.f32.mxu0 %v2002
    %2287 = vmatmul.mubr.f32.gmra.mrb[0].mxu0 %v2001
    %v2288 = vpop.f32.mrb[0].mxu0
    %v2289 = vadd.f32 %v2144, %v2288
    %v2290 = vpop.f32.mrb[0].mxu0
    %2291 = vmatprep.mubr.f32.mxu0 %v2006
    %2292 = vmatmul.mubr.f32.gmra.mrb[0].mxu0 %v2005
    %v2293 = vpop.f32.mrb[0].mxu0
    %v2294 = vadd.f32 %v2149, %v2293
    %v2295 = vpop.f32.mrb[0].mxu0
    %2296 = vdwg.mxu0
    %s2297 = scalar_lea.vmem [#allocation10], 12
    %v2298 = vld [vmem:[%s2297] sm:$0xf]
    %v2300 = vsel %vm979, %v2219, 0
    %v2303 = vsel %vm979, %v2224, 0
    %v2306 = vsel %vm979, %v2229, 0
    %v2309 = vsel %vm979, %v2234, 0
    %v2312 = vsel %vm979, %v2239, 0
    %v2315 = vsel %vm979, %v2244, 0
    %v2318 = vsel %vm979, %v2249, 0
    %v2321 = vsel %vm979, %v2254, 0
    %v2324 = vsel %vm979, %v2259, 0
    %v2327 = vsel %vm979, %v2264, 0
    %v2330 = vsel %vm979, %v2269, 0
    %v2333 = vsel %vm979, %v2274, 0
    %v2336 = vsel %vm979, %v2279, 0
    %v2339 = vsel %vm979, %v2284, 0
    %v2342 = vsel %vm979, %v2289, 0
    %v2345 = vsel %vm979, %v2294, 0
    %v2348 = vsel %vm1028, %v2298, 0
    %2350 = vmatprep.subr.mxu0 0.0
    %2351 = vmatpush1.msra.mxu0 %v2348
    %2352 = vmatprep.subr.mxu0 0.0
    %2353 = vmatpush1.msra.mxu0 0.0
    %2354 = vmatprep.subr.mxu0 0.0
    %2355 = vmatpush1.msra.mxu0 0.0
    %2356 = vmatprep.subr.mxu0 0.0
    %2357 = vmatpush1.msra.mxu0 0.0
    %2358 = vmatprep.subr.mxu0 0.0
    %2359 = vmatpush1.msra.mxu0 0.0
    %2360 = vmatprep.subr.mxu0 0.0
    %2361 = vmatpush1.msra.mxu0 0.0
    %2362 = vmatprep.subr.mxu0 0.0
    %2363 = vmatpush1.msra.mxu0 0.0
    %2364 = vmatprep.subr.mxu0 0.0
    %2365 = vmatpush1.msra.mxu0 0.0
    %2366 = vmatprep.subr.mxu0 0.0
    %2367 = vmatpush1.msra.mxu0 0.0
    %2368 = vmatprep.subr.mxu0 0.0
    %2369 = vmatpush1.msra.mxu0 0.0
    %2370 = vmatprep.subr.mxu0 0.0
    %2371 = vmatpush1.msra.mxu0 0.0
    %2372 = vmatprep.subr.mxu0 0.0
    %2373 = vmatpush1.msra.mxu0 0.0
    %2374 = vmatprep.subr.mxu0 0.0
    %2375 = vmatpush1.msra.mxu0 0.0
    %2376 = vmatprep.subr.mxu0 0.0
    %2377 = vmatpush1.msra.mxu0 0.0
    %2378 = vmatprep.subr.mxu0 0.0
    %2379 = vmatpush1.msra.mxu0 0.0
    %2380 = vmatprep.subr.mxu0 0.0
    %2381 = vmatpush1.msra.mxu0 0.0
    %2382 = vmatprep.subr.mxu0 0.0
    %2383 = vmatpush1.msra.mxu0 0.0
    %2384 = vmatprep.subr.mxu0 0.0
    %2385 = vmatpush1.msra.mxu0 0.0
    %2386 = vmatprep.subr.mxu0 0.0
    %2387 = vmatpush1.msra.mxu0 0.0
    %2388 = vmatprep.subr.mxu0 0.0
    %2389 = vmatpush1.msra.mxu0 0.0
    %2390 = vmatprep.subr.mxu0 0.0
    %2391 = vmatpush1.msra.mxu0 0.0
    %2392 = vmatprep.subr.mxu0 0.0
    %2393 = vmatpush1.msra.mxu0 0.0
    %2394 = vmatprep.subr.mxu0 0.0
    %2395 = vmatpush1.msra.mxu0 0.0
    %2396 = vmatprep.subr.mxu0 0.0
    %2397 = vmatpush1.msra.mxu0 0.0
    %2398 = vmatprep.subr.mxu0 0.0
    %2399 = vmatpush1.msra.mxu0 0.0
    %2400 = vmatprep.subr.mxu0 0.0
    %2401 = vmatpush1.msra.mxu0 0.0
    %2402 = vmatprep.subr.mxu0 0.0
    %2403 = vmatpush1.msra.mxu0 0.0
    %2404 = vmatprep.subr.mxu0 0.0
    %2405 = vmatpush1.msra.mxu0 0.0
    %2406 = vmatprep.subr.mxu0 0.0
    %2407 = vmatpush1.msra.mxu0 0.0
    %2408 = vmatprep.subr.mxu0 0.0
    %2409 = vmatpush1.msra.mxu0 0.0
    %2410 = vmatprep.subr.mxu0 0.0
    %2411 = vmatpush1.msra.mxu0 0.0
    %2412 = vmatprep.subr.mxu0 0.0
    %2413 = vmatpush1.msra.mxu0 0.0
    %2414 = vmatprep.mubr.f32.mxu0 0.0
    %2415 = vmatmul.mubr.f32.gmra.mrb[0].mxu0 %v2300
    %v2416 = vpop.f32.mrb[0].mxu0
    %v2417 = vadd.f32 0.0, %v2416
    %v2418 = vpop.f32.mrb[0].mxu0
    %2419 = vmatprep.mubr.f32.mxu0 0.0
    %2420 = vmatmul.mubr.f32.gmra.mrb[0].mxu0 %v2303
    %v2421 = vpop.f32.mrb[0].mxu0
    %v2422 = vadd.f32 0.0, %v2421
    %v2423 = vpop.f32.mrb[0].mxu0
    %2424 = vmatprep.mubr.f32.mxu0 0.0
    %2425 = vmatmul.mubr.f32.gmra.mrb[0].mxu0 %v2306
    %v2426 = vpop.f32.mrb[0].mxu0
    %v2427 = vadd.f32 0.0, %v2426
    %v2428 = vpop.f32.mrb[0].mxu0
    %2429 = vmatprep.mubr.f32.mxu0 0.0
    %2430 = vmatmul.mubr.f32.gmra.mrb[0].mxu0 %v2309
    %v2431 = vpop.f32.mrb[0].mxu0
    %v2432 = vadd.f32 0.0, %v2431
    %v2433 = vpop.f32.mrb[0].mxu0
    %2434 = vmatprep.mubr.f32.mxu0 0.0
    %2435 = vmatmul.mubr.f32.gmra.mrb[0].mxu0 %v2312
    %v2436 = vpop.f32.mrb[0].mxu0
    %v2437 = vadd.f32 0.0, %v2436
    %v2438 = vpop.f32.mrb[0].mxu0
    %2439 = vmatprep.mubr.f32.mxu0 0.0
    %2440 = vmatmul.mubr.f32.gmra.mrb[0].mxu0 %v2315
    %v2441 = vpop.f32.mrb[0].mxu0
    %v2442 = vadd.f32 0.0, %v2441
    %v2443 = vpop.f32.mrb[0].mxu0
    %2444 = vmatprep.mubr.f32.mxu0 0.0
    %2445 = vmatmul.mubr.f32.gmra.mrb[0].mxu0 %v2318
    %v2446 = vpop.f32.mrb[0].mxu0
    %v2447 = vadd.f32 0.0, %v2446
    %v2448 = vpop.f32.mrb[0].mxu0
    %2449 = vmatprep.mubr.f32.mxu0 0.0
    %2450 = vmatmul.mubr.f32.gmra.mrb[0].mxu0 %v2321
    %v2451 = vpop.f32.mrb[0].mxu0
    %v2452 = vadd.f32 0.0, %v2451
    %v2453 = vpop.f32.mrb[0].mxu0
    %2454 = vmatprep.mubr.f32.mxu0 0.0
    %2455 = vmatmul.mubr.f32.gmra.mrb[0].mxu0 %v2324
    %v2456 = vpop.f32.mrb[0].mxu0
    %v2457 = vadd.f32 0.0, %v2456
    %v2458 = vpop.f32.mrb[0].mxu0
    %2459 = vmatprep.mubr.f32.mxu0 0.0
    %2460 = vmatmul.mubr.f32.gmra.mrb[0].mxu0 %v2327
    %v2461 = vpop.f32.mrb[0].mxu0
    %v2462 = vadd.f32 0.0, %v2461
    %v2463 = vpop.f32.mrb[0].mxu0
    %2464 = vmatprep.mubr.f32.mxu0 0.0
    %2465 = vmatmul.mubr.f32.gmra.mrb[0].mxu0 %v2330
    %v2466 = vpop.f32.mrb[0].mxu0
    %v2467 = vadd.f32 0.0, %v2466
    %v2468 = vpop.f32.mrb[0].mxu0
    %2469 = vmatprep.mubr.f32.mxu0 0.0
    %2470 = vmatmul.mubr.f32.gmra.mrb[0].mxu0 %v2333
    %v2471 = vpop.f32.mrb[0].mxu0
    %v2472 = vadd.f32 0.0, %v2471
    %v2473 = vpop.f32.mrb[0].mxu0
    %2474 = vmatprep.mubr.f32.mxu0 0.0
    %2475 = vmatmul.mubr.f32.gmra.mrb[0].mxu0 %v2336
    %v2476 = vpop.f32.mrb[0].mxu0
    %v2477 = vadd.f32 0.0, %v2476
    %v2478 = vpop.f32.mrb[0].mxu0
    %2479 = vmatprep.mubr.f32.mxu0 0.0
    %2480 = vmatmul.mubr.f32.gmra.mrb[0].mxu0 %v2339
    %v2481 = vpop.f32.mrb[0].mxu0
    %v2482 = vadd.f32 0.0, %v2481
    %v2483 = vpop.f32.mrb[0].mxu0
    %2484 = vmatprep.mubr.f32.mxu0 0.0
    %2485 = vmatmul.mubr.f32.gmra.mrb[0].mxu0 %v2342
    %v2486 = vpop.f32.mrb[0].mxu0
    %v2487 = vadd.f32 0.0, %v2486
    %v2488 = vpop.f32.mrb[0].mxu0
    %2489 = vmatprep.mubr.f32.mxu0 0.0
    %2490 = vmatmul.mubr.f32.gmra.mrb[0].mxu0 %v2345
    %v2491 = vpop.f32.mrb[0].mxu0
    %v2492 = vadd.f32 0.0, %v2491
    %v2493 = vpop.f32.mrb[0].mxu0
    %2494 = vdwg.mxu0
    %v2495 = vadd.f32 %v1926, %v2417
    %v2496 = vadd.f32 %v1927, %v2422
    %v2497 = vadd.f32 %v1928, %v2427
    %v2498 = vadd.f32 %v1929, %v2432
    %v2499 = vadd.f32 %v1930, %v2437
    %v2500 = vadd.f32 %v1931, %v2442
    %v2501 = vadd.f32 %v1932, %v2447
    %v2502 = vadd.f32 %v1933, %v2452
    %v2503 = vadd.f32 %v1934, %v2457
    %v2504 = vadd.f32 %v1935, %v2462
    %v2505 = vadd.f32 %v1936, %v2467
    %v2506 = vadd.f32 %v1937, %v2472
    %v2507 = vadd.f32 %v1938, %v2477
    %v2508 = vadd.f32 %v1939, %v2482
    %v2509 = vadd.f32 %v1940, %v2487
    %v2510 = vadd.f32 %v1941, %v2492
    %s2511 = scalar_lea.vmem [#allocation5], 2048
    %v2512 = vld [vmem:[%s2511] sm:$0xff]
    %v2513 = vld [vmem:[%s2511 + $0x8] sm:$0xff]
    %v2514 = vld [vmem:[%s2511 + $0x10] sm:$0xff]
    %v2515 = vld [vmem:[%s2511 + $0x18] sm:$0xff]
    %v2516 = vld [vmem:[%s2511 + $0x20] sm:$0xff]
    %v2517 = vld [vmem:[%s2511 + $0x28] sm:$0xff]
    %v2518 = vld [vmem:[%s2511 + $0x30] sm:$0xff]
    %v2519 = vld [vmem:[%s2511 + $0x38] sm:$0xff]
    %v2520 = vld [vmem:[%s2511 + $0x40] sm:$0xff]
    %v2521 = vld [vmem:[%s2511 + $0x48] sm:$0xff]
    %v2522 = vld [vmem:[%s2511 + $0x50] sm:$0xff]
    %v2523 = vld [vmem:[%s2511 + $0x58] sm:$0xff]
    %v2524 = vld [vmem:[%s2511 + $0x60] sm:$0xff]
    %v2525 = vld [vmem:[%s2511 + $0x68] sm:$0xff]
    %v2526 = vld [vmem:[%s2511 + $0x70] sm:$0xff]
    %v2527 = vld [vmem:[%s2511 + $0x78] sm:$0xff]
    %v2528 = vld [vmem:[%s2511 + $0x80] sm:$0xff]
    %v2529 = vld [vmem:[%s2511 + $0x88] sm:$0xff]
    %v2530 = vld [vmem:[%s2511 + $0x90] sm:$0xff]
    %v2531 = vld [vmem:[%s2511 + $0x98] sm:$0xff]
    %v2532 = vld [vmem:[%s2511 + $0xa0] sm:$0xff]
    %v2533 = vld [vmem:[%s2511 + $0xa8] sm:$0xff]
    %v2534 = vld [vmem:[%s2511 + $0xb0] sm:$0xff]
    %v2535 = vld [vmem:[%s2511 + $0xb8] sm:$0xff]
    %v2536 = vld [vmem:[%s2511 + $0xc0] sm:$0xff]
    %v2537 = vld [vmem:[%s2511 + $0xc8] sm:$0xff]
    %v2538 = vld [vmem:[%s2511 + $0xd0] sm:$0xff]
    %v2539 = vld [vmem:[%s2511 + $0xd8] sm:$0xff]
    %v2540 = vld [vmem:[%s2511 + $0xe0] sm:$0xff]
    %v2541 = vld [vmem:[%s2511 + $0xe8] sm:$0xff]
    %v2542 = vld [vmem:[%s2511 + $0xf0] sm:$0xff]
    %v2543 = vld [vmem:[%s2511 + $0xf8] sm:$0xff]
    %v2544 = vld [vmem:[%s2511 + $0x100] sm:$0xff]
    %v2545 = vld [vmem:[%s2511 + $0x108] sm:$0xff]
    %v2546 = vld [vmem:[%s2511 + $0x110] sm:$0xff]
    %v2547 = vld [vmem:[%s2511 + $0x118] sm:$0xff]
    %v2548 = vld [vmem:[%s2511 + $0x120] sm:$0xff]
    %v2549 = vld [vmem:[%s2511 + $0x128] sm:$0xff]
    %v2550 = vld [vmem:[%s2511 + $0x130] sm:$0xff]
    %v2551 = vld [vmem:[%s2511 + $0x138] sm:$0xff]
    %v2552 = vld [vmem:[%s2511 + $0x140] sm:$0xff]
    %v2553 = vld [vmem:[%s2511 + $0x148] sm:$0xff]
    %v2554 = vld [vmem:[%s2511 + $0x150] sm:$0xff]
    %v2555 = vld [vmem:[%s2511 + $0x158] sm:$0xff]
    %v2556 = vld [vmem:[%s2511 + $0x160] sm:$0xff]
    %v2557 = vld [vmem:[%s2511 + $0x168] sm:$0xff]
    %v2558 = vld [vmem:[%s2511 + $0x170] sm:$0xff]
    %v2559 = vld [vmem:[%s2511 + $0x178] sm:$0xff]
    %v2560 = vld [vmem:[%s2511 + $0x180] sm:$0xff]
    %v2561 = vld [vmem:[%s2511 + $0x188] sm:$0xff]
    %v2562 = vld [vmem:[%s2511 + $0x190] sm:$0xff]
    %v2563 = vld [vmem:[%s2511 + $0x198] sm:$0xff]
    %v2564 = vld [vmem:[%s2511 + $0x1a0] sm:$0xff]
    %v2565 = vld [vmem:[%s2511 + $0x1a8] sm:$0xff]
    %v2566 = vld [vmem:[%s2511 + $0x1b0] sm:$0xff]
    %v2567 = vld [vmem:[%s2511 + $0x1b8] sm:$0xff]
    %v2568 = vld [vmem:[%s2511 + $0x1c0] sm:$0xff]
    %v2569 = vld [vmem:[%s2511 + $0x1c8] sm:$0xff]
    %v2570 = vld [vmem:[%s2511 + $0x1d0] sm:$0xff]
    %v2571 = vld [vmem:[%s2511 + $0x1d8] sm:$0xff]
    %v2572 = vld [vmem:[%s2511 + $0x1e0] sm:$0xff]
    %v2573 = vld [vmem:[%s2511 + $0x1e8] sm:$0xff]
    %v2574 = vld [vmem:[%s2511 + $0x1f0] sm:$0xff]
    %v2575 = vld [vmem:[%s2511 + $0x1f8] sm:$0xff]
    %2576 = vmatprep.subr.mxu0 0.0
    %2577 = vmatpush1.msra.mxu0 %v203
    %2578 = vmatprep.subr.mxu0 0.0
    %2579 = vmatpush1.msra.mxu0 %v204
    %2580 = vmatprep.subr.mxu0 0.0
    %2581 = vmatpush1.msra.mxu0 %v205
    %2582 = vmatprep.subr.mxu0 0.0
    %2583 = vmatpush1.msra.mxu0 %v206
    %2584 = vmatprep.subr.mxu0 0.0
    %2585 = vmatpush1.msra.mxu0 %v207
    %2586 = vmatprep.subr.mxu0 0.0
    %2587 = vmatpush1.msra.mxu0 %v208
    %2588 = vmatprep.subr.mxu0 0.0
    %2589 = vmatpush1.msra.mxu0 %v209
    %2590 = vmatprep.subr.mxu0 0.0
    %2591 = vmatpush1.msra.mxu0 %v210
    %2592 = vmatprep.subr.mxu0 0.0
    %2593 = vmatpush1.msra.mxu0 %v211
    %2594 = vmatprep.subr.mxu0 0.0
    %2595 = vmatpush1.msra.mxu0 %v212
    %2596 = vmatprep.subr.mxu0 0.0
    %2597 = vmatpush1.msra.mxu0 %v213
    %2598 = vmatprep.subr.mxu0 0.0
    %2599 = vmatpush1.msra.mxu0 %v214
    %2600 = vmatprep.subr.mxu0 0.0
    %2601 = vmatpush1.msra.mxu0 %v215
    %2602 = vmatprep.subr.mxu0 0.0
    %2603 = vmatpush1.msra.mxu0 %v216
    %2604 = vmatprep.subr.mxu0 0.0
    %2605 = vmatpush1.msra.mxu0 %v217
    %2606 = vmatprep.subr.mxu0 0.0
    %2607 = vmatpush1.msra.mxu0 %v218
    %2608 = vmatprep.subr.mxu0 0.0
    %2609 = vmatpush1.msra.mxu0 %v219
    %2610 = vmatprep.subr.mxu0 0.0
    %2611 = vmatpush1.msra.mxu0 %v220
    %2612 = vmatprep.subr.mxu0 0.0
    %2613 = vmatpush1.msra.mxu0 %v221
    %2614 = vmatprep.subr.mxu0 0.0
    %2615 = vmatpush1.msra.mxu0 %v222
    %2616 = vmatprep.subr.mxu0 0.0
    %2617 = vmatpush1.msra.mxu0 %v223
    %2618 = vmatprep.subr.mxu0 0.0
    %2619 = vmatpush1.msra.mxu0 %v224
    %2620 = vmatprep.subr.mxu0 0.0
    %2621 = vmatpush1.msra.mxu0 %v225
    %2622 = vmatprep.subr.mxu0 0.0
    %2623 = vmatpush1.msra.mxu0 %v226
    %2624 = vmatprep.subr.mxu0 0.0
    %2625 = vmatpush1.msra.mxu0 %v227
    %2626 = vmatprep.subr.mxu0 0.0
    %2627 = vmatpush1.msra.mxu0 %v228
    %2628 = vmatprep.subr.mxu0 0.0
    %2629 = vmatpush1.msra.mxu0 %v229
    %2630 = vmatprep.subr.mxu0 0.0
    %2631 = vmatpush1.msra.mxu0 %v230
    %2632 = vmatprep.subr.mxu0 0.0
    %2633 = vmatpush1.msra.mxu0 %v231
    %2634 = vmatprep.subr.mxu0 0.0
    %2635 = vmatpush1.msra.mxu0 %v232
    %2636 = vmatprep.subr.mxu0 0.0
    %2637 = vmatpush1.msra.mxu0 %v233
    %2638 = vmatprep.subr.mxu0 0.0
    %2639 = vmatpush1.msra.mxu0 %v234
    %2640 = vmatprep.mubr.f32.mxu0 %v2513
    %2641 = vmatmul.mubr.f32.gmra.mrb[0].mxu0 %v2512
    %v2642 = vpop.f32.mrb[0].mxu0
    %v2643 = vadd.f32 0.0, %v2642
    %v2644 = vpop.f32.mrb[0].mxu0
    %2645 = vmatprep.mubr.f32.mxu0 %v2517
    %2646 = vmatmul.mubr.f32.gmra.mrb[0].mxu0 %v2516
    %v2647 = vpop.f32.mrb[0].mxu0
    %v2648 = vadd.f32 0.0, %v2647
    %v2649 = vpop.f32.mrb[0].mxu0
    %2650 = vmatprep.mubr.f32.mxu0 %v2521
    %2651 = vmatmul.mubr.f32.gmra.mrb[0].mxu0 %v2520
    %v2652 = vpop.f32.mrb[0].mxu0
    %v2653 = vadd.f32 0.0, %v2652
    %v2654 = vpop.f32.mrb[0].mxu0
    %2655 = vmatprep.mubr.f32.mxu0 %v2525
    %2656 = vmatmul.mubr.f32.gmra.mrb[0].mxu0 %v2524
    %v2657 = vpop.f32.mrb[0].mxu0
    %v2658 = vadd.f32 0.0, %v2657
    %v2659 = vpop.f32.mrb[0].mxu0
    %2660 = vmatprep.mubr.f32.mxu0 %v2529
    %2661 = vmatmul.mubr.f32.gmra.mrb[0].mxu0 %v2528
    %v2662 = vpop.f32.mrb[0].mxu0
    %v2663 = vadd.f32 0.0, %v2662
    %v2664 = vpop.f32.mrb[0].mxu0
    %2665 = vmatprep.mubr.f32.mxu0 %v2533
    %2666 = vmatmul.mubr.f32.gmra.mrb[0].mxu0 %v2532
    %v2667 = vpop.f32.mrb[0].mxu0
    %v2668 = vadd.f32 0.0, %v2667
    %v2669 = vpop.f32.mrb[0].mxu0
    %2670 = vmatprep.mubr.f32.mxu0 %v2537
    %2671 = vmatmul.mubr.f32.gmra.mrb[0].mxu0 %v2536
    %v2672 = vpop.f32.mrb[0].mxu0
    %v2673 = vadd.f32 0.0, %v2672
    %v2674 = vpop.f32.mrb[0].mxu0
    %2675 = vmatprep.mubr.f32.mxu0 %v2541
    %2676 = vmatmul.mubr.f32.gmra.mrb[0].mxu0 %v2540
    %v2677 = vpop.f32.mrb[0].mxu0
    %v2678 = vadd.f32 0.0, %v2677
    %v2679 = vpop.f32.mrb[0].mxu0
    %2680 = vmatprep.mubr.f32.mxu0 %v2545
    %2681 = vmatmul.mubr.f32.gmra.mrb[0].mxu0 %v2544
    %v2682 = vpop.f32.mrb[0].mxu0
    %v2683 = vadd.f32 0.0, %v2682
    %v2684 = vpop.f32.mrb[0].mxu0
    %2685 = vmatprep.mubr.f32.mxu0 %v2549
    %2686 = vmatmul.mubr.f32.gmra.mrb[0].mxu0 %v2548
    %v2687 = vpop.f32.mrb[0].mxu0
    %v2688 = vadd.f32 0.0, %v2687
    %v2689 = vpop.f32.mrb[0].mxu0
    %2690 = vmatprep.mubr.f32.mxu0 %v2553
    %2691 = vmatmul.mubr.f32.gmra.mrb[0].mxu0 %v2552
    %v2692 = vpop.f32.mrb[0].mxu0
    %v2693 = vadd.f32 0.0, %v2692
    %v2694 = vpop.f32.mrb[0].mxu0
    %2695 = vmatprep.mubr.f32.mxu0 %v2557
    %2696 = vmatmul.mubr.f32.gmra.mrb[0].mxu0 %v2556
    %v2697 = vpop.f32.mrb[0].mxu0
    %v2698 = vadd.f32 0.0, %v2697
    %v2699 = vpop.f32.mrb[0].mxu0
    %2700 = vmatprep.mubr.f32.mxu0 %v2561
    %2701 = vmatmul.mubr.f32.gmra.mrb[0].mxu0 %v2560
    %v2702 = vpop.f32.mrb[0].mxu0
    %v2703 = vadd.f32 0.0, %v2702
    %v2704 = vpop.f32.mrb[0].mxu0
    %2705 = vmatprep.mubr.f32.mxu0 %v2565
    %2706 = vmatmul.mubr.f32.gmra.mrb[0].mxu0 %v2564
    %v2707 = vpop.f32.mrb[0].mxu0
    %v2708 = vadd.f32 0.0, %v2707
    %v2709 = vpop.f32.mrb[0].mxu0
    %2710 = vmatprep.mubr.f32.mxu0 %v2569
    %2711 = vmatmul.mubr.f32.gmra.mrb[0].mxu0 %v2568
    %v2712 = vpop.f32.mrb[0].mxu0
    %v2713 = vadd.f32 0.0, %v2712
    %v2714 = vpop.f32.mrb[0].mxu0
    %2715 = vmatprep.mubr.f32.mxu0 %v2573
    %2716 = vmatmul.mubr.f32.gmra.mrb[0].mxu0 %v2572
    %v2717 = vpop.f32.mrb[0].mxu0
    %v2718 = vadd.f32 0.0, %v2717
    %v2719 = vpop.f32.mrb[0].mxu0
    %2720 = vdwg.mxu0
    %2721 = vmatprep.subr.mxu0 0.0
    %2722 = vmatpush1.msra.mxu0 %v235
    %2723 = vmatprep.subr.mxu0 0.0
    %2724 = vmatpush1.msra.mxu0 %v236
    %2725 = vmatprep.subr.mxu0 0.0
    %2726 = vmatpush1.msra.mxu0 %v237
    %2727 = vmatprep.subr.mxu0 0.0
    %2728 = vmatpush1.msra.mxu0 %v238
    %2729 = vmatprep.subr.mxu0 0.0
    %2730 = vmatpush1.msra.mxu0 %v239
    %2731 = vmatprep.subr.mxu0 0.0
    %2732 = vmatpush1.msra.mxu0 %v240
    %2733 = vmatprep.subr.mxu0 0.0
    %2734 = vmatpush1.msra.mxu0 %v241
    %2735 = vmatprep.subr.mxu0 0.0
    %2736 = vmatpush1.msra.mxu0 %v242
    %2737 = vmatprep.subr.mxu0 0.0
    %2738 = vmatpush1.msra.mxu0 %v243
    %2739 = vmatprep.subr.mxu0 0.0
    %2740 = vmatpush1.msra.mxu0 %v244
    %2741 = vmatprep.subr.mxu0 0.0
    %2742 = vmatpush1.msra.mxu0 %v245
    %2743 = vmatprep.subr.mxu0 0.0
    %2744 = vmatpush1.msra.mxu0 %v246
    %2745 = vmatprep.subr.mxu0 0.0
    %2746 = vmatpush1.msra.mxu0 %v247
    %2747 = vmatprep.subr.mxu0 0.0
    %2748 = vmatpush1.msra.mxu0 %v248
    %2749 = vmatprep.subr.mxu0 0.0
    %2750 = vmatpush1.msra.mxu0 %v249
    %2751 = vmatprep.subr.mxu0 0.0
    %2752 = vmatpush1.msra.mxu0 %v250
    %2753 = vmatprep.subr.mxu0 0.0
    %2754 = vmatpush1.msra.mxu0 %v251
    %2755 = vmatprep.subr.mxu0 0.0
    %2756 = vmatpush1.msra.mxu0 %v252
    %2757 = vmatprep.subr.mxu0 0.0
    %2758 = vmatpush1.msra.mxu0 %v253
    %2759 = vmatprep.subr.mxu0 0.0
    %2760 = vmatpush1.msra.mxu0 %v254
    %2761 = vmatprep.subr.mxu0 0.0
    %2762 = vmatpush1.msra.mxu0 %v255
    %2763 = vmatprep.subr.mxu0 0.0
    %2764 = vmatpush1.msra.mxu0 %v256
    %2765 = vmatprep.subr.mxu0 0.0
    %2766 = vmatpush1.msra.mxu0 %v257
    %2767 = vmatprep.subr.mxu0 0.0
    %2768 = vmatpush1.msra.mxu0 %v258
    %2769 = vmatprep.subr.mxu0 0.0
    %2770 = vmatpush1.msra.mxu0 %v259
    %2771 = vmatprep.subr.mxu0 0.0
    %2772 = vmatpush1.msra.mxu0 %v260
    %2773 = vmatprep.subr.mxu0 0.0
    %2774 = vmatpush1.msra.mxu0 %v261
    %2775 = vmatprep.subr.mxu0 0.0
    %2776 = vmatpush1.msra.mxu0 %v262
    %2777 = vmatprep.subr.mxu0 0.0
    %2778 = vmatpush1.msra.mxu0 %v263
    %2779 = vmatprep.subr.mxu0 0.0
    %2780 = vmatpush1.msra.mxu0 %v264
    %2781 = vmatprep.subr.mxu0 0.0
    %2782 = vmatpush1.msra.mxu0 %v265
    %2783 = vmatprep.subr.mxu0 0.0
    %2784 = vmatpush1.msra.mxu0 %v266
    %2785 = vmatprep.mubr.f32.mxu0 %v2515
    %2786 = vmatmul.mubr.f32.gmra.mrb[0].mxu0 %v2514
    %v2787 = vpop.f32.mrb[0].mxu0
    %v2788 = vadd.f32 %v2643, %v2787
    %v2789 = vpop.f32.mrb[0].mxu0
    %2790 = vmatprep.mubr.f32.mxu0 %v2519
    %2791 = vmatmul.mubr.f32.gmra.mrb[0].mxu0 %v2518
    %v2792 = vpop.f32.mrb[0].mxu0
    %v2793 = vadd.f32 %v2648, %v2792
    %v2794 = vpop.f32.mrb[0].mxu0
    %2795 = vmatprep.mubr.f32.mxu0 %v2523
    %2796 = vmatmul.mubr.f32.gmra.mrb[0].mxu0 %v2522
    %v2797 = vpop.f32.mrb[0].mxu0
    %v2798 = vadd.f32 %v2653, %v2797
    %v2799 = vpop.f32.mrb[0].mxu0
    %2800 = vmatprep.mubr.f32.mxu0 %v2527
    %2801 = vmatmul.mubr.f32.gmra.mrb[0].mxu0 %v2526
    %v2802 = vpop.f32.mrb[0].mxu0
    %v2803 = vadd.f32 %v2658, %v2802
    %v2804 = vpop.f32.mrb[0].mxu0
    %2805 = vmatprep.mubr.f32.mxu0 %v2531
    %2806 = vmatmul.mubr.f32.gmra.mrb[0].mxu0 %v2530
    %v2807 = vpop.f32.mrb[0].mxu0
    %v2808 = vadd.f32 %v2663, %v2807
    %v2809 = vpop.f32.mrb[0].mxu0
    %2810 = vmatprep.mubr.f32.mxu0 %v2535
    %2811 = vmatmul.mubr.f32.gmra.mrb[0].mxu0 %v2534
    %v2812 = vpop.f32.mrb[0].mxu0
    %v2813 = vadd.f32 %v2668, %v2812
    %v2814 = vpop.f32.mrb[0].mxu0
    %2815 = vmatprep.mubr.f32.mxu0 %v2539
    %2816 = vmatmul.mubr.f32.gmra.mrb[0].mxu0 %v2538
    %v2817 = vpop.f32.mrb[0].mxu0
    %v2818 = vadd.f32 %v2673, %v2817
    %v2819 = vpop.f32.mrb[0].mxu0
    %2820 = vmatprep.mubr.f32.mxu0 %v2543
    %2821 = vmatmul.mubr.f32.gmra.mrb[0].mxu0 %v2542
    %v2822 = vpop.f32.mrb[0].mxu0
    %v2823 = vadd.f32 %v2678, %v2822
    %v2824 = vpop.f32.mrb[0].mxu0
    %2825 = vmatprep.mubr.f32.mxu0 %v2547
    %2826 = vmatmul.mubr.f32.gmra.mrb[0].mxu0 %v2546
    %v2827 = vpop.f32.mrb[0].mxu0
    %v2828 = vadd.f32 %v2683, %v2827
    %v2829 = vpop.f32.mrb[0].mxu0
    %2830 = vmatprep.mubr.f32.mxu0 %v2551
    %2831 = vmatmul.mubr.f32.gmra.mrb[0].mxu0 %v2550
    %v2832 = vpop.f32.mrb[0].mxu0
    %v2833 = vadd.f32 %v2688, %v2832
    %v2834 = vpop.f32.mrb[0].mxu0
    %2835 = vmatprep.mubr.f32.mxu0 %v2555
    %2836 = vmatmul.mubr.f32.gmra.mrb[0].mxu0 %v2554
    %v2837 = vpop.f32.mrb[0].mxu0
    %v2838 = vadd.f32 %v2693, %v2837
    %v2839 = vpop.f32.mrb[0].mxu0
    %2840 = vmatprep.mubr.f32.mxu0 %v2559
    %2841 = vmatmul.mubr.f32.gmra.mrb[0].mxu0 %v2558
    %v2842 = vpop.f32.mrb[0].mxu0
    %v2843 = vadd.f32 %v2698, %v2842
    %v2844 = vpop.f32.mrb[0].mxu0
    %2845 = vmatprep.mubr.f32.mxu0 %v2563
    %2846 = vmatmul.mubr.f32.gmra.mrb[0].mxu0 %v2562
    %v2847 = vpop.f32.mrb[0].mxu0
    %v2848 = vadd.f32 %v2703, %v2847
    %v2849 = vpop.f32.mrb[0].mxu0
    %2850 = vmatprep.mubr.f32.mxu0 %v2567
    %2851 = vmatmul.mubr.f32.gmra.mrb[0].mxu0 %v2566
    %v2852 = vpop.f32.mrb[0].mxu0
    %v2853 = vadd.f32 %v2708, %v2852
    %v2854 = vpop.f32.mrb[0].mxu0
    %2855 = vmatprep.mubr.f32.mxu0 %v2571
    %2856 = vmatmul.mubr.f32.gmra.mrb[0].mxu0 %v2570
    %v2857 = vpop.f32.mrb[0].mxu0
    %v2858 = vadd.f32 %v2713, %v2857
    %v2859 = vpop.f32.mrb[0].mxu0
    %2860 = vmatprep.mubr.f32.mxu0 %v2575
    %2861 = vmatmul.mubr.f32.gmra.mrb[0].mxu0 %v2574
    %v2862 = vpop.f32.mrb[0].mxu0
    %v2863 = vadd.f32 %v2718, %v2862
    %v2864 = vpop.f32.mrb[0].mxu0
    %2865 = vdwg.mxu0
    %s2866 = scalar_lea.vmem [#allocation10], 16
    %v2867 = vld [vmem:[%s2866] sm:$0xf]
    %v2869 = vsel %vm979, %v2788, 0
    %v2872 = vsel %vm979, %v2793, 0
    %v2875 = vsel %vm979, %v2798, 0
    %v2878 = vsel %vm979, %v2803, 0
    %v2881 = vsel %vm979, %v2808, 0
    %v2884 = vsel %vm979, %v2813, 0
    %v2887 = vsel %vm979, %v2818, 0
    %v2890 = vsel %vm979, %v2823, 0
    %v2893 = vsel %vm979, %v2828, 0
    %v2896 = vsel %vm979, %v2833, 0
    %v2899 = vsel %vm979, %v2838, 0
    %v2902 = vsel %vm979, %v2843, 0
    %v2905 = vsel %vm979, %v2848, 0
    %v2908 = vsel %vm979, %v2853, 0
    %v2911 = vsel %vm979, %v2858, 0
    %v2914 = vsel %vm979, %v2863, 0
    %v2917 = vsel %vm1028, %v2867, 0
    %2919 = vmatprep.subr.mxu0 0.0
    %2920 = vmatpush1.msra.mxu0 %v2917
    %2921 = vmatprep.subr.mxu0 0.0
    %2922 = vmatpush1.msra.mxu0 0.0
    %2923 = vmatprep.subr.mxu0 0.0
    %2924 = vmatpush1.msra.mxu0 0.0
    %2925 = vmatprep.subr.mxu0 0.0
    %2926 = vmatpush1.msra.mxu0 0.0
    %2927 = vmatprep.subr.mxu0 0.0
    %2928 = vmatpush1.msra.mxu0 0.0
    %2929 = vmatprep.subr.mxu0 0.0
    %2930 = vmatpush1.msra.mxu0 0.0
    %2931 = vmatprep.subr.mxu0 0.0
    %2932 = vmatpush1.msra.mxu0 0.0
    %2933 = vmatprep.subr.mxu0 0.0
    %2934 = vmatpush1.msra.mxu0 0.0
    %2935 = vmatprep.subr.mxu0 0.0
    %2936 = vmatpush1.msra.mxu0 0.0
    %2937 = vmatprep.subr.mxu0 0.0
    %2938 = vmatpush1.msra.mxu0 0.0
    %2939 = vmatprep.subr.mxu0 0.0
    %2940 = vmatpush1.msra.mxu0 0.0
    %2941 = vmatprep.subr.mxu0 0.0
    %2942 = vmatpush1.msra.mxu0 0.0
    %2943 = vmatprep.subr.mxu0 0.0
    %2944 = vmatpush1.msra.mxu0 0.0
    %2945 = vmatprep.subr.mxu0 0.0
    %2946 = vmatpush1.msra.mxu0 0.0
    %2947 = vmatprep.subr.mxu0 0.0
    %2948 = vmatpush1.msra.mxu0 0.0
    %2949 = vmatprep.subr.mxu0 0.0
    %2950 = vmatpush1.msra.mxu0 0.0
    %2951 = vmatprep.subr.mxu0 0.0
    %2952 = vmatpush1.msra.mxu0 0.0
    %2953 = vmatprep.subr.mxu0 0.0
    %2954 = vmatpush1.msra.mxu0 0.0
    %2955 = vmatprep.subr.mxu0 0.0
    %2956 = vmatpush1.msra.mxu0 0.0
    %2957 = vmatprep.subr.mxu0 0.0
    %2958 = vmatpush1.msra.mxu0 0.0
    %2959 = vmatprep.subr.mxu0 0.0
    %2960 = vmatpush1.msra.mxu0 0.0
    %2961 = vmatprep.subr.mxu0 0.0
    %2962 = vmatpush1.msra.mxu0 0.0
    %2963 = vmatprep.subr.mxu0 0.0
    %2964 = vmatpush1.msra.mxu0 0.0
    %2965 = vmatprep.subr.mxu0 0.0
    %2966 = vmatpush1.msra.mxu0 0.0
    %2967 = vmatprep.subr.mxu0 0.0
    %2968 = vmatpush1.msra.mxu0 0.0
    %2969 = vmatprep.subr.mxu0 0.0
    %2970 = vmatpush1.msra.mxu0 0.0
    %2971 = vmatprep.subr.mxu0 0.0
    %2972 = vmatpush1.msra.mxu0 0.0
    %2973 = vmatprep.subr.mxu0 0.0
    %2974 = vmatpush1.msra.mxu0 0.0
    %2975 = vmatprep.subr.mxu0 0.0
    %2976 = vmatpush1.msra.mxu0 0.0
    %2977 = vmatprep.subr.mxu0 0.0
    %2978 = vmatpush1.msra.mxu0 0.0
    %2979 = vmatprep.subr.mxu0 0.0
    %2980 = vmatpush1.msra.mxu0 0.0
    %2981 = vmatprep.subr.mxu0 0.0
    %2982 = vmatpush1.msra.mxu0 0.0
    %2983 = vmatprep.mubr.f32.mxu0 0.0
    %2984 = vmatmul.mubr.f32.gmra.mrb[0].mxu0 %v2869
    %v2985 = vpop.f32.mrb[0].mxu0
    %v2986 = vadd.f32 0.0, %v2985
    %v2987 = vpop.f32.mrb[0].mxu0
    %2988 = vmatprep.mubr.f32.mxu0 0.0
    %2989 = vmatmul.mubr.f32.gmra.mrb[0].mxu0 %v2872
    %v2990 = vpop.f32.mrb[0].mxu0
    %v2991 = vadd.f32 0.0, %v2990
    %v2992 = vpop.f32.mrb[0].mxu0
    %2993 = vmatprep.mubr.f32.mxu0 0.0
    %2994 = vmatmul.mubr.f32.gmra.mrb[0].mxu0 %v2875
    %v2995 = vpop.f32.mrb[0].mxu0
    %v2996 = vadd.f32 0.0, %v2995
    %v2997 = vpop.f32.mrb[0].mxu0
    %2998 = vmatprep.mubr.f32.mxu0 0.0
    %2999 = vmatmul.mubr.f32.gmra.mrb[0].mxu0 %v2878
    %v3000 = vpop.f32.mrb[0].mxu0
    %v3001 = vadd.f32 0.0, %v3000
    %v3002 = vpop.f32.mrb[0].mxu0
    %3003 = vmatprep.mubr.f32.mxu0 0.0
    %3004 = vmatmul.mubr.f32.gmra.mrb[0].mxu0 %v2881
    %v3005 = vpop.f32.mrb[0].mxu0
    %v3006 = vadd.f32 0.0, %v3005
    %v3007 = vpop.f32.mrb[0].mxu0
    %3008 = vmatprep.mubr.f32.mxu0 0.0
    %3009 = vmatmul.mubr.f32.gmra.mrb[0].mxu0 %v2884
    %v3010 = vpop.f32.mrb[0].mxu0
    %v3011 = vadd.f32 0.0, %v3010
    %v3012 = vpop.f32.mrb[0].mxu0
    %3013 = vmatprep.mubr.f32.mxu0 0.0
    %3014 = vmatmul.mubr.f32.gmra.mrb[0].mxu0 %v2887
    %v3015 = vpop.f32.mrb[0].mxu0
    %v3016 = vadd.f32 0.0, %v3015
    %v3017 = vpop.f32.mrb[0].mxu0
    %3018 = vmatprep.mubr.f32.mxu0 0.0
    %3019 = vmatmul.mubr.f32.gmra.mrb[0].mxu0 %v2890
    %v3020 = vpop.f32.mrb[0].mxu0
    %v3021 = vadd.f32 0.0, %v3020
    %v3022 = vpop.f32.mrb[0].mxu0
    %3023 = vmatprep.mubr.f32.mxu0 0.0
    %3024 = vmatmul.mubr.f32.gmra.mrb[0].mxu0 %v2893
    %v3025 = vpop.f32.mrb[0].mxu0
    %v3026 = vadd.f32 0.0, %v3025
    %v3027 = vpop.f32.mrb[0].mxu0
    %3028 = vmatprep.mubr.f32.mxu0 0.0
    %3029 = vmatmul.mubr.f32.gmra.mrb[0].mxu0 %v2896
    %v3030 = vpop.f32.mrb[0].mxu0
    %v3031 = vadd.f32 0.0, %v3030
    %v3032 = vpop.f32.mrb[0].mxu0
    %3033 = vmatprep.mubr.f32.mxu0 0.0
    %3034 = vmatmul.mubr.f32.gmra.mrb[0].mxu0 %v2899
    %v3035 = vpop.f32.mrb[0].mxu0
    %v3036 = vadd.f32 0.0, %v3035
    %v3037 = vpop.f32.mrb[0].mxu0
    %3038 = vmatprep.mubr.f32.mxu0 0.0
    %3039 = vmatmul.mubr.f32.gmra.mrb[0].mxu0 %v2902
    %v3040 = vpop.f32.mrb[0].mxu0
    %v3041 = vadd.f32 0.0, %v3040
    %v3042 = vpop.f32.mrb[0].mxu0
    %3043 = vmatprep.mubr.f32.mxu0 0.0
    %3044 = vmatmul.mubr.f32.gmra.mrb[0].mxu0 %v2905
    %v3045 = vpop.f32.mrb[0].mxu0
    %v3046 = vadd.f32 0.0, %v3045
    %v3047 = vpop.f32.mrb[0].mxu0
    %3048 = vmatprep.mubr.f32.mxu0 0.0
    %3049 = vmatmul.mubr.f32.gmra.mrb[0].mxu0 %v2908
    %v3050 = vpop.f32.mrb[0].mxu0
    %v3051 = vadd.f32 0.0, %v3050
    %v3052 = vpop.f32.mrb[0].mxu0
    %3053 = vmatprep.mubr.f32.mxu0 0.0
    %3054 = vmatmul.mubr.f32.gmra.mrb[0].mxu0 %v2911
    %v3055 = vpop.f32.mrb[0].mxu0
    %v3056 = vadd.f32 0.0, %v3055
    %v3057 = vpop.f32.mrb[0].mxu0
    %3058 = vmatprep.mubr.f32.mxu0 0.0
    %3059 = vmatmul.mubr.f32.gmra.mrb[0].mxu0 %v2914
    %v3060 = vpop.f32.mrb[0].mxu0
    %v3061 = vadd.f32 0.0, %v3060
    %v3062 = vpop.f32.mrb[0].mxu0
    %3063 = vdwg.mxu0
    %v3064 = vadd.f32 %v2495, %v2986
    %v3065 = vadd.f32 %v2496, %v2991
    %v3066 = vadd.f32 %v2497, %v2996
    %v3067 = vadd.f32 %v2498, %v3001
    %v3068 = vadd.f32 %v2499, %v3006
    %v3069 = vadd.f32 %v2500, %v3011
    %v3070 = vadd.f32 %v2501, %v3016
    %v3071 = vadd.f32 %v2502, %v3021
    %v3072 = vadd.f32 %v2503, %v3026
    %v3073 = vadd.f32 %v2504, %v3031
    %v3074 = vadd.f32 %v2505, %v3036
    %v3075 = vadd.f32 %v2506, %v3041
    %v3076 = vadd.f32 %v2507, %v3046
    %v3077 = vadd.f32 %v2508, %v3051
    %v3078 = vadd.f32 %v2509, %v3056
    %v3079 = vadd.f32 %v2510, %v3061
    %s3080 = scalar_lea.vmem [#allocation5], 2560
    %v3081 = vld [vmem:[%s3080] sm:$0xff]
    %v3082 = vld [vmem:[%s3080 + $0x8] sm:$0xff]
    %v3083 = vld [vmem:[%s3080 + $0x10] sm:$0xff]
    %v3084 = vld [vmem:[%s3080 + $0x18] sm:$0xff]
    %v3085 = vld [vmem:[%s3080 + $0x20] sm:$0xff]
    %v3086 = vld [vmem:[%s3080 + $0x28] sm:$0xff]
    %v3087 = vld [vmem:[%s3080 + $0x30] sm:$0xff]
    %v3088 = vld [vmem:[%s3080 + $0x38] sm:$0xff]
    %v3089 = vld [vmem:[%s3080 + $0x40] sm:$0xff]
    %v3090 = vld [vmem:[%s3080 + $0x48] sm:$0xff]
    %v3091 = vld [vmem:[%s3080 + $0x50] sm:$0xff]
    %v3092 = vld [vmem:[%s3080 + $0x58] sm:$0xff]
    %v3093 = vld [vmem:[%s3080 + $0x60] sm:$0xff]
    %v3094 = vld [vmem:[%s3080 + $0x68] sm:$0xff]
    %v3095 = vld [vmem:[%s3080 + $0x70] sm:$0xff]
    %v3096 = vld [vmem:[%s3080 + $0x78] sm:$0xff]
    %v3097 = vld [vmem:[%s3080 + $0x80] sm:$0xff]
    %v3098 = vld [vmem:[%s3080 + $0x88] sm:$0xff]
    %v3099 = vld [vmem:[%s3080 + $0x90] sm:$0xff]
    %v3100 = vld [vmem:[%s3080 + $0x98] sm:$0xff]
    %v3101 = vld [vmem:[%s3080 + $0xa0] sm:$0xff]
    %v3102 = vld [vmem:[%s3080 + $0xa8] sm:$0xff]
    %v3103 = vld [vmem:[%s3080 + $0xb0] sm:$0xff]
    %v3104 = vld [vmem:[%s3080 + $0xb8] sm:$0xff]
    %v3105 = vld [vmem:[%s3080 + $0xc0] sm:$0xff]
    %v3106 = vld [vmem:[%s3080 + $0xc8] sm:$0xff]
    %v3107 = vld [vmem:[%s3080 + $0xd0] sm:$0xff]
    %v3108 = vld [vmem:[%s3080 + $0xd8] sm:$0xff]
    %v3109 = vld [vmem:[%s3080 + $0xe0] sm:$0xff]
    %v3110 = vld [vmem:[%s3080 + $0xe8] sm:$0xff]
    %v3111 = vld [vmem:[%s3080 + $0xf0] sm:$0xff]
    %v3112 = vld [vmem:[%s3080 + $0xf8] sm:$0xff]
    %v3113 = vld [vmem:[%s3080 + $0x100] sm:$0xff]
    %v3114 = vld [vmem:[%s3080 + $0x108] sm:$0xff]
    %v3115 = vld [vmem:[%s3080 + $0x110] sm:$0xff]
    %v3116 = vld [vmem:[%s3080 + $0x118] sm:$0xff]
    %v3117 = vld [vmem:[%s3080 + $0x120] sm:$0xff]
    %v3118 = vld [vmem:[%s3080 + $0x128] sm:$0xff]
    %v3119 = vld [vmem:[%s3080 + $0x130] sm:$0xff]
    %v3120 = vld [vmem:[%s3080 + $0x138] sm:$0xff]
    %v3121 = vld [vmem:[%s3080 + $0x140] sm:$0xff]
    %v3122 = vld [vmem:[%s3080 + $0x148] sm:$0xff]
    %v3123 = vld [vmem:[%s3080 + $0x150] sm:$0xff]
    %v3124 = vld [vmem:[%s3080 + $0x158] sm:$0xff]
    %v3125 = vld [vmem:[%s3080 + $0x160] sm:$0xff]
    %v3126 = vld [vmem:[%s3080 + $0x168] sm:$0xff]
    %v3127 = vld [vmem:[%s3080 + $0x170] sm:$0xff]
    %v3128 = vld [vmem:[%s3080 + $0x178] sm:$0xff]
    %v3129 = vld [vmem:[%s3080 + $0x180] sm:$0xff]
    %v3130 = vld [vmem:[%s3080 + $0x188] sm:$0xff]
    %v3131 = vld [vmem:[%s3080 + $0x190] sm:$0xff]
    %v3132 = vld [vmem:[%s3080 + $0x198] sm:$0xff]
    %v3133 = vld [vmem:[%s3080 + $0x1a0] sm:$0xff]
    %v3134 = vld [vmem:[%s3080 + $0x1a8] sm:$0xff]
    %v3135 = vld [vmem:[%s3080 + $0x1b0] sm:$0xff]
    %v3136 = vld [vmem:[%s3080 + $0x1b8] sm:$0xff]
    %v3137 = vld [vmem:[%s3080 + $0x1c0] sm:$0xff]
    %v3138 = vld [vmem:[%s3080 + $0x1c8] sm:$0xff]
    %v3139 = vld [vmem:[%s3080 + $0x1d0] sm:$0xff]
    %v3140 = vld [vmem:[%s3080 + $0x1d8] sm:$0xff]
    %v3141 = vld [vmem:[%s3080 + $0x1e0] sm:$0xff]
    %v3142 = vld [vmem:[%s3080 + $0x1e8] sm:$0xff]
    %v3143 = vld [vmem:[%s3080 + $0x1f0] sm:$0xff]
    %v3144 = vld [vmem:[%s3080 + $0x1f8] sm:$0xff]
    %3145 = vmatprep.subr.mxu0 0.0
    %3146 = vmatpush1.msra.mxu0 %v203
    %3147 = vmatprep.subr.mxu0 0.0
    %3148 = vmatpush1.msra.mxu0 %v204
    %3149 = vmatprep.subr.mxu0 0.0
    %3150 = vmatpush1.msra.mxu0 %v205
    %3151 = vmatprep.subr.mxu0 0.0
    %3152 = vmatpush1.msra.mxu0 %v206
    %3153 = vmatprep.subr.mxu0 0.0
    %3154 = vmatpush1.msra.mxu0 %v207
    %3155 = vmatprep.subr.mxu0 0.0
    %3156 = vmatpush1.msra.mxu0 %v208
    %3157 = vmatprep.subr.mxu0 0.0
    %3158 = vmatpush1.msra.mxu0 %v209
    %3159 = vmatprep.subr.mxu0 0.0
    %3160 = vmatpush1.msra.mxu0 %v210
    %3161 = vmatprep.subr.mxu0 0.0
    %3162 = vmatpush1.msra.mxu0 %v211
    %3163 = vmatprep.subr.mxu0 0.0
    %3164 = vmatpush1.msra.mxu0 %v212
    %3165 = vmatprep.subr.mxu0 0.0
    %3166 = vmatpush1.msra.mxu0 %v213
    %3167 = vmatprep.subr.mxu0 0.0
    %3168 = vmatpush1.msra.mxu0 %v214
    %3169 = vmatprep.subr.mxu0 0.0
    %3170 = vmatpush1.msra.mxu0 %v215
    %3171 = vmatprep.subr.mxu0 0.0
    %3172 = vmatpush1.msra.mxu0 %v216
    %3173 = vmatprep.subr.mxu0 0.0
    %3174 = vmatpush1.msra.mxu0 %v217
    %3175 = vmatprep.subr.mxu0 0.0
    %3176 = vmatpush1.msra.mxu0 %v218
    %3177 = vmatprep.subr.mxu0 0.0
    %3178 = vmatpush1.msra.mxu0 %v219
    %3179 = vmatprep.subr.mxu0 0.0
    %3180 = vmatpush1.msra.mxu0 %v220
    %3181 = vmatprep.subr.mxu0 0.0
    %3182 = vmatpush1.msra.mxu0 %v221
    %3183 = vmatprep.subr.mxu0 0.0
    %3184 = vmatpush1.msra.mxu0 %v222
    %3185 = vmatprep.subr.mxu0 0.0
    %3186 = vmatpush1.msra.mxu0 %v223
    %3187 = vmatprep.subr.mxu0 0.0
    %3188 = vmatpush1.msra.mxu0 %v224
    %3189 = vmatprep.subr.mxu0 0.0
    %3190 = vmatpush1.msra.mxu0 %v225
    %3191 = vmatprep.subr.mxu0 0.0
    %3192 = vmatpush1.msra.mxu0 %v226
    %3193 = vmatprep.subr.mxu0 0.0
    %3194 = vmatpush1.msra.mxu0 %v227
    %3195 = vmatprep.subr.mxu0 0.0
    %3196 = vmatpush1.msra.mxu0 %v228
    %3197 = vmatprep.subr.mxu0 0.0
    %3198 = vmatpush1.msra.mxu0 %v229
    %3199 = vmatprep.subr.mxu0 0.0
    %3200 = vmatpush1.msra.mxu0 %v230
    %3201 = vmatprep.subr.mxu0 0.0
    %3202 = vmatpush1.msra.mxu0 %v231
    %3203 = vmatprep.subr.mxu0 0.0
    %3204 = vmatpush1.msra.mxu0 %v232
    %3205 = vmatprep.subr.mxu0 0.0
    %3206 = vmatpush1.msra.mxu0 %v233
    %3207 = vmatprep.subr.mxu0 0.0
    %3208 = vmatpush1.msra.mxu0 %v234
    %3209 = vmatprep.mubr.f32.mxu0 %v3082
    %3210 = vmatmul.mubr.f32.gmra.mrb[0].mxu0 %v3081
    %v3211 = vpop.f32.mrb[0].mxu0
    %v3212 = vadd.f32 0.0, %v3211
    %v3213 = vpop.f32.mrb[0].mxu0
    %3214 = vmatprep.mubr.f32.mxu0 %v3086
    %3215 = vmatmul.mubr.f32.gmra.mrb[0].mxu0 %v3085
    %v3216 = vpop.f32.mrb[0].mxu0
    %v3217 = vadd.f32 0.0, %v3216
    %v3218 = vpop.f32.mrb[0].mxu0
    %3219 = vmatprep.mubr.f32.mxu0 %v3090
    %3220 = vmatmul.mubr.f32.gmra.mrb[0].mxu0 %v3089
    %v3221 = vpop.f32.mrb[0].mxu0
    %v3222 = vadd.f32 0.0, %v3221
    %v3223 = vpop.f32.mrb[0].mxu0
    %3224 = vmatprep.mubr.f32.mxu0 %v3094
    %3225 = vmatmul.mubr.f32.gmra.mrb[0].mxu0 %v3093
    %v3226 = vpop.f32.mrb[0].mxu0
    %v3227 = vadd.f32 0.0, %v3226
    %v3228 = vpop.f32.mrb[0].mxu0
    %3229 = vmatprep.mubr.f32.mxu0 %v3098
    %3230 = vmatmul.mubr.f32.gmra.mrb[0].mxu0 %v3097
    %v3231 = vpop.f32.mrb[0].mxu0
    %v3232 = vadd.f32 0.0, %v3231
    %v3233 = vpop.f32.mrb[0].mxu0
    %3234 = vmatprep.mubr.f32.mxu0 %v3102
    %3235 = vmatmul.mubr.f32.gmra.mrb[0].mxu0 %v3101
    %v3236 = vpop.f32.mrb[0].mxu0
    %v3237 = vadd.f32 0.0, %v3236
    %v3238 = vpop.f32.mrb[0].mxu0
    %3239 = vmatprep.mubr.f32.mxu0 %v3106
    %3240 = vmatmul.mubr.f32.gmra.mrb[0].mxu0 %v3105
    %v3241 = vpop.f32.mrb[0].mxu0
    %v3242 = vadd.f32 0.0, %v3241
    %v3243 = vpop.f32.mrb[0].mxu0
    %3244 = vmatprep.mubr.f32.mxu0 %v3110
    %3245 = vmatmul.mubr.f32.gmra.mrb[0].mxu0 %v3109
    %v3246 = vpop.f32.mrb[0].mxu0
    %v3247 = vadd.f32 0.0, %v3246
    %v3248 = vpop.f32.mrb[0].mxu0
    %3249 = vmatprep.mubr.f32.mxu0 %v3114
    %3250 = vmatmul.mubr.f32.gmra.mrb[0].mxu0 %v3113
    %v3251 = vpop.f32.mrb[0].mxu0
    %v3252 = vadd.f32 0.0, %v3251
    %v3253 = vpop.f32.mrb[0].mxu0
    %3254 = vmatprep.mubr.f32.mxu0 %v3118
    %3255 = vmatmul.mubr.f32.gmra.mrb[0].mxu0 %v3117
    %v3256 = vpop.f32.mrb[0].mxu0
    %v3257 = vadd.f32 0.0, %v3256
    %v3258 = vpop.f32.mrb[0].mxu0
    %3259 = vmatprep.mubr.f32.mxu0 %v3122
    %3260 = vmatmul.mubr.f32.gmra.mrb[0].mxu0 %v3121
    %v3261 = vpop.f32.mrb[0].mxu0
    %v3262 = vadd.f32 0.0, %v3261
    %v3263 = vpop.f32.mrb[0].mxu0
    %3264 = vmatprep.mubr.f32.mxu0 %v3126
    %3265 = vmatmul.mubr.f32.gmra.mrb[0].mxu0 %v3125
    %v3266 = vpop.f32.mrb[0].mxu0
    %v3267 = vadd.f32 0.0, %v3266
    %v3268 = vpop.f32.mrb[0].mxu0
    %3269 = vmatprep.mubr.f32.mxu0 %v3130
    %3270 = vmatmul.mubr.f32.gmra.mrb[0].mxu0 %v3129
    %v3271 = vpop.f32.mrb[0].mxu0
    %v3272 = vadd.f32 0.0, %v3271
    %v3273 = vpop.f32.mrb[0].mxu0
    %3274 = vmatprep.mubr.f32.mxu0 %v3134
    %3275 = vmatmul.mubr.f32.gmra.mrb[0].mxu0 %v3133
    %v3276 = vpop.f32.mrb[0].mxu0
    %v3277 = vadd.f32 0.0, %v3276
    %v3278 = vpop.f32.mrb[0].mxu0
    %3279 = vmatprep.mubr.f32.mxu0 %v3138
    %3280 = vmatmul.mubr.f32.gmra.mrb[0].mxu0 %v3137
    %v3281 = vpop.f32.mrb[0].mxu0
    %v3282 = vadd.f32 0.0, %v3281
    %v3283 = vpop.f32.mrb[0].mxu0
    %3284 = vmatprep.mubr.f32.mxu0 %v3142
    %3285 = vmatmul.mubr.f32.gmra.mrb[0].mxu0 %v3141
    %v3286 = vpop.f32.mrb[0].mxu0
    %v3287 = vadd.f32 0.0, %v3286
    %v3288 = vpop.f32.mrb[0].mxu0
    %3289 = vdwg.mxu0
    %3290 = vmatprep.subr.mxu0 0.0
    %3291 = vmatpush1.msra.mxu0 %v235
    %3292 = vmatprep.subr.mxu0 0.0
    %3293 = vmatpush1.msra.mxu0 %v236
    %3294 = vmatprep.subr.mxu0 0.0
    %3295 = vmatpush1.msra.mxu0 %v237
    %3296 = vmatprep.subr.mxu0 0.0
    %3297 = vmatpush1.msra.mxu0 %v238
    %3298 = vmatprep.subr.mxu0 0.0
    %3299 = vmatpush1.msra.mxu0 %v239
    %3300 = vmatprep.subr.mxu0 0.0
    %3301 = vmatpush1.msra.mxu0 %v240
    %3302 = vmatprep.subr.mxu0 0.0
    %3303 = vmatpush1.msra.mxu0 %v241
    %3304 = vmatprep.subr.mxu0 0.0
    %3305 = vmatpush1.msra.mxu0 %v242
    %3306 = vmatprep.subr.mxu0 0.0
    %3307 = vmatpush1.msra.mxu0 %v243
    %3308 = vmatprep.subr.mxu0 0.0
    %3309 = vmatpush1.msra.mxu0 %v244
    %3310 = vmatprep.subr.mxu0 0.0
    %3311 = vmatpush1.msra.mxu0 %v245
    %3312 = vmatprep.subr.mxu0 0.0
    %3313 = vmatpush1.msra.mxu0 %v246
    %3314 = vmatprep.subr.mxu0 0.0
    %3315 = vmatpush1.msra.mxu0 %v247
    %3316 = vmatprep.subr.mxu0 0.0
    %3317 = vmatpush1.msra.mxu0 %v248
    %3318 = vmatprep.subr.mxu0 0.0
    %3319 = vmatpush1.msra.mxu0 %v249
    %3320 = vmatprep.subr.mxu0 0.0
    %3321 = vmatpush1.msra.mxu0 %v250
    %3322 = vmatprep.subr.mxu0 0.0
    %3323 = vmatpush1.msra.mxu0 %v251
    %3324 = vmatprep.subr.mxu0 0.0
    %3325 = vmatpush1.msra.mxu0 %v252
    %3326 = vmatprep.subr.mxu0 0.0
    %3327 = vmatpush1.msra.mxu0 %v253
    %3328 = vmatprep.subr.mxu0 0.0
    %3329 = vmatpush1.msra.mxu0 %v254
    %3330 = vmatprep.subr.mxu0 0.0
    %3331 = vmatpush1.msra.mxu0 %v255
    %3332 = vmatprep.subr.mxu0 0.0
    %3333 = vmatpush1.msra.mxu0 %v256
    %3334 = vmatprep.subr.mxu0 0.0
    %3335 = vmatpush1.msra.mxu0 %v257
    %3336 = vmatprep.subr.mxu0 0.0
    %3337 = vmatpush1.msra.mxu0 %v258
    %3338 = vmatprep.subr.mxu0 0.0
    %3339 = vmatpush1.msra.mxu0 %v259
    %3340 = vmatprep.subr.mxu0 0.0
    %3341 = vmatpush1.msra.mxu0 %v260
    %3342 = vmatprep.subr.mxu0 0.0
    %3343 = vmatpush1.msra.mxu0 %v261
    %3344 = vmatprep.subr.mxu0 0.0
    %3345 = vmatpush1.msra.mxu0 %v262
    %3346 = vmatprep.subr.mxu0 0.0
    %3347 = vmatpush1.msra.mxu0 %v263
    %3348 = vmatprep.subr.mxu0 0.0
    %3349 = vmatpush1.msra.mxu0 %v264
    %3350 = vmatprep.subr.mxu0 0.0
    %3351 = vmatpush1.msra.mxu0 %v265
    %3352 = vmatprep.subr.mxu0 0.0
    %3353 = vmatpush1.msra.mxu0 %v266
    %3354 = vmatprep.mubr.f32.mxu0 %v3084
    %3355 = vmatmul.mubr.f32.gmra.mrb[0].mxu0 %v3083
    %v3356 = vpop.f32.mrb[0].mxu0
    %v3357 = vadd.f32 %v3212, %v3356
    %v3358 = vpop.f32.mrb[0].mxu0
    %3359 = vmatprep.mubr.f32.mxu0 %v3088
    %3360 = vmatmul.mubr.f32.gmra.mrb[0].mxu0 %v3087
    %v3361 = vpop.f32.mrb[0].mxu0
    %v3362 = vadd.f32 %v3217, %v3361
    %v3363 = vpop.f32.mrb[0].mxu0
    %3364 = vmatprep.mubr.f32.mxu0 %v3092
    %3365 = vmatmul.mubr.f32.gmra.mrb[0].mxu0 %v3091
    %v3366 = vpop.f32.mrb[0].mxu0
    %v3367 = vadd.f32 %v3222, %v3366
    %v3368 = vpop.f32.mrb[0].mxu0
    %3369 = vmatprep.mubr.f32.mxu0 %v3096
    %3370 = vmatmul.mubr.f32.gmra.mrb[0].mxu0 %v3095
    %v3371 = vpop.f32.mrb[0].mxu0
    %v3372 = vadd.f32 %v3227, %v3371
    %v3373 = vpop.f32.mrb[0].mxu0
    %3374 = vmatprep.mubr.f32.mxu0 %v3100
    %3375 = vmatmul.mubr.f32.gmra.mrb[0].mxu0 %v3099
    %v3376 = vpop.f32.mrb[0].mxu0
    %v3377 = vadd.f32 %v3232, %v3376
    %v3378 = vpop.f32.mrb[0].mxu0
    %3379 = vmatprep.mubr.f32.mxu0 %v3104
    %3380 = vmatmul.mubr.f32.gmra.mrb[0].mxu0 %v3103
    %v3381 = vpop.f32.mrb[0].mxu0
    %v3382 = vadd.f32 %v3237, %v3381
    %v3383 = vpop.f32.mrb[0].mxu0
    %3384 = vmatprep.mubr.f32.mxu0 %v3108
    %3385 = vmatmul.mubr.f32.gmra.mrb[0].mxu0 %v3107
    %v3386 = vpop.f32.mrb[0].mxu0
    %v3387 = vadd.f32 %v3242, %v3386
    %v3388 = vpop.f32.mrb[0].mxu0
    %3389 = vmatprep.mubr.f32.mxu0 %v3112
    %3390 = vmatmul.mubr.f32.gmra.mrb[0].mxu0 %v3111
    %v3391 = vpop.f32.mrb[0].mxu0
    %v3392 = vadd.f32 %v3247, %v3391
    %v3393 = vpop.f32.mrb[0].mxu0
    %3394 = vmatprep.mubr.f32.mxu0 %v3116
    %3395 = vmatmul.mubr.f32.gmra.mrb[0].mxu0 %v3115
    %v3396 = vpop.f32.mrb[0].mxu0
    %v3397 = vadd.f32 %v3252, %v3396
    %v3398 = vpop.f32.mrb[0].mxu0
    %3399 = vmatprep.mubr.f32.mxu0 %v3120
    %3400 = vmatmul.mubr.f32.gmra.mrb[0].mxu0 %v3119
    %v3401 = vpop.f32.mrb[0].mxu0
    %v3402 = vadd.f32 %v3257, %v3401
    %v3403 = vpop.f32.mrb[0].mxu0
    %3404 = vmatprep.mubr.f32.mxu0 %v3124
    %3405 = vmatmul.mubr.f32.gmra.mrb[0].mxu0 %v3123
    %v3406 = vpop.f32.mrb[0].mxu0
    %v3407 = vadd.f32 %v3262, %v3406
    %v3408 = vpop.f32.mrb[0].mxu0
    %3409 = vmatprep.mubr.f32.mxu0 %v3128
    %3410 = vmatmul.mubr.f32.gmra.mrb[0].mxu0 %v3127
    %v3411 = vpop.f32.mrb[0].mxu0
    %v3412 = vadd.f32 %v3267, %v3411
    %v3413 = vpop.f32.mrb[0].mxu0
    %3414 = vmatprep.mubr.f32.mxu0 %v3132
    %3415 = vmatmul.mubr.f32.gmra.mrb[0].mxu0 %v3131
    %v3416 = vpop.f32.mrb[0].mxu0
    %v3417 = vadd.f32 %v3272, %v3416
    %v3418 = vpop.f32.mrb[0].mxu0
    %3419 = vmatprep.mubr.f32.mxu0 %v3136
    %3420 = vmatmul.mubr.f32.gmra.mrb[0].mxu0 %v3135
    %v3421 = vpop.f32.mrb[0].mxu0
    %v3422 = vadd.f32 %v3277, %v3421
    %v3423 = vpop.f32.mrb[0].mxu0
    %3424 = vmatprep.mubr.f32.mxu0 %v3140
    %3425 = vmatmul.mubr.f32.gmra.mrb[0].mxu0 %v3139
    %v3426 = vpop.f32.mrb[0].mxu0
    %v3427 = vadd.f32 %v3282, %v3426
    %v3428 = vpop.f32.mrb[0].mxu0
    %3429 = vmatprep.mubr.f32.mxu0 %v3144
    %3430 = vmatmul.mubr.f32.gmra.mrb[0].mxu0 %v3143
    %v3431 = vpop.f32.mrb[0].mxu0
    %v3432 = vadd.f32 %v3287, %v3431
    %v3433 = vpop.f32.mrb[0].mxu0
    %3434 = vdwg.mxu0
    %s3435 = scalar_lea.vmem [#allocation10], 20
    %v3436 = vld [vmem:[%s3435] sm:$0xf]
    %v3438 = vsel %vm979, %v3357, 0
    %v3441 = vsel %vm979, %v3362, 0
    %v3444 = vsel %vm979, %v3367, 0
    %v3447 = vsel %vm979, %v3372, 0
    %v3450 = vsel %vm979, %v3377, 0
    %v3453 = vsel %vm979, %v3382, 0
    %v3456 = vsel %vm979, %v3387, 0
    %v3459 = vsel %vm979, %v3392, 0
    %v3462 = vsel %vm979, %v3397, 0
    %v3465 = vsel %vm979, %v3402, 0
    %v3468 = vsel %vm979, %v3407, 0
    %v3471 = vsel %vm979, %v3412, 0
    %v3474 = vsel %vm979, %v3417, 0
    %v3477 = vsel %vm979, %v3422, 0
    %v3480 = vsel %vm979, %v3427, 0
    %v3483 = vsel %vm979, %v3432, 0
    %v3486 = vsel %vm1028, %v3436, 0
    %3488 = vmatprep.subr.mxu0 0.0
    %3489 = vmatpush1.msra.mxu0 %v3486
    %3490 = vmatprep.subr.mxu0 0.0
    %3491 = vmatpush1.msra.mxu0 0.0
    %3492 = vmatprep.subr.mxu0 0.0
    %3493 = vmatpush1.msra.mxu0 0.0
    %3494 = vmatprep.subr.mxu0 0.0
    %3495 = vmatpush1.msra.mxu0 0.0
    %3496 = vmatprep.subr.mxu0 0.0
    %3497 = vmatpush1.msra.mxu0 0.0
    %3498 = vmatprep.subr.mxu0 0.0
    %3499 = vmatpush1.msra.mxu0 0.0
    %3500 = vmatprep.subr.mxu0 0.0
    %3501 = vmatpush1.msra.mxu0 0.0
    %3502 = vmatprep.subr.mxu0 0.0
    %3503 = vmatpush1.msra.mxu0 0.0
    %3504 = vmatprep.subr.mxu0 0.0
    %3505 = vmatpush1.msra.mxu0 0.0
    %3506 = vmatprep.subr.mxu0 0.0
    %3507 = vmatpush1.msra.mxu0 0.0
    %3508 = vmatprep.subr.mxu0 0.0
    %3509 = vmatpush1.msra.mxu0 0.0
    %3510 = vmatprep.subr.mxu0 0.0
    %3511 = vmatpush1.msra.mxu0 0.0
    %3512 = vmatprep.subr.mxu0 0.0
    %3513 = vmatpush1.msra.mxu0 0.0
    %3514 = vmatprep.subr.mxu0 0.0
    %3515 = vmatpush1.msra.mxu0 0.0
    %3516 = vmatprep.subr.mxu0 0.0
    %3517 = vmatpush1.msra.mxu0 0.0
    %3518 = vmatprep.subr.mxu0 0.0
    %3519 = vmatpush1.msra.mxu0 0.0
    %3520 = vmatprep.subr.mxu0 0.0
    %3521 = vmatpush1.msra.mxu0 0.0
    %3522 = vmatprep.subr.mxu0 0.0
    %3523 = vmatpush1.msra.mxu0 0.0
    %3524 = vmatprep.subr.mxu0 0.0
    %3525 = vmatpush1.msra.mxu0 0.0
    %3526 = vmatprep.subr.mxu0 0.0
    %3527 = vmatpush1.msra.mxu0 0.0
    %3528 = vmatprep.subr.mxu0 0.0
    %3529 = vmatpush1.msra.mxu0 0.0
    %3530 = vmatprep.subr.mxu0 0.0
    %3531 = vmatpush1.msra.mxu0 0.0
    %3532 = vmatprep.subr.mxu0 0.0
    %3533 = vmatpush1.msra.mxu0 0.0
    %3534 = vmatprep.subr.mxu0 0.0
    %3535 = vmatpush1.msra.mxu0 0.0
    %3536 = vmatprep.subr.mxu0 0.0
    %3537 = vmatpush1.msra.mxu0 0.0
    %3538 = vmatprep.subr.mxu0 0.0
    %3539 = vmatpush1.msra.mxu0 0.0
    %3540 = vmatprep.subr.mxu0 0.0
    %3541 = vmatpush1.msra.mxu0 0.0
    %3542 = vmatprep.subr.mxu0 0.0
    %3543 = vmatpush1.msra.mxu0 0.0
    %3544 = vmatprep.subr.mxu0 0.0
    %3545 = vmatpush1.msra.mxu0 0.0
    %3546 = vmatprep.subr.mxu0 0.0
    %3547 = vmatpush1.msra.mxu0 0.0
    %3548 = vmatprep.subr.mxu0 0.0
    %3549 = vmatpush1.msra.mxu0 0.0
    %3550 = vmatprep.subr.mxu0 0.0
    %3551 = vmatpush1.msra.mxu0 0.0
    %3552 = vmatprep.mubr.f32.mxu0 0.0
    %3553 = vmatmul.mubr.f32.gmra.mrb[0].mxu0 %v3438
    %v3554 = vpop.f32.mrb[0].mxu0
    %v3555 = vadd.f32 0.0, %v3554
    %v3556 = vpop.f32.mrb[0].mxu0
    %3557 = vmatprep.mubr.f32.mxu0 0.0
    %3558 = vmatmul.mubr.f32.gmra.mrb[0].mxu0 %v3441
    %v3559 = vpop.f32.mrb[0].mxu0
    %v3560 = vadd.f32 0.0, %v3559
    %v3561 = vpop.f32.mrb[0].mxu0
    %3562 = vmatprep.mubr.f32.mxu0 0.0
    %3563 = vmatmul.mubr.f32.gmra.mrb[0].mxu0 %v3444
    %v3564 = vpop.f32.mrb[0].mxu0
    %v3565 = vadd.f32 0.0, %v3564
    %v3566 = vpop.f32.mrb[0].mxu0
    %3567 = vmatprep.mubr.f32.mxu0 0.0
    %3568 = vmatmul.mubr.f32.gmra.mrb[0].mxu0 %v3447
    %v3569 = vpop.f32.mrb[0].mxu0
    %v3570 = vadd.f32 0.0, %v3569
    %v3571 = vpop.f32.mrb[0].mxu0
    %3572 = vmatprep.mubr.f32.mxu0 0.0
    %3573 = vmatmul.mubr.f32.gmra.mrb[0].mxu0 %v3450
    %v3574 = vpop.f32.mrb[0].mxu0
    %v3575 = vadd.f32 0.0, %v3574
    %v3576 = vpop.f32.mrb[0].mxu0
    %3577 = vmatprep.mubr.f32.mxu0 0.0
    %3578 = vmatmul.mubr.f32.gmra.mrb[0].mxu0 %v3453
    %v3579 = vpop.f32.mrb[0].mxu0
    %v3580 = vadd.f32 0.0, %v3579
    %v3581 = vpop.f32.mrb[0].mxu0
    %3582 = vmatprep.mubr.f32.mxu0 0.0
    %3583 = vmatmul.mubr.f32.gmra.mrb[0].mxu0 %v3456
    %v3584 = vpop.f32.mrb[0].mxu0
    %v3585 = vadd.f32 0.0, %v3584
    %v3586 = vpop.f32.mrb[0].mxu0
    %3587 = vmatprep.mubr.f32.mxu0 0.0
    %3588 = vmatmul.mubr.f32.gmra.mrb[0].mxu0 %v3459
    %v3589 = vpop.f32.mrb[0].mxu0
    %v3590 = vadd.f32 0.0, %v3589
    %v3591 = vpop.f32.mrb[0].mxu0
    %3592 = vmatprep.mubr.f32.mxu0 0.0
    %3593 = vmatmul.mubr.f32.gmra.mrb[0].mxu0 %v3462
    %v3594 = vpop.f32.mrb[0].mxu0
    %v3595 = vadd.f32 0.0, %v3594
    %v3596 = vpop.f32.mrb[0].mxu0
    %3597 = vmatprep.mubr.f32.mxu0 0.0
    %3598 = vmatmul.mubr.f32.gmra.mrb[0].mxu0 %v3465
    %v3599 = vpop.f32.mrb[0].mxu0
    %v3600 = vadd.f32 0.0, %v3599
    %v3601 = vpop.f32.mrb[0].mxu0
    %3602 = vmatprep.mubr.f32.mxu0 0.0
    %3603 = vmatmul.mubr.f32.gmra.mrb[0].mxu0 %v3468
    %v3604 = vpop.f32.mrb[0].mxu0
    %v3605 = vadd.f32 0.0, %v3604
    %v3606 = vpop.f32.mrb[0].mxu0
    %3607 = vmatprep.mubr.f32.mxu0 0.0
    %3608 = vmatmul.mubr.f32.gmra.mrb[0].mxu0 %v3471
    %v3609 = vpop.f32.mrb[0].mxu0
    %v3610 = vadd.f32 0.0, %v3609
    %v3611 = vpop.f32.mrb[0].mxu0
    %3612 = vmatprep.mubr.f32.mxu0 0.0
    %3613 = vmatmul.mubr.f32.gmra.mrb[0].mxu0 %v3474
    %v3614 = vpop.f32.mrb[0].mxu0
    %v3615 = vadd.f32 0.0, %v3614
    %v3616 = vpop.f32.mrb[0].mxu0
    %3617 = vmatprep.mubr.f32.mxu0 0.0
    %3618 = vmatmul.mubr.f32.gmra.mrb[0].mxu0 %v3477
    %v3619 = vpop.f32.mrb[0].mxu0
    %v3620 = vadd.f32 0.0, %v3619
    %v3621 = vpop.f32.mrb[0].mxu0
    %3622 = vmatprep.mubr.f32.mxu0 0.0
    %3623 = vmatmul.mubr.f32.gmra.mrb[0].mxu0 %v3480
    %v3624 = vpop.f32.mrb[0].mxu0
    %v3625 = vadd.f32 0.0, %v3624
    %v3626 = vpop.f32.mrb[0].mxu0
    %3627 = vmatprep.mubr.f32.mxu0 0.0
    %3628 = vmatmul.mubr.f32.gmra.mrb[0].mxu0 %v3483
    %v3629 = vpop.f32.mrb[0].mxu0
    %v3630 = vadd.f32 0.0, %v3629
    %v3631 = vpop.f32.mrb[0].mxu0
    %3632 = vdwg.mxu0
    %v3633 = vadd.f32 %v3064, %v3555
    %v3634 = vadd.f32 %v3065, %v3560
    %v3635 = vadd.f32 %v3066, %v3565
    %v3636 = vadd.f32 %v3067, %v3570
    %v3637 = vadd.f32 %v3068, %v3575
    %v3638 = vadd.f32 %v3069, %v3580
    %v3639 = vadd.f32 %v3070, %v3585
    %v3640 = vadd.f32 %v3071, %v3590
    %v3641 = vadd.f32 %v3072, %v3595
    %v3642 = vadd.f32 %v3073, %v3600
    %v3643 = vadd.f32 %v3074, %v3605
    %v3644 = vadd.f32 %v3075, %v3610
    %v3645 = vadd.f32 %v3076, %v3615
    %v3646 = vadd.f32 %v3077, %v3620
    %v3647 = vadd.f32 %v3078, %v3625
    %v3648 = vadd.f32 %v3079, %v3630
    %s3649 = scalar_lea.vmem [#allocation5], 3072
    %v3650 = vld [vmem:[%s3649] sm:$0xff]
    %v3651 = vld [vmem:[%s3649 + $0x8] sm:$0xff]
    %v3652 = vld [vmem:[%s3649 + $0x10] sm:$0xff]
    %v3653 = vld [vmem:[%s3649 + $0x18] sm:$0xff]
    %v3654 = vld [vmem:[%s3649 + $0x20] sm:$0xff]
    %v3655 = vld [vmem:[%s3649 + $0x28] sm:$0xff]
    %v3656 = vld [vmem:[%s3649 + $0x30] sm:$0xff]
    %v3657 = vld [vmem:[%s3649 + $0x38] sm:$0xff]
    %v3658 = vld [vmem:[%s3649 + $0x40] sm:$0xff]
    %v3659 = vld [vmem:[%s3649 + $0x48] sm:$0xff]
    %v3660 = vld [vmem:[%s3649 + $0x50] sm:$0xff]
    %v3661 = vld [vmem:[%s3649 + $0x58] sm:$0xff]
    %v3662 = vld [vmem:[%s3649 + $0x60] sm:$0xff]
    %v3663 = vld [vmem:[%s3649 + $0x68] sm:$0xff]
    %v3664 = vld [vmem:[%s3649 + $0x70] sm:$0xff]
    %v3665 = vld [vmem:[%s3649 + $0x78] sm:$0xff]
    %v3666 = vld [vmem:[%s3649 + $0x80] sm:$0xff]
    %v3667 = vld [vmem:[%s3649 + $0x88] sm:$0xff]
    %v3668 = vld [vmem:[%s3649 + $0x90] sm:$0xff]
    %v3669 = vld [vmem:[%s3649 + $0x98] sm:$0xff]
    %v3670 = vld [vmem:[%s3649 + $0xa0] sm:$0xff]
    %v3671 = vld [vmem:[%s3649 + $0xa8] sm:$0xff]
    %v3672 = vld [vmem:[%s3649 + $0xb0] sm:$0xff]
    %v3673 = vld [vmem:[%s3649 + $0xb8] sm:$0xff]
    %v3674 = vld [vmem:[%s3649 + $0xc0] sm:$0xff]
    %v3675 = vld [vmem:[%s3649 + $0xc8] sm:$0xff]
    %v3676 = vld [vmem:[%s3649 + $0xd0] sm:$0xff]
    %v3677 = vld [vmem:[%s3649 + $0xd8] sm:$0xff]
    %v3678 = vld [vmem:[%s3649 + $0xe0] sm:$0xff]
    %v3679 = vld [vmem:[%s3649 + $0xe8] sm:$0xff]
    %v3680 = vld [vmem:[%s3649 + $0xf0] sm:$0xff]
    %v3681 = vld [vmem:[%s3649 + $0xf8] sm:$0xff]
    %v3682 = vld [vmem:[%s3649 + $0x100] sm:$0xff]
    %v3683 = vld [vmem:[%s3649 + $0x108] sm:$0xff]
    %v3684 = vld [vmem:[%s3649 + $0x110] sm:$0xff]
    %v3685 = vld [vmem:[%s3649 + $0x118] sm:$0xff]
    %v3686 = vld [vmem:[%s3649 + $0x120] sm:$0xff]
    %v3687 = vld [vmem:[%s3649 + $0x128] sm:$0xff]
    %v3688 = vld [vmem:[%s3649 + $0x130] sm:$0xff]
    %v3689 = vld [vmem:[%s3649 + $0x138] sm:$0xff]
    %v3690 = vld [vmem:[%s3649 + $0x140] sm:$0xff]
    %v3691 = vld [vmem:[%s3649 + $0x148] sm:$0xff]
    %v3692 = vld [vmem:[%s3649 + $0x150] sm:$0xff]
    %v3693 = vld [vmem:[%s3649 + $0x158] sm:$0xff]
    %v3694 = vld [vmem:[%s3649 + $0x160] sm:$0xff]
    %v3695 = vld [vmem:[%s3649 + $0x168] sm:$0xff]
    %v3696 = vld [vmem:[%s3649 + $0x170] sm:$0xff]
    %v3697 = vld [vmem:[%s3649 + $0x178] sm:$0xff]
    %v3698 = vld [vmem:[%s3649 + $0x180] sm:$0xff]
    %v3699 = vld [vmem:[%s3649 + $0x188] sm:$0xff]
    %v3700 = vld [vmem:[%s3649 + $0x190] sm:$0xff]
    %v3701 = vld [vmem:[%s3649 + $0x198] sm:$0xff]
    %v3702 = vld [vmem:[%s3649 + $0x1a0] sm:$0xff]
    %v3703 = vld [vmem:[%s3649 + $0x1a8] sm:$0xff]
    %v3704 = vld [vmem:[%s3649 + $0x1b0] sm:$0xff]
    %v3705 = vld [vmem:[%s3649 + $0x1b8] sm:$0xff]
    %v3706 = vld [vmem:[%s3649 + $0x1c0] sm:$0xff]
    %v3707 = vld [vmem:[%s3649 + $0x1c8] sm:$0xff]
    %v3708 = vld [vmem:[%s3649 + $0x1d0] sm:$0xff]
    %v3709 = vld [vmem:[%s3649 + $0x1d8] sm:$0xff]
    %v3710 = vld [vmem:[%s3649 + $0x1e0] sm:$0xff]
    %v3711 = vld [vmem:[%s3649 + $0x1e8] sm:$0xff]
    %v3712 = vld [vmem:[%s3649 + $0x1f0] sm:$0xff]
    %v3713 = vld [vmem:[%s3649 + $0x1f8] sm:$0xff]
    %3714 = vmatprep.subr.mxu0 0.0
    %3715 = vmatpush1.msra.mxu0 %v203
    %3716 = vmatprep.subr.mxu0 0.0
    %3717 = vmatpush1.msra.mxu0 %v204
    %3718 = vmatprep.subr.mxu0 0.0
    %3719 = vmatpush1.msra.mxu0 %v205
    %3720 = vmatprep.subr.mxu0 0.0
    %3721 = vmatpush1.msra.mxu0 %v206
    %3722 = vmatprep.subr.mxu0 0.0
    %3723 = vmatpush1.msra.mxu0 %v207
    %3724 = vmatprep.subr.mxu0 0.0
    %3725 = vmatpush1.msra.mxu0 %v208
    %3726 = vmatprep.subr.mxu0 0.0
    %3727 = vmatpush1.msra.mxu0 %v209
    %3728 = vmatprep.subr.mxu0 0.0
    %3729 = vmatpush1.msra.mxu0 %v210
    %3730 = vmatprep.subr.mxu0 0.0
    %3731 = vmatpush1.msra.mxu0 %v211
    %3732 = vmatprep.subr.mxu0 0.0
    %3733 = vmatpush1.msra.mxu0 %v212
    %3734 = vmatprep.subr.mxu0 0.0
    %3735 = vmatpush1.msra.mxu0 %v213
    %3736 = vmatprep.subr.mxu0 0.0
    %3737 = vmatpush1.msra.mxu0 %v214
    %3738 = vmatprep.subr.mxu0 0.0
    %3739 = vmatpush1.msra.mxu0 %v215
    %3740 = vmatprep.subr.mxu0 0.0
    %3741 = vmatpush1.msra.mxu0 %v216
    %3742 = vmatprep.subr.mxu0 0.0
    %3743 = vmatpush1.msra.mxu0 %v217
    %3744 = vmatprep.subr.mxu0 0.0
    %3745 = vmatpush1.msra.mxu0 %v218
    %3746 = vmatprep.subr.mxu0 0.0
    %3747 = vmatpush1.msra.mxu0 %v219
    %3748 = vmatprep.subr.mxu0 0.0
    %3749 = vmatpush1.msra.mxu0 %v220
    %3750 = vmatprep.subr.mxu0 0.0
    %3751 = vmatpush1.msra.mxu0 %v221
    %3752 = vmatprep.subr.mxu0 0.0
    %3753 = vmatpush1.msra.mxu0 %v222
    %3754 = vmatprep.subr.mxu0 0.0
    %3755 = vmatpush1.msra.mxu0 %v223
    %3756 = vmatprep.subr.mxu0 0.0
    %3757 = vmatpush1.msra.mxu0 %v224
    %3758 = vmatprep.subr.mxu0 0.0
    %3759 = vmatpush1.msra.mxu0 %v225
    %3760 = vmatprep.subr.mxu0 0.0
    %3761 = vmatpush1.msra.mxu0 %v226
    %3762 = vmatprep.subr.mxu0 0.0
    %3763 = vmatpush1.msra.mxu0 %v227
    %3764 = vmatprep.subr.mxu0 0.0
    %3765 = vmatpush1.msra.mxu0 %v228
    %3766 = vmatprep.subr.mxu0 0.0
    %3767 = vmatpush1.msra.mxu0 %v229
    %3768 = vmatprep.subr.mxu0 0.0
    %3769 = vmatpush1.msra.mxu0 %v230
    %3770 = vmatprep.subr.mxu0 0.0
    %3771 = vmatpush1.msra.mxu0 %v231
    %3772 = vmatprep.subr.mxu0 0.0
    %3773 = vmatpush1.msra.mxu0 %v232
    %3774 = vmatprep.subr.mxu0 0.0
    %3775 = vmatpush1.msra.mxu0 %v233
    %3776 = vmatprep.subr.mxu0 0.0
    %3777 = vmatpush1.msra.mxu0 %v234
    %3778 = vmatprep.mubr.f32.mxu0 %v3651
    %3779 = vmatmul.mubr.f32.gmra.mrb[0].mxu0 %v3650
    %v3780 = vpop.f32.mrb[0].mxu0
    %v3781 = vadd.f32 0.0, %v3780
    %v3782 = vpop.f32.mrb[0].mxu0
    %3783 = vmatprep.mubr.f32.mxu0 %v3655
    %3784 = vmatmul.mubr.f32.gmra.mrb[0].mxu0 %v3654
    %v3785 = vpop.f32.mrb[0].mxu0
    %v3786 = vadd.f32 0.0, %v3785
    %v3787 = vpop.f32.mrb[0].mxu0
    %3788 = vmatprep.mubr.f32.mxu0 %v3659
    %3789 = vmatmul.mubr.f32.gmra.mrb[0].mxu0 %v3658
    %v3790 = vpop.f32.mrb[0].mxu0
    %v3791 = vadd.f32 0.0, %v3790
    %v3792 = vpop.f32.mrb[0].mxu0
    %3793 = vmatprep.mubr.f32.mxu0 %v3663
    %3794 = vmatmul.mubr.f32.gmra.mrb[0].mxu0 %v3662
    %v3795 = vpop.f32.mrb[0].mxu0
    %v3796 = vadd.f32 0.0, %v3795
    %v3797 = vpop.f32.mrb[0].mxu0
    %3798 = vmatprep.mubr.f32.mxu0 %v3667
    %3799 = vmatmul.mubr.f32.gmra.mrb[0].mxu0 %v3666
    %v3800 = vpop.f32.mrb[0].mxu0
    %v3801 = vadd.f32 0.0, %v3800
    %v3802 = vpop.f32.mrb[0].mxu0
    %3803 = vmatprep.mubr.f32.mxu0 %v3671
    %3804 = vmatmul.mubr.f32.gmra.mrb[0].mxu0 %v3670
    %v3805 = vpop.f32.mrb[0].mxu0
    %v3806 = vadd.f32 0.0, %v3805
    %v3807 = vpop.f32.mrb[0].mxu0
    %3808 = vmatprep.mubr.f32.mxu0 %v3675
    %3809 = vmatmul.mubr.f32.gmra.mrb[0].mxu0 %v3674
    %v3810 = vpop.f32.mrb[0].mxu0
    %v3811 = vadd.f32 0.0, %v3810
    %v3812 = vpop.f32.mrb[0].mxu0
    %3813 = vmatprep.mubr.f32.mxu0 %v3679
    %3814 = vmatmul.mubr.f32.gmra.mrb[0].mxu0 %v3678
    %v3815 = vpop.f32.mrb[0].mxu0
    %v3816 = vadd.f32 0.0, %v3815
    %v3817 = vpop.f32.mrb[0].mxu0
    %3818 = vmatprep.mubr.f32.mxu0 %v3683
    %3819 = vmatmul.mubr.f32.gmra.mrb[0].mxu0 %v3682
    %v3820 = vpop.f32.mrb[0].mxu0
    %v3821 = vadd.f32 0.0, %v3820
    %v3822 = vpop.f32.mrb[0].mxu0
    %3823 = vmatprep.mubr.f32.mxu0 %v3687
    %3824 = vmatmul.mubr.f32.gmra.mrb[0].mxu0 %v3686
    %v3825 = vpop.f32.mrb[0].mxu0
    %v3826 = vadd.f32 0.0, %v3825
    %v3827 = vpop.f32.mrb[0].mxu0
    %3828 = vmatprep.mubr.f32.mxu0 %v3691
    %3829 = vmatmul.mubr.f32.gmra.mrb[0].mxu0 %v3690
    %v3830 = vpop.f32.mrb[0].mxu0
    %v3831 = vadd.f32 0.0, %v3830
    %v3832 = vpop.f32.mrb[0].mxu0
    %3833 = vmatprep.mubr.f32.mxu0 %v3695
    %3834 = vmatmul.mubr.f32.gmra.mrb[0].mxu0 %v3694
    %v3835 = vpop.f32.mrb[0].mxu0
    %v3836 = vadd.f32 0.0, %v3835
    %v3837 = vpop.f32.mrb[0].mxu0
    %3838 = vmatprep.mubr.f32.mxu0 %v3699
    %3839 = vmatmul.mubr.f32.gmra.mrb[0].mxu0 %v3698
    %v3840 = vpop.f32.mrb[0].mxu0
    %v3841 = vadd.f32 0.0, %v3840
    %v3842 = vpop.f32.mrb[0].mxu0
    %3843 = vmatprep.mubr.f32.mxu0 %v3703
    %3844 = vmatmul.mubr.f32.gmra.mrb[0].mxu0 %v3702
    %v3845 = vpop.f32.mrb[0].mxu0
    %v3846 = vadd.f32 0.0, %v3845
    %v3847 = vpop.f32.mrb[0].mxu0
    %3848 = vmatprep.mubr.f32.mxu0 %v3707
    %3849 = vmatmul.mubr.f32.gmra.mrb[0].mxu0 %v3706
    %v3850 = vpop.f32.mrb[0].mxu0
    %v3851 = vadd.f32 0.0, %v3850
    %v3852 = vpop.f32.mrb[0].mxu0
    %3853 = vmatprep.mubr.f32.mxu0 %v3711
    %3854 = vmatmul.mubr.f32.gmra.mrb[0].mxu0 %v3710
    %v3855 = vpop.f32.mrb[0].mxu0
    %v3856 = vadd.f32 0.0, %v3855
    %v3857 = vpop.f32.mrb[0].mxu0
    %3858 = vdwg.mxu0
    %3859 = vmatprep.subr.mxu0 0.0
    %3860 = vmatpush1.msra.mxu0 %v235
    %3861 = vmatprep.subr.mxu0 0.0
    %3862 = vmatpush1.msra.mxu0 %v236
    %3863 = vmatprep.subr.mxu0 0.0
    %3864 = vmatpush1.msra.mxu0 %v237
    %3865 = vmatprep.subr.mxu0 0.0
    %3866 = vmatpush1.msra.mxu0 %v238
    %3867 = vmatprep.subr.mxu0 0.0
    %3868 = vmatpush1.msra.mxu0 %v239
    %3869 = vmatprep.subr.mxu0 0.0
    %3870 = vmatpush1.msra.mxu0 %v240
    %3871 = vmatprep.subr.mxu0 0.0
    %3872 = vmatpush1.msra.mxu0 %v241
    %3873 = vmatprep.subr.mxu0 0.0
    %3874 = vmatpush1.msra.mxu0 %v242
    %3875 = vmatprep.subr.mxu0 0.0
    %3876 = vmatpush1.msra.mxu0 %v243
    %3877 = vmatprep.subr.mxu0 0.0
    %3878 = vmatpush1.msra.mxu0 %v244
    %3879 = vmatprep.subr.mxu0 0.0
    %3880 = vmatpush1.msra.mxu0 %v245
    %3881 = vmatprep.subr.mxu0 0.0
    %3882 = vmatpush1.msra.mxu0 %v246
    %3883 = vmatprep.subr.mxu0 0.0
    %3884 = vmatpush1.msra.mxu0 %v247
    %3885 = vmatprep.subr.mxu0 0.0
    %3886 = vmatpush1.msra.mxu0 %v248
    %3887 = vmatprep.subr.mxu0 0.0
    %3888 = vmatpush1.msra.mxu0 %v249
    %3889 = vmatprep.subr.mxu0 0.0
    %3890 = vmatpush1.msra.mxu0 %v250
    %3891 = vmatprep.subr.mxu0 0.0
    %3892 = vmatpush1.msra.mxu0 %v251
    %3893 = vmatprep.subr.mxu0 0.0
    %3894 = vmatpush1.msra.mxu0 %v252
    %3895 = vmatprep.subr.mxu0 0.0
    %3896 = vmatpush1.msra.mxu0 %v253
    %3897 = vmatprep.subr.mxu0 0.0
    %3898 = vmatpush1.msra.mxu0 %v254
    %3899 = vmatprep.subr.mxu0 0.0
    %3900 = vmatpush1.msra.mxu0 %v255
    %3901 = vmatprep.subr.mxu0 0.0
    %3902 = vmatpush1.msra.mxu0 %v256
    %3903 = vmatprep.subr.mxu0 0.0
    %3904 = vmatpush1.msra.mxu0 %v257
    %3905 = vmatprep.subr.mxu0 0.0
    %3906 = vmatpush1.msra.mxu0 %v258
    %3907 = vmatprep.subr.mxu0 0.0
    %3908 = vmatpush1.msra.mxu0 %v259
    %3909 = vmatprep.subr.mxu0 0.0
    %3910 = vmatpush1.msra.mxu0 %v260
    %3911 = vmatprep.subr.mxu0 0.0
    %3912 = vmatpush1.msra.mxu0 %v261
    %3913 = vmatprep.subr.mxu0 0.0
    %3914 = vmatpush1.msra.mxu0 %v262
    %3915 = vmatprep.subr.mxu0 0.0
    %3916 = vmatpush1.msra.mxu0 %v263
    %3917 = vmatprep.subr.mxu0 0.0
    %3918 = vmatpush1.msra.mxu0 %v264
    %3919 = vmatprep.subr.mxu0 0.0
    %3920 = vmatpush1.msra.mxu0 %v265
    %3921 = vmatprep.subr.mxu0 0.0
    %3922 = vmatpush1.msra.mxu0 %v266
    %3923 = vmatprep.mubr.f32.mxu0 %v3653
    %3924 = vmatmul.mubr.f32.gmra.mrb[0].mxu0 %v3652
    %v3925 = vpop.f32.mrb[0].mxu0
    %v3926 = vadd.f32 %v3781, %v3925
    %v3927 = vpop.f32.mrb[0].mxu0
    %3928 = vmatprep.mubr.f32.mxu0 %v3657
    %3929 = vmatmul.mubr.f32.gmra.mrb[0].mxu0 %v3656
    %v3930 = vpop.f32.mrb[0].mxu0
    %v3931 = vadd.f32 %v3786, %v3930
    %v3932 = vpop.f32.mrb[0].mxu0
    %3933 = vmatprep.mubr.f32.mxu0 %v3661
    %3934 = vmatmul.mubr.f32.gmra.mrb[0].mxu0 %v3660
    %v3935 = vpop.f32.mrb[0].mxu0
    %v3936 = vadd.f32 %v3791, %v3935
    %v3937 = vpop.f32.mrb[0].mxu0
    %3938 = vmatprep.mubr.f32.mxu0 %v3665
    %3939 = vmatmul.mubr.f32.gmra.mrb[0].mxu0 %v3664
    %v3940 = vpop.f32.mrb[0].mxu0
    %v3941 = vadd.f32 %v3796, %v3940
    %v3942 = vpop.f32.mrb[0].mxu0
    %3943 = vmatprep.mubr.f32.mxu0 %v3669
    %3944 = vmatmul.mubr.f32.gmra.mrb[0].mxu0 %v3668
    %v3945 = vpop.f32.mrb[0].mxu0
    %v3946 = vadd.f32 %v3801, %v3945
    %v3947 = vpop.f32.mrb[0].mxu0
    %3948 = vmatprep.mubr.f32.mxu0 %v3673
    %3949 = vmatmul.mubr.f32.gmra.mrb[0].mxu0 %v3672
    %v3950 = vpop.f32.mrb[0].mxu0
    %v3951 = vadd.f32 %v3806, %v3950
    %v3952 = vpop.f32.mrb[0].mxu0
    %3953 = vmatprep.mubr.f32.mxu0 %v3677
    %3954 = vmatmul.mubr.f32.gmra.mrb[0].mxu0 %v3676
    %v3955 = vpop.f32.mrb[0].mxu0
    %v3956 = vadd.f32 %v3811, %v3955
    %v3957 = vpop.f32.mrb[0].mxu0
    %3958 = vmatprep.mubr.f32.mxu0 %v3681
    %3959 = vmatmul.mubr.f32.gmra.mrb[0].mxu0 %v3680
    %v3960 = vpop.f32.mrb[0].mxu0
    %v3961 = vadd.f32 %v3816, %v3960
    %v3962 = vpop.f32.mrb[0].mxu0
    %3963 = vmatprep.mubr.f32.mxu0 %v3685
    %3964 = vmatmul.mubr.f32.gmra.mrb[0].mxu0 %v3684
    %v3965 = vpop.f32.mrb[0].mxu0
    %v3966 = vadd.f32 %v3821, %v3965
    %v3967 = vpop.f32.mrb[0].mxu0
    %3968 = vmatprep.mubr.f32.mxu0 %v3689
    %3969 = vmatmul.mubr.f32.gmra.mrb[0].mxu0 %v3688
    %v3970 = vpop.f32.mrb[0].mxu0
    %v3971 = vadd.f32 %v3826, %v3970
    %v3972 = vpop.f32.mrb[0].mxu0
    %3973 = vmatprep.mubr.f32.mxu0 %v3693
    %3974 = vmatmul.mubr.f32.gmra.mrb[0].mxu0 %v3692
    %v3975 = vpop.f32.mrb[0].mxu0
    %v3976 = vadd.f32 %v3831, %v3975
    %v3977 = vpop.f32.mrb[0].mxu0
    %3978 = vmatprep.mubr.f32.mxu0 %v3697
    %3979 = vmatmul.mubr.f32.gmra.mrb[0].mxu0 %v3696
    %v3980 = vpop.f32.mrb[0].mxu0
    %v3981 = vadd.f32 %v3836, %v3980
    %v3982 = vpop.f32.mrb[0].mxu0
    %3983 = vmatprep.mubr.f32.mxu0 %v3701
    %3984 = vmatmul.mubr.f32.gmra.mrb[0].mxu0 %v3700
    %v3985 = vpop.f32.mrb[0].mxu0
    %v3986 = vadd.f32 %v3841, %v3985
    %v3987 = vpop.f32.mrb[0].mxu0
    %3988 = vmatprep.mubr.f32.mxu0 %v3705
    %3989 = vmatmul.mubr.f32.gmra.mrb[0].mxu0 %v3704
    %v3990 = vpop.f32.mrb[0].mxu0
    %v3991 = vadd.f32 %v3846, %v3990
    %v3992 = vpop.f32.mrb[0].mxu0
    %3993 = vmatprep.mubr.f32.mxu0 %v3709
    %3994 = vmatmul.mubr.f32.gmra.mrb[0].mxu0 %v3708
    %v3995 = vpop.f32.mrb[0].mxu0
    %v3996 = vadd.f32 %v3851, %v3995
    %v3997 = vpop.f32.mrb[0].mxu0
    %3998 = vmatprep.mubr.f32.mxu0 %v3713
    %3999 = vmatmul.mubr.f32.gmra.mrb[0].mxu0 %v3712
    %v4000 = vpop.f32.mrb[0].mxu0
    %v4001 = vadd.f32 %v3856, %v4000
    %v4002 = vpop.f32.mrb[0].mxu0
    %4003 = vdwg.mxu0
    %s4004 = scalar_lea.vmem [#allocation10], 24
    %v4005 = vld [vmem:[%s4004] sm:$0xf]
    %v4007 = vsel %vm979, %v3926, 0
    %v4010 = vsel %vm979, %v3931, 0
    %v4013 = vsel %vm979, %v3936, 0
    %v4016 = vsel %vm979, %v3941, 0
    %v4019 = vsel %vm979, %v3946, 0
    %v4022 = vsel %vm979, %v3951, 0
    %v4025 = vsel %vm979, %v3956, 0
    %v4028 = vsel %vm979, %v3961, 0
    %v4031 = vsel %vm979, %v3966, 0
    %v4034 = vsel %vm979, %v3971, 0
    %v4037 = vsel %vm979, %v3976, 0
    %v4040 = vsel %vm979, %v3981, 0
    %v4043 = vsel %vm979, %v3986, 0
    %v4046 = vsel %vm979, %v3991, 0
    %v4049 = vsel %vm979, %v3996, 0
    %v4052 = vsel %vm979, %v4001, 0
    %v4055 = vsel %vm1028, %v4005, 0
    %4057 = vmatprep.subr.mxu0 0.0
    %4058 = vmatpush1.msra.mxu0 %v4055
    %4059 = vmatprep.subr.mxu0 0.0
    %4060 = vmatpush1.msra.mxu0 0.0
    %4061 = vmatprep.subr.mxu0 0.0
    %4062 = vmatpush1.msra.mxu0 0.0
    %4063 = vmatprep.subr.mxu0 0.0
    %4064 = vmatpush1.msra.mxu0 0.0
    %4065 = vmatprep.subr.mxu0 0.0
    %4066 = vmatpush1.msra.mxu0 0.0
    %4067 = vmatprep.subr.mxu0 0.0
    %4068 = vmatpush1.msra.mxu0 0.0
    %4069 = vmatprep.subr.mxu0 0.0
    %4070 = vmatpush1.msra.mxu0 0.0
    %4071 = vmatprep.subr.mxu0 0.0
    %4072 = vmatpush1.msra.mxu0 0.0
    %4073 = vmatprep.subr.mxu0 0.0
    %4074 = vmatpush1.msra.mxu0 0.0
    %4075 = vmatprep.subr.mxu0 0.0
    %4076 = vmatpush1.msra.mxu0 0.0
    %4077 = vmatprep.subr.mxu0 0.0
    %4078 = vmatpush1.msra.mxu0 0.0
    %4079 = vmatprep.subr.mxu0 0.0
    %4080 = vmatpush1.msra.mxu0 0.0
    %4081 = vmatprep.subr.mxu0 0.0
    %4082 = vmatpush1.msra.mxu0 0.0
    %4083 = vmatprep.subr.mxu0 0.0
    %4084 = vmatpush1.msra.mxu0 0.0
    %4085 = vmatprep.subr.mxu0 0.0
    %4086 = vmatpush1.msra.mxu0 0.0
    %4087 = vmatprep.subr.mxu0 0.0
    %4088 = vmatpush1.msra.mxu0 0.0
    %4089 = vmatprep.subr.mxu0 0.0
    %4090 = vmatpush1.msra.mxu0 0.0
    %4091 = vmatprep.subr.mxu0 0.0
    %4092 = vmatpush1.msra.mxu0 0.0
    %4093 = vmatprep.subr.mxu0 0.0
    %4094 = vmatpush1.msra.mxu0 0.0
    %4095 = vmatprep.subr.mxu0 0.0
    %4096 = vmatpush1.msra.mxu0 0.0
    %4097 = vmatprep.subr.mxu0 0.0
    %4098 = vmatpush1.msra.mxu0 0.0
    %4099 = vmatprep.subr.mxu0 0.0
    %4100 = vmatpush1.msra.mxu0 0.0
    %4101 = vmatprep.subr.mxu0 0.0
    %4102 = vmatpush1.msra.mxu0 0.0
    %4103 = vmatprep.subr.mxu0 0.0
    %4104 = vmatpush1.msra.mxu0 0.0
    %4105 = vmatprep.subr.mxu0 0.0
    %4106 = vmatpush1.msra.mxu0 0.0
    %4107 = vmatprep.subr.mxu0 0.0
    %4108 = vmatpush1.msra.mxu0 0.0
    %4109 = vmatprep.subr.mxu0 0.0
    %4110 = vmatpush1.msra.mxu0 0.0
    %4111 = vmatprep.subr.mxu0 0.0
    %4112 = vmatpush1.msra.mxu0 0.0
    %4113 = vmatprep.subr.mxu0 0.0
    %4114 = vmatpush1.msra.mxu0 0.0
    %4115 = vmatprep.subr.mxu0 0.0
    %4116 = vmatpush1.msra.mxu0 0.0
    %4117 = vmatprep.subr.mxu0 0.0
    %4118 = vmatpush1.msra.mxu0 0.0
    %4119 = vmatprep.subr.mxu0 0.0
    %4120 = vmatpush1.msra.mxu0 0.0
    %4121 = vmatprep.mubr.f32.mxu0 0.0
    %4122 = vmatmul.mubr.f32.gmra.mrb[0].mxu0 %v4007
    %v4123 = vpop.f32.mrb[0].mxu0
    %v4124 = vadd.f32 0.0, %v4123
    %v4125 = vpop.f32.mrb[0].mxu0
    %4126 = vmatprep.mubr.f32.mxu0 0.0
    %4127 = vmatmul.mubr.f32.gmra.mrb[0].mxu0 %v4010
    %v4128 = vpop.f32.mrb[0].mxu0
    %v4129 = vadd.f32 0.0, %v4128
    %v4130 = vpop.f32.mrb[0].mxu0
    %4131 = vmatprep.mubr.f32.mxu0 0.0
    %4132 = vmatmul.mubr.f32.gmra.mrb[0].mxu0 %v4013
    %v4133 = vpop.f32.mrb[0].mxu0
    %v4134 = vadd.f32 0.0, %v4133
    %v4135 = vpop.f32.mrb[0].mxu0
    %4136 = vmatprep.mubr.f32.mxu0 0.0
    %4137 = vmatmul.mubr.f32.gmra.mrb[0].mxu0 %v4016
    %v4138 = vpop.f32.mrb[0].mxu0
    %v4139 = vadd.f32 0.0, %v4138
    %v4140 = vpop.f32.mrb[0].mxu0
    %4141 = vmatprep.mubr.f32.mxu0 0.0
    %4142 = vmatmul.mubr.f32.gmra.mrb[0].mxu0 %v4019
    %v4143 = vpop.f32.mrb[0].mxu0
    %v4144 = vadd.f32 0.0, %v4143
    %v4145 = vpop.f32.mrb[0].mxu0
    %4146 = vmatprep.mubr.f32.mxu0 0.0
    %4147 = vmatmul.mubr.f32.gmra.mrb[0].mxu0 %v4022
    %v4148 = vpop.f32.mrb[0].mxu0
    %v4149 = vadd.f32 0.0, %v4148
    %v4150 = vpop.f32.mrb[0].mxu0
    %4151 = vmatprep.mubr.f32.mxu0 0.0
    %4152 = vmatmul.mubr.f32.gmra.mrb[0].mxu0 %v4025
    %v4153 = vpop.f32.mrb[0].mxu0
    %v4154 = vadd.f32 0.0, %v4153
    %v4155 = vpop.f32.mrb[0].mxu0
    %4156 = vmatprep.mubr.f32.mxu0 0.0
    %4157 = vmatmul.mubr.f32.gmra.mrb[0].mxu0 %v4028
    %v4158 = vpop.f32.mrb[0].mxu0
    %v4159 = vadd.f32 0.0, %v4158
    %v4160 = vpop.f32.mrb[0].mxu0
    %4161 = vmatprep.mubr.f32.mxu0 0.0
    %4162 = vmatmul.mubr.f32.gmra.mrb[0].mxu0 %v4031
    %v4163 = vpop.f32.mrb[0].mxu0
    %v4164 = vadd.f32 0.0, %v4163
    %v4165 = vpop.f32.mrb[0].mxu0
    %4166 = vmatprep.mubr.f32.mxu0 0.0
    %4167 = vmatmul.mubr.f32.gmra.mrb[0].mxu0 %v4034
    %v4168 = vpop.f32.mrb[0].mxu0
    %v4169 = vadd.f32 0.0, %v4168
    %v4170 = vpop.f32.mrb[0].mxu0
    %4171 = vmatprep.mubr.f32.mxu0 0.0
    %4172 = vmatmul.mubr.f32.gmra.mrb[0].mxu0 %v4037
    %v4173 = vpop.f32.mrb[0].mxu0
    %v4174 = vadd.f32 0.0, %v4173
    %v4175 = vpop.f32.mrb[0].mxu0
    %4176 = vmatprep.mubr.f32.mxu0 0.0
    %4177 = vmatmul.mubr.f32.gmra.mrb[0].mxu0 %v4040
    %v4178 = vpop.f32.mrb[0].mxu0
    %v4179 = vadd.f32 0.0, %v4178
    %v4180 = vpop.f32.mrb[0].mxu0
    %4181 = vmatprep.mubr.f32.mxu0 0.0
    %4182 = vmatmul.mubr.f32.gmra.mrb[0].mxu0 %v4043
    %v4183 = vpop.f32.mrb[0].mxu0
    %v4184 = vadd.f32 0.0, %v4183
    %v4185 = vpop.f32.mrb[0].mxu0
    %4186 = vmatprep.mubr.f32.mxu0 0.0
    %4187 = vmatmul.mubr.f32.gmra.mrb[0].mxu0 %v4046
    %v4188 = vpop.f32.mrb[0].mxu0
    %v4189 = vadd.f32 0.0, %v4188
    %v4190 = vpop.f32.mrb[0].mxu0
    %4191 = vmatprep.mubr.f32.mxu0 0.0
    %4192 = vmatmul.mubr.f32.gmra.mrb[0].mxu0 %v4049
    %v4193 = vpop.f32.mrb[0].mxu0
    %v4194 = vadd.f32 0.0, %v4193
    %v4195 = vpop.f32.mrb[0].mxu0
    %4196 = vmatprep.mubr.f32.mxu0 0.0
    %4197 = vmatmul.mubr.f32.gmra.mrb[0].mxu0 %v4052
    %v4198 = vpop.f32.mrb[0].mxu0
    %v4199 = vadd.f32 0.0, %v4198
    %v4200 = vpop.f32.mrb[0].mxu0
    %4201 = vdwg.mxu0
    %v4202 = vadd.f32 %v3633, %v4124
    %v4203 = vadd.f32 %v3634, %v4129
    %v4204 = vadd.f32 %v3635, %v4134
    %v4205 = vadd.f32 %v3636, %v4139
    %v4206 = vadd.f32 %v3637, %v4144
    %v4207 = vadd.f32 %v3638, %v4149
    %v4208 = vadd.f32 %v3639, %v4154
    %v4209 = vadd.f32 %v3640, %v4159
    %v4210 = vadd.f32 %v3641, %v4164
    %v4211 = vadd.f32 %v3642, %v4169
    %v4212 = vadd.f32 %v3643, %v4174
    %v4213 = vadd.f32 %v3644, %v4179
    %v4214 = vadd.f32 %v3645, %v4184
    %v4215 = vadd.f32 %v3646, %v4189
    %v4216 = vadd.f32 %v3647, %v4194
    %v4217 = vadd.f32 %v3648, %v4199
    %s4218 = scalar_lea.vmem [#allocation5], 3584
    %v4219 = vld [vmem:[%s4218] sm:$0xff]
    %v4220 = vld [vmem:[%s4218 + $0x8] sm:$0xff]
    %v4221 = vld [vmem:[%s4218 + $0x10] sm:$0xff]
    %v4222 = vld [vmem:[%s4218 + $0x18] sm:$0xff]
    %v4223 = vld [vmem:[%s4218 + $0x20] sm:$0xff]
    %v4224 = vld [vmem:[%s4218 + $0x28] sm:$0xff]
    %v4225 = vld [vmem:[%s4218 + $0x30] sm:$0xff]
    %v4226 = vld [vmem:[%s4218 + $0x38] sm:$0xff]
    %v4227 = vld [vmem:[%s4218 + $0x40] sm:$0xff]
    %v4228 = vld [vmem:[%s4218 + $0x48] sm:$0xff]
    %v4229 = vld [vmem:[%s4218 + $0x50] sm:$0xff]
    %v4230 = vld [vmem:[%s4218 + $0x58] sm:$0xff]
    %v4231 = vld [vmem:[%s4218 + $0x60] sm:$0xff]
    %v4232 = vld [vmem:[%s4218 + $0x68] sm:$0xff]
    %v4233 = vld [vmem:[%s4218 + $0x70] sm:$0xff]
    %v4234 = vld [vmem:[%s4218 + $0x78] sm:$0xff]
    %v4235 = vld [vmem:[%s4218 + $0x80] sm:$0xff]
    %v4236 = vld [vmem:[%s4218 + $0x88] sm:$0xff]
    %v4237 = vld [vmem:[%s4218 + $0x90] sm:$0xff]
    %v4238 = vld [vmem:[%s4218 + $0x98] sm:$0xff]
    %v4239 = vld [vmem:[%s4218 + $0xa0] sm:$0xff]
    %v4240 = vld [vmem:[%s4218 + $0xa8] sm:$0xff]
    %v4241 = vld [vmem:[%s4218 + $0xb0] sm:$0xff]
    %v4242 = vld [vmem:[%s4218 + $0xb8] sm:$0xff]
    %v4243 = vld [vmem:[%s4218 + $0xc0] sm:$0xff]
    %v4244 = vld [vmem:[%s4218 + $0xc8] sm:$0xff]
    %v4245 = vld [vmem:[%s4218 + $0xd0] sm:$0xff]
    %v4246 = vld [vmem:[%s4218 + $0xd8] sm:$0xff]
    %v4247 = vld [vmem:[%s4218 + $0xe0] sm:$0xff]
    %v4248 = vld [vmem:[%s4218 + $0xe8] sm:$0xff]
    %v4249 = vld [vmem:[%s4218 + $0xf0] sm:$0xff]
    %v4250 = vld [vmem:[%s4218 + $0xf8] sm:$0xff]
    %v4251 = vld [vmem:[%s4218 + $0x100] sm:$0xff]
    %v4252 = vld [vmem:[%s4218 + $0x108] sm:$0xff]
    %v4253 = vld [vmem:[%s4218 + $0x110] sm:$0xff]
    %v4254 = vld [vmem:[%s4218 + $0x118] sm:$0xff]
    %v4255 = vld [vmem:[%s4218 + $0x120] sm:$0xff]
    %v4256 = vld [vmem:[%s4218 + $0x128] sm:$0xff]
    %v4257 = vld [vmem:[%s4218 + $0x130] sm:$0xff]
    %v4258 = vld [vmem:[%s4218 + $0x138] sm:$0xff]
    %v4259 = vld [vmem:[%s4218 + $0x140] sm:$0xff]
    %v4260 = vld [vmem:[%s4218 + $0x148] sm:$0xff]
    %v4261 = vld [vmem:[%s4218 + $0x150] sm:$0xff]
    %v4262 = vld [vmem:[%s4218 + $0x158] sm:$0xff]
    %v4263 = vld [vmem:[%s4218 + $0x160] sm:$0xff]
    %v4264 = vld [vmem:[%s4218 + $0x168] sm:$0xff]
    %v4265 = vld [vmem:[%s4218 + $0x170] sm:$0xff]
    %v4266 = vld [vmem:[%s4218 + $0x178] sm:$0xff]
    %v4267 = vld [vmem:[%s4218 + $0x180] sm:$0xff]
    %v4268 = vld [vmem:[%s4218 + $0x188] sm:$0xff]
    %v4269 = vld [vmem:[%s4218 + $0x190] sm:$0xff]
    %v4270 = vld [vmem:[%s4218 + $0x198] sm:$0xff]
    %v4271 = vld [vmem:[%s4218 + $0x1a0] sm:$0xff]
    %v4272 = vld [vmem:[%s4218 + $0x1a8] sm:$0xff]
    %v4273 = vld [vmem:[%s4218 + $0x1b0] sm:$0xff]
    %v4274 = vld [vmem:[%s4218 + $0x1b8] sm:$0xff]
    %v4275 = vld [vmem:[%s4218 + $0x1c0] sm:$0xff]
    %v4276 = vld [vmem:[%s4218 + $0x1c8] sm:$0xff]
    %v4277 = vld [vmem:[%s4218 + $0x1d0] sm:$0xff]
    %v4278 = vld [vmem:[%s4218 + $0x1d8] sm:$0xff]
    %v4279 = vld [vmem:[%s4218 + $0x1e0] sm:$0xff]
    %v4280 = vld [vmem:[%s4218 + $0x1e8] sm:$0xff]
    %v4281 = vld [vmem:[%s4218 + $0x1f0] sm:$0xff]
    %v4282 = vld [vmem:[%s4218 + $0x1f8] sm:$0xff]
    %4283 = vmatprep.subr.mxu0 0.0
    %4284 = vmatpush1.msra.mxu0 %v203
    %4285 = vmatprep.subr.mxu0 0.0
    %4286 = vmatpush1.msra.mxu0 %v204
    %4287 = vmatprep.subr.mxu0 0.0
    %4288 = vmatpush1.msra.mxu0 %v205
    %4289 = vmatprep.subr.mxu0 0.0
    %4290 = vmatpush1.msra.mxu0 %v206
    %4291 = vmatprep.subr.mxu0 0.0
    %4292 = vmatpush1.msra.mxu0 %v207
    %4293 = vmatprep.subr.mxu0 0.0
    %4294 = vmatpush1.msra.mxu0 %v208
    %4295 = vmatprep.subr.mxu0 0.0
    %4296 = vmatpush1.msra.mxu0 %v209
    %4297 = vmatprep.subr.mxu0 0.0
    %4298 = vmatpush1.msra.mxu0 %v210
    %4299 = vmatprep.subr.mxu0 0.0
    %4300 = vmatpush1.msra.mxu0 %v211
    %4301 = vmatprep.subr.mxu0 0.0
    %4302 = vmatpush1.msra.mxu0 %v212
    %4303 = vmatprep.subr.mxu0 0.0
    %4304 = vmatpush1.msra.mxu0 %v213
    %4305 = vmatprep.subr.mxu0 0.0
    %4306 = vmatpush1.msra.mxu0 %v214
    %4307 = vmatprep.subr.mxu0 0.0
    %4308 = vmatpush1.msra.mxu0 %v215
    %4309 = vmatprep.subr.mxu0 0.0
    %4310 = vmatpush1.msra.mxu0 %v216
    %4311 = vmatprep.subr.mxu0 0.0
    %4312 = vmatpush1.msra.mxu0 %v217
    %4313 = vmatprep.subr.mxu0 0.0
    %4314 = vmatpush1.msra.mxu0 %v218
    %4315 = vmatprep.subr.mxu0 0.0
    %4316 = vmatpush1.msra.mxu0 %v219
    %4317 = vmatprep.subr.mxu0 0.0
    %4318 = vmatpush1.msra.mxu0 %v220
    %4319 = vmatprep.subr.mxu0 0.0
    %4320 = vmatpush1.msra.mxu0 %v221
    %4321 = vmatprep.subr.mxu0 0.0
    %4322 = vmatpush1.msra.mxu0 %v222
    %4323 = vmatprep.subr.mxu0 0.0
    %4324 = vmatpush1.msra.mxu0 %v223
    %4325 = vmatprep.subr.mxu0 0.0
    %4326 = vmatpush1.msra.mxu0 %v224
    %4327 = vmatprep.subr.mxu0 0.0
    %4328 = vmatpush1.msra.mxu0 %v225
    %4329 = vmatprep.subr.mxu0 0.0
    %4330 = vmatpush1.msra.mxu0 %v226
    %4331 = vmatprep.subr.mxu0 0.0
    %4332 = vmatpush1.msra.mxu0 %v227
    %4333 = vmatprep.subr.mxu0 0.0
    %4334 = vmatpush1.msra.mxu0 %v228
    %4335 = vmatprep.subr.mxu0 0.0
    %4336 = vmatpush1.msra.mxu0 %v229
    %4337 = vmatprep.subr.mxu0 0.0
    %4338 = vmatpush1.msra.mxu0 %v230
    %4339 = vmatprep.subr.mxu0 0.0
    %4340 = vmatpush1.msra.mxu0 %v231
    %4341 = vmatprep.subr.mxu0 0.0
    %4342 = vmatpush1.msra.mxu0 %v232
    %4343 = vmatprep.subr.mxu0 0.0
    %4344 = vmatpush1.msra.mxu0 %v233
    %4345 = vmatprep.subr.mxu0 0.0
    %4346 = vmatpush1.msra.mxu0 %v234
    %4347 = vmatprep.mubr.f32.mxu0 %v4220
    %4348 = vmatmul.mubr.f32.gmra.mrb[0].mxu0 %v4219
    %v4349 = vpop.f32.mrb[0].mxu0
    %v4350 = vadd.f32 0.0, %v4349
    %v4351 = vpop.f32.mrb[0].mxu0
    %4352 = vmatprep.mubr.f32.mxu0 %v4224
    %4353 = vmatmul.mubr.f32.gmra.mrb[0].mxu0 %v4223
    %v4354 = vpop.f32.mrb[0].mxu0
    %v4355 = vadd.f32 0.0, %v4354
    %v4356 = vpop.f32.mrb[0].mxu0
    %4357 = vmatprep.mubr.f32.mxu0 %v4228
    %4358 = vmatmul.mubr.f32.gmra.mrb[0].mxu0 %v4227
    %v4359 = vpop.f32.mrb[0].mxu0
    %v4360 = vadd.f32 0.0, %v4359
    %v4361 = vpop.f32.mrb[0].mxu0
    %4362 = vmatprep.mubr.f32.mxu0 %v4232
    %4363 = vmatmul.mubr.f32.gmra.mrb[0].mxu0 %v4231
    %v4364 = vpop.f32.mrb[0].mxu0
    %v4365 = vadd.f32 0.0, %v4364
    %v4366 = vpop.f32.mrb[0].mxu0
    %4367 = vmatprep.mubr.f32.mxu0 %v4236
    %4368 = vmatmul.mubr.f32.gmra.mrb[0].mxu0 %v4235
    %v4369 = vpop.f32.mrb[0].mxu0
    %v4370 = vadd.f32 0.0, %v4369
    %v4371 = vpop.f32.mrb[0].mxu0
    %4372 = vmatprep.mubr.f32.mxu0 %v4240
    %4373 = vmatmul.mubr.f32.gmra.mrb[0].mxu0 %v4239
    %v4374 = vpop.f32.mrb[0].mxu0
    %v4375 = vadd.f32 0.0, %v4374
    %v4376 = vpop.f32.mrb[0].mxu0
    %4377 = vmatprep.mubr.f32.mxu0 %v4244
    %4378 = vmatmul.mubr.f32.gmra.mrb[0].mxu0 %v4243
    %v4379 = vpop.f32.mrb[0].mxu0
    %v4380 = vadd.f32 0.0, %v4379
    %v4381 = vpop.f32.mrb[0].mxu0
    %4382 = vmatprep.mubr.f32.mxu0 %v4248
    %4383 = vmatmul.mubr.f32.gmra.mrb[0].mxu0 %v4247
    %v4384 = vpop.f32.mrb[0].mxu0
    %v4385 = vadd.f32 0.0, %v4384
    %v4386 = vpop.f32.mrb[0].mxu0
    %4387 = vmatprep.mubr.f32.mxu0 %v4252
    %4388 = vmatmul.mubr.f32.gmra.mrb[0].mxu0 %v4251
    %v4389 = vpop.f32.mrb[0].mxu0
    %v4390 = vadd.f32 0.0, %v4389
    %v4391 = vpop.f32.mrb[0].mxu0
    %4392 = vmatprep.mubr.f32.mxu0 %v4256
    %4393 = vmatmul.mubr.f32.gmra.mrb[0].mxu0 %v4255
    %v4394 = vpop.f32.mrb[0].mxu0
    %v4395 = vadd.f32 0.0, %v4394
    %v4396 = vpop.f32.mrb[0].mxu0
    %4397 = vmatprep.mubr.f32.mxu0 %v4260
    %4398 = vmatmul.mubr.f32.gmra.mrb[0].mxu0 %v4259
    %v4399 = vpop.f32.mrb[0].mxu0
    %v4400 = vadd.f32 0.0, %v4399
    %v4401 = vpop.f32.mrb[0].mxu0
    %4402 = vmatprep.mubr.f32.mxu0 %v4264
    %4403 = vmatmul.mubr.f32.gmra.mrb[0].mxu0 %v4263
    %v4404 = vpop.f32.mrb[0].mxu0
    %v4405 = vadd.f32 0.0, %v4404
    %v4406 = vpop.f32.mrb[0].mxu0
    %4407 = vmatprep.mubr.f32.mxu0 %v4268
    %4408 = vmatmul.mubr.f32.gmra.mrb[0].mxu0 %v4267
    %v4409 = vpop.f32.mrb[0].mxu0
    %v4410 = vadd.f32 0.0, %v4409
    %v4411 = vpop.f32.mrb[0].mxu0
    %4412 = vmatprep.mubr.f32.mxu0 %v4272
    %4413 = vmatmul.mubr.f32.gmra.mrb[0].mxu0 %v4271
    %v4414 = vpop.f32.mrb[0].mxu0
    %v4415 = vadd.f32 0.0, %v4414
    %v4416 = vpop.f32.mrb[0].mxu0
    %4417 = vmatprep.mubr.f32.mxu0 %v4276
    %4418 = vmatmul.mubr.f32.gmra.mrb[0].mxu0 %v4275
    %v4419 = vpop.f32.mrb[0].mxu0
    %v4420 = vadd.f32 0.0, %v4419
    %v4421 = vpop.f32.mrb[0].mxu0
    %4422 = vmatprep.mubr.f32.mxu0 %v4280
    %4423 = vmatmul.mubr.f32.gmra.mrb[0].mxu0 %v4279
    %v4424 = vpop.f32.mrb[0].mxu0
    %v4425 = vadd.f32 0.0, %v4424
    %v4426 = vpop.f32.mrb[0].mxu0
    %4427 = vdwg.mxu0
    %4428 = vmatprep.subr.mxu0 0.0
    %4429 = vmatpush1.msra.mxu0 %v235
    %4430 = vmatprep.subr.mxu0 0.0
    %4431 = vmatpush1.msra.mxu0 %v236
    %4432 = vmatprep.subr.mxu0 0.0
    %4433 = vmatpush1.msra.mxu0 %v237
    %4434 = vmatprep.subr.mxu0 0.0
    %4435 = vmatpush1.msra.mxu0 %v238
    %4436 = vmatprep.subr.mxu0 0.0
    %4437 = vmatpush1.msra.mxu0 %v239
    %4438 = vmatprep.subr.mxu0 0.0
    %4439 = vmatpush1.msra.mxu0 %v240
    %4440 = vmatprep.subr.mxu0 0.0
    %4441 = vmatpush1.msra.mxu0 %v241
    %4442 = vmatprep.subr.mxu0 0.0
    %4443 = vmatpush1.msra.mxu0 %v242
    %4444 = vmatprep.subr.mxu0 0.0
    %4445 = vmatpush1.msra.mxu0 %v243
    %4446 = vmatprep.subr.mxu0 0.0
    %4447 = vmatpush1.msra.mxu0 %v244
    %4448 = vmatprep.subr.mxu0 0.0
    %4449 = vmatpush1.msra.mxu0 %v245
    %4450 = vmatprep.subr.mxu0 0.0
    %4451 = vmatpush1.msra.mxu0 %v246
    %4452 = vmatprep.subr.mxu0 0.0
    %4453 = vmatpush1.msra.mxu0 %v247
    %4454 = vmatprep.subr.mxu0 0.0
    %4455 = vmatpush1.msra.mxu0 %v248
    %4456 = vmatprep.subr.mxu0 0.0
    %4457 = vmatpush1.msra.mxu0 %v249
    %4458 = vmatprep.subr.mxu0 0.0
    %4459 = vmatpush1.msra.mxu0 %v250
    %4460 = vmatprep.subr.mxu0 0.0
    %4461 = vmatpush1.msra.mxu0 %v251
    %4462 = vmatprep.subr.mxu0 0.0
    %4463 = vmatpush1.msra.mxu0 %v252
    %4464 = vmatprep.subr.mxu0 0.0
    %4465 = vmatpush1.msra.mxu0 %v253
    %4466 = vmatprep.subr.mxu0 0.0
    %4467 = vmatpush1.msra.mxu0 %v254
    %4468 = vmatprep.subr.mxu0 0.0
    %4469 = vmatpush1.msra.mxu0 %v255
    %4470 = vmatprep.subr.mxu0 0.0
    %4471 = vmatpush1.msra.mxu0 %v256
    %4472 = vmatprep.subr.mxu0 0.0
    %4473 = vmatpush1.msra.mxu0 %v257
    %4474 = vmatprep.subr.mxu0 0.0
    %4475 = vmatpush1.msra.mxu0 %v258
    %4476 = vmatprep.subr.mxu0 0.0
    %4477 = vmatpush1.msra.mxu0 %v259
    %4478 = vmatprep.subr.mxu0 0.0
    %4479 = vmatpush1.msra.mxu0 %v260
    %4480 = vmatprep.subr.mxu0 0.0
    %4481 = vmatpush1.msra.mxu0 %v261
    %4482 = vmatprep.subr.mxu0 0.0
    %4483 = vmatpush1.msra.mxu0 %v262
    %4484 = vmatprep.subr.mxu0 0.0
    %4485 = vmatpush1.msra.mxu0 %v263
    %4486 = vmatprep.subr.mxu0 0.0
    %4487 = vmatpush1.msra.mxu0 %v264
    %4488 = vmatprep.subr.mxu0 0.0
    %4489 = vmatpush1.msra.mxu0 %v265
    %4490 = vmatprep.subr.mxu0 0.0
    %4491 = vmatpush1.msra.mxu0 %v266
    %4492 = vmatprep.mubr.f32.mxu0 %v4222
    %4493 = vmatmul.mubr.f32.gmra.mrb[0].mxu0 %v4221
    %v4494 = vpop.f32.mrb[0].mxu0
    %v4495 = vadd.f32 %v4350, %v4494
    %v4496 = vpop.f32.mrb[0].mxu0
    %4497 = vmatprep.mubr.f32.mxu0 %v4226
    %4498 = vmatmul.mubr.f32.gmra.mrb[0].mxu0 %v4225
    %v4499 = vpop.f32.mrb[0].mxu0
    %v4500 = vadd.f32 %v4355, %v4499
    %v4501 = vpop.f32.mrb[0].mxu0
    %4502 = vmatprep.mubr.f32.mxu0 %v4230
    %4503 = vmatmul.mubr.f32.gmra.mrb[0].mxu0 %v4229
    %v4504 = vpop.f32.mrb[0].mxu0
    %v4505 = vadd.f32 %v4360, %v4504
    %v4506 = vpop.f32.mrb[0].mxu0
    %4507 = vmatprep.mubr.f32.mxu0 %v4234
    %4508 = vmatmul.mubr.f32.gmra.mrb[0].mxu0 %v4233
    %v4509 = vpop.f32.mrb[0].mxu0
    %v4510 = vadd.f32 %v4365, %v4509
    %v4511 = vpop.f32.mrb[0].mxu0
    %4512 = vmatprep.mubr.f32.mxu0 %v4238
    %4513 = vmatmul.mubr.f32.gmra.mrb[0].mxu0 %v4237
    %v4514 = vpop.f32.mrb[0].mxu0
    %v4515 = vadd.f32 %v4370, %v4514
    %v4516 = vpop.f32.mrb[0].mxu0
    %4517 = vmatprep.mubr.f32.mxu0 %v4242
    %4518 = vmatmul.mubr.f32.gmra.mrb[0].mxu0 %v4241
    %v4519 = vpop.f32.mrb[0].mxu0
    %v4520 = vadd.f32 %v4375, %v4519
    %v4521 = vpop.f32.mrb[0].mxu0
    %4522 = vmatprep.mubr.f32.mxu0 %v4246
    %4523 = vmatmul.mubr.f32.gmra.mrb[0].mxu0 %v4245
    %v4524 = vpop.f32.mrb[0].mxu0
    %v4525 = vadd.f32 %v4380, %v4524
    %v4526 = vpop.f32.mrb[0].mxu0
    %4527 = vmatprep.mubr.f32.mxu0 %v4250
    %4528 = vmatmul.mubr.f32.gmra.mrb[0].mxu0 %v4249
    %v4529 = vpop.f32.mrb[0].mxu0
    %v4530 = vadd.f32 %v4385, %v4529
    %v4531 = vpop.f32.mrb[0].mxu0
    %4532 = vmatprep.mubr.f32.mxu0 %v4254
    %4533 = vmatmul.mubr.f32.gmra.mrb[0].mxu0 %v4253
    %v4534 = vpop.f32.mrb[0].mxu0
    %v4535 = vadd.f32 %v4390, %v4534
    %v4536 = vpop.f32.mrb[0].mxu0
    %4537 = vmatprep.mubr.f32.mxu0 %v4258
    %4538 = vmatmul.mubr.f32.gmra.mrb[0].mxu0 %v4257
    %v4539 = vpop.f32.mrb[0].mxu0
    %v4540 = vadd.f32 %v4395, %v4539
    %v4541 = vpop.f32.mrb[0].mxu0
    %4542 = vmatprep.mubr.f32.mxu0 %v4262
    %4543 = vmatmul.mubr.f32.gmra.mrb[0].mxu0 %v4261
    %v4544 = vpop.f32.mrb[0].mxu0
    %v4545 = vadd.f32 %v4400, %v4544
    %v4546 = vpop.f32.mrb[0].mxu0
    %4547 = vmatprep.mubr.f32.mxu0 %v4266
    %4548 = vmatmul.mubr.f32.gmra.mrb[0].mxu0 %v4265
    %v4549 = vpop.f32.mrb[0].mxu0
    %v4550 = vadd.f32 %v4405, %v4549
    %v4551 = vpop.f32.mrb[0].mxu0
    %4552 = vmatprep.mubr.f32.mxu0 %v4270
    %4553 = vmatmul.mubr.f32.gmra.mrb[0].mxu0 %v4269
    %v4554 = vpop.f32.mrb[0].mxu0
    %v4555 = vadd.f32 %v4410, %v4554
    %v4556 = vpop.f32.mrb[0].mxu0
    %4557 = vmatprep.mubr.f32.mxu0 %v4274
    %4558 = vmatmul.mubr.f32.gmra.mrb[0].mxu0 %v4273
    %v4559 = vpop.f32.mrb[0].mxu0
    %v4560 = vadd.f32 %v4415, %v4559
    %v4561 = vpop.f32.mrb[0].mxu0
    %4562 = vmatprep.mubr.f32.mxu0 %v4278
    %4563 = vmatmul.mubr.f32.gmra.mrb[0].mxu0 %v4277
    %v4564 = vpop.f32.mrb[0].mxu0
    %v4565 = vadd.f32 %v4420, %v4564
    %v4566 = vpop.f32.mrb[0].mxu0
    %4567 = vmatprep.mubr.f32.mxu0 %v4282
    %4568 = vmatmul.mubr.f32.gmra.mrb[0].mxu0 %v4281
    %v4569 = vpop.f32.mrb[0].mxu0
    %v4570 = vadd.f32 %v4425, %v4569
    %v4571 = vpop.f32.mrb[0].mxu0
    %4572 = vdwg.mxu0
    %s4573 = scalar_lea.vmem [#allocation10], 28
    %v4574 = vld [vmem:[%s4573] sm:$0xf]
    %v4576 = vsel %vm979, %v4495, 0
    %v4579 = vsel %vm979, %v4500, 0
    %v4582 = vsel %vm979, %v4505, 0
    %v4585 = vsel %vm979, %v4510, 0
    %v4588 = vsel %vm979, %v4515, 0
    %v4591 = vsel %vm979, %v4520, 0
    %v4594 = vsel %vm979, %v4525, 0
    %v4597 = vsel %vm979, %v4530, 0
    %v4600 = vsel %vm979, %v4535, 0
    %v4603 = vsel %vm979, %v4540, 0
    %v4606 = vsel %vm979, %v4545, 0
    %v4609 = vsel %vm979, %v4550, 0
    %v4612 = vsel %vm979, %v4555, 0
    %v4615 = vsel %vm979, %v4560, 0
    %v4618 = vsel %vm979, %v4565, 0
    %v4621 = vsel %vm979, %v4570, 0
    %v4624 = vsel %vm1028, %v4574, 0
    %4626 = vmatprep.subr.mxu0 0.0
    %4627 = vmatpush1.msra.mxu0 %v4624
    %4628 = vmatprep.subr.mxu0 0.0
    %4629 = vmatpush1.msra.mxu0 0.0
    %4630 = vmatprep.subr.mxu0 0.0
    %4631 = vmatpush1.msra.mxu0 0.0
    %4632 = vmatprep.subr.mxu0 0.0
    %4633 = vmatpush1.msra.mxu0 0.0
    %4634 = vmatprep.subr.mxu0 0.0
    %4635 = vmatpush1.msra.mxu0 0.0
    %4636 = vmatprep.subr.mxu0 0.0
    %4637 = vmatpush1.msra.mxu0 0.0
    %4638 = vmatprep.subr.mxu0 0.0
    %4639 = vmatpush1.msra.mxu0 0.0
    %4640 = vmatprep.subr.mxu0 0.0
    %4641 = vmatpush1.msra.mxu0 0.0
    %4642 = vmatprep.subr.mxu0 0.0
    %4643 = vmatpush1.msra.mxu0 0.0
    %4644 = vmatprep.subr.mxu0 0.0
    %4645 = vmatpush1.msra.mxu0 0.0
    %4646 = vmatprep.subr.mxu0 0.0
    %4647 = vmatpush1.msra.mxu0 0.0
    %4648 = vmatprep.subr.mxu0 0.0
    %4649 = vmatpush1.msra.mxu0 0.0
    %4650 = vmatprep.subr.mxu0 0.0
    %4651 = vmatpush1.msra.mxu0 0.0
    %4652 = vmatprep.subr.mxu0 0.0
    %4653 = vmatpush1.msra.mxu0 0.0
    %4654 = vmatprep.subr.mxu0 0.0
    %4655 = vmatpush1.msra.mxu0 0.0
    %4656 = vmatprep.subr.mxu0 0.0
    %4657 = vmatpush1.msra.mxu0 0.0
    %4658 = vmatprep.subr.mxu0 0.0
    %4659 = vmatpush1.msra.mxu0 0.0
    %4660 = vmatprep.subr.mxu0 0.0
    %4661 = vmatpush1.msra.mxu0 0.0
    %4662 = vmatprep.subr.mxu0 0.0
    %4663 = vmatpush1.msra.mxu0 0.0
    %4664 = vmatprep.subr.mxu0 0.0
    %4665 = vmatpush1.msra.mxu0 0.0
    %4666 = vmatprep.subr.mxu0 0.0
    %4667 = vmatpush1.msra.mxu0 0.0
    %4668 = vmatprep.subr.mxu0 0.0
    %4669 = vmatpush1.msra.mxu0 0.0
    %4670 = vmatprep.subr.mxu0 0.0
    %4671 = vmatpush1.msra.mxu0 0.0
    %4672 = vmatprep.subr.mxu0 0.0
    %4673 = vmatpush1.msra.mxu0 0.0
    %4674 = vmatprep.subr.mxu0 0.0
    %4675 = vmatpush1.msra.mxu0 0.0
    %4676 = vmatprep.subr.mxu0 0.0
    %4677 = vmatpush1.msra.mxu0 0.0
    %4678 = vmatprep.subr.mxu0 0.0
    %4679 = vmatpush1.msra.mxu0 0.0
    %4680 = vmatprep.subr.mxu0 0.0
    %4681 = vmatpush1.msra.mxu0 0.0
    %4682 = vmatprep.subr.mxu0 0.0
    %4683 = vmatpush1.msra.mxu0 0.0
    %4684 = vmatprep.subr.mxu0 0.0
    %4685 = vmatpush1.msra.mxu0 0.0
    %4686 = vmatprep.subr.mxu0 0.0
    %4687 = vmatpush1.msra.mxu0 0.0
    %4688 = vmatprep.subr.mxu0 0.0
    %4689 = vmatpush1.msra.mxu0 0.0
    %4690 = vmatprep.mubr.f32.mxu0 0.0
    %4691 = vmatmul.mubr.f32.gmra.mrb[0].mxu0 %v4576
    %v4692 = vpop.f32.mrb[0].mxu0
    %v4693 = vadd.f32 0.0, %v4692
    %v4694 = vpop.f32.mrb[0].mxu0
    %4695 = vmatprep.mubr.f32.mxu0 0.0
    %4696 = vmatmul.mubr.f32.gmra.mrb[0].mxu0 %v4579
    %v4697 = vpop.f32.mrb[0].mxu0
    %v4698 = vadd.f32 0.0, %v4697
    %v4699 = vpop.f32.mrb[0].mxu0
    %4700 = vmatprep.mubr.f32.mxu0 0.0
    %4701 = vmatmul.mubr.f32.gmra.mrb[0].mxu0 %v4582
    %v4702 = vpop.f32.mrb[0].mxu0
    %v4703 = vadd.f32 0.0, %v4702
    %v4704 = vpop.f32.mrb[0].mxu0
    %4705 = vmatprep.mubr.f32.mxu0 0.0
    %4706 = vmatmul.mubr.f32.gmra.mrb[0].mxu0 %v4585
    %v4707 = vpop.f32.mrb[0].mxu0
    %v4708 = vadd.f32 0.0, %v4707
    %v4709 = vpop.f32.mrb[0].mxu0
    %4710 = vmatprep.mubr.f32.mxu0 0.0
    %4711 = vmatmul.mubr.f32.gmra.mrb[0].mxu0 %v4588
    %v4712 = vpop.f32.mrb[0].mxu0
    %v4713 = vadd.f32 0.0, %v4712
    %v4714 = vpop.f32.mrb[0].mxu0
    %4715 = vmatprep.mubr.f32.mxu0 0.0
    %4716 = vmatmul.mubr.f32.gmra.mrb[0].mxu0 %v4591
    %v4717 = vpop.f32.mrb[0].mxu0
    %v4718 = vadd.f32 0.0, %v4717
    %v4719 = vpop.f32.mrb[0].mxu0
    %4720 = vmatprep.mubr.f32.mxu0 0.0
    %4721 = vmatmul.mubr.f32.gmra.mrb[0].mxu0 %v4594
    %v4722 = vpop.f32.mrb[0].mxu0
    %v4723 = vadd.f32 0.0, %v4722
    %v4724 = vpop.f32.mrb[0].mxu0
    %4725 = vmatprep.mubr.f32.mxu0 0.0
    %4726 = vmatmul.mubr.f32.gmra.mrb[0].mxu0 %v4597
    %v4727 = vpop.f32.mrb[0].mxu0
    %v4728 = vadd.f32 0.0, %v4727
    %v4729 = vpop.f32.mrb[0].mxu0
    %4730 = vmatprep.mubr.f32.mxu0 0.0
    %4731 = vmatmul.mubr.f32.gmra.mrb[0].mxu0 %v4600
    %v4732 = vpop.f32.mrb[0].mxu0
    %v4733 = vadd.f32 0.0, %v4732
    %v4734 = vpop.f32.mrb[0].mxu0
    %4735 = vmatprep.mubr.f32.mxu0 0.0
    %4736 = vmatmul.mubr.f32.gmra.mrb[0].mxu0 %v4603
    %v4737 = vpop.f32.mrb[0].mxu0
    %v4738 = vadd.f32 0.0, %v4737
    %v4739 = vpop.f32.mrb[0].mxu0
    %4740 = vmatprep.mubr.f32.mxu0 0.0
    %4741 = vmatmul.mubr.f32.gmra.mrb[0].mxu0 %v4606
    %v4742 = vpop.f32.mrb[0].mxu0
    %v4743 = vadd.f32 0.0, %v4742
    %v4744 = vpop.f32.mrb[0].mxu0
    %4745 = vmatprep.mubr.f32.mxu0 0.0
    %4746 = vmatmul.mubr.f32.gmra.mrb[0].mxu0 %v4609
    %v4747 = vpop.f32.mrb[0].mxu0
    %v4748 = vadd.f32 0.0, %v4747
    %v4749 = vpop.f32.mrb[0].mxu0
    %4750 = vmatprep.mubr.f32.mxu0 0.0
    %4751 = vmatmul.mubr.f32.gmra.mrb[0].mxu0 %v4612
    %v4752 = vpop.f32.mrb[0].mxu0
    %v4753 = vadd.f32 0.0, %v4752
    %v4754 = vpop.f32.mrb[0].mxu0
    %4755 = vmatprep.mubr.f32.mxu0 0.0
    %4756 = vmatmul.mubr.f32.gmra.mrb[0].mxu0 %v4615
    %v4757 = vpop.f32.mrb[0].mxu0
    %v4758 = vadd.f32 0.0, %v4757
    %v4759 = vpop.f32.mrb[0].mxu0
    %4760 = vmatprep.mubr.f32.mxu0 0.0
    %4761 = vmatmul.mubr.f32.gmra.mrb[0].mxu0 %v4618
    %v4762 = vpop.f32.mrb[0].mxu0
    %v4763 = vadd.f32 0.0, %v4762
    %v4764 = vpop.f32.mrb[0].mxu0
    %4765 = vmatprep.mubr.f32.mxu0 0.0
    %4766 = vmatmul.mubr.f32.gmra.mrb[0].mxu0 %v4621
    %v4767 = vpop.f32.mrb[0].mxu0
    %v4768 = vadd.f32 0.0, %v4767
    %v4769 = vpop.f32.mrb[0].mxu0
    %4770 = vdwg.mxu0
    %v4771 = vadd.f32 %v4202, %v4693
    %v4772 = vadd.f32 %v4203, %v4698
    %v4773 = vadd.f32 %v4204, %v4703
    %v4774 = vadd.f32 %v4205, %v4708
    %v4775 = vadd.f32 %v4206, %v4713
    %v4776 = vadd.f32 %v4207, %v4718
    %v4777 = vadd.f32 %v4208, %v4723
    %v4778 = vadd.f32 %v4209, %v4728
    %v4779 = vadd.f32 %v4210, %v4733
    %v4780 = vadd.f32 %v4211, %v4738
    %v4781 = vadd.f32 %v4212, %v4743
    %v4782 = vadd.f32 %v4213, %v4748
    %v4783 = vadd.f32 %v4214, %v4753
    %v4784 = vadd.f32 %v4215, %v4758
    %v4785 = vadd.f32 %v4216, %v4763
    %v4786 = vadd.f32 %v4217, %v4768
    %s4787 = scalar_lea.vmem [#allocation5], 4096
    %v4788 = vld [vmem:[%s4787] sm:$0xff]
    %v4789 = vld [vmem:[%s4787 + $0x8] sm:$0xff]
    %v4790 = vld [vmem:[%s4787 + $0x10] sm:$0xff]
    %v4791 = vld [vmem:[%s4787 + $0x18] sm:$0xff]
    %v4792 = vld [vmem:[%s4787 + $0x20] sm:$0xff]
    %v4793 = vld [vmem:[%s4787 + $0x28] sm:$0xff]
    %v4794 = vld [vmem:[%s4787 + $0x30] sm:$0xff]
    %v4795 = vld [vmem:[%s4787 + $0x38] sm:$0xff]
    %v4796 = vld [vmem:[%s4787 + $0x40] sm:$0xff]
    %v4797 = vld [vmem:[%s4787 + $0x48] sm:$0xff]
    %v4798 = vld [vmem:[%s4787 + $0x50] sm:$0xff]
    %v4799 = vld [vmem:[%s4787 + $0x58] sm:$0xff]
    %v4800 = vld [vmem:[%s4787 + $0x60] sm:$0xff]
    %v4801 = vld [vmem:[%s4787 + $0x68] sm:$0xff]
    %v4802 = vld [vmem:[%s4787 + $0x70] sm:$0xff]
    %v4803 = vld [vmem:[%s4787 + $0x78] sm:$0xff]
    %v4804 = vld [vmem:[%s4787 + $0x80] sm:$0xff]
    %v4805 = vld [vmem:[%s4787 + $0x88] sm:$0xff]
    %v4806 = vld [vmem:[%s4787 + $0x90] sm:$0xff]
    %v4807 = vld [vmem:[%s4787 + $0x98] sm:$0xff]
    %v4808 = vld [vmem:[%s4787 + $0xa0] sm:$0xff]
    %v4809 = vld [vmem:[%s4787 + $0xa8] sm:$0xff]
    %v4810 = vld [vmem:[%s4787 + $0xb0] sm:$0xff]
    %v4811 = vld [vmem:[%s4787 + $0xb8] sm:$0xff]
    %v4812 = vld [vmem:[%s4787 + $0xc0] sm:$0xff]
    %v4813 = vld [vmem:[%s4787 + $0xc8] sm:$0xff]
    %v4814 = vld [vmem:[%s4787 + $0xd0] sm:$0xff]
    %v4815 = vld [vmem:[%s4787 + $0xd8] sm:$0xff]
    %v4816 = vld [vmem:[%s4787 + $0xe0] sm:$0xff]
    %v4817 = vld [vmem:[%s4787 + $0xe8] sm:$0xff]
    %v4818 = vld [vmem:[%s4787 + $0xf0] sm:$0xff]
    %v4819 = vld [vmem:[%s4787 + $0xf8] sm:$0xff]
    %v4820 = vld [vmem:[%s4787 + $0x100] sm:$0xff]
    %v4821 = vld [vmem:[%s4787 + $0x108] sm:$0xff]
    %v4822 = vld [vmem:[%s4787 + $0x110] sm:$0xff]
    %v4823 = vld [vmem:[%s4787 + $0x118] sm:$0xff]
    %v4824 = vld [vmem:[%s4787 + $0x120] sm:$0xff]
    %v4825 = vld [vmem:[%s4787 + $0x128] sm:$0xff]
    %v4826 = vld [vmem:[%s4787 + $0x130] sm:$0xff]
    %v4827 = vld [vmem:[%s4787 + $0x138] sm:$0xff]
    %v4828 = vld [vmem:[%s4787 + $0x140] sm:$0xff]
    %v4829 = vld [vmem:[%s4787 + $0x148] sm:$0xff]
    %v4830 = vld [vmem:[%s4787 + $0x150] sm:$0xff]
    %v4831 = vld [vmem:[%s4787 + $0x158] sm:$0xff]
    %v4832 = vld [vmem:[%s4787 + $0x160] sm:$0xff]
    %v4833 = vld [vmem:[%s4787 + $0x168] sm:$0xff]
    %v4834 = vld [vmem:[%s4787 + $0x170] sm:$0xff]
    %v4835 = vld [vmem:[%s4787 + $0x178] sm:$0xff]
    %v4836 = vld [vmem:[%s4787 + $0x180] sm:$0xff]
    %v4837 = vld [vmem:[%s4787 + $0x188] sm:$0xff]
    %v4838 = vld [vmem:[%s4787 + $0x190] sm:$0xff]
    %v4839 = vld [vmem:[%s4787 + $0x198] sm:$0xff]
    %v4840 = vld [vmem:[%s4787 + $0x1a0] sm:$0xff]
    %v4841 = vld [vmem:[%s4787 + $0x1a8] sm:$0xff]
    %v4842 = vld [vmem:[%s4787 + $0x1b0] sm:$0xff]
    %v4843 = vld [vmem:[%s4787 + $0x1b8] sm:$0xff]
    %v4844 = vld [vmem:[%s4787 + $0x1c0] sm:$0xff]
    %v4845 = vld [vmem:[%s4787 + $0x1c8] sm:$0xff]
    %v4846 = vld [vmem:[%s4787 + $0x1d0] sm:$0xff]
    %v4847 = vld [vmem:[%s4787 + $0x1d8] sm:$0xff]
    %v4848 = vld [vmem:[%s4787 + $0x1e0] sm:$0xff]
    %v4849 = vld [vmem:[%s4787 + $0x1e8] sm:$0xff]
    %v4850 = vld [vmem:[%s4787 + $0x1f0] sm:$0xff]
    %v4851 = vld [vmem:[%s4787 + $0x1f8] sm:$0xff]
    %4852 = vmatprep.subr.mxu0 0.0
    %4853 = vmatpush1.msra.mxu0 %v203
    %4854 = vmatprep.subr.mxu0 0.0
    %4855 = vmatpush1.msra.mxu0 %v204
    %4856 = vmatprep.subr.mxu0 0.0
    %4857 = vmatpush1.msra.mxu0 %v205
    %4858 = vmatprep.subr.mxu0 0.0
    %4859 = vmatpush1.msra.mxu0 %v206
    %4860 = vmatprep.subr.mxu0 0.0
    %4861 = vmatpush1.msra.mxu0 %v207
    %4862 = vmatprep.subr.mxu0 0.0
    %4863 = vmatpush1.msra.mxu0 %v208
    %4864 = vmatprep.subr.mxu0 0.0
    %4865 = vmatpush1.msra.mxu0 %v209
    %4866 = vmatprep.subr.mxu0 0.0
    %4867 = vmatpush1.msra.mxu0 %v210
    %4868 = vmatprep.subr.mxu0 0.0
    %4869 = vmatpush1.msra.mxu0 %v211
    %4870 = vmatprep.subr.mxu0 0.0
    %4871 = vmatpush1.msra.mxu0 %v212
    %4872 = vmatprep.subr.mxu0 0.0
    %4873 = vmatpush1.msra.mxu0 %v213
    %4874 = vmatprep.subr.mxu0 0.0
    %4875 = vmatpush1.msra.mxu0 %v214
    %4876 = vmatprep.subr.mxu0 0.0
    %4877 = vmatpush1.msra.mxu0 %v215
    %4878 = vmatprep.subr.mxu0 0.0
    %4879 = vmatpush1.msra.mxu0 %v216
    %4880 = vmatprep.subr.mxu0 0.0
    %4881 = vmatpush1.msra.mxu0 %v217
    %4882 = vmatprep.subr.mxu0 0.0
    %4883 = vmatpush1.msra.mxu0 %v218
    %4884 = vmatprep.subr.mxu0 0.0
    %4885 = vmatpush1.msra.mxu0 %v219
    %4886 = vmatprep.subr.mxu0 0.0
    %4887 = vmatpush1.msra.mxu0 %v220
    %4888 = vmatprep.subr.mxu0 0.0
    %4889 = vmatpush1.msra.mxu0 %v221
    %4890 = vmatprep.subr.mxu0 0.0
    %4891 = vmatpush1.msra.mxu0 %v222
    %4892 = vmatprep.subr.mxu0 0.0
    %4893 = vmatpush1.msra.mxu0 %v223
    %4894 = vmatprep.subr.mxu0 0.0
    %4895 = vmatpush1.msra.mxu0 %v224
    %4896 = vmatprep.subr.mxu0 0.0
    %4897 = vmatpush1.msra.mxu0 %v225
    %4898 = vmatprep.subr.mxu0 0.0
    %4899 = vmatpush1.msra.mxu0 %v226
    %4900 = vmatprep.subr.mxu0 0.0
    %4901 = vmatpush1.msra.mxu0 %v227
    %4902 = vmatprep.subr.mxu0 0.0
    %4903 = vmatpush1.msra.mxu0 %v228
    %4904 = vmatprep.subr.mxu0 0.0
    %4905 = vmatpush1.msra.mxu0 %v229
    %4906 = vmatprep.subr.mxu0 0.0
    %4907 = vmatpush1.msra.mxu0 %v230
    %4908 = vmatprep.subr.mxu0 0.0
    %4909 = vmatpush1.msra.mxu0 %v231
    %4910 = vmatprep.subr.mxu0 0.0
    %4911 = vmatpush1.msra.mxu0 %v232
    %4912 = vmatprep.subr.mxu0 0.0
    %4913 = vmatpush1.msra.mxu0 %v233
    %4914 = vmatprep.subr.mxu0 0.0
    %4915 = vmatpush1.msra.mxu0 %v234
    %4916 = vmatprep.mubr.f32.mxu0 %v4789
    %4917 = vmatmul.mubr.f32.gmra.mrb[0].mxu0 %v4788
    %v4918 = vpop.f32.mrb[0].mxu0
    %v4919 = vadd.f32 0.0, %v4918
    %v4920 = vpop.f32.mrb[0].mxu0
    %4921 = vmatprep.mubr.f32.mxu0 %v4793
    %4922 = vmatmul.mubr.f32.gmra.mrb[0].mxu0 %v4792
    %v4923 = vpop.f32.mrb[0].mxu0
    %v4924 = vadd.f32 0.0, %v4923
    %v4925 = vpop.f32.mrb[0].mxu0
    %4926 = vmatprep.mubr.f32.mxu0 %v4797
    %4927 = vmatmul.mubr.f32.gmra.mrb[0].mxu0 %v4796
    %v4928 = vpop.f32.mrb[0].mxu0
    %v4929 = vadd.f32 0.0, %v4928
    %v4930 = vpop.f32.mrb[0].mxu0
    %4931 = vmatprep.mubr.f32.mxu0 %v4801
    %4932 = vmatmul.mubr.f32.gmra.mrb[0].mxu0 %v4800
    %v4933 = vpop.f32.mrb[0].mxu0
    %v4934 = vadd.f32 0.0, %v4933
    %v4935 = vpop.f32.mrb[0].mxu0
    %4936 = vmatprep.mubr.f32.mxu0 %v4805
    %4937 = vmatmul.mubr.f32.gmra.mrb[0].mxu0 %v4804
    %v4938 = vpop.f32.mrb[0].mxu0
    %v4939 = vadd.f32 0.0, %v4938
    %v4940 = vpop.f32.mrb[0].mxu0
    %4941 = vmatprep.mubr.f32.mxu0 %v4809
    %4942 = vmatmul.mubr.f32.gmra.mrb[0].mxu0 %v4808
    %v4943 = vpop.f32.mrb[0].mxu0
    %v4944 = vadd.f32 0.0, %v4943
    %v4945 = vpop.f32.mrb[0].mxu0
    %4946 = vmatprep.mubr.f32.mxu0 %v4813
    %4947 = vmatmul.mubr.f32.gmra.mrb[0].mxu0 %v4812
    %v4948 = vpop.f32.mrb[0].mxu0
    %v4949 = vadd.f32 0.0, %v4948
    %v4950 = vpop.f32.mrb[0].mxu0
    %4951 = vmatprep.mubr.f32.mxu0 %v4817
    %4952 = vmatmul.mubr.f32.gmra.mrb[0].mxu0 %v4816
    %v4953 = vpop.f32.mrb[0].mxu0
    %v4954 = vadd.f32 0.0, %v4953
    %v4955 = vpop.f32.mrb[0].mxu0
    %4956 = vmatprep.mubr.f32.mxu0 %v4821
    %4957 = vmatmul.mubr.f32.gmra.mrb[0].mxu0 %v4820
    %v4958 = vpop.f32.mrb[0].mxu0
    %v4959 = vadd.f32 0.0, %v4958
    %v4960 = vpop.f32.mrb[0].mxu0
    %4961 = vmatprep.mubr.f32.mxu0 %v4825
    %4962 = vmatmul.mubr.f32.gmra.mrb[0].mxu0 %v4824
    %v4963 = vpop.f32.mrb[0].mxu0
    %v4964 = vadd.f32 0.0, %v4963
    %v4965 = vpop.f32.mrb[0].mxu0
    %4966 = vmatprep.mubr.f32.mxu0 %v4829
    %4967 = vmatmul.mubr.f32.gmra.mrb[0].mxu0 %v4828
    %v4968 = vpop.f32.mrb[0].mxu0
    %v4969 = vadd.f32 0.0, %v4968
    %v4970 = vpop.f32.mrb[0].mxu0
    %4971 = vmatprep.mubr.f32.mxu0 %v4833
    %4972 = vmatmul.mubr.f32.gmra.mrb[0].mxu0 %v4832
    %v4973 = vpop.f32.mrb[0].mxu0
    %v4974 = vadd.f32 0.0, %v4973
    %v4975 = vpop.f32.mrb[0].mxu0
    %4976 = vmatprep.mubr.f32.mxu0 %v4837
    %4977 = vmatmul.mubr.f32.gmra.mrb[0].mxu0 %v4836
    %v4978 = vpop.f32.mrb[0].mxu0
    %v4979 = vadd.f32 0.0, %v4978
    %v4980 = vpop.f32.mrb[0].mxu0
    %4981 = vmatprep.mubr.f32.mxu0 %v4841
    %4982 = vmatmul.mubr.f32.gmra.mrb[0].mxu0 %v4840
    %v4983 = vpop.f32.mrb[0].mxu0
    %v4984 = vadd.f32 0.0, %v4983
    %v4985 = vpop.f32.mrb[0].mxu0
    %4986 = vmatprep.mubr.f32.mxu0 %v4845
    %4987 = vmatmul.mubr.f32.gmra.mrb[0].mxu0 %v4844
    %v4988 = vpop.f32.mrb[0].mxu0
    %v4989 = vadd.f32 0.0, %v4988
    %v4990 = vpop.f32.mrb[0].mxu0
    %4991 = vmatprep.mubr.f32.mxu0 %v4849
    %4992 = vmatmul.mubr.f32.gmra.mrb[0].mxu0 %v4848
    %v4993 = vpop.f32.mrb[0].mxu0
    %v4994 = vadd.f32 0.0, %v4993
    %v4995 = vpop.f32.mrb[0].mxu0
    %4996 = vdwg.mxu0
    %4997 = vmatprep.subr.mxu0 0.0
    %4998 = vmatpush1.msra.mxu0 %v235
    %4999 = vmatprep.subr.mxu0 0.0
    %5000 = vmatpush1.msra.mxu0 %v236
    %5001 = vmatprep.subr.mxu0 0.0
    %5002 = vmatpush1.msra.mxu0 %v237
    %5003 = vmatprep.subr.mxu0 0.0
    %5004 = vmatpush1.msra.mxu0 %v238
    %5005 = vmatprep.subr.mxu0 0.0
    %5006 = vmatpush1.msra.mxu0 %v239
    %5007 = vmatprep.subr.mxu0 0.0
    %5008 = vmatpush1.msra.mxu0 %v240
    %5009 = vmatprep.subr.mxu0 0.0
    %5010 = vmatpush1.msra.mxu0 %v241
    %5011 = vmatprep.subr.mxu0 0.0
    %5012 = vmatpush1.msra.mxu0 %v242
    %5013 = vmatprep.subr.mxu0 0.0
    %5014 = vmatpush1.msra.mxu0 %v243
    %5015 = vmatprep.subr.mxu0 0.0
    %5016 = vmatpush1.msra.mxu0 %v244
    %5017 = vmatprep.subr.mxu0 0.0
    %5018 = vmatpush1.msra.mxu0 %v245
    %5019 = vmatprep.subr.mxu0 0.0
    %5020 = vmatpush1.msra.mxu0 %v246
    %5021 = vmatprep.subr.mxu0 0.0
    %5022 = vmatpush1.msra.mxu0 %v247
    %5023 = vmatprep.subr.mxu0 0.0
    %5024 = vmatpush1.msra.mxu0 %v248
    %5025 = vmatprep.subr.mxu0 0.0
    %5026 = vmatpush1.msra.mxu0 %v249
    %5027 = vmatprep.subr.mxu0 0.0
    %5028 = vmatpush1.msra.mxu0 %v250
    %5029 = vmatprep.subr.mxu0 0.0
    %5030 = vmatpush1.msra.mxu0 %v251
    %5031 = vmatprep.subr.mxu0 0.0
    %5032 = vmatpush1.msra.mxu0 %v252
    %5033 = vmatprep.subr.mxu0 0.0
    %5034 = vmatpush1.msra.mxu0 %v253
    %5035 = vmatprep.subr.mxu0 0.0
    %5036 = vmatpush1.msra.mxu0 %v254
    %5037 = vmatprep.subr.mxu0 0.0
    %5038 = vmatpush1.msra.mxu0 %v255
    %5039 = vmatprep.subr.mxu0 0.0
    %5040 = vmatpush1.msra.mxu0 %v256
    %5041 = vmatprep.subr.mxu0 0.0
    %5042 = vmatpush1.msra.mxu0 %v257
    %5043 = vmatprep.subr.mxu0 0.0
    %5044 = vmatpush1.msra.mxu0 %v258
    %5045 = vmatprep.subr.mxu0 0.0
    %5046 = vmatpush1.msra.mxu0 %v259
    %5047 = vmatprep.subr.mxu0 0.0
    %5048 = vmatpush1.msra.mxu0 %v260
    %5049 = vmatprep.subr.mxu0 0.0
    %5050 = vmatpush1.msra.mxu0 %v261
    %5051 = vmatprep.subr.mxu0 0.0
    %5052 = vmatpush1.msra.mxu0 %v262
    %5053 = vmatprep.subr.mxu0 0.0
    %5054 = vmatpush1.msra.mxu0 %v263
    %5055 = vmatprep.subr.mxu0 0.0
    %5056 = vmatpush1.msra.mxu0 %v264
    %5057 = vmatprep.subr.mxu0 0.0
    %5058 = vmatpush1.msra.mxu0 %v265
    %5059 = vmatprep.subr.mxu0 0.0
    %5060 = vmatpush1.msra.mxu0 %v266
    %5061 = vmatprep.mubr.f32.mxu0 %v4791
    %5062 = vmatmul.mubr.f32.gmra.mrb[0].mxu0 %v4790
    %v5063 = vpop.f32.mrb[0].mxu0
    %v5064 = vadd.f32 %v4919, %v5063
    %v5065 = vpop.f32.mrb[0].mxu0
    %5066 = vmatprep.mubr.f32.mxu0 %v4795
    %5067 = vmatmul.mubr.f32.gmra.mrb[0].mxu0 %v4794
    %v5068 = vpop.f32.mrb[0].mxu0
    %v5069 = vadd.f32 %v4924, %v5068
    %v5070 = vpop.f32.mrb[0].mxu0
    %5071 = vmatprep.mubr.f32.mxu0 %v4799
    %5072 = vmatmul.mubr.f32.gmra.mrb[0].mxu0 %v4798
    %v5073 = vpop.f32.mrb[0].mxu0
    %v5074 = vadd.f32 %v4929, %v5073
    %v5075 = vpop.f32.mrb[0].mxu0
    %5076 = vmatprep.mubr.f32.mxu0 %v4803
    %5077 = vmatmul.mubr.f32.gmra.mrb[0].mxu0 %v4802
    %v5078 = vpop.f32.mrb[0].mxu0
    %v5079 = vadd.f32 %v4934, %v5078
    %v5080 = vpop.f32.mrb[0].mxu0
    %5081 = vmatprep.mubr.f32.mxu0 %v4807
    %5082 = vmatmul.mubr.f32.gmra.mrb[0].mxu0 %v4806
    %v5083 = vpop.f32.mrb[0].mxu0
    %v5084 = vadd.f32 %v4939, %v5083
    %v5085 = vpop.f32.mrb[0].mxu0
    %5086 = vmatprep.mubr.f32.mxu0 %v4811
    %5087 = vmatmul.mubr.f32.gmra.mrb[0].mxu0 %v4810
    %v5088 = vpop.f32.mrb[0].mxu0
    %v5089 = vadd.f32 %v4944, %v5088
    %v5090 = vpop.f32.mrb[0].mxu0
    %5091 = vmatprep.mubr.f32.mxu0 %v4815
    %5092 = vmatmul.mubr.f32.gmra.mrb[0].mxu0 %v4814
    %v5093 = vpop.f32.mrb[0].mxu0
    %v5094 = vadd.f32 %v4949, %v5093
    %v5095 = vpop.f32.mrb[0].mxu0
    %5096 = vmatprep.mubr.f32.mxu0 %v4819
    %5097 = vmatmul.mubr.f32.gmra.mrb[0].mxu0 %v4818
    %v5098 = vpop.f32.mrb[0].mxu0
    %v5099 = vadd.f32 %v4954, %v5098
    %v5100 = vpop.f32.mrb[0].mxu0
    %5101 = vmatprep.mubr.f32.mxu0 %v4823
    %5102 = vmatmul.mubr.f32.gmra.mrb[0].mxu0 %v4822
    %v5103 = vpop.f32.mrb[0].mxu0
    %v5104 = vadd.f32 %v4959, %v5103
    %v5105 = vpop.f32.mrb[0].mxu0
    %5106 = vmatprep.mubr.f32.mxu0 %v4827
    %5107 = vmatmul.mubr.f32.gmra.mrb[0].mxu0 %v4826
    %v5108 = vpop.f32.mrb[0].mxu0
    %v5109 = vadd.f32 %v4964, %v5108
    %v5110 = vpop.f32.mrb[0].mxu0
    %5111 = vmatprep.mubr.f32.mxu0 %v4831
    %5112 = vmatmul.mubr.f32.gmra.mrb[0].mxu0 %v4830
    %v5113 = vpop.f32.mrb[0].mxu0
    %v5114 = vadd.f32 %v4969, %v5113
    %v5115 = vpop.f32.mrb[0].mxu0
    %5116 = vmatprep.mubr.f32.mxu0 %v4835
    %5117 = vmatmul.mubr.f32.gmra.mrb[0].mxu0 %v4834
    %v5118 = vpop.f32.mrb[0].mxu0
    %v5119 = vadd.f32 %v4974, %v5118
    %v5120 = vpop.f32.mrb[0].mxu0
    %5121 = vmatprep.mubr.f32.mxu0 %v4839
    %5122 = vmatmul.mubr.f32.gmra.mrb[0].mxu0 %v4838
    %v5123 = vpop.f32.mrb[0].mxu0
    %v5124 = vadd.f32 %v4979, %v5123
    %v5125 = vpop.f32.mrb[0].mxu0
    %5126 = vmatprep.mubr.f32.mxu0 %v4843
    %5127 = vmatmul.mubr.f32.gmra.mrb[0].mxu0 %v4842
    %v5128 = vpop.f32.mrb[0].mxu0
    %v5129 = vadd.f32 %v4984, %v5128
    %v5130 = vpop.f32.mrb[0].mxu0
    %5131 = vmatprep.mubr.f32.mxu0 %v4847
    %5132 = vmatmul.mubr.f32.gmra.mrb[0].mxu0 %v4846
    %v5133 = vpop.f32.mrb[0].mxu0
    %v5134 = vadd.f32 %v4989, %v5133
    %v5135 = vpop.f32.mrb[0].mxu0
    %5136 = vmatprep.mubr.f32.mxu0 %v4851
    %5137 = vmatmul.mubr.f32.gmra.mrb[0].mxu0 %v4850
    %v5138 = vpop.f32.mrb[0].mxu0
    %v5139 = vadd.f32 %v4994, %v5138
    %v5140 = vpop.f32.mrb[0].mxu0
    %5141 = vdwg.mxu0
    %s5142 = scalar_lea.vmem [#allocation10], 32
    %v5143 = vld [vmem:[%s5142] sm:$0xf]
    %v5145 = vsel %vm979, %v5064, 0
    %v5148 = vsel %vm979, %v5069, 0
    %v5151 = vsel %vm979, %v5074, 0
    %v5154 = vsel %vm979, %v5079, 0
    %v5157 = vsel %vm979, %v5084, 0
    %v5160 = vsel %vm979, %v5089, 0
    %v5163 = vsel %vm979, %v5094, 0
    %v5166 = vsel %vm979, %v5099, 0
    %v5169 = vsel %vm979, %v5104, 0
    %v5172 = vsel %vm979, %v5109, 0
    %v5175 = vsel %vm979, %v5114, 0
    %v5178 = vsel %vm979, %v5119, 0
    %v5181 = vsel %vm979, %v5124, 0
    %v5184 = vsel %vm979, %v5129, 0
    %v5187 = vsel %vm979, %v5134, 0
    %v5190 = vsel %vm979, %v5139, 0
    %v5193 = vsel %vm1028, %v5143, 0
    %5195 = vmatprep.subr.mxu0 0.0
    %5196 = vmatpush1.msra.mxu0 %v5193
    %5197 = vmatprep.subr.mxu0 0.0
    %5198 = vmatpush1.msra.mxu0 0.0
    %5199 = vmatprep.subr.mxu0 0.0
    %5200 = vmatpush1.msra.mxu0 0.0
    %5201 = vmatprep.subr.mxu0 0.0
    %5202 = vmatpush1.msra.mxu0 0.0
    %5203 = vmatprep.subr.mxu0 0.0
    %5204 = vmatpush1.msra.mxu0 0.0
    %5205 = vmatprep.subr.mxu0 0.0
    %5206 = vmatpush1.msra.mxu0 0.0
    %5207 = vmatprep.subr.mxu0 0.0
    %5208 = vmatpush1.msra.mxu0 0.0
    %5209 = vmatprep.subr.mxu0 0.0
    %5210 = vmatpush1.msra.mxu0 0.0
    %5211 = vmatprep.subr.mxu0 0.0
    %5212 = vmatpush1.msra.mxu0 0.0
    %5213 = vmatprep.subr.mxu0 0.0
    %5214 = vmatpush1.msra.mxu0 0.0
    %5215 = vmatprep.subr.mxu0 0.0
    %5216 = vmatpush1.msra.mxu0 0.0
    %5217 = vmatprep.subr.mxu0 0.0
    %5218 = vmatpush1.msra.mxu0 0.0
    %5219 = vmatprep.subr.mxu0 0.0
    %5220 = vmatpush1.msra.mxu0 0.0
    %5221 = vmatprep.subr.mxu0 0.0
    %5222 = vmatpush1.msra.mxu0 0.0
    %5223 = vmatprep.subr.mxu0 0.0
    %5224 = vmatpush1.msra.mxu0 0.0
    %5225 = vmatprep.subr.mxu0 0.0
    %5226 = vmatpush1.msra.mxu0 0.0
    %5227 = vmatprep.subr.mxu0 0.0
    %5228 = vmatpush1.msra.mxu0 0.0
    %5229 = vmatprep.subr.mxu0 0.0
    %5230 = vmatpush1.msra.mxu0 0.0
    %5231 = vmatprep.subr.mxu0 0.0
    %5232 = vmatpush1.msra.mxu0 0.0
    %5233 = vmatprep.subr.mxu0 0.0
    %5234 = vmatpush1.msra.mxu0 0.0
    %5235 = vmatprep.subr.mxu0 0.0
    %5236 = vmatpush1.msra.mxu0 0.0
    %5237 = vmatprep.subr.mxu0 0.0
    %5238 = vmatpush1.msra.mxu0 0.0
    %5239 = vmatprep.subr.mxu0 0.0
    %5240 = vmatpush1.msra.mxu0 0.0
    %5241 = vmatprep.subr.mxu0 0.0
    %5242 = vmatpush1.msra.mxu0 0.0
    %5243 = vmatprep.subr.mxu0 0.0
    %5244 = vmatpush1.msra.mxu0 0.0
    %5245 = vmatprep.subr.mxu0 0.0
    %5246 = vmatpush1.msra.mxu0 0.0
    %5247 = vmatprep.subr.mxu0 0.0
    %5248 = vmatpush1.msra.mxu0 0.0
    %5249 = vmatprep.subr.mxu0 0.0
    %5250 = vmatpush1.msra.mxu0 0.0
    %5251 = vmatprep.subr.mxu0 0.0
    %5252 = vmatpush1.msra.mxu0 0.0
    %5253 = vmatprep.subr.mxu0 0.0
    %5254 = vmatpush1.msra.mxu0 0.0
    %5255 = vmatprep.subr.mxu0 0.0
    %5256 = vmatpush1.msra.mxu0 0.0
    %5257 = vmatprep.subr.mxu0 0.0
    %5258 = vmatpush1.msra.mxu0 0.0
    %5259 = vmatprep.mubr.f32.mxu0 0.0
    %5260 = vmatmul.mubr.f32.gmra.mrb[0].mxu0 %v5145
    %v5261 = vpop.f32.mrb[0].mxu0
    %v5262 = vadd.f32 0.0, %v5261
    %v5263 = vpop.f32.mrb[0].mxu0
    %5264 = vmatprep.mubr.f32.mxu0 0.0
    %5265 = vmatmul.mubr.f32.gmra.mrb[0].mxu0 %v5148
    %v5266 = vpop.f32.mrb[0].mxu0
    %v5267 = vadd.f32 0.0, %v5266
    %v5268 = vpop.f32.mrb[0].mxu0
    %5269 = vmatprep.mubr.f32.mxu0 0.0
    %5270 = vmatmul.mubr.f32.gmra.mrb[0].mxu0 %v5151
    %v5271 = vpop.f32.mrb[0].mxu0
    %v5272 = vadd.f32 0.0, %v5271
    %v5273 = vpop.f32.mrb[0].mxu0
    %5274 = vmatprep.mubr.f32.mxu0 0.0
    %5275 = vmatmul.mubr.f32.gmra.mrb[0].mxu0 %v5154
    %v5276 = vpop.f32.mrb[0].mxu0
    %v5277 = vadd.f32 0.0, %v5276
    %v5278 = vpop.f32.mrb[0].mxu0
    %5279 = vmatprep.mubr.f32.mxu0 0.0
    %5280 = vmatmul.mubr.f32.gmra.mrb[0].mxu0 %v5157
    %v5281 = vpop.f32.mrb[0].mxu0
    %v5282 = vadd.f32 0.0, %v5281
    %v5283 = vpop.f32.mrb[0].mxu0
    %5284 = vmatprep.mubr.f32.mxu0 0.0
    %5285 = vmatmul.mubr.f32.gmra.mrb[0].mxu0 %v5160
    %v5286 = vpop.f32.mrb[0].mxu0
    %v5287 = vadd.f32 0.0, %v5286
    %v5288 = vpop.f32.mrb[0].mxu0
    %5289 = vmatprep.mubr.f32.mxu0 0.0
    %5290 = vmatmul.mubr.f32.gmra.mrb[0].mxu0 %v5163
    %v5291 = vpop.f32.mrb[0].mxu0
    %v5292 = vadd.f32 0.0, %v5291
    %v5293 = vpop.f32.mrb[0].mxu0
    %5294 = vmatprep.mubr.f32.mxu0 0.0
    %5295 = vmatmul.mubr.f32.gmra.mrb[0].mxu0 %v5166
    %v5296 = vpop.f32.mrb[0].mxu0
    %v5297 = vadd.f32 0.0, %v5296
    %v5298 = vpop.f32.mrb[0].mxu0
    %5299 = vmatprep.mubr.f32.mxu0 0.0
    %5300 = vmatmul.mubr.f32.gmra.mrb[0].mxu0 %v5169
    %v5301 = vpop.f32.mrb[0].mxu0
    %v5302 = vadd.f32 0.0, %v5301
    %v5303 = vpop.f32.mrb[0].mxu0
    %5304 = vmatprep.mubr.f32.mxu0 0.0
    %5305 = vmatmul.mubr.f32.gmra.mrb[0].mxu0 %v5172
    %v5306 = vpop.f32.mrb[0].mxu0
    %v5307 = vadd.f32 0.0, %v5306
    %v5308 = vpop.f32.mrb[0].mxu0
    %5309 = vmatprep.mubr.f32.mxu0 0.0
    %5310 = vmatmul.mubr.f32.gmra.mrb[0].mxu0 %v5175
    %v5311 = vpop.f32.mrb[0].mxu0
    %v5312 = vadd.f32 0.0, %v5311
    %v5313 = vpop.f32.mrb[0].mxu0
    %5314 = vmatprep.mubr.f32.mxu0 0.0
    %5315 = vmatmul.mubr.f32.gmra.mrb[0].mxu0 %v5178
    %v5316 = vpop.f32.mrb[0].mxu0
    %v5317 = vadd.f32 0.0, %v5316
    %v5318 = vpop.f32.mrb[0].mxu0
    %5319 = vmatprep.mubr.f32.mxu0 0.0
    %5320 = vmatmul.mubr.f32.gmra.mrb[0].mxu0 %v5181
    %v5321 = vpop.f32.mrb[0].mxu0
    %v5322 = vadd.f32 0.0, %v5321
    %v5323 = vpop.f32.mrb[0].mxu0
    %5324 = vmatprep.mubr.f32.mxu0 0.0
    %5325 = vmatmul.mubr.f32.gmra.mrb[0].mxu0 %v5184
    %v5326 = vpop.f32.mrb[0].mxu0
    %v5327 = vadd.f32 0.0, %v5326
    %v5328 = vpop.f32.mrb[0].mxu0
    %5329 = vmatprep.mubr.f32.mxu0 0.0
    %5330 = vmatmul.mubr.f32.gmra.mrb[0].mxu0 %v5187
    %v5331 = vpop.f32.mrb[0].mxu0
    %v5332 = vadd.f32 0.0, %v5331
    %v5333 = vpop.f32.mrb[0].mxu0
    %5334 = vmatprep.mubr.f32.mxu0 0.0
    %5335 = vmatmul.mubr.f32.gmra.mrb[0].mxu0 %v5190
    %v5336 = vpop.f32.mrb[0].mxu0
    %v5337 = vadd.f32 0.0, %v5336
    %v5338 = vpop.f32.mrb[0].mxu0
    %5339 = vdwg.mxu0
    %v5340 = vadd.f32 %v4771, %v5262
    %v5341 = vadd.f32 %v4772, %v5267
    %v5342 = vadd.f32 %v4773, %v5272
    %v5343 = vadd.f32 %v4774, %v5277
    %v5344 = vadd.f32 %v4775, %v5282
    %v5345 = vadd.f32 %v4776, %v5287
    %v5346 = vadd.f32 %v4777, %v5292
    %v5347 = vadd.f32 %v4778, %v5297
    %v5348 = vadd.f32 %v4779, %v5302
    %v5349 = vadd.f32 %v4780, %v5307
    %v5350 = vadd.f32 %v4781, %v5312
    %v5351 = vadd.f32 %v4782, %v5317
    %v5352 = vadd.f32 %v4783, %v5322
    %v5353 = vadd.f32 %v4784, %v5327
    %v5354 = vadd.f32 %v4785, %v5332
    %v5355 = vadd.f32 %v4786, %v5337
    %v5356 = vld [vmem:[#allocation11] sm:$0x1]
    %v5358 = vlaneseq
    %v5359 = vshrl.u32 %v5358, 7
    %v5360 = vsub.s32 0, %v5359
    %v5361 = vrot.slane %v5356, %v5360
    %v5363 = vadd.f32 %v5340, %v5361
    %v5364 = vadd.f32 %v5341, %v5361
    %v5365 = vadd.f32 %v5342, %v5361
    %v5366 = vadd.f32 %v5343, %v5361
    %v5367 = vadd.f32 %v5344, %v5361
    %v5368 = vadd.f32 %v5345, %v5361
    %v5369 = vadd.f32 %v5346, %v5361
    %v5370 = vadd.f32 %v5347, %v5361
    %v5371 = vadd.f32 %v5348, %v5361
    %v5372 = vadd.f32 %v5349, %v5361
    %v5373 = vadd.f32 %v5350, %v5361
    %v5374 = vadd.f32 %v5351, %v5361
    %v5375 = vadd.f32 %v5352, %v5361
    %v5376 = vadd.f32 %v5353, %v5361
    %v5377 = vadd.f32 %v5354, %v5361
    %v5378 = vadd.f32 %v5355, %v5361
    %vm5379 = vcmp.gt.f32.partialorder %v5363, 0.0
    %vm5380 = vcmp.gt.f32.partialorder %v5364, 0.0
    %vm5381 = vcmp.gt.f32.partialorder %v5365, 0.0
    %vm5382 = vcmp.gt.f32.partialorder %v5366, 0.0
    %vm5383 = vcmp.gt.f32.partialorder %v5367, 0.0
    %vm5384 = vcmp.gt.f32.partialorder %v5368, 0.0
    %vm5385 = vcmp.gt.f32.partialorder %v5369, 0.0
    %vm5386 = vcmp.gt.f32.partialorder %v5370, 0.0
    %vm5387 = vcmp.gt.f32.partialorder %v5371, 0.0
    %vm5388 = vcmp.gt.f32.partialorder %v5372, 0.0
    %vm5389 = vcmp.gt.f32.partialorder %v5373, 0.0
    %vm5390 = vcmp.gt.f32.partialorder %v5374, 0.0
    %vm5391 = vcmp.gt.f32.partialorder %v5375, 0.0
    %vm5392 = vcmp.gt.f32.partialorder %v5376, 0.0
    %vm5393 = vcmp.gt.f32.partialorder %v5377, 0.0
    %vm5394 = vcmp.gt.f32.partialorder %v5378, 0.0
    %v5395 = vmul.f32 %v5363, 0.01
    %v5396 = vmul.f32 %v5364, 0.01
    %v5397 = vmul.f32 %v5365, 0.01
    %v5398 = vmul.f32 %v5366, 0.01
    %v5399 = vmul.f32 %v5367, 0.01
    %v5400 = vmul.f32 %v5368, 0.01
    %v5401 = vmul.f32 %v5369, 0.01
    %v5402 = vmul.f32 %v5370, 0.01
    %v5403 = vmul.f32 %v5371, 0.01
    %v5404 = vmul.f32 %v5372, 0.01
    %v5405 = vmul.f32 %v5373, 0.01
    %v5406 = vmul.f32 %v5374, 0.01
    %v5407 = vmul.f32 %v5375, 0.01
    %v5408 = vmul.f32 %v5376, 0.01
    %v5409 = vmul.f32 %v5377, 0.01
    %v5410 = vmul.f32 %v5378, 0.01
    %v5411 = vsel %vm5379, %v5363, %v5395
    %v5412 = vsel %vm5380, %v5364, %v5396
    %v5413 = vsel %vm5381, %v5365, %v5397
    %v5414 = vsel %vm5382, %v5366, %v5398
    %v5415 = vsel %vm5383, %v5367, %v5399
    %v5416 = vsel %vm5384, %v5368, %v5400
    %v5417 = vsel %vm5385, %v5369, %v5401
    %v5418 = vsel %vm5386, %v5370, %v5402
    %v5419 = vsel %vm5387, %v5371, %v5403
    %v5420 = vsel %vm5388, %v5372, %v5404
    %v5421 = vsel %vm5389, %v5373, %v5405
    %v5422 = vsel %vm5390, %v5374, %v5406
    %v5423 = vsel %vm5391, %v5375, %v5407
    %v5424 = vsel %vm5392, %v5376, %v5408
    %v5425 = vsel %vm5393, %v5377, %v5409
    %v5426 = vsel %vm5394, %v5378, %v5410
    %v5427 = vld [vmem:[#allocation7] sm:$0xff]
    %v5428 = vld [vmem:[#allocation7 + $0x8] sm:$0xff]
    %v5429 = vld [vmem:[#allocation7 + $0x10] sm:$0xff]
    %v5430 = vld [vmem:[#allocation7 + $0x18] sm:$0xff]
    %5431 = vmatprep.subr.mxu0 0.0
    %5432 = vmatpush1.msra.mxu0 %v5411
    %5433 = vmatprep.subr.mxu0 0.0
    %5434 = vmatpush1.msra.mxu0 %v5412
    %5435 = vmatprep.subr.mxu0 0.0
    %5436 = vmatpush1.msra.mxu0 %v5413
    %5437 = vmatprep.subr.mxu0 0.0
    %5438 = vmatpush1.msra.mxu0 %v5414
    %5439 = vmatprep.subr.mxu0 0.0
    %5440 = vmatpush1.msra.mxu0 %v5415
    %5441 = vmatprep.subr.mxu0 0.0
    %5442 = vmatpush1.msra.mxu0 %v5416
    %5443 = vmatprep.subr.mxu0 0.0
    %5444 = vmatpush1.msra.mxu0 %v5417
    %5445 = vmatprep.subr.mxu0 0.0
    %5446 = vmatpush1.msra.mxu0 %v5418
    %5447 = vmatprep.subr.mxu0 0.0
    %5448 = vmatpush1.msra.mxu0 %v5419
    %5449 = vmatprep.subr.mxu0 0.0
    %5450 = vmatpush1.msra.mxu0 %v5420
    %5451 = vmatprep.subr.mxu0 0.0
    %5452 = vmatpush1.msra.mxu0 %v5421
    %5453 = vmatprep.subr.mxu0 0.0
    %5454 = vmatpush1.msra.mxu0 %v5422
    %5455 = vmatprep.subr.mxu0 0.0
    %5456 = vmatpush1.msra.mxu0 %v5423
    %5457 = vmatprep.subr.mxu0 0.0
    %5458 = vmatpush1.msra.mxu0 %v5424
    %5459 = vmatprep.subr.mxu0 0.0
    %5460 = vmatpush1.msra.mxu0 %v5425
    %5461 = vmatprep.subr.mxu0 0.0
    %5462 = vmatpush1.msra.mxu0 %v5426
    %5463 = vmatprep.subr.mxu0 0.0
    %5464 = vmatpush1.msra.mxu0 0.0
    %5465 = vmatprep.subr.mxu0 0.0
    %5466 = vmatpush1.msra.mxu0 0.0
    %5467 = vmatprep.subr.mxu0 0.0
    %5468 = vmatpush1.msra.mxu0 0.0
    %5469 = vmatprep.subr.mxu0 0.0
    %5470 = vmatpush1.msra.mxu0 0.0
    %5471 = vmatprep.subr.mxu0 0.0
    %5472 = vmatpush1.msra.mxu0 0.0
    %5473 = vmatprep.subr.mxu0 0.0
    %5474 = vmatpush1.msra.mxu0 0.0
    %5475 = vmatprep.subr.mxu0 0.0
    %5476 = vmatpush1.msra.mxu0 0.0
    %5477 = vmatprep.subr.mxu0 0.0
    %5478 = vmatpush1.msra.mxu0 0.0
    %5479 = vmatprep.subr.mxu0 0.0
    %5480 = vmatpush1.msra.mxu0 0.0
    %5481 = vmatprep.subr.mxu0 0.0
    %5482 = vmatpush1.msra.mxu0 0.0
    %5483 = vmatprep.subr.mxu0 0.0
    %5484 = vmatpush1.msra.mxu0 0.0
    %5485 = vmatprep.subr.mxu0 0.0
    %5486 = vmatpush1.msra.mxu0 0.0
    %5487 = vmatprep.subr.mxu0 0.0
    %5488 = vmatpush1.msra.mxu0 0.0
    %5489 = vmatprep.subr.mxu0 0.0
    %5490 = vmatpush1.msra.mxu0 0.0
    %5491 = vmatprep.subr.mxu0 0.0
    %5492 = vmatpush1.msra.mxu0 0.0
    %5493 = vmatprep.subr.mxu0 0.0
    %5494 = vmatpush1.msra.mxu0 0.0
    %5495 = vmatprep.mubr.f32.mxu0 0.0
    %5496 = vmatmul.mubr.f32.gmra.mrb[0].mxu0 %v5427
    %v5497 = vpop.f32.mrb[0].mxu0
    %v5498 = vadd.f32 0.0, %v5497
    %v5499 = vpop.f32.mrb[0].mxu0
    %5500 = vmatprep.mubr.f32.mxu0 0.0
    %5501 = vmatmul.mubr.f32.gmra.mrb[0].mxu0 %v5428
    %v5502 = vpop.f32.mrb[0].mxu0
    %v5503 = vadd.f32 0.0, %v5502
    %v5504 = vpop.f32.mrb[0].mxu0
    %5505 = vmatprep.mubr.f32.mxu0 0.0
    %5506 = vmatmul.mubr.f32.gmra.mrb[0].mxu0 %v5429
    %v5507 = vpop.f32.mrb[0].mxu0
    %v5508 = vadd.f32 0.0, %v5507
    %v5509 = vpop.f32.mrb[0].mxu0
    %5510 = vmatprep.mubr.f32.mxu0 0.0
    %5511 = vmatmul.mubr.f32.gmra.mrb[0].mxu0 %v5430
    %v5512 = vpop.f32.mrb[0].mxu0
    %v5513 = vadd.f32 0.0, %v5512
    %v5514 = vpop.f32.mrb[0].mxu0
    %5515 = vdwg.mxu0
    %v5516 = vld [vmem:[#allocation13] sm:$0xff]
    %v5517 = vld [vmem:[#allocation13 + $0x8] sm:$0x3f]
    %s5518 = scalar_lea.vmem [#allocation7], 32
    %v5519 = vld [vmem:[%s5518] sm:$0xff]
    %v5520 = vld [vmem:[%s5518 + $0x8] sm:$0xff]
    %v5521 = vld [vmem:[%s5518 + $0x10] sm:$0xff]
    %v5522 = vld [vmem:[%s5518 + $0x18] sm:$0xff]
    %5523 = vmatprep.subr.mxu0 0.0
    %5524 = vmatpush1.msra.mxu0 %v5411
    %5525 = vmatprep.subr.mxu0 0.0
    %5526 = vmatpush1.msra.mxu0 %v5412
    %5527 = vmatprep.subr.mxu0 0.0
    %5528 = vmatpush1.msra.mxu0 %v5413
    %5529 = vmatprep.subr.mxu0 0.0
    %5530 = vmatpush1.msra.mxu0 %v5414
    %5531 = vmatprep.subr.mxu0 0.0
    %5532 = vmatpush1.msra.mxu0 %v5415
    %5533 = vmatprep.subr.mxu0 0.0
    %5534 = vmatpush1.msra.mxu0 %v5416
    %5535 = vmatprep.subr.mxu0 0.0
    %5536 = vmatpush1.msra.mxu0 %v5417
    %5537 = vmatprep.subr.mxu0 0.0
    %5538 = vmatpush1.msra.mxu0 %v5418
    %5539 = vmatprep.subr.mxu0 0.0
    %5540 = vmatpush1.msra.mxu0 %v5419
    %5541 = vmatprep.subr.mxu0 0.0
    %5542 = vmatpush1.msra.mxu0 %v5420
    %5543 = vmatprep.subr.mxu0 0.0
    %5544 = vmatpush1.msra.mxu0 %v5421
    %5545 = vmatprep.subr.mxu0 0.0
    %5546 = vmatpush1.msra.mxu0 %v5422
    %5547 = vmatprep.subr.mxu0 0.0
    %5548 = vmatpush1.msra.mxu0 %v5423
    %5549 = vmatprep.subr.mxu0 0.0
    %5550 = vmatpush1.msra.mxu0 %v5424
    %5551 = vmatprep.subr.mxu0 0.0
    %5552 = vmatpush1.msra.mxu0 %v5425
    %5553 = vmatprep.subr.mxu0 0.0
    %5554 = vmatpush1.msra.mxu0 %v5426
    %5555 = vmatprep.subr.mxu0 0.0
    %5556 = vmatpush1.msra.mxu0 0.0
    %5557 = vmatprep.subr.mxu0 0.0
    %5558 = vmatpush1.msra.mxu0 0.0
    %5559 = vmatprep.subr.mxu0 0.0
    %5560 = vmatpush1.msra.mxu0 0.0
    %5561 = vmatprep.subr.mxu0 0.0
    %5562 = vmatpush1.msra.mxu0 0.0
    %5563 = vmatprep.subr.mxu0 0.0
    %5564 = vmatpush1.msra.mxu0 0.0
    %5565 = vmatprep.subr.mxu0 0.0
    %5566 = vmatpush1.msra.mxu0 0.0
    %5567 = vmatprep.subr.mxu0 0.0
    %5568 = vmatpush1.msra.mxu0 0.0
    %5569 = vmatprep.subr.mxu0 0.0
    %5570 = vmatpush1.msra.mxu0 0.0
    %5571 = vmatprep.subr.mxu0 0.0
    %5572 = vmatpush1.msra.mxu0 0.0
    %5573 = vmatprep.subr.mxu0 0.0
    %5574 = vmatpush1.msra.mxu0 0.0
    %5575 = vmatprep.subr.mxu0 0.0
    %5576 = vmatpush1.msra.mxu0 0.0
    %5577 = vmatprep.subr.mxu0 0.0
    %5578 = vmatpush1.msra.mxu0 0.0
    %5579 = vmatprep.subr.mxu0 0.0
    %5580 = vmatpush1.msra.mxu0 0.0
    %5581 = vmatprep.subr.mxu0 0.0
    %5582 = vmatpush1.msra.mxu0 0.0
    %5583 = vmatprep.subr.mxu0 0.0
    %5584 = vmatpush1.msra.mxu0 0.0
    %5585 = vmatprep.subr.mxu0 0.0
    %5586 = vmatpush1.msra.mxu0 0.0
    %5587 = vmatprep.mubr.f32.mxu0 0.0
    %5588 = vmatmul.mubr.f32.gmra.mrb[0].mxu0 %v5519
    %v5589 = vpop.f32.mrb[0].mxu0
    %v5590 = vadd.f32 0.0, %v5589
    %v5591 = vpop.f32.mrb[0].mxu0
    %5592 = vmatprep.mubr.f32.mxu0 0.0
    %5593 = vmatmul.mubr.f32.gmra.mrb[0].mxu0 %v5520
    %v5594 = vpop.f32.mrb[0].mxu0
    %v5595 = vadd.f32 0.0, %v5594
    %v5596 = vpop.f32.mrb[0].mxu0
    %5597 = vmatprep.mubr.f32.mxu0 0.0
    %5598 = vmatmul.mubr.f32.gmra.mrb[0].mxu0 %v5521
    %v5599 = vpop.f32.mrb[0].mxu0
    %v5600 = vadd.f32 0.0, %v5599
    %v5601 = vpop.f32.mrb[0].mxu0
    %5602 = vmatprep.mubr.f32.mxu0 0.0
    %5603 = vmatmul.mubr.f32.gmra.mrb[0].mxu0 %v5522
    %v5604 = vpop.f32.mrb[0].mxu0
    %v5605 = vadd.f32 0.0, %v5604
    %v5606 = vpop.f32.mrb[0].mxu0
    %5607 = vdwg.mxu0
    %s5608 = scalar_lea.vmem [#allocation13], 16
    %v5609 = vld [vmem:[%s5608] sm:$0xff]
    %v5610 = vld [vmem:[%s5608 + $0x8] sm:$0x3f]
    %vm5611 = vcmask 113664
    %v5613 = vsel %vm5611, %v5590, 0
    %v5616 = vsel %vm5611, %v5595, 0
    %v5619 = vsel %vm5611, %v5600, 0
    %v5622 = vsel %vm5611, %v5605, 0
    %vm5624 = vcmask 1045504
    %v5626 = vsel %vm5624, %v5610, 0
    %5628 = vmatprep.subr.mxu0 0.0
    %5629 = vmatpush1.msra.mxu0 %v5609
    %5630 = vmatprep.subr.mxu0 0.0
    %5631 = vmatpush1.msra.mxu0 %v5626
    %5632 = vmatprep.subr.mxu0 0.0
    %5633 = vmatpush1.msra.mxu0 0.0
    %5634 = vmatprep.subr.mxu0 0.0
    %5635 = vmatpush1.msra.mxu0 0.0
    %5636 = vmatprep.subr.mxu0 0.0
    %5637 = vmatpush1.msra.mxu0 0.0
    %5638 = vmatprep.subr.mxu0 0.0
    %5639 = vmatpush1.msra.mxu0 0.0
    %5640 = vmatprep.subr.mxu0 0.0
    %5641 = vmatpush1.msra.mxu0 0.0
    %5642 = vmatprep.subr.mxu0 0.0
    %5643 = vmatpush1.msra.mxu0 0.0
    %5644 = vmatprep.subr.mxu0 0.0
    %5645 = vmatpush1.msra.mxu0 0.0
    %5646 = vmatprep.subr.mxu0 0.0
    %5647 = vmatpush1.msra.mxu0 0.0
    %5648 = vmatprep.subr.mxu0 0.0
    %5649 = vmatpush1.msra.mxu0 0.0
    %5650 = vmatprep.subr.mxu0 0.0
    %5651 = vmatpush1.msra.mxu0 0.0
    %5652 = vmatprep.subr.mxu0 0.0
    %5653 = vmatpush1.msra.mxu0 0.0
    %5654 = vmatprep.subr.mxu0 0.0
    %5655 = vmatpush1.msra.mxu0 0.0
    %5656 = vmatprep.subr.mxu0 0.0
    %5657 = vmatpush1.msra.mxu0 0.0
    %5658 = vmatprep.subr.mxu0 0.0
    %5659 = vmatpush1.msra.mxu0 0.0
    %5660 = vmatprep.subr.mxu0 0.0
    %5661 = vmatpush1.msra.mxu0 0.0
    %5662 = vmatprep.subr.mxu0 0.0
    %5663 = vmatpush1.msra.mxu0 0.0
    %5664 = vmatprep.subr.mxu0 0.0
    %5665 = vmatpush1.msra.mxu0 0.0
    %5666 = vmatprep.subr.mxu0 0.0
    %5667 = vmatpush1.msra.mxu0 0.0
    %5668 = vmatprep.subr.mxu0 0.0
    %5669 = vmatpush1.msra.mxu0 0.0
    %5670 = vmatprep.subr.mxu0 0.0
    %5671 = vmatpush1.msra.mxu0 0.0
    %5672 = vmatprep.subr.mxu0 0.0
    %5673 = vmatpush1.msra.mxu0 0.0
    %5674 = vmatprep.subr.mxu0 0.0
    %5675 = vmatpush1.msra.mxu0 0.0
    %5676 = vmatprep.subr.mxu0 0.0
    %5677 = vmatpush1.msra.mxu0 0.0
    %5678 = vmatprep.subr.mxu0 0.0
    %5679 = vmatpush1.msra.mxu0 0.0
    %5680 = vmatprep.subr.mxu0 0.0
    %5681 = vmatpush1.msra.mxu0 0.0
    %5682 = vmatprep.subr.mxu0 0.0
    %5683 = vmatpush1.msra.mxu0 0.0
    %5684 = vmatprep.subr.mxu0 0.0
    %5685 = vmatpush1.msra.mxu0 0.0
    %5686 = vmatprep.subr.mxu0 0.0
    %5687 = vmatpush1.msra.mxu0 0.0
    %5688 = vmatprep.subr.mxu0 0.0
    %5689 = vmatpush1.msra.mxu0 0.0
    %5690 = vmatprep.subr.mxu0 0.0
    %5691 = vmatpush1.msra.mxu0 0.0
    %5692 = vmatprep.mubr.f32.mxu0 0.0
    %5693 = vmatmul.mubr.f32.gmra.mrb[0].mxu0 %v5613
    %v5694 = vpop.f32.mrb[0].mxu0
    %v5695 = vadd.f32 0.0, %v5694
    %v5696 = vpop.f32.mrb[0].mxu0
    %5697 = vmatprep.mubr.f32.mxu0 0.0
    %5698 = vmatmul.mubr.f32.gmra.mrb[0].mxu0 %v5616
    %v5699 = vpop.f32.mrb[0].mxu0
    %v5700 = vadd.f32 0.0, %v5699
    %v5701 = vpop.f32.mrb[0].mxu0
    %5702 = vmatprep.mubr.f32.mxu0 0.0
    %5703 = vmatmul.mubr.f32.gmra.mrb[0].mxu0 %v5619
    %v5704 = vpop.f32.mrb[0].mxu0
    %v5705 = vadd.f32 0.0, %v5704
    %v5706 = vpop.f32.mrb[0].mxu0
    %5707 = vmatprep.mubr.f32.mxu0 0.0
    %5708 = vmatmul.mubr.f32.gmra.mrb[0].mxu0 %v5622
    %v5709 = vpop.f32.mrb[0].mxu0
    %v5710 = vadd.f32 0.0, %v5709
    %v5711 = vpop.f32.mrb[0].mxu0
    %5712 = vdwg.mxu0
    %v5714 = vsel %vm5611, %v5498, 0
    %v5717 = vsel %vm5611, %v5503, 0
    %v5720 = vsel %vm5611, %v5508, 0
    %v5723 = vsel %vm5611, %v5513, 0
    %v5726 = vsel %vm5624, %v5517, 0
    %5728 = vmatprep.subr.mxu0 0.0
    %5729 = vmatpush1.msra.mxu0 %v5516
    %5730 = vmatprep.subr.mxu0 0.0
    %5731 = vmatpush1.msra.mxu0 %v5726
    %5732 = vmatprep.subr.mxu0 0.0
    %5733 = vmatpush1.msra.mxu0 0.0
    %5734 = vmatprep.subr.mxu0 0.0
    %5735 = vmatpush1.msra.mxu0 0.0
    %5736 = vmatprep.subr.mxu0 0.0
    %5737 = vmatpush1.msra.mxu0 0.0
    %5738 = vmatprep.subr.mxu0 0.0
    %5739 = vmatpush1.msra.mxu0 0.0
    %5740 = vmatprep.subr.mxu0 0.0
    %5741 = vmatpush1.msra.mxu0 0.0
    %5742 = vmatprep.subr.mxu0 0.0
    %5743 = vmatpush1.msra.mxu0 0.0
    %5744 = vmatprep.subr.mxu0 0.0
    %5745 = vmatpush1.msra.mxu0 0.0
    %5746 = vmatprep.subr.mxu0 0.0
    %5747 = vmatpush1.msra.mxu0 0.0
    %5748 = vmatprep.subr.mxu0 0.0
    %5749 = vmatpush1.msra.mxu0 0.0
    %5750 = vmatprep.subr.mxu0 0.0
    %5751 = vmatpush1.msra.mxu0 0.0
    %5752 = vmatprep.subr.mxu0 0.0
    %5753 = vmatpush1.msra.mxu0 0.0
    %5754 = vmatprep.subr.mxu0 0.0
    %5755 = vmatpush1.msra.mxu0 0.0
    %5756 = vmatprep.subr.mxu0 0.0
    %5757 = vmatpush1.msra.mxu0 0.0
    %5758 = vmatprep.subr.mxu0 0.0
    %5759 = vmatpush1.msra.mxu0 0.0
    %5760 = vmatprep.subr.mxu0 0.0
    %5761 = vmatpush1.msra.mxu0 0.0
    %5762 = vmatprep.subr.mxu0 0.0
    %5763 = vmatpush1.msra.mxu0 0.0
    %5764 = vmatprep.subr.mxu0 0.0
    %5765 = vmatpush1.msra.mxu0 0.0
    %5766 = vmatprep.subr.mxu0 0.0
    %5767 = vmatpush1.msra.mxu0 0.0
    %5768 = vmatprep.subr.mxu0 0.0
    %5769 = vmatpush1.msra.mxu0 0.0
    %5770 = vmatprep.subr.mxu0 0.0
    %5771 = vmatpush1.msra.mxu0 0.0
    %5772 = vmatprep.subr.mxu0 0.0
    %5773 = vmatpush1.msra.mxu0 0.0
    %5774 = vmatprep.subr.mxu0 0.0
    %5775 = vmatpush1.msra.mxu0 0.0
    %5776 = vmatprep.subr.mxu0 0.0
    %5777 = vmatpush1.msra.mxu0 0.0
    %5778 = vmatprep.subr.mxu0 0.0
    %5779 = vmatpush1.msra.mxu0 0.0
    %5780 = vmatprep.subr.mxu0 0.0
    %5781 = vmatpush1.msra.mxu0 0.0
    %5782 = vmatprep.subr.mxu0 0.0
    %5783 = vmatpush1.msra.mxu0 0.0
    %5784 = vmatprep.subr.mxu0 0.0
    %5785 = vmatpush1.msra.mxu0 0.0
    %5786 = vmatprep.subr.mxu0 0.0
    %5787 = vmatpush1.msra.mxu0 0.0
    %5788 = vmatprep.subr.mxu0 0.0
    %5789 = vmatpush1.msra.mxu0 0.0
    %5790 = vmatprep.subr.mxu0 0.0
    %5791 = vmatpush1.msra.mxu0 0.0
    %5792 = vmatprep.mubr.f32.mxu0 0.0
    %5793 = vmatmul.mubr.f32.gmra.mrb[0].mxu0 %v5714
    %v5794 = vpop.f32.mrb[0].mxu0
    %v5795 = vadd.f32 %v5695, %v5794
    %v5796 = vpop.f32.mrb[0].mxu0
    %5797 = vmatprep.mubr.f32.mxu0 0.0
    %5798 = vmatmul.mubr.f32.gmra.mrb[0].mxu0 %v5717
    %v5799 = vpop.f32.mrb[0].mxu0
    %v5800 = vadd.f32 %v5700, %v5799
    %v5801 = vpop.f32.mrb[0].mxu0
    %5802 = vmatprep.mubr.f32.mxu0 0.0
    %5803 = vmatmul.mubr.f32.gmra.mrb[0].mxu0 %v5720
    %v5804 = vpop.f32.mrb[0].mxu0
    %v5805 = vadd.f32 %v5705, %v5804
    %v5806 = vpop.f32.mrb[0].mxu0
    %5807 = vmatprep.mubr.f32.mxu0 0.0
    %5808 = vmatmul.mubr.f32.gmra.mrb[0].mxu0 %v5723
    %v5809 = vpop.f32.mrb[0].mxu0
    %v5810 = vadd.f32 %v5710, %v5809
    %v5811 = vpop.f32.mrb[0].mxu0
    %5812 = vdwg.mxu0
    %s5813 = scalar_lea.vmem [#allocation7], 64
    %v5814 = vld [vmem:[%s5813] sm:$0xff]
    %v5815 = vld [vmem:[%s5813 + $0x8] sm:$0xff]
    %v5816 = vld [vmem:[%s5813 + $0x10] sm:$0xff]
    %v5817 = vld [vmem:[%s5813 + $0x18] sm:$0xff]
    %5818 = vmatprep.subr.mxu0 0.0
    %5819 = vmatpush1.msra.mxu0 %v5411
    %5820 = vmatprep.subr.mxu0 0.0
    %5821 = vmatpush1.msra.mxu0 %v5412
    %5822 = vmatprep.subr.mxu0 0.0
    %5823 = vmatpush1.msra.mxu0 %v5413
    %5824 = vmatprep.subr.mxu0 0.0
    %5825 = vmatpush1.msra.mxu0 %v5414
    %5826 = vmatprep.subr.mxu0 0.0
    %5827 = vmatpush1.msra.mxu0 %v5415
    %5828 = vmatprep.subr.mxu0 0.0
    %5829 = vmatpush1.msra.mxu0 %v5416
    %5830 = vmatprep.subr.mxu0 0.0
    %5831 = vmatpush1.msra.mxu0 %v5417
    %5832 = vmatprep.subr.mxu0 0.0
    %5833 = vmatpush1.msra.mxu0 %v5418
    %5834 = vmatprep.subr.mxu0 0.0
    %5835 = vmatpush1.msra.mxu0 %v5419
    %5836 = vmatprep.subr.mxu0 0.0
    %5837 = vmatpush1.msra.mxu0 %v5420
    %5838 = vmatprep.subr.mxu0 0.0
    %5839 = vmatpush1.msra.mxu0 %v5421
    %5840 = vmatprep.subr.mxu0 0.0
    %5841 = vmatpush1.msra.mxu0 %v5422
    %5842 = vmatprep.subr.mxu0 0.0
    %5843 = vmatpush1.msra.mxu0 %v5423
    %5844 = vmatprep.subr.mxu0 0.0
    %5845 = vmatpush1.msra.mxu0 %v5424
    %5846 = vmatprep.subr.mxu0 0.0
    %5847 = vmatpush1.msra.mxu0 %v5425
    %5848 = vmatprep.subr.mxu0 0.0
    %5849 = vmatpush1.msra.mxu0 %v5426
    %5850 = vmatprep.subr.mxu0 0.0
    %5851 = vmatpush1.msra.mxu0 0.0
    %5852 = vmatprep.subr.mxu0 0.0
    %5853 = vmatpush1.msra.mxu0 0.0
    %5854 = vmatprep.subr.mxu0 0.0
    %5855 = vmatpush1.msra.mxu0 0.0
    %5856 = vmatprep.subr.mxu0 0.0
    %5857 = vmatpush1.msra.mxu0 0.0
    %5858 = vmatprep.subr.mxu0 0.0
    %5859 = vmatpush1.msra.mxu0 0.0
    %5860 = vmatprep.subr.mxu0 0.0
    %5861 = vmatpush1.msra.mxu0 0.0
    %5862 = vmatprep.subr.mxu0 0.0
    %5863 = vmatpush1.msra.mxu0 0.0
    %5864 = vmatprep.subr.mxu0 0.0
    %5865 = vmatpush1.msra.mxu0 0.0
    %5866 = vmatprep.subr.mxu0 0.0
    %5867 = vmatpush1.msra.mxu0 0.0
    %5868 = vmatprep.subr.mxu0 0.0
    %5869 = vmatpush1.msra.mxu0 0.0
    %5870 = vmatprep.subr.mxu0 0.0
    %5871 = vmatpush1.msra.mxu0 0.0
    %5872 = vmatprep.subr.mxu0 0.0
    %5873 = vmatpush1.msra.mxu0 0.0
    %5874 = vmatprep.subr.mxu0 0.0
    %5875 = vmatpush1.msra.mxu0 0.0
    %5876 = vmatprep.subr.mxu0 0.0
    %5877 = vmatpush1.msra.mxu0 0.0
    %5878 = vmatprep.subr.mxu0 0.0
    %5879 = vmatpush1.msra.mxu0 0.0
    %5880 = vmatprep.subr.mxu0 0.0
    %5881 = vmatpush1.msra.mxu0 0.0
    %5882 = vmatprep.mubr.f32.mxu0 0.0
    %5883 = vmatmul.mubr.f32.gmra.mrb[0].mxu0 %v5814
    %v5884 = vpop.f32.mrb[0].mxu0
    %v5885 = vadd.f32 0.0, %v5884
    %v5886 = vpop.f32.mrb[0].mxu0
    %5887 = vmatprep.mubr.f32.mxu0 0.0
    %5888 = vmatmul.mubr.f32.gmra.mrb[0].mxu0 %v5815
    %v5889 = vpop.f32.mrb[0].mxu0
    %v5890 = vadd.f32 0.0, %v5889
    %v5891 = vpop.f32.mrb[0].mxu0
    %5892 = vmatprep.mubr.f32.mxu0 0.0
    %5893 = vmatmul.mubr.f32.gmra.mrb[0].mxu0 %v5816
    %v5894 = vpop.f32.mrb[0].mxu0
    %v5895 = vadd.f32 0.0, %v5894
    %v5896 = vpop.f32.mrb[0].mxu0
    %5897 = vmatprep.mubr.f32.mxu0 0.0
    %5898 = vmatmul.mubr.f32.gmra.mrb[0].mxu0 %v5817
    %v5899 = vpop.f32.mrb[0].mxu0
    %v5900 = vadd.f32 0.0, %v5899
    %v5901 = vpop.f32.mrb[0].mxu0
    %5902 = vdwg.mxu0
    %s5903 = scalar_lea.vmem [#allocation13], 32
    %v5904 = vld [vmem:[%s5903] sm:$0xff]
    %v5905 = vld [vmem:[%s5903 + $0x8] sm:$0x3f]
    %v5907 = vsel %vm5611, %v5885, 0
    %v5910 = vsel %vm5611, %v5890, 0
    %v5913 = vsel %vm5611, %v5895, 0
    %v5916 = vsel %vm5611, %v5900, 0
    %v5919 = vsel %vm5624, %v5905, 0
    %5921 = vmatprep.subr.mxu0 0.0
    %5922 = vmatpush1.msra.mxu0 %v5904
    %5923 = vmatprep.subr.mxu0 0.0
    %5924 = vmatpush1.msra.mxu0 %v5919
    %5925 = vmatprep.subr.mxu0 0.0
    %5926 = vmatpush1.msra.mxu0 0.0
    %5927 = vmatprep.subr.mxu0 0.0
    %5928 = vmatpush1.msra.mxu0 0.0
    %5929 = vmatprep.subr.mxu0 0.0
    %5930 = vmatpush1.msra.mxu0 0.0
    %5931 = vmatprep.subr.mxu0 0.0
    %5932 = vmatpush1.msra.mxu0 0.0
    %5933 = vmatprep.subr.mxu0 0.0
    %5934 = vmatpush1.msra.mxu0 0.0
    %5935 = vmatprep.subr.mxu0 0.0
    %5936 = vmatpush1.msra.mxu0 0.0
    %5937 = vmatprep.subr.mxu0 0.0
    %5938 = vmatpush1.msra.mxu0 0.0
    %5939 = vmatprep.subr.mxu0 0.0
    %5940 = vmatpush1.msra.mxu0 0.0
    %5941 = vmatprep.subr.mxu0 0.0
    %5942 = vmatpush1.msra.mxu0 0.0
    %5943 = vmatprep.subr.mxu0 0.0
    %5944 = vmatpush1.msra.mxu0 0.0
    %5945 = vmatprep.subr.mxu0 0.0
    %5946 = vmatpush1.msra.mxu0 0.0
    %5947 = vmatprep.subr.mxu0 0.0
    %5948 = vmatpush1.msra.mxu0 0.0
    %5949 = vmatprep.subr.mxu0 0.0
    %5950 = vmatpush1.msra.mxu0 0.0
    %5951 = vmatprep.subr.mxu0 0.0
    %5952 = vmatpush1.msra.mxu0 0.0
    %5953 = vmatprep.subr.mxu0 0.0
    %5954 = vmatpush1.msra.mxu0 0.0
    %5955 = vmatprep.subr.mxu0 0.0
    %5956 = vmatpush1.msra.mxu0 0.0
    %5957 = vmatprep.subr.mxu0 0.0
    %5958 = vmatpush1.msra.mxu0 0.0
    %5959 = vmatprep.subr.mxu0 0.0
    %5960 = vmatpush1.msra.mxu0 0.0
    %5961 = vmatprep.subr.mxu0 0.0
    %5962 = vmatpush1.msra.mxu0 0.0
    %5963 = vmatprep.subr.mxu0 0.0
    %5964 = vmatpush1.msra.mxu0 0.0
    %5965 = vmatprep.subr.mxu0 0.0
    %5966 = vmatpush1.msra.mxu0 0.0
    %5967 = vmatprep.subr.mxu0 0.0
    %5968 = vmatpush1.msra.mxu0 0.0
    %5969 = vmatprep.subr.mxu0 0.0
    %5970 = vmatpush1.msra.mxu0 0.0
    %5971 = vmatprep.subr.mxu0 0.0
    %5972 = vmatpush1.msra.mxu0 0.0
    %5973 = vmatprep.subr.mxu0 0.0
    %5974 = vmatpush1.msra.mxu0 0.0
    %5975 = vmatprep.subr.mxu0 0.0
    %5976 = vmatpush1.msra.mxu0 0.0
    %5977 = vmatprep.subr.mxu0 0.0
    %5978 = vmatpush1.msra.mxu0 0.0
    %5979 = vmatprep.subr.mxu0 0.0
    %5980 = vmatpush1.msra.mxu0 0.0
    %5981 = vmatprep.subr.mxu0 0.0
    %5982 = vmatpush1.msra.mxu0 0.0
    %5983 = vmatprep.subr.mxu0 0.0
    %5984 = vmatpush1.msra.mxu0 0.0
    %5985 = vmatprep.mubr.f32.mxu0 0.0
    %5986 = vmatmul.mubr.f32.gmra.mrb[0].mxu0 %v5907
    %v5987 = vpop.f32.mrb[0].mxu0
    %v5988 = vadd.f32 0.0, %v5987
    %v5989 = vpop.f32.mrb[0].mxu0
    %5990 = vmatprep.mubr.f32.mxu0 0.0
    %5991 = vmatmul.mubr.f32.gmra.mrb[0].mxu0 %v5910
    %v5992 = vpop.f32.mrb[0].mxu0
    %v5993 = vadd.f32 0.0, %v5992
    %v5994 = vpop.f32.mrb[0].mxu0
    %5995 = vmatprep.mubr.f32.mxu0 0.0
    %5996 = vmatmul.mubr.f32.gmra.mrb[0].mxu0 %v5913
    %v5997 = vpop.f32.mrb[0].mxu0
    %v5998 = vadd.f32 0.0, %v5997
    %v5999 = vpop.f32.mrb[0].mxu0
    %6000 = vmatprep.mubr.f32.mxu0 0.0
    %6001 = vmatmul.mubr.f32.gmra.mrb[0].mxu0 %v5916
    %v6002 = vpop.f32.mrb[0].mxu0
    %v6003 = vadd.f32 0.0, %v6002
    %v6004 = vpop.f32.mrb[0].mxu0
    %6005 = vdwg.mxu0
    %v6006 = vadd.f32 %v5795, %v5988
    %v6007 = vadd.f32 %v5800, %v5993
    %v6008 = vadd.f32 %v5805, %v5998
    %v6009 = vadd.f32 %v5810, %v6003
    %s6010 = scalar_lea.vmem [#allocation7], 96
    %v6011 = vld [vmem:[%s6010] sm:$0xff]
    %v6012 = vld [vmem:[%s6010 + $0x8] sm:$0xff]
    %v6013 = vld [vmem:[%s6010 + $0x10] sm:$0xff]
    %v6014 = vld [vmem:[%s6010 + $0x18] sm:$0xff]
    %6015 = vmatprep.subr.mxu0 0.0
    %6016 = vmatpush1.msra.mxu0 %v5411
    %6017 = vmatprep.subr.mxu0 0.0
    %6018 = vmatpush1.msra.mxu0 %v5412
    %6019 = vmatprep.subr.mxu0 0.0
    %6020 = vmatpush1.msra.mxu0 %v5413
    %6021 = vmatprep.subr.mxu0 0.0
    %6022 = vmatpush1.msra.mxu0 %v5414
    %6023 = vmatprep.subr.mxu0 0.0
    %6024 = vmatpush1.msra.mxu0 %v5415
    %6025 = vmatprep.subr.mxu0 0.0
    %6026 = vmatpush1.msra.mxu0 %v5416
    %6027 = vmatprep.subr.mxu0 0.0
    %6028 = vmatpush1.msra.mxu0 %v5417
    %6029 = vmatprep.subr.mxu0 0.0
    %6030 = vmatpush1.msra.mxu0 %v5418
    %6031 = vmatprep.subr.mxu0 0.0
    %6032 = vmatpush1.msra.mxu0 %v5419
    %6033 = vmatprep.subr.mxu0 0.0
    %6034 = vmatpush1.msra.mxu0 %v5420
    %6035 = vmatprep.subr.mxu0 0.0
    %6036 = vmatpush1.msra.mxu0 %v5421
    %6037 = vmatprep.subr.mxu0 0.0
    %6038 = vmatpush1.msra.mxu0 %v5422
    %6039 = vmatprep.subr.mxu0 0.0
    %6040 = vmatpush1.msra.mxu0 %v5423
    %6041 = vmatprep.subr.mxu0 0.0
    %6042 = vmatpush1.msra.mxu0 %v5424
    %6043 = vmatprep.subr.mxu0 0.0
    %6044 = vmatpush1.msra.mxu0 %v5425
    %6045 = vmatprep.subr.mxu0 0.0
    %6046 = vmatpush1.msra.mxu0 %v5426
    %6047 = vmatprep.subr.mxu0 0.0
    %6048 = vmatpush1.msra.mxu0 0.0
    %6049 = vmatprep.subr.mxu0 0.0
    %6050 = vmatpush1.msra.mxu0 0.0
    %6051 = vmatprep.subr.mxu0 0.0
    %6052 = vmatpush1.msra.mxu0 0.0
    %6053 = vmatprep.subr.mxu0 0.0
    %6054 = vmatpush1.msra.mxu0 0.0
    %6055 = vmatprep.subr.mxu0 0.0
    %6056 = vmatpush1.msra.mxu0 0.0
    %6057 = vmatprep.subr.mxu0 0.0
    %6058 = vmatpush1.msra.mxu0 0.0
    %6059 = vmatprep.subr.mxu0 0.0
    %6060 = vmatpush1.msra.mxu0 0.0
    %6061 = vmatprep.subr.mxu0 0.0
    %6062 = vmatpush1.msra.mxu0 0.0
    %6063 = vmatprep.subr.mxu0 0.0
    %6064 = vmatpush1.msra.mxu0 0.0
    %6065 = vmatprep.subr.mxu0 0.0
    %6066 = vmatpush1.msra.mxu0 0.0
    %6067 = vmatprep.subr.mxu0 0.0
    %6068 = vmatpush1.msra.mxu0 0.0
    %6069 = vmatprep.subr.mxu0 0.0
    %6070 = vmatpush1.msra.mxu0 0.0
    %6071 = vmatprep.subr.mxu0 0.0
    %6072 = vmatpush1.msra.mxu0 0.0
    %6073 = vmatprep.subr.mxu0 0.0
    %6074 = vmatpush1.msra.mxu0 0.0
    %6075 = vmatprep.subr.mxu0 0.0
    %6076 = vmatpush1.msra.mxu0 0.0
    %6077 = vmatprep.subr.mxu0 0.0
    %6078 = vmatpush1.msra.mxu0 0.0
    %6079 = vmatprep.mubr.f32.mxu0 0.0
    %6080 = vmatmul.mubr.f32.gmra.mrb[0].mxu0 %v6011
    %v6081 = vpop.f32.mrb[0].mxu0
    %v6082 = vadd.f32 0.0, %v6081
    %v6083 = vpop.f32.mrb[0].mxu0
    %6084 = vmatprep.mubr.f32.mxu0 0.0
    %6085 = vmatmul.mubr.f32.gmra.mrb[0].mxu0 %v6012
    %v6086 = vpop.f32.mrb[0].mxu0
    %v6087 = vadd.f32 0.0, %v6086
    %v6088 = vpop.f32.mrb[0].mxu0
    %6089 = vmatprep.mubr.f32.mxu0 0.0
    %6090 = vmatmul.mubr.f32.gmra.mrb[0].mxu0 %v6013
    %v6091 = vpop.f32.mrb[0].mxu0
    %v6092 = vadd.f32 0.0, %v6091
    %v6093 = vpop.f32.mrb[0].mxu0
    %6094 = vmatprep.mubr.f32.mxu0 0.0
    %6095 = vmatmul.mubr.f32.gmra.mrb[0].mxu0 %v6014
    %v6096 = vpop.f32.mrb[0].mxu0
    %v6097 = vadd.f32 0.0, %v6096
    %v6098 = vpop.f32.mrb[0].mxu0
    %6099 = vdwg.mxu0
    %s6100 = scalar_lea.vmem [#allocation13], 48
    %v6101 = vld [vmem:[%s6100] sm:$0xff]
    %v6102 = vld [vmem:[%s6100 + $0x8] sm:$0x3f]
    %v6104 = vsel %vm5611, %v6082, 0
    %v6107 = vsel %vm5611, %v6087, 0
    %v6110 = vsel %vm5611, %v6092, 0
    %v6113 = vsel %vm5611, %v6097, 0
    %v6116 = vsel %vm5624, %v6102, 0
    %6118 = vmatprep.subr.mxu0 0.0
    %6119 = vmatpush1.msra.mxu0 %v6101
    %6120 = vmatprep.subr.mxu0 0.0
    %6121 = vmatpush1.msra.mxu0 %v6116
    %6122 = vmatprep.subr.mxu0 0.0
    %6123 = vmatpush1.msra.mxu0 0.0
    %6124 = vmatprep.subr.mxu0 0.0
    %6125 = vmatpush1.msra.mxu0 0.0
    %6126 = vmatprep.subr.mxu0 0.0
    %6127 = vmatpush1.msra.mxu0 0.0
    %6128 = vmatprep.subr.mxu0 0.0
    %6129 = vmatpush1.msra.mxu0 0.0
    %6130 = vmatprep.subr.mxu0 0.0
    %6131 = vmatpush1.msra.mxu0 0.0
    %6132 = vmatprep.subr.mxu0 0.0
    %6133 = vmatpush1.msra.mxu0 0.0
    %6134 = vmatprep.subr.mxu0 0.0
    %6135 = vmatpush1.msra.mxu0 0.0
    %6136 = vmatprep.subr.mxu0 0.0
    %6137 = vmatpush1.msra.mxu0 0.0
    %6138 = vmatprep.subr.mxu0 0.0
    %6139 = vmatpush1.msra.mxu0 0.0
    %6140 = vmatprep.subr.mxu0 0.0
    %6141 = vmatpush1.msra.mxu0 0.0
    %6142 = vmatprep.subr.mxu0 0.0
    %6143 = vmatpush1.msra.mxu0 0.0
    %6144 = vmatprep.subr.mxu0 0.0
    %6145 = vmatpush1.msra.mxu0 0.0
    %6146 = vmatprep.subr.mxu0 0.0
    %6147 = vmatpush1.msra.mxu0 0.0
    %6148 = vmatprep.subr.mxu0 0.0
    %6149 = vmatpush1.msra.mxu0 0.0
    %6150 = vmatprep.subr.mxu0 0.0
    %6151 = vmatpush1.msra.mxu0 0.0
    %6152 = vmatprep.subr.mxu0 0.0
    %6153 = vmatpush1.msra.mxu0 0.0
    %6154 = vmatprep.subr.mxu0 0.0
    %6155 = vmatpush1.msra.mxu0 0.0
    %6156 = vmatprep.subr.mxu0 0.0
    %6157 = vmatpush1.msra.mxu0 0.0
    %6158 = vmatprep.subr.mxu0 0.0
    %6159 = vmatpush1.msra.mxu0 0.0
    %6160 = vmatprep.subr.mxu0 0.0
    %6161 = vmatpush1.msra.mxu0 0.0
    %6162 = vmatprep.subr.mxu0 0.0
    %6163 = vmatpush1.msra.mxu0 0.0
    %6164 = vmatprep.subr.mxu0 0.0
    %6165 = vmatpush1.msra.mxu0 0.0
    %6166 = vmatprep.subr.mxu0 0.0
    %6167 = vmatpush1.msra.mxu0 0.0
    %6168 = vmatprep.subr.mxu0 0.0
    %6169 = vmatpush1.msra.mxu0 0.0
    %6170 = vmatprep.subr.mxu0 0.0
    %6171 = vmatpush1.msra.mxu0 0.0
    %6172 = vmatprep.subr.mxu0 0.0
    %6173 = vmatpush1.msra.mxu0 0.0
    %6174 = vmatprep.subr.mxu0 0.0
    %6175 = vmatpush1.msra.mxu0 0.0
    %6176 = vmatprep.subr.mxu0 0.0
    %6177 = vmatpush1.msra.mxu0 0.0
    %6178 = vmatprep.subr.mxu0 0.0
    %6179 = vmatpush1.msra.mxu0 0.0
    %6180 = vmatprep.subr.mxu0 0.0
    %6181 = vmatpush1.msra.mxu0 0.0
    %6182 = vmatprep.mubr.f32.mxu0 0.0
    %6183 = vmatmul.mubr.f32.gmra.mrb[0].mxu0 %v6104
    %v6184 = vpop.f32.mrb[0].mxu0
    %v6185 = vadd.f32 0.0, %v6184
    %v6186 = vpop.f32.mrb[0].mxu0
    %6187 = vmatprep.mubr.f32.mxu0 0.0
    %6188 = vmatmul.mubr.f32.gmra.mrb[0].mxu0 %v6107
    %v6189 = vpop.f32.mrb[0].mxu0
    %v6190 = vadd.f32 0.0, %v6189
    %v6191 = vpop.f32.mrb[0].mxu0
    %6192 = vmatprep.mubr.f32.mxu0 0.0
    %6193 = vmatmul.mubr.f32.gmra.mrb[0].mxu0 %v6110
    %v6194 = vpop.f32.mrb[0].mxu0
    %v6195 = vadd.f32 0.0, %v6194
    %v6196 = vpop.f32.mrb[0].mxu0
    %6197 = vmatprep.mubr.f32.mxu0 0.0
    %6198 = vmatmul.mubr.f32.gmra.mrb[0].mxu0 %v6113
    %v6199 = vpop.f32.mrb[0].mxu0
    %v6200 = vadd.f32 0.0, %v6199
    %v6201 = vpop.f32.mrb[0].mxu0
    %6202 = vdwg.mxu0
    %v6203 = vadd.f32 %v6006, %v6185
    %v6204 = vadd.f32 %v6007, %v6190
    %v6205 = vadd.f32 %v6008, %v6195
    %v6206 = vadd.f32 %v6009, %v6200
    %s6207 = scalar_lea.vmem [#allocation7], 128
    %v6208 = vld [vmem:[%s6207] sm:$0xff]
    %v6209 = vld [vmem:[%s6207 + $0x8] sm:$0xff]
    %v6210 = vld [vmem:[%s6207 + $0x10] sm:$0xff]
    %v6211 = vld [vmem:[%s6207 + $0x18] sm:$0xff]
    %6212 = vmatprep.subr.mxu0 0.0
    %6213 = vmatpush1.msra.mxu0 %v5411
    %6214 = vmatprep.subr.mxu0 0.0
    %6215 = vmatpush1.msra.mxu0 %v5412
    %6216 = vmatprep.subr.mxu0 0.0
    %6217 = vmatpush1.msra.mxu0 %v5413
    %6218 = vmatprep.subr.mxu0 0.0
    %6219 = vmatpush1.msra.mxu0 %v5414
    %6220 = vmatprep.subr.mxu0 0.0
    %6221 = vmatpush1.msra.mxu0 %v5415
    %6222 = vmatprep.subr.mxu0 0.0
    %6223 = vmatpush1.msra.mxu0 %v5416
    %6224 = vmatprep.subr.mxu0 0.0
    %6225 = vmatpush1.msra.mxu0 %v5417
    %6226 = vmatprep.subr.mxu0 0.0
    %6227 = vmatpush1.msra.mxu0 %v5418
    %6228 = vmatprep.subr.mxu0 0.0
    %6229 = vmatpush1.msra.mxu0 %v5419
    %6230 = vmatprep.subr.mxu0 0.0
    %6231 = vmatpush1.msra.mxu0 %v5420
    %6232 = vmatprep.subr.mxu0 0.0
    %6233 = vmatpush1.msra.mxu0 %v5421
    %6234 = vmatprep.subr.mxu0 0.0
    %6235 = vmatpush1.msra.mxu0 %v5422
    %6236 = vmatprep.subr.mxu0 0.0
    %6237 = vmatpush1.msra.mxu0 %v5423
    %6238 = vmatprep.subr.mxu0 0.0
    %6239 = vmatpush1.msra.mxu0 %v5424
    %6240 = vmatprep.subr.mxu0 0.0
    %6241 = vmatpush1.msra.mxu0 %v5425
    %6242 = vmatprep.subr.mxu0 0.0
    %6243 = vmatpush1.msra.mxu0 %v5426
    %6244 = vmatprep.subr.mxu0 0.0
    %6245 = vmatpush1.msra.mxu0 0.0
    %6246 = vmatprep.subr.mxu0 0.0
    %6247 = vmatpush1.msra.mxu0 0.0
    %6248 = vmatprep.subr.mxu0 0.0
    %6249 = vmatpush1.msra.mxu0 0.0
    %6250 = vmatprep.subr.mxu0 0.0
    %6251 = vmatpush1.msra.mxu0 0.0
    %6252 = vmatprep.subr.mxu0 0.0
    %6253 = vmatpush1.msra.mxu0 0.0
    %6254 = vmatprep.subr.mxu0 0.0
    %6255 = vmatpush1.msra.mxu0 0.0
    %6256 = vmatprep.subr.mxu0 0.0
    %6257 = vmatpush1.msra.mxu0 0.0
    %6258 = vmatprep.subr.mxu0 0.0
    %6259 = vmatpush1.msra.mxu0 0.0
    %6260 = vmatprep.subr.mxu0 0.0
    %6261 = vmatpush1.msra.mxu0 0.0
    %6262 = vmatprep.subr.mxu0 0.0
    %6263 = vmatpush1.msra.mxu0 0.0
    %6264 = vmatprep.subr.mxu0 0.0
    %6265 = vmatpush1.msra.mxu0 0.0
    %6266 = vmatprep.subr.mxu0 0.0
    %6267 = vmatpush1.msra.mxu0 0.0
    %6268 = vmatprep.subr.mxu0 0.0
    %6269 = vmatpush1.msra.mxu0 0.0
    %6270 = vmatprep.subr.mxu0 0.0
    %6271 = vmatpush1.msra.mxu0 0.0
    %6272 = vmatprep.subr.mxu0 0.0
    %6273 = vmatpush1.msra.mxu0 0.0
    %6274 = vmatprep.subr.mxu0 0.0
    %6275 = vmatpush1.msra.mxu0 0.0
    %6276 = vmatprep.mubr.f32.mxu0 0.0
    %6277 = vmatmul.mubr.f32.gmra.mrb[0].mxu0 %v6208
    %v6278 = vpop.f32.mrb[0].mxu0
    %v6279 = vadd.f32 0.0, %v6278
    %v6280 = vpop.f32.mrb[0].mxu0
    %6281 = vmatprep.mubr.f32.mxu0 0.0
    %6282 = vmatmul.mubr.f32.gmra.mrb[0].mxu0 %v6209
    %v6283 = vpop.f32.mrb[0].mxu0
    %v6284 = vadd.f32 0.0, %v6283
    %v6285 = vpop.f32.mrb[0].mxu0
    %6286 = vmatprep.mubr.f32.mxu0 0.0
    %6287 = vmatmul.mubr.f32.gmra.mrb[0].mxu0 %v6210
    %v6288 = vpop.f32.mrb[0].mxu0
    %v6289 = vadd.f32 0.0, %v6288
    %v6290 = vpop.f32.mrb[0].mxu0
    %6291 = vmatprep.mubr.f32.mxu0 0.0
    %6292 = vmatmul.mubr.f32.gmra.mrb[0].mxu0 %v6211
    %v6293 = vpop.f32.mrb[0].mxu0
    %v6294 = vadd.f32 0.0, %v6293
    %v6295 = vpop.f32.mrb[0].mxu0
    %6296 = vdwg.mxu0
    %s6297 = scalar_lea.vmem [#allocation13], 64
    %v6298 = vld [vmem:[%s6297] sm:$0xff]
    %v6299 = vld [vmem:[%s6297 + $0x8] sm:$0x3f]
    %v6301 = vsel %vm5611, %v6279, 0
    %v6304 = vsel %vm5611, %v6284, 0
    %v6307 = vsel %vm5611, %v6289, 0
    %v6310 = vsel %vm5611, %v6294, 0
    %v6313 = vsel %vm5624, %v6299, 0
    %6315 = vmatprep.subr.mxu0 0.0
    %6316 = vmatpush1.msra.mxu0 %v6298
    %6317 = vmatprep.subr.mxu0 0.0
    %6318 = vmatpush1.msra.mxu0 %v6313
    %6319 = vmatprep.subr.mxu0 0.0
    %6320 = vmatpush1.msra.mxu0 0.0
    %6321 = vmatprep.subr.mxu0 0.0
    %6322 = vmatpush1.msra.mxu0 0.0
    %6323 = vmatprep.subr.mxu0 0.0
    %6324 = vmatpush1.msra.mxu0 0.0
    %6325 = vmatprep.subr.mxu0 0.0
    %6326 = vmatpush1.msra.mxu0 0.0
    %6327 = vmatprep.subr.mxu0 0.0
    %6328 = vmatpush1.msra.mxu0 0.0
    %6329 = vmatprep.subr.mxu0 0.0
    %6330 = vmatpush1.msra.mxu0 0.0
    %6331 = vmatprep.subr.mxu0 0.0
    %6332 = vmatpush1.msra.mxu0 0.0
    %6333 = vmatprep.subr.mxu0 0.0
    %6334 = vmatpush1.msra.mxu0 0.0
    %6335 = vmatprep.subr.mxu0 0.0
    %6336 = vmatpush1.msra.mxu0 0.0
    %6337 = vmatprep.subr.mxu0 0.0
    %6338 = vmatpush1.msra.mxu0 0.0
    %6339 = vmatprep.subr.mxu0 0.0
    %6340 = vmatpush1.msra.mxu0 0.0
    %6341 = vmatprep.subr.mxu0 0.0
    %6342 = vmatpush1.msra.mxu0 0.0
    %6343 = vmatprep.subr.mxu0 0.0
    %6344 = vmatpush1.msra.mxu0 0.0
    %6345 = vmatprep.subr.mxu0 0.0
    %6346 = vmatpush1.msra.mxu0 0.0
    %6347 = vmatprep.subr.mxu0 0.0
    %6348 = vmatpush1.msra.mxu0 0.0
    %6349 = vmatprep.subr.mxu0 0.0
    %6350 = vmatpush1.msra.mxu0 0.0
    %6351 = vmatprep.subr.mxu0 0.0
    %6352 = vmatpush1.msra.mxu0 0.0
    %6353 = vmatprep.subr.mxu0 0.0
    %6354 = vmatpush1.msra.mxu0 0.0
    %6355 = vmatprep.subr.mxu0 0.0
    %6356 = vmatpush1.msra.mxu0 0.0
    %6357 = vmatprep.subr.mxu0 0.0
    %6358 = vmatpush1.msra.mxu0 0.0
    %6359 = vmatprep.subr.mxu0 0.0
    %6360 = vmatpush1.msra.mxu0 0.0
    %6361 = vmatprep.subr.mxu0 0.0
    %6362 = vmatpush1.msra.mxu0 0.0
    %6363 = vmatprep.subr.mxu0 0.0
    %6364 = vmatpush1.msra.mxu0 0.0
    %6365 = vmatprep.subr.mxu0 0.0
    %6366 = vmatpush1.msra.mxu0 0.0
    %6367 = vmatprep.subr.mxu0 0.0
    %6368 = vmatpush1.msra.mxu0 0.0
    %6369 = vmatprep.subr.mxu0 0.0
    %6370 = vmatpush1.msra.mxu0 0.0
    %6371 = vmatprep.subr.mxu0 0.0
    %6372 = vmatpush1.msra.mxu0 0.0
    %6373 = vmatprep.subr.mxu0 0.0
    %6374 = vmatpush1.msra.mxu0 0.0
    %6375 = vmatprep.subr.mxu0 0.0
    %6376 = vmatpush1.msra.mxu0 0.0
    %6377 = vmatprep.subr.mxu0 0.0
    %6378 = vmatpush1.msra.mxu0 0.0
    %6379 = vmatprep.mubr.f32.mxu0 0.0
    %6380 = vmatmul.mubr.f32.gmra.mrb[0].mxu0 %v6301
    %v6381 = vpop.f32.mrb[0].mxu0
    %v6382 = vadd.f32 0.0, %v6381
    %v6383 = vpop.f32.mrb[0].mxu0
    %6384 = vmatprep.mubr.f32.mxu0 0.0
    %6385 = vmatmul.mubr.f32.gmra.mrb[0].mxu0 %v6304
    %v6386 = vpop.f32.mrb[0].mxu0
    %v6387 = vadd.f32 0.0, %v6386
    %v6388 = vpop.f32.mrb[0].mxu0
    %6389 = vmatprep.mubr.f32.mxu0 0.0
    %6390 = vmatmul.mubr.f32.gmra.mrb[0].mxu0 %v6307
    %v6391 = vpop.f32.mrb[0].mxu0
    %v6392 = vadd.f32 0.0, %v6391
    %v6393 = vpop.f32.mrb[0].mxu0
    %6394 = vmatprep.mubr.f32.mxu0 0.0
    %6395 = vmatmul.mubr.f32.gmra.mrb[0].mxu0 %v6310
    %v6396 = vpop.f32.mrb[0].mxu0
    %v6397 = vadd.f32 0.0, %v6396
    %v6398 = vpop.f32.mrb[0].mxu0
    %6399 = vdwg.mxu0
    %v6400 = vadd.f32 %v6203, %v6382
    %v6401 = vadd.f32 %v6204, %v6387
    %v6402 = vadd.f32 %v6205, %v6392
    %v6403 = vadd.f32 %v6206, %v6397
    %s6404 = scalar_lea.vmem [#allocation7], 160
    %v6405 = vld [vmem:[%s6404] sm:$0xff]
    %v6406 = vld [vmem:[%s6404 + $0x8] sm:$0xff]
    %v6407 = vld [vmem:[%s6404 + $0x10] sm:$0xff]
    %v6408 = vld [vmem:[%s6404 + $0x18] sm:$0xff]
    %6409 = vmatprep.subr.mxu0 0.0
    %6410 = vmatpush1.msra.mxu0 %v5411
    %6411 = vmatprep.subr.mxu0 0.0
    %6412 = vmatpush1.msra.mxu0 %v5412
    %6413 = vmatprep.subr.mxu0 0.0
    %6414 = vmatpush1.msra.mxu0 %v5413
    %6415 = vmatprep.subr.mxu0 0.0
    %6416 = vmatpush1.msra.mxu0 %v5414
    %6417 = vmatprep.subr.mxu0 0.0
    %6418 = vmatpush1.msra.mxu0 %v5415
    %6419 = vmatprep.subr.mxu0 0.0
    %6420 = vmatpush1.msra.mxu0 %v5416
    %6421 = vmatprep.subr.mxu0 0.0
    %6422 = vmatpush1.msra.mxu0 %v5417
    %6423 = vmatprep.subr.mxu0 0.0
    %6424 = vmatpush1.msra.mxu0 %v5418
    %6425 = vmatprep.subr.mxu0 0.0
    %6426 = vmatpush1.msra.mxu0 %v5419
    %6427 = vmatprep.subr.mxu0 0.0
    %6428 = vmatpush1.msra.mxu0 %v5420
    %6429 = vmatprep.subr.mxu0 0.0
    %6430 = vmatpush1.msra.mxu0 %v5421
    %6431 = vmatprep.subr.mxu0 0.0
    %6432 = vmatpush1.msra.mxu0 %v5422
    %6433 = vmatprep.subr.mxu0 0.0
    %6434 = vmatpush1.msra.mxu0 %v5423
    %6435 = vmatprep.subr.mxu0 0.0
    %6436 = vmatpush1.msra.mxu0 %v5424
    %6437 = vmatprep.subr.mxu0 0.0
    %6438 = vmatpush1.msra.mxu0 %v5425
    %6439 = vmatprep.subr.mxu0 0.0
    %6440 = vmatpush1.msra.mxu0 %v5426
    %6441 = vmatprep.subr.mxu0 0.0
    %6442 = vmatpush1.msra.mxu0 0.0
    %6443 = vmatprep.subr.mxu0 0.0
    %6444 = vmatpush1.msra.mxu0 0.0
    %6445 = vmatprep.subr.mxu0 0.0
    %6446 = vmatpush1.msra.mxu0 0.0
    %6447 = vmatprep.subr.mxu0 0.0
    %6448 = vmatpush1.msra.mxu0 0.0
    %6449 = vmatprep.subr.mxu0 0.0
    %6450 = vmatpush1.msra.mxu0 0.0
    %6451 = vmatprep.subr.mxu0 0.0
    %6452 = vmatpush1.msra.mxu0 0.0
    %6453 = vmatprep.subr.mxu0 0.0
    %6454 = vmatpush1.msra.mxu0 0.0
    %6455 = vmatprep.subr.mxu0 0.0
    %6456 = vmatpush1.msra.mxu0 0.0
    %6457 = vmatprep.subr.mxu0 0.0
    %6458 = vmatpush1.msra.mxu0 0.0
    %6459 = vmatprep.subr.mxu0 0.0
    %6460 = vmatpush1.msra.mxu0 0.0
    %6461 = vmatprep.subr.mxu0 0.0
    %6462 = vmatpush1.msra.mxu0 0.0
    %6463 = vmatprep.subr.mxu0 0.0
    %6464 = vmatpush1.msra.mxu0 0.0
    %6465 = vmatprep.subr.mxu0 0.0
    %6466 = vmatpush1.msra.mxu0 0.0
    %6467 = vmatprep.subr.mxu0 0.0
    %6468 = vmatpush1.msra.mxu0 0.0
    %6469 = vmatprep.subr.mxu0 0.0
    %6470 = vmatpush1.msra.mxu0 0.0
    %6471 = vmatprep.subr.mxu0 0.0
    %6472 = vmatpush1.msra.mxu0 0.0
    %6473 = vmatprep.mubr.f32.mxu0 0.0
    %6474 = vmatmul.mubr.f32.gmra.mrb[0].mxu0 %v6405
    %v6475 = vpop.f32.mrb[0].mxu0
    %v6476 = vadd.f32 0.0, %v6475
    %v6477 = vpop.f32.mrb[0].mxu0
    %6478 = vmatprep.mubr.f32.mxu0 0.0
    %6479 = vmatmul.mubr.f32.gmra.mrb[0].mxu0 %v6406
    %v6480 = vpop.f32.mrb[0].mxu0
    %v6481 = vadd.f32 0.0, %v6480
    %v6482 = vpop.f32.mrb[0].mxu0
    %6483 = vmatprep.mubr.f32.mxu0 0.0
    %6484 = vmatmul.mubr.f32.gmra.mrb[0].mxu0 %v6407
    %v6485 = vpop.f32.mrb[0].mxu0
    %v6486 = vadd.f32 0.0, %v6485
    %v6487 = vpop.f32.mrb[0].mxu0
    %6488 = vmatprep.mubr.f32.mxu0 0.0
    %6489 = vmatmul.mubr.f32.gmra.mrb[0].mxu0 %v6408
    %v6490 = vpop.f32.mrb[0].mxu0
    %v6491 = vadd.f32 0.0, %v6490
    %v6492 = vpop.f32.mrb[0].mxu0
    %6493 = vdwg.mxu0
    %s6494 = scalar_lea.vmem [#allocation13], 80
    %v6495 = vld [vmem:[%s6494] sm:$0xff]
    %v6496 = vld [vmem:[%s6494 + $0x8] sm:$0x3f]
    %v6498 = vsel %vm5611, %v6476, 0
    %v6501 = vsel %vm5611, %v6481, 0
    %v6504 = vsel %vm5611, %v6486, 0
    %v6507 = vsel %vm5611, %v6491, 0
    %v6510 = vsel %vm5624, %v6496, 0
    %6512 = vmatprep.subr.mxu0 0.0
    %6513 = vmatpush1.msra.mxu0 %v6495
    %6514 = vmatprep.subr.mxu0 0.0
    %6515 = vmatpush1.msra.mxu0 %v6510
    %6516 = vmatprep.subr.mxu0 0.0
    %6517 = vmatpush1.msra.mxu0 0.0
    %6518 = vmatprep.subr.mxu0 0.0
    %6519 = vmatpush1.msra.mxu0 0.0
    %6520 = vmatprep.subr.mxu0 0.0
    %6521 = vmatpush1.msra.mxu0 0.0
    %6522 = vmatprep.subr.mxu0 0.0
    %6523 = vmatpush1.msra.mxu0 0.0
    %6524 = vmatprep.subr.mxu0 0.0
    %6525 = vmatpush1.msra.mxu0 0.0
    %6526 = vmatprep.subr.mxu0 0.0
    %6527 = vmatpush1.msra.mxu0 0.0
    %6528 = vmatprep.subr.mxu0 0.0
    %6529 = vmatpush1.msra.mxu0 0.0
    %6530 = vmatprep.subr.mxu0 0.0
    %6531 = vmatpush1.msra.mxu0 0.0
    %6532 = vmatprep.subr.mxu0 0.0
    %6533 = vmatpush1.msra.mxu0 0.0
    %6534 = vmatprep.subr.mxu0 0.0
    %6535 = vmatpush1.msra.mxu0 0.0
    %6536 = vmatprep.subr.mxu0 0.0
    %6537 = vmatpush1.msra.mxu0 0.0
    %6538 = vmatprep.subr.mxu0 0.0
    %6539 = vmatpush1.msra.mxu0 0.0
    %6540 = vmatprep.subr.mxu0 0.0
    %6541 = vmatpush1.msra.mxu0 0.0
    %6542 = vmatprep.subr.mxu0 0.0
    %6543 = vmatpush1.msra.mxu0 0.0
    %6544 = vmatprep.subr.mxu0 0.0
    %6545 = vmatpush1.msra.mxu0 0.0
    %6546 = vmatprep.subr.mxu0 0.0
    %6547 = vmatpush1.msra.mxu0 0.0
    %6548 = vmatprep.subr.mxu0 0.0
    %6549 = vmatpush1.msra.mxu0 0.0
    %6550 = vmatprep.subr.mxu0 0.0
    %6551 = vmatpush1.msra.mxu0 0.0
    %6552 = vmatprep.subr.mxu0 0.0
    %6553 = vmatpush1.msra.mxu0 0.0
    %6554 = vmatprep.subr.mxu0 0.0
    %6555 = vmatpush1.msra.mxu0 0.0
    %6556 = vmatprep.subr.mxu0 0.0
    %6557 = vmatpush1.msra.mxu0 0.0
    %6558 = vmatprep.subr.mxu0 0.0
    %6559 = vmatpush1.msra.mxu0 0.0
    %6560 = vmatprep.subr.mxu0 0.0
    %6561 = vmatpush1.msra.mxu0 0.0
    %6562 = vmatprep.subr.mxu0 0.0
    %6563 = vmatpush1.msra.mxu0 0.0
    %6564 = vmatprep.subr.mxu0 0.0
    %6565 = vmatpush1.msra.mxu0 0.0
    %6566 = vmatprep.subr.mxu0 0.0
    %6567 = vmatpush1.msra.mxu0 0.0
    %6568 = vmatprep.subr.mxu0 0.0
    %6569 = vmatpush1.msra.mxu0 0.0
    %6570 = vmatprep.subr.mxu0 0.0
    %6571 = vmatpush1.msra.mxu0 0.0
    %6572 = vmatprep.subr.mxu0 0.0
    %6573 = vmatpush1.msra.mxu0 0.0
    %6574 = vmatprep.subr.mxu0 0.0
    %6575 = vmatpush1.msra.mxu0 0.0
    %6576 = vmatprep.mubr.f32.mxu0 0.0
    %6577 = vmatmul.mubr.f32.gmra.mrb[0].mxu0 %v6498
    %v6578 = vpop.f32.mrb[0].mxu0
    %v6579 = vadd.f32 0.0, %v6578
    %v6580 = vpop.f32.mrb[0].mxu0
    %6581 = vmatprep.mubr.f32.mxu0 0.0
    %6582 = vmatmul.mubr.f32.gmra.mrb[0].mxu0 %v6501
    %v6583 = vpop.f32.mrb[0].mxu0
    %v6584 = vadd.f32 0.0, %v6583
    %v6585 = vpop.f32.mrb[0].mxu0
    %6586 = vmatprep.mubr.f32.mxu0 0.0
    %6587 = vmatmul.mubr.f32.gmra.mrb[0].mxu0 %v6504
    %v6588 = vpop.f32.mrb[0].mxu0
    %v6589 = vadd.f32 0.0, %v6588
    %v6590 = vpop.f32.mrb[0].mxu0
    %6591 = vmatprep.mubr.f32.mxu0 0.0
    %6592 = vmatmul.mubr.f32.gmra.mrb[0].mxu0 %v6507
    %v6593 = vpop.f32.mrb[0].mxu0
    %v6594 = vadd.f32 0.0, %v6593
    %v6595 = vpop.f32.mrb[0].mxu0
    %6596 = vdwg.mxu0
    %v6597 = vadd.f32 %v6400, %v6579
    %v6598 = vadd.f32 %v6401, %v6584
    %v6599 = vadd.f32 %v6402, %v6589
    %v6600 = vadd.f32 %v6403, %v6594
    %s6601 = scalar_lea.vmem [#allocation7], 192
    %v6602 = vld [vmem:[%s6601] sm:$0xff]
    %v6603 = vld [vmem:[%s6601 + $0x8] sm:$0xff]
    %v6604 = vld [vmem:[%s6601 + $0x10] sm:$0xff]
    %v6605 = vld [vmem:[%s6601 + $0x18] sm:$0xff]
    %6606 = vmatprep.subr.mxu0 0.0
    %6607 = vmatpush1.msra.mxu0 %v5411
    %6608 = vmatprep.subr.mxu0 0.0
    %6609 = vmatpush1.msra.mxu0 %v5412
    %6610 = vmatprep.subr.mxu0 0.0
    %6611 = vmatpush1.msra.mxu0 %v5413
    %6612 = vmatprep.subr.mxu0 0.0
    %6613 = vmatpush1.msra.mxu0 %v5414
    %6614 = vmatprep.subr.mxu0 0.0
    %6615 = vmatpush1.msra.mxu0 %v5415
    %6616 = vmatprep.subr.mxu0 0.0
    %6617 = vmatpush1.msra.mxu0 %v5416
    %6618 = vmatprep.subr.mxu0 0.0
    %6619 = vmatpush1.msra.mxu0 %v5417
    %6620 = vmatprep.subr.mxu0 0.0
    %6621 = vmatpush1.msra.mxu0 %v5418
    %6622 = vmatprep.subr.mxu0 0.0
    %6623 = vmatpush1.msra.mxu0 %v5419
    %6624 = vmatprep.subr.mxu0 0.0
    %6625 = vmatpush1.msra.mxu0 %v5420
    %6626 = vmatprep.subr.mxu0 0.0
    %6627 = vmatpush1.msra.mxu0 %v5421
    %6628 = vmatprep.subr.mxu0 0.0
    %6629 = vmatpush1.msra.mxu0 %v5422
    %6630 = vmatprep.subr.mxu0 0.0
    %6631 = vmatpush1.msra.mxu0 %v5423
    %6632 = vmatprep.subr.mxu0 0.0
    %6633 = vmatpush1.msra.mxu0 %v5424
    %6634 = vmatprep.subr.mxu0 0.0
    %6635 = vmatpush1.msra.mxu0 %v5425
    %6636 = vmatprep.subr.mxu0 0.0
    %6637 = vmatpush1.msra.mxu0 %v5426
    %6638 = vmatprep.subr.mxu0 0.0
    %6639 = vmatpush1.msra.mxu0 0.0
    %6640 = vmatprep.subr.mxu0 0.0
    %6641 = vmatpush1.msra.mxu0 0.0
    %6642 = vmatprep.subr.mxu0 0.0
    %6643 = vmatpush1.msra.mxu0 0.0
    %6644 = vmatprep.subr.mxu0 0.0
    %6645 = vmatpush1.msra.mxu0 0.0
    %6646 = vmatprep.subr.mxu0 0.0
    %6647 = vmatpush1.msra.mxu0 0.0
    %6648 = vmatprep.subr.mxu0 0.0
    %6649 = vmatpush1.msra.mxu0 0.0
    %6650 = vmatprep.subr.mxu0 0.0
    %6651 = vmatpush1.msra.mxu0 0.0
    %6652 = vmatprep.subr.mxu0 0.0
    %6653 = vmatpush1.msra.mxu0 0.0
    %6654 = vmatprep.subr.mxu0 0.0
    %6655 = vmatpush1.msra.mxu0 0.0
    %6656 = vmatprep.subr.mxu0 0.0
    %6657 = vmatpush1.msra.mxu0 0.0
    %6658 = vmatprep.subr.mxu0 0.0
    %6659 = vmatpush1.msra.mxu0 0.0
    %6660 = vmatprep.subr.mxu0 0.0
    %6661 = vmatpush1.msra.mxu0 0.0
    %6662 = vmatprep.subr.mxu0 0.0
    %6663 = vmatpush1.msra.mxu0 0.0
    %6664 = vmatprep.subr.mxu0 0.0
    %6665 = vmatpush1.msra.mxu0 0.0
    %6666 = vmatprep.subr.mxu0 0.0
    %6667 = vmatpush1.msra.mxu0 0.0
    %6668 = vmatprep.subr.mxu0 0.0
    %6669 = vmatpush1.msra.mxu0 0.0
    %6670 = vmatprep.mubr.f32.mxu0 0.0
    %6671 = vmatmul.mubr.f32.gmra.mrb[0].mxu0 %v6602
    %v6672 = vpop.f32.mrb[0].mxu0
    %v6673 = vadd.f32 0.0, %v6672
    %v6674 = vpop.f32.mrb[0].mxu0
    %6675 = vmatprep.mubr.f32.mxu0 0.0
    %6676 = vmatmul.mubr.f32.gmra.mrb[0].mxu0 %v6603
    %v6677 = vpop.f32.mrb[0].mxu0
    %v6678 = vadd.f32 0.0, %v6677
    %v6679 = vpop.f32.mrb[0].mxu0
    %6680 = vmatprep.mubr.f32.mxu0 0.0
    %6681 = vmatmul.mubr.f32.gmra.mrb[0].mxu0 %v6604
    %v6682 = vpop.f32.mrb[0].mxu0
    %v6683 = vadd.f32 0.0, %v6682
    %v6684 = vpop.f32.mrb[0].mxu0
    %6685 = vmatprep.mubr.f32.mxu0 0.0
    %6686 = vmatmul.mubr.f32.gmra.mrb[0].mxu0 %v6605
    %v6687 = vpop.f32.mrb[0].mxu0
    %v6688 = vadd.f32 0.0, %v6687
    %v6689 = vpop.f32.mrb[0].mxu0
    %6690 = vdwg.mxu0
    %s6691 = scalar_lea.vmem [#allocation13], 96
    %v6692 = vld [vmem:[%s6691] sm:$0xff]
    %v6693 = vld [vmem:[%s6691 + $0x8] sm:$0x3f]
    %v6695 = vsel %vm5611, %v6673, 0
    %v6698 = vsel %vm5611, %v6678, 0
    %v6701 = vsel %vm5611, %v6683, 0
    %v6704 = vsel %vm5611, %v6688, 0
    %v6707 = vsel %vm5624, %v6693, 0
    %6709 = vmatprep.subr.mxu0 0.0
    %6710 = vmatpush1.msra.mxu0 %v6692
    %6711 = vmatprep.subr.mxu0 0.0
    %6712 = vmatpush1.msra.mxu0 %v6707
    %6713 = vmatprep.subr.mxu0 0.0
    %6714 = vmatpush1.msra.mxu0 0.0
    %6715 = vmatprep.subr.mxu0 0.0
    %6716 = vmatpush1.msra.mxu0 0.0
    %6717 = vmatprep.subr.mxu0 0.0
    %6718 = vmatpush1.msra.mxu0 0.0
    %6719 = vmatprep.subr.mxu0 0.0
    %6720 = vmatpush1.msra.mxu0 0.0
    %6721 = vmatprep.subr.mxu0 0.0
    %6722 = vmatpush1.msra.mxu0 0.0
    %6723 = vmatprep.subr.mxu0 0.0
    %6724 = vmatpush1.msra.mxu0 0.0
    %6725 = vmatprep.subr.mxu0 0.0
    %6726 = vmatpush1.msra.mxu0 0.0
    %6727 = vmatprep.subr.mxu0 0.0
    %6728 = vmatpush1.msra.mxu0 0.0
    %6729 = vmatprep.subr.mxu0 0.0
    %6730 = vmatpush1.msra.mxu0 0.0
    %6731 = vmatprep.subr.mxu0 0.0
    %6732 = vmatpush1.msra.mxu0 0.0
    %6733 = vmatprep.subr.mxu0 0.0
    %6734 = vmatpush1.msra.mxu0 0.0
    %6735 = vmatprep.subr.mxu0 0.0
    %6736 = vmatpush1.msra.mxu0 0.0
    %6737 = vmatprep.subr.mxu0 0.0
    %6738 = vmatpush1.msra.mxu0 0.0
    %6739 = vmatprep.subr.mxu0 0.0
    %6740 = vmatpush1.msra.mxu0 0.0
    %6741 = vmatprep.subr.mxu0 0.0
    %6742 = vmatpush1.msra.mxu0 0.0
    %6743 = vmatprep.subr.mxu0 0.0
    %6744 = vmatpush1.msra.mxu0 0.0
    %6745 = vmatprep.subr.mxu0 0.0
    %6746 = vmatpush1.msra.mxu0 0.0
    %6747 = vmatprep.subr.mxu0 0.0
    %6748 = vmatpush1.msra.mxu0 0.0
    %6749 = vmatprep.subr.mxu0 0.0
    %6750 = vmatpush1.msra.mxu0 0.0
    %6751 = vmatprep.subr.mxu0 0.0
    %6752 = vmatpush1.msra.mxu0 0.0
    %6753 = vmatprep.subr.mxu0 0.0
    %6754 = vmatpush1.msra.mxu0 0.0
    %6755 = vmatprep.subr.mxu0 0.0
    %6756 = vmatpush1.msra.mxu0 0.0
    %6757 = vmatprep.subr.mxu0 0.0
    %6758 = vmatpush1.msra.mxu0 0.0
    %6759 = vmatprep.subr.mxu0 0.0
    %6760 = vmatpush1.msra.mxu0 0.0
    %6761 = vmatprep.subr.mxu0 0.0
    %6762 = vmatpush1.msra.mxu0 0.0
    %6763 = vmatprep.subr.mxu0 0.0
    %6764 = vmatpush1.msra.mxu0 0.0
    %6765 = vmatprep.subr.mxu0 0.0
    %6766 = vmatpush1.msra.mxu0 0.0
    %6767 = vmatprep.subr.mxu0 0.0
    %6768 = vmatpush1.msra.mxu0 0.0
    %6769 = vmatprep.subr.mxu0 0.0
    %6770 = vmatpush1.msra.mxu0 0.0
    %6771 = vmatprep.subr.mxu0 0.0
    %6772 = vmatpush1.msra.mxu0 0.0
    %6773 = vmatprep.mubr.f32.mxu0 0.0
    %6774 = vmatmul.mubr.f32.gmra.mrb[0].mxu0 %v6695
    %v6775 = vpop.f32.mrb[0].mxu0
    %v6776 = vadd.f32 0.0, %v6775
    %v6777 = vpop.f32.mrb[0].mxu0
    %6778 = vmatprep.mubr.f32.mxu0 0.0
    %6779 = vmatmul.mubr.f32.gmra.mrb[0].mxu0 %v6698
    %v6780 = vpop.f32.mrb[0].mxu0
    %v6781 = vadd.f32 0.0, %v6780
    %v6782 = vpop.f32.mrb[0].mxu0
    %6783 = vmatprep.mubr.f32.mxu0 0.0
    %6784 = vmatmul.mubr.f32.gmra.mrb[0].mxu0 %v6701
    %v6785 = vpop.f32.mrb[0].mxu0
    %v6786 = vadd.f32 0.0, %v6785
    %v6787 = vpop.f32.mrb[0].mxu0
    %6788 = vmatprep.mubr.f32.mxu0 0.0
    %6789 = vmatmul.mubr.f32.gmra.mrb[0].mxu0 %v6704
    %v6790 = vpop.f32.mrb[0].mxu0
    %v6791 = vadd.f32 0.0, %v6790
    %v6792 = vpop.f32.mrb[0].mxu0
    %6793 = vdwg.mxu0
    %v6794 = vadd.f32 %v6597, %v6776
    %v6795 = vadd.f32 %v6598, %v6781
    %v6796 = vadd.f32 %v6599, %v6786
    %v6797 = vadd.f32 %v6600, %v6791
    %s6798 = scalar_lea.vmem [#allocation7], 224
    %v6799 = vld [vmem:[%s6798] sm:$0xff]
    %v6800 = vld [vmem:[%s6798 + $0x8] sm:$0xff]
    %v6801 = vld [vmem:[%s6798 + $0x10] sm:$0xff]
    %v6802 = vld [vmem:[%s6798 + $0x18] sm:$0xff]
    %6803 = vmatprep.subr.mxu0 0.0
    %6804 = vmatpush1.msra.mxu0 %v5411
    %6805 = vmatprep.subr.mxu0 0.0
    %6806 = vmatpush1.msra.mxu0 %v5412
    %6807 = vmatprep.subr.mxu0 0.0
    %6808 = vmatpush1.msra.mxu0 %v5413
    %6809 = vmatprep.subr.mxu0 0.0
    %6810 = vmatpush1.msra.mxu0 %v5414
    %6811 = vmatprep.subr.mxu0 0.0
    %6812 = vmatpush1.msra.mxu0 %v5415
    %6813 = vmatprep.subr.mxu0 0.0
    %6814 = vmatpush1.msra.mxu0 %v5416
    %6815 = vmatprep.subr.mxu0 0.0
    %6816 = vmatpush1.msra.mxu0 %v5417
    %6817 = vmatprep.subr.mxu0 0.0
    %6818 = vmatpush1.msra.mxu0 %v5418
    %6819 = vmatprep.subr.mxu0 0.0
    %6820 = vmatpush1.msra.mxu0 %v5419
    %6821 = vmatprep.subr.mxu0 0.0
    %6822 = vmatpush1.msra.mxu0 %v5420
    %6823 = vmatprep.subr.mxu0 0.0
    %6824 = vmatpush1.msra.mxu0 %v5421
    %6825 = vmatprep.subr.mxu0 0.0
    %6826 = vmatpush1.msra.mxu0 %v5422
    %6827 = vmatprep.subr.mxu0 0.0
    %6828 = vmatpush1.msra.mxu0 %v5423
    %6829 = vmatprep.subr.mxu0 0.0
    %6830 = vmatpush1.msra.mxu0 %v5424
    %6831 = vmatprep.subr.mxu0 0.0
    %6832 = vmatpush1.msra.mxu0 %v5425
    %6833 = vmatprep.subr.mxu0 0.0
    %6834 = vmatpush1.msra.mxu0 %v5426
    %6835 = vmatprep.subr.mxu0 0.0
    %6836 = vmatpush1.msra.mxu0 0.0
    %6837 = vmatprep.subr.mxu0 0.0
    %6838 = vmatpush1.msra.mxu0 0.0
    %6839 = vmatprep.subr.mxu0 0.0
    %6840 = vmatpush1.msra.mxu0 0.0
    %6841 = vmatprep.subr.mxu0 0.0
    %6842 = vmatpush1.msra.mxu0 0.0
    %6843 = vmatprep.subr.mxu0 0.0
    %6844 = vmatpush1.msra.mxu0 0.0
    %6845 = vmatprep.subr.mxu0 0.0
    %6846 = vmatpush1.msra.mxu0 0.0
    %6847 = vmatprep.subr.mxu0 0.0
    %6848 = vmatpush1.msra.mxu0 0.0
    %6849 = vmatprep.subr.mxu0 0.0
    %6850 = vmatpush1.msra.mxu0 0.0
    %6851 = vmatprep.subr.mxu0 0.0
    %6852 = vmatpush1.msra.mxu0 0.0
    %6853 = vmatprep.subr.mxu0 0.0
    %6854 = vmatpush1.msra.mxu0 0.0
    %6855 = vmatprep.subr.mxu0 0.0
    %6856 = vmatpush1.msra.mxu0 0.0
    %6857 = vmatprep.subr.mxu0 0.0
    %6858 = vmatpush1.msra.mxu0 0.0
    %6859 = vmatprep.subr.mxu0 0.0
    %6860 = vmatpush1.msra.mxu0 0.0
    %6861 = vmatprep.subr.mxu0 0.0
    %6862 = vmatpush1.msra.mxu0 0.0
    %6863 = vmatprep.subr.mxu0 0.0
    %6864 = vmatpush1.msra.mxu0 0.0
    %6865 = vmatprep.subr.mxu0 0.0
    %6866 = vmatpush1.msra.mxu0 0.0
    %6867 = vmatprep.mubr.f32.mxu0 0.0
    %6868 = vmatmul.mubr.f32.gmra.mrb[0].mxu0 %v6799
    %v6869 = vpop.f32.mrb[0].mxu0
    %v6870 = vadd.f32 0.0, %v6869
    %v6871 = vpop.f32.mrb[0].mxu0
    %6872 = vmatprep.mubr.f32.mxu0 0.0
    %6873 = vmatmul.mubr.f32.gmra.mrb[0].mxu0 %v6800
    %v6874 = vpop.f32.mrb[0].mxu0
    %v6875 = vadd.f32 0.0, %v6874
    %v6876 = vpop.f32.mrb[0].mxu0
    %6877 = vmatprep.mubr.f32.mxu0 0.0
    %6878 = vmatmul.mubr.f32.gmra.mrb[0].mxu0 %v6801
    %v6879 = vpop.f32.mrb[0].mxu0
    %v6880 = vadd.f32 0.0, %v6879
    %v6881 = vpop.f32.mrb[0].mxu0
    %6882 = vmatprep.mubr.f32.mxu0 0.0
    %6883 = vmatmul.mubr.f32.gmra.mrb[0].mxu0 %v6802
    %v6884 = vpop.f32.mrb[0].mxu0
    %v6885 = vadd.f32 0.0, %v6884
    %v6886 = vpop.f32.mrb[0].mxu0
    %6887 = vdwg.mxu0
    %s6888 = scalar_lea.vmem [#allocation13], 112
    %v6889 = vld [vmem:[%s6888] sm:$0xff]
    %v6890 = vld [vmem:[%s6888 + $0x8] sm:$0x3f]
    %v6892 = vsel %vm5611, %v6870, 0
    %v6895 = vsel %vm5611, %v6875, 0
    %v6898 = vsel %vm5611, %v6880, 0
    %v6901 = vsel %vm5611, %v6885, 0
    %v6904 = vsel %vm5624, %v6890, 0
    %6906 = vmatprep.subr.mxu0 0.0
    %6907 = vmatpush1.msra.mxu0 %v6889
    %6908 = vmatprep.subr.mxu0 0.0
    %6909 = vmatpush1.msra.mxu0 %v6904
    %6910 = vmatprep.subr.mxu0 0.0
    %6911 = vmatpush1.msra.mxu0 0.0
    %6912 = vmatprep.subr.mxu0 0.0
    %6913 = vmatpush1.msra.mxu0 0.0
    %6914 = vmatprep.subr.mxu0 0.0
    %6915 = vmatpush1.msra.mxu0 0.0
    %6916 = vmatprep.subr.mxu0 0.0
    %6917 = vmatpush1.msra.mxu0 0.0
    %6918 = vmatprep.subr.mxu0 0.0
    %6919 = vmatpush1.msra.mxu0 0.0
    %6920 = vmatprep.subr.mxu0 0.0
    %6921 = vmatpush1.msra.mxu0 0.0
    %6922 = vmatprep.subr.mxu0 0.0
    %6923 = vmatpush1.msra.mxu0 0.0
    %6924 = vmatprep.subr.mxu0 0.0
    %6925 = vmatpush1.msra.mxu0 0.0
    %6926 = vmatprep.subr.mxu0 0.0
    %6927 = vmatpush1.msra.mxu0 0.0
    %6928 = vmatprep.subr.mxu0 0.0
    %6929 = vmatpush1.msra.mxu0 0.0
    %6930 = vmatprep.subr.mxu0 0.0
    %6931 = vmatpush1.msra.mxu0 0.0
    %6932 = vmatprep.subr.mxu0 0.0
    %6933 = vmatpush1.msra.mxu0 0.0
    %6934 = vmatprep.subr.mxu0 0.0
    %6935 = vmatpush1.msra.mxu0 0.0
    %6936 = vmatprep.subr.mxu0 0.0
    %6937 = vmatpush1.msra.mxu0 0.0
    %6938 = vmatprep.subr.mxu0 0.0
    %6939 = vmatpush1.msra.mxu0 0.0
    %6940 = vmatprep.subr.mxu0 0.0
    %6941 = vmatpush1.msra.mxu0 0.0
    %6942 = vmatprep.subr.mxu0 0.0
    %6943 = vmatpush1.msra.mxu0 0.0
    %6944 = vmatprep.subr.mxu0 0.0
    %6945 = vmatpush1.msra.mxu0 0.0
    %6946 = vmatprep.subr.mxu0 0.0
    %6947 = vmatpush1.msra.mxu0 0.0
    %6948 = vmatprep.subr.mxu0 0.0
    %6949 = vmatpush1.msra.mxu0 0.0
    %6950 = vmatprep.subr.mxu0 0.0
    %6951 = vmatpush1.msra.mxu0 0.0
    %6952 = vmatprep.subr.mxu0 0.0
    %6953 = vmatpush1.msra.mxu0 0.0
    %6954 = vmatprep.subr.mxu0 0.0
    %6955 = vmatpush1.msra.mxu0 0.0
    %6956 = vmatprep.subr.mxu0 0.0
    %6957 = vmatpush1.msra.mxu0 0.0
    %6958 = vmatprep.subr.mxu0 0.0
    %6959 = vmatpush1.msra.mxu0 0.0
    %6960 = vmatprep.subr.mxu0 0.0
    %6961 = vmatpush1.msra.mxu0 0.0
    %6962 = vmatprep.subr.mxu0 0.0
    %6963 = vmatpush1.msra.mxu0 0.0
    %6964 = vmatprep.subr.mxu0 0.0
    %6965 = vmatpush1.msra.mxu0 0.0
    %6966 = vmatprep.subr.mxu0 0.0
    %6967 = vmatpush1.msra.mxu0 0.0
    %6968 = vmatprep.subr.mxu0 0.0
    %6969 = vmatpush1.msra.mxu0 0.0
    %6970 = vmatprep.mubr.f32.mxu0 0.0
    %6971 = vmatmul.mubr.f32.gmra.mrb[0].mxu0 %v6892
    %v6972 = vpop.f32.mrb[0].mxu0
    %v6973 = vadd.f32 0.0, %v6972
    %v6974 = vpop.f32.mrb[0].mxu0
    %6975 = vmatprep.mubr.f32.mxu0 0.0
    %6976 = vmatmul.mubr.f32.gmra.mrb[0].mxu0 %v6895
    %v6977 = vpop.f32.mrb[0].mxu0
    %v6978 = vadd.f32 0.0, %v6977
    %v6979 = vpop.f32.mrb[0].mxu0
    %6980 = vmatprep.mubr.f32.mxu0 0.0
    %6981 = vmatmul.mubr.f32.gmra.mrb[0].mxu0 %v6898
    %v6982 = vpop.f32.mrb[0].mxu0
    %v6983 = vadd.f32 0.0, %v6982
    %v6984 = vpop.f32.mrb[0].mxu0
    %6985 = vmatprep.mubr.f32.mxu0 0.0
    %6986 = vmatmul.mubr.f32.gmra.mrb[0].mxu0 %v6901
    %v6987 = vpop.f32.mrb[0].mxu0
    %v6988 = vadd.f32 0.0, %v6987
    %v6989 = vpop.f32.mrb[0].mxu0
    %6990 = vdwg.mxu0
    %v6991 = vadd.f32 %v6794, %v6973
    %v6992 = vadd.f32 %v6795, %v6978
    %v6993 = vadd.f32 %v6796, %v6983
    %v6994 = vadd.f32 %v6797, %v6988
    %s6995 = scalar_lea.vmem [#allocation7], 256
    %v6996 = vld [vmem:[%s6995] sm:$0xff]
    %v6997 = vld [vmem:[%s6995 + $0x8] sm:$0xff]
    %v6998 = vld [vmem:[%s6995 + $0x10] sm:$0xff]
    %v6999 = vld [vmem:[%s6995 + $0x18] sm:$0xff]
    %7000 = vmatprep.subr.mxu0 0.0
    %7001 = vmatpush1.msra.mxu0 %v5411
    %7002 = vmatprep.subr.mxu0 0.0
    %7003 = vmatpush1.msra.mxu0 %v5412
    %7004 = vmatprep.subr.mxu0 0.0
    %7005 = vmatpush1.msra.mxu0 %v5413
    %7006 = vmatprep.subr.mxu0 0.0
    %7007 = vmatpush1.msra.mxu0 %v5414
    %7008 = vmatprep.subr.mxu0 0.0
    %7009 = vmatpush1.msra.mxu0 %v5415
    %7010 = vmatprep.subr.mxu0 0.0
    %7011 = vmatpush1.msra.mxu0 %v5416
    %7012 = vmatprep.subr.mxu0 0.0
    %7013 = vmatpush1.msra.mxu0 %v5417
    %7014 = vmatprep.subr.mxu0 0.0
    %7015 = vmatpush1.msra.mxu0 %v5418
    %7016 = vmatprep.subr.mxu0 0.0
    %7017 = vmatpush1.msra.mxu0 %v5419
    %7018 = vmatprep.subr.mxu0 0.0
    %7019 = vmatpush1.msra.mxu0 %v5420
    %7020 = vmatprep.subr.mxu0 0.0
    %7021 = vmatpush1.msra.mxu0 %v5421
    %7022 = vmatprep.subr.mxu0 0.0
    %7023 = vmatpush1.msra.mxu0 %v5422
    %7024 = vmatprep.subr.mxu0 0.0
    %7025 = vmatpush1.msra.mxu0 %v5423
    %7026 = vmatprep.subr.mxu0 0.0
    %7027 = vmatpush1.msra.mxu0 %v5424
    %7028 = vmatprep.subr.mxu0 0.0
    %7029 = vmatpush1.msra.mxu0 %v5425
    %7030 = vmatprep.subr.mxu0 0.0
    %7031 = vmatpush1.msra.mxu0 %v5426
    %7032 = vmatprep.subr.mxu0 0.0
    %7033 = vmatpush1.msra.mxu0 0.0
    %7034 = vmatprep.subr.mxu0 0.0
    %7035 = vmatpush1.msra.mxu0 0.0
    %7036 = vmatprep.subr.mxu0 0.0
    %7037 = vmatpush1.msra.mxu0 0.0
    %7038 = vmatprep.subr.mxu0 0.0
    %7039 = vmatpush1.msra.mxu0 0.0
    %7040 = vmatprep.subr.mxu0 0.0
    %7041 = vmatpush1.msra.mxu0 0.0
    %7042 = vmatprep.subr.mxu0 0.0
    %7043 = vmatpush1.msra.mxu0 0.0
    %7044 = vmatprep.subr.mxu0 0.0
    %7045 = vmatpush1.msra.mxu0 0.0
    %7046 = vmatprep.subr.mxu0 0.0
    %7047 = vmatpush1.msra.mxu0 0.0
    %7048 = vmatprep.subr.mxu0 0.0
    %7049 = vmatpush1.msra.mxu0 0.0
    %7050 = vmatprep.subr.mxu0 0.0
    %7051 = vmatpush1.msra.mxu0 0.0
    %7052 = vmatprep.subr.mxu0 0.0
    %7053 = vmatpush1.msra.mxu0 0.0
    %7054 = vmatprep.subr.mxu0 0.0
    %7055 = vmatpush1.msra.mxu0 0.0
    %7056 = vmatprep.subr.mxu0 0.0
    %7057 = vmatpush1.msra.mxu0 0.0
    %7058 = vmatprep.subr.mxu0 0.0
    %7059 = vmatpush1.msra.mxu0 0.0
    %7060 = vmatprep.subr.mxu0 0.0
    %7061 = vmatpush1.msra.mxu0 0.0
    %7062 = vmatprep.subr.mxu0 0.0
    %7063 = vmatpush1.msra.mxu0 0.0
    %7064 = vmatprep.mubr.f32.mxu0 0.0
    %7065 = vmatmul.mubr.f32.gmra.mrb[0].mxu0 %v6996
    %v7066 = vpop.f32.mrb[0].mxu0
    %v7067 = vadd.f32 0.0, %v7066
    %v7068 = vpop.f32.mrb[0].mxu0
    %7069 = vmatprep.mubr.f32.mxu0 0.0
    %7070 = vmatmul.mubr.f32.gmra.mrb[0].mxu0 %v6997
    %v7071 = vpop.f32.mrb[0].mxu0
    %v7072 = vadd.f32 0.0, %v7071
    %v7073 = vpop.f32.mrb[0].mxu0
    %7074 = vmatprep.mubr.f32.mxu0 0.0
    %7075 = vmatmul.mubr.f32.gmra.mrb[0].mxu0 %v6998
    %v7076 = vpop.f32.mrb[0].mxu0
    %v7077 = vadd.f32 0.0, %v7076
    %v7078 = vpop.f32.mrb[0].mxu0
    %7079 = vmatprep.mubr.f32.mxu0 0.0
    %7080 = vmatmul.mubr.f32.gmra.mrb[0].mxu0 %v6999
    %v7081 = vpop.f32.mrb[0].mxu0
    %v7082 = vadd.f32 0.0, %v7081
    %v7083 = vpop.f32.mrb[0].mxu0
    %7084 = vdwg.mxu0
    %s7085 = scalar_lea.vmem [#allocation13], 128
    %v7086 = vld [vmem:[%s7085] sm:$0xff]
    %v7087 = vld [vmem:[%s7085 + $0x8] sm:$0x3f]
    %v7089 = vsel %vm5611, %v7067, 0
    %v7092 = vsel %vm5611, %v7072, 0
    %v7095 = vsel %vm5611, %v7077, 0
    %v7098 = vsel %vm5611, %v7082, 0
    %v7101 = vsel %vm5624, %v7087, 0
    %7103 = vmatprep.subr.mxu0 0.0
    %7104 = vmatpush1.msra.mxu0 %v7086
    %7105 = vmatprep.subr.mxu0 0.0
    %7106 = vmatpush1.msra.mxu0 %v7101
    %7107 = vmatprep.subr.mxu0 0.0
    %7108 = vmatpush1.msra.mxu0 0.0
    %7109 = vmatprep.subr.mxu0 0.0
    %7110 = vmatpush1.msra.mxu0 0.0
    %7111 = vmatprep.subr.mxu0 0.0
    %7112 = vmatpush1.msra.mxu0 0.0
    %7113 = vmatprep.subr.mxu0 0.0
    %7114 = vmatpush1.msra.mxu0 0.0
    %7115 = vmatprep.subr.mxu0 0.0
    %7116 = vmatpush1.msra.mxu0 0.0
    %7117 = vmatprep.subr.mxu0 0.0
    %7118 = vmatpush1.msra.mxu0 0.0
    %7119 = vmatprep.subr.mxu0 0.0
    %7120 = vmatpush1.msra.mxu0 0.0
    %7121 = vmatprep.subr.mxu0 0.0
    %7122 = vmatpush1.msra.mxu0 0.0
    %7123 = vmatprep.subr.mxu0 0.0
    %7124 = vmatpush1.msra.mxu0 0.0
    %7125 = vmatprep.subr.mxu0 0.0
    %7126 = vmatpush1.msra.mxu0 0.0
    %7127 = vmatprep.subr.mxu0 0.0
    %7128 = vmatpush1.msra.mxu0 0.0
    %7129 = vmatprep.subr.mxu0 0.0
    %7130 = vmatpush1.msra.mxu0 0.0
    %7131 = vmatprep.subr.mxu0 0.0
    %7132 = vmatpush1.msra.mxu0 0.0
    %7133 = vmatprep.subr.mxu0 0.0
    %7134 = vmatpush1.msra.mxu0 0.0
    %7135 = vmatprep.subr.mxu0 0.0
    %7136 = vmatpush1.msra.mxu0 0.0
    %7137 = vmatprep.subr.mxu0 0.0
    %7138 = vmatpush1.msra.mxu0 0.0
    %7139 = vmatprep.subr.mxu0 0.0
    %7140 = vmatpush1.msra.mxu0 0.0
    %7141 = vmatprep.subr.mxu0 0.0
    %7142 = vmatpush1.msra.mxu0 0.0
    %7143 = vmatprep.subr.mxu0 0.0
    %7144 = vmatpush1.msra.mxu0 0.0
    %7145 = vmatprep.subr.mxu0 0.0
    %7146 = vmatpush1.msra.mxu0 0.0
    %7147 = vmatprep.subr.mxu0 0.0
    %7148 = vmatpush1.msra.mxu0 0.0
    %7149 = vmatprep.subr.mxu0 0.0
    %7150 = vmatpush1.msra.mxu0 0.0
    %7151 = vmatprep.subr.mxu0 0.0
    %7152 = vmatpush1.msra.mxu0 0.0
    %7153 = vmatprep.subr.mxu0 0.0
    %7154 = vmatpush1.msra.mxu0 0.0
    %7155 = vmatprep.subr.mxu0 0.0
    %7156 = vmatpush1.msra.mxu0 0.0
    %7157 = vmatprep.subr.mxu0 0.0
    %7158 = vmatpush1.msra.mxu0 0.0
    %7159 = vmatprep.subr.mxu0 0.0
    %7160 = vmatpush1.msra.mxu0 0.0
    %7161 = vmatprep.subr.mxu0 0.0
    %7162 = vmatpush1.msra.mxu0 0.0
    %7163 = vmatprep.subr.mxu0 0.0
    %7164 = vmatpush1.msra.mxu0 0.0
    %7165 = vmatprep.subr.mxu0 0.0
    %7166 = vmatpush1.msra.mxu0 0.0
    %7167 = vmatprep.mubr.f32.mxu0 0.0
    %7168 = vmatmul.mubr.f32.gmra.mrb[0].mxu0 %v7089
    %v7169 = vpop.f32.mrb[0].mxu0
    %v7170 = vadd.f32 0.0, %v7169
    %v7171 = vpop.f32.mrb[0].mxu0
    %7172 = vmatprep.mubr.f32.mxu0 0.0
    %7173 = vmatmul.mubr.f32.gmra.mrb[0].mxu0 %v7092
    %v7174 = vpop.f32.mrb[0].mxu0
    %v7175 = vadd.f32 0.0, %v7174
    %v7176 = vpop.f32.mrb[0].mxu0
    %7177 = vmatprep.mubr.f32.mxu0 0.0
    %7178 = vmatmul.mubr.f32.gmra.mrb[0].mxu0 %v7095
    %v7179 = vpop.f32.mrb[0].mxu0
    %v7180 = vadd.f32 0.0, %v7179
    %v7181 = vpop.f32.mrb[0].mxu0
    %7182 = vmatprep.mubr.f32.mxu0 0.0
    %7183 = vmatmul.mubr.f32.gmra.mrb[0].mxu0 %v7098
    %v7184 = vpop.f32.mrb[0].mxu0
    %v7185 = vadd.f32 0.0, %v7184
    %v7186 = vpop.f32.mrb[0].mxu0
    %7187 = vdwg.mxu0
    %v7188 = vadd.f32 %v6991, %v7170
    %v7189 = vadd.f32 %v6992, %v7175
    %v7190 = vadd.f32 %v6993, %v7180
    %v7191 = vadd.f32 %v6994, %v7185
    %v7192 = vld [vmem:[#allocation14] sm:$0x1]
    %v7194 = vlaneseq
    %v7195 = vshrl.u32 %v7194, 7
    %v7196 = vsub.s32 0, %v7195
    %v7197 = vrot.slane %v7192, %v7196
    %v7199 = vadd.f32 %v7188, %v7197
    %v7200 = vadd.f32 %v7189, %v7197
    %v7201 = vadd.f32 %v7190, %v7197
    %v7202 = vadd.f32 %v7191, %v7197
    %vm7203 = vcmp.gt.f32.partialorder %v7199, 0.0
    %vm7204 = vcmp.gt.f32.partialorder %v7200, 0.0
    %vm7205 = vcmp.gt.f32.partialorder %v7201, 0.0
    %vm7206 = vcmp.gt.f32.partialorder %v7202, 0.0
    %v7207 = vmul.f32 %v7199, 0.01
    %v7208 = vmul.f32 %v7200, 0.01
    %v7209 = vmul.f32 %v7201, 0.01
    %v7210 = vmul.f32 %v7202, 0.01
    %v7211 = vsel %vm7203, %v7199, %v7207
    %v7212 = vsel %vm7204, %v7200, %v7208
    %v7213 = vsel %vm7205, %v7201, %v7209
    %v7214 = vsel %vm7206, %v7202, %v7210
    %v7215 = vld [vmem:[#allocation8] sm:$0x3]
    %vm7216 = vcmask 261120
    %v7218 = vsel %vm7216, %v7215, 0
    %7220 = vmatprep.subr.mxu0 0.0
    %7221 = vmatpush1.msra.mxu0 %v7211
    %7222 = vmatprep.subr.mxu0 0.0
    %7223 = vmatpush1.msra.mxu0 %v7212
    %7224 = vmatprep.subr.mxu0 0.0
    %7225 = vmatpush1.msra.mxu0 %v7213
    %7226 = vmatprep.subr.mxu0 0.0
    %7227 = vmatpush1.msra.mxu0 %v7214
    %7228 = vmatprep.subr.mxu0 0.0
    %7229 = vmatpush1.msra.mxu0 0.0
    %7230 = vmatprep.subr.mxu0 0.0
    %7231 = vmatpush1.msra.mxu0 0.0
    %7232 = vmatprep.subr.mxu0 0.0
    %7233 = vmatpush1.msra.mxu0 0.0
    %7234 = vmatprep.subr.mxu0 0.0
    %7235 = vmatpush1.msra.mxu0 0.0
    %7236 = vmatprep.subr.mxu0 0.0
    %7237 = vmatpush1.msra.mxu0 0.0
    %7238 = vmatprep.subr.mxu0 0.0
    %7239 = vmatpush1.msra.mxu0 0.0
    %7240 = vmatprep.subr.mxu0 0.0
    %7241 = vmatpush1.msra.mxu0 0.0
    %7242 = vmatprep.subr.mxu0 0.0
    %7243 = vmatpush1.msra.mxu0 0.0
    %7244 = vmatprep.subr.mxu0 0.0
    %7245 = vmatpush1.msra.mxu0 0.0
    %7246 = vmatprep.subr.mxu0 0.0
    %7247 = vmatpush1.msra.mxu0 0.0
    %7248 = vmatprep.subr.mxu0 0.0
    %7249 = vmatpush1.msra.mxu0 0.0
    %7250 = vmatprep.subr.mxu0 0.0
    %7251 = vmatpush1.msra.mxu0 0.0
    %7252 = vmatprep.subr.mxu0 0.0
    %7253 = vmatpush1.msra.mxu0 0.0
    %7254 = vmatprep.subr.mxu0 0.0
    %7255 = vmatpush1.msra.mxu0 0.0
    %7256 = vmatprep.subr.mxu0 0.0
    %7257 = vmatpush1.msra.mxu0 0.0
    %7258 = vmatprep.subr.mxu0 0.0
    %7259 = vmatpush1.msra.mxu0 0.0
    %7260 = vmatprep.subr.mxu0 0.0
    %7261 = vmatpush1.msra.mxu0 0.0
    %7262 = vmatprep.subr.mxu0 0.0
    %7263 = vmatpush1.msra.mxu0 0.0
    %7264 = vmatprep.subr.mxu0 0.0
    %7265 = vmatpush1.msra.mxu0 0.0
    %7266 = vmatprep.subr.mxu0 0.0
    %7267 = vmatpush1.msra.mxu0 0.0
    %7268 = vmatprep.subr.mxu0 0.0
    %7269 = vmatpush1.msra.mxu0 0.0
    %7270 = vmatprep.subr.mxu0 0.0
    %7271 = vmatpush1.msra.mxu0 0.0
    %7272 = vmatprep.subr.mxu0 0.0
    %7273 = vmatpush1.msra.mxu0 0.0
    %7274 = vmatprep.subr.mxu0 0.0
    %7275 = vmatpush1.msra.mxu0 0.0
    %7276 = vmatprep.subr.mxu0 0.0
    %7277 = vmatpush1.msra.mxu0 0.0
    %7278 = vmatprep.subr.mxu0 0.0
    %7279 = vmatpush1.msra.mxu0 0.0
    %7280 = vmatprep.subr.mxu0 0.0
    %7281 = vmatpush1.msra.mxu0 0.0
    %7282 = vmatprep.subr.mxu0 0.0
    %7283 = vmatpush1.msra.mxu0 0.0
    %7284 = vmatprep.mubr.f32.mxu0 0.0
    %7285 = vmatmul.mubr.f32.gmra.mrb[0].mxu0 %v7218
    %v7286 = vpop.f32.mrb[0].mxu0
    %v7287 = vadd.f32 0.0, %v7286
    %v7288 = vpop.f32.mrb[0].mxu0
    %7289 = vdwg.mxu0
    %v7290 = vld [vmem:[%s9] sm:$0xff]
    %v7291 = vld [vmem:[%s9 + $0x8] sm:$0x3f]
    %s7292 = scalar_lea.vmem [#allocation8], 2
    %v7293 = vld [vmem:[%s7292] sm:$0x3]
    %v7295 = vsel %vm7216, %v7293, 0
    %7297 = vmatprep.subr.mxu0 0.0
    %7298 = vmatpush1.msra.mxu0 %v7211
    %7299 = vmatprep.subr.mxu0 0.0
    %7300 = vmatpush1.msra.mxu0 %v7212
    %7301 = vmatprep.subr.mxu0 0.0
    %7302 = vmatpush1.msra.mxu0 %v7213
    %7303 = vmatprep.subr.mxu0 0.0
    %7304 = vmatpush1.msra.mxu0 %v7214
    %7305 = vmatprep.subr.mxu0 0.0
    %7306 = vmatpush1.msra.mxu0 0.0
    %7307 = vmatprep.subr.mxu0 0.0
    %7308 = vmatpush1.msra.mxu0 0.0
    %7309 = vmatprep.subr.mxu0 0.0
    %7310 = vmatpush1.msra.mxu0 0.0
    %7311 = vmatprep.subr.mxu0 0.0
    %7312 = vmatpush1.msra.mxu0 0.0
    %7313 = vmatprep.subr.mxu0 0.0
    %7314 = vmatpush1.msra.mxu0 0.0
    %7315 = vmatprep.subr.mxu0 0.0
    %7316 = vmatpush1.msra.mxu0 0.0
    %7317 = vmatprep.subr.mxu0 0.0
    %7318 = vmatpush1.msra.mxu0 0.0
    %7319 = vmatprep.subr.mxu0 0.0
    %7320 = vmatpush1.msra.mxu0 0.0
    %7321 = vmatprep.subr.mxu0 0.0
    %7322 = vmatpush1.msra.mxu0 0.0
    %7323 = vmatprep.subr.mxu0 0.0
    %7324 = vmatpush1.msra.mxu0 0.0
    %7325 = vmatprep.subr.mxu0 0.0
    %7326 = vmatpush1.msra.mxu0 0.0
    %7327 = vmatprep.subr.mxu0 0.0
    %7328 = vmatpush1.msra.mxu0 0.0
    %7329 = vmatprep.subr.mxu0 0.0
    %7330 = vmatpush1.msra.mxu0 0.0
    %7331 = vmatprep.subr.mxu0 0.0
    %7332 = vmatpush1.msra.mxu0 0.0
    %7333 = vmatprep.subr.mxu0 0.0
    %7334 = vmatpush1.msra.mxu0 0.0
    %7335 = vmatprep.subr.mxu0 0.0
    %7336 = vmatpush1.msra.mxu0 0.0
    %7337 = vmatprep.subr.mxu0 0.0
    %7338 = vmatpush1.msra.mxu0 0.0
    %7339 = vmatprep.subr.mxu0 0.0
    %7340 = vmatpush1.msra.mxu0 0.0
    %7341 = vmatprep.subr.mxu0 0.0
    %7342 = vmatpush1.msra.mxu0 0.0
    %7343 = vmatprep.subr.mxu0 0.0
    %7344 = vmatpush1.msra.mxu0 0.0
    %7345 = vmatprep.subr.mxu0 0.0
    %7346 = vmatpush1.msra.mxu0 0.0
    %7347 = vmatprep.subr.mxu0 0.0
    %7348 = vmatpush1.msra.mxu0 0.0
    %7349 = vmatprep.subr.mxu0 0.0
    %7350 = vmatpush1.msra.mxu0 0.0
    %7351 = vmatprep.subr.mxu0 0.0
    %7352 = vmatpush1.msra.mxu0 0.0
    %7353 = vmatprep.subr.mxu0 0.0
    %7354 = vmatpush1.msra.mxu0 0.0
    %7355 = vmatprep.subr.mxu0 0.0
    %7356 = vmatpush1.msra.mxu0 0.0
    %7357 = vmatprep.subr.mxu0 0.0
    %7358 = vmatpush1.msra.mxu0 0.0
    %7359 = vmatprep.subr.mxu0 0.0
    %7360 = vmatpush1.msra.mxu0 0.0
    %7361 = vmatprep.mubr.f32.mxu0 0.0
    %7362 = vmatmul.mubr.f32.gmra.mrb[0].mxu0 %v7295
    %v7363 = vpop.f32.mrb[0].mxu0
    %v7364 = vadd.f32 0.0, %v7363
    %v7365 = vpop.f32.mrb[0].mxu0
    %7366 = vdwg.mxu0
    %s7367 = scalar_lea.vmem %s9, 16
    %v7368 = vld [vmem:[%s7367] sm:$0xff]
    %v7369 = vld [vmem:[%s7367 + $0x8] sm:$0x3f]
    %v7371 = vsel %vm5611, %v7364, 0
    %v7374 = vsel %vm5624, %v7369, 0
    %7376 = vmatprep.subr.mxu0 0.0
    %7377 = vmatpush1.msra.mxu0 %v7368
    %7378 = vmatprep.subr.mxu0 0.0
    %7379 = vmatpush1.msra.mxu0 %v7374
    %7380 = vmatprep.subr.mxu0 0.0
    %7381 = vmatpush1.msra.mxu0 0.0
    %7382 = vmatprep.subr.mxu0 0.0
    %7383 = vmatpush1.msra.mxu0 0.0
    %7384 = vmatprep.subr.mxu0 0.0
    %7385 = vmatpush1.msra.mxu0 0.0
    %7386 = vmatprep.subr.mxu0 0.0
    %7387 = vmatpush1.msra.mxu0 0.0
    %7388 = vmatprep.subr.mxu0 0.0
    %7389 = vmatpush1.msra.mxu0 0.0
    %7390 = vmatprep.subr.mxu0 0.0
    %7391 = vmatpush1.msra.mxu0 0.0
    %7392 = vmatprep.subr.mxu0 0.0
    %7393 = vmatpush1.msra.mxu0 0.0
    %7394 = vmatprep.subr.mxu0 0.0
    %7395 = vmatpush1.msra.mxu0 0.0
    %7396 = vmatprep.subr.mxu0 0.0
    %7397 = vmatpush1.msra.mxu0 0.0
    %7398 = vmatprep.subr.mxu0 0.0
    %7399 = vmatpush1.msra.mxu0 0.0
    %7400 = vmatprep.subr.mxu0 0.0
    %7401 = vmatpush1.msra.mxu0 0.0
    %7402 = vmatprep.subr.mxu0 0.0
    %7403 = vmatpush1.msra.mxu0 0.0
    %7404 = vmatprep.subr.mxu0 0.0
    %7405 = vmatpush1.msra.mxu0 0.0
    %7406 = vmatprep.subr.mxu0 0.0
    %7407 = vmatpush1.msra.mxu0 0.0
    %7408 = vmatprep.subr.mxu0 0.0
    %7409 = vmatpush1.msra.mxu0 0.0
    %7410 = vmatprep.subr.mxu0 0.0
    %7411 = vmatpush1.msra.mxu0 0.0
    %7412 = vmatprep.subr.mxu0 0.0
    %7413 = vmatpush1.msra.mxu0 0.0
    %7414 = vmatprep.subr.mxu0 0.0
    %7415 = vmatpush1.msra.mxu0 0.0
    %7416 = vmatprep.subr.mxu0 0.0
    %7417 = vmatpush1.msra.mxu0 0.0
    %7418 = vmatprep.subr.mxu0 0.0
    %7419 = vmatpush1.msra.mxu0 0.0
    %7420 = vmatprep.subr.mxu0 0.0
    %7421 = vmatpush1.msra.mxu0 0.0
    %7422 = vmatprep.subr.mxu0 0.0
    %7423 = vmatpush1.msra.mxu0 0.0
    %7424 = vmatprep.subr.mxu0 0.0
    %7425 = vmatpush1.msra.mxu0 0.0
    %7426 = vmatprep.subr.mxu0 0.0
    %7427 = vmatpush1.msra.mxu0 0.0
    %7428 = vmatprep.subr.mxu0 0.0
    %7429 = vmatpush1.msra.mxu0 0.0
    %7430 = vmatprep.subr.mxu0 0.0
    %7431 = vmatpush1.msra.mxu0 0.0
    %7432 = vmatprep.subr.mxu0 0.0
    %7433 = vmatpush1.msra.mxu0 0.0
    %7434 = vmatprep.subr.mxu0 0.0
    %7435 = vmatpush1.msra.mxu0 0.0
    %7436 = vmatprep.subr.mxu0 0.0
    %7437 = vmatpush1.msra.mxu0 0.0
    %7438 = vmatprep.subr.mxu0 0.0
    %7439 = vmatpush1.msra.mxu0 0.0
    %7440 = vmatprep.mubr.f32.mxu0 0.0
    %7441 = vmatmul.mubr.f32.gmra.mrb[0].mxu0 %v7371
    %v7442 = vpop.f32.mrb[0].mxu0
    %v7443 = vadd.f32 0.0, %v7442
    %v7444 = vpop.f32.mrb[0].mxu0
    %7445 = vdwg.mxu0
    %v7447 = vsel %vm5611, %v7287, 0
    %v7450 = vsel %vm5624, %v7291, 0
    %7452 = vmatprep.subr.mxu0 0.0
    %7453 = vmatpush1.msra.mxu0 %v7290
    %7454 = vmatprep.subr.mxu0 0.0
    %7455 = vmatpush1.msra.mxu0 %v7450
    %7456 = vmatprep.subr.mxu0 0.0
    %7457 = vmatpush1.msra.mxu0 0.0
    %7458 = vmatprep.subr.mxu0 0.0
    %7459 = vmatpush1.msra.mxu0 0.0
    %7460 = vmatprep.subr.mxu0 0.0
    %7461 = vmatpush1.msra.mxu0 0.0
    %7462 = vmatprep.subr.mxu0 0.0
    %7463 = vmatpush1.msra.mxu0 0.0
    %7464 = vmatprep.subr.mxu0 0.0
    %7465 = vmatpush1.msra.mxu0 0.0
    %7466 = vmatprep.subr.mxu0 0.0
    %7467 = vmatpush1.msra.mxu0 0.0
    %7468 = vmatprep.subr.mxu0 0.0
    %7469 = vmatpush1.msra.mxu0 0.0
    %7470 = vmatprep.subr.mxu0 0.0
    %7471 = vmatpush1.msra.mxu0 0.0
    %7472 = vmatprep.subr.mxu0 0.0
    %7473 = vmatpush1.msra.mxu0 0.0
    %7474 = vmatprep.subr.mxu0 0.0
    %7475 = vmatpush1.msra.mxu0 0.0
    %7476 = vmatprep.subr.mxu0 0.0
    %7477 = vmatpush1.msra.mxu0 0.0
    %7478 = vmatprep.subr.mxu0 0.0
    %7479 = vmatpush1.msra.mxu0 0.0
    %7480 = vmatprep.subr.mxu0 0.0
    %7481 = vmatpush1.msra.mxu0 0.0
    %7482 = vmatprep.subr.mxu0 0.0
    %7483 = vmatpush1.msra.mxu0 0.0
    %7484 = vmatprep.subr.mxu0 0.0
    %7485 = vmatpush1.msra.mxu0 0.0
    %7486 = vmatprep.subr.mxu0 0.0
    %7487 = vmatpush1.msra.mxu0 0.0
    %7488 = vmatprep.subr.mxu0 0.0
    %7489 = vmatpush1.msra.mxu0 0.0
    %7490 = vmatprep.subr.mxu0 0.0
    %7491 = vmatpush1.msra.mxu0 0.0
    %7492 = vmatprep.subr.mxu0 0.0
    %7493 = vmatpush1.msra.mxu0 0.0
    %7494 = vmatprep.subr.mxu0 0.0
    %7495 = vmatpush1.msra.mxu0 0.0
    %7496 = vmatprep.subr.mxu0 0.0
    %7497 = vmatpush1.msra.mxu0 0.0
    %7498 = vmatprep.subr.mxu0 0.0
    %7499 = vmatpush1.msra.mxu0 0.0
    %7500 = vmatprep.subr.mxu0 0.0
    %7501 = vmatpush1.msra.mxu0 0.0
    %7502 = vmatprep.subr.mxu0 0.0
    %7503 = vmatpush1.msra.mxu0 0.0
    %7504 = vmatprep.subr.mxu0 0.0
    %7505 = vmatpush1.msra.mxu0 0.0
    %7506 = vmatprep.subr.mxu0 0.0
    %7507 = vmatpush1.msra.mxu0 0.0
    %7508 = vmatprep.subr.mxu0 0.0
    %7509 = vmatpush1.msra.mxu0 0.0
    %7510 = vmatprep.subr.mxu0 0.0
    %7511 = vmatpush1.msra.mxu0 0.0
    %7512 = vmatprep.subr.mxu0 0.0
    %7513 = vmatpush1.msra.mxu0 0.0
    %7514 = vmatprep.subr.mxu0 0.0
    %7515 = vmatpush1.msra.mxu0 0.0
    %7516 = vmatprep.mubr.f32.mxu0 0.0
    %7517 = vmatmul.mubr.f32.gmra.mrb[0].mxu0 %v7447
    %v7518 = vpop.f32.mrb[0].mxu0
    %v7519 = vadd.f32 %v7443, %v7518
    %v7520 = vpop.f32.mrb[0].mxu0
    %7521 = vdwg.mxu0
    %s7522 = scalar_lea.vmem [#allocation8], 4
    %v7523 = vld [vmem:[%s7522] sm:$0x3]
    %v7525 = vsel %vm7216, %v7523, 0
    %7527 = vmatprep.subr.mxu0 0.0
    %7528 = vmatpush1.msra.mxu0 %v7211
    %7529 = vmatprep.subr.mxu0 0.0
    %7530 = vmatpush1.msra.mxu0 %v7212
    %7531 = vmatprep.subr.mxu0 0.0
    %7532 = vmatpush1.msra.mxu0 %v7213
    %7533 = vmatprep.subr.mxu0 0.0
    %7534 = vmatpush1.msra.mxu0 %v7214
    %7535 = vmatprep.subr.mxu0 0.0
    %7536 = vmatpush1.msra.mxu0 0.0
    %7537 = vmatprep.subr.mxu0 0.0
    %7538 = vmatpush1.msra.mxu0 0.0
    %7539 = vmatprep.subr.mxu0 0.0
    %7540 = vmatpush1.msra.mxu0 0.0
    %7541 = vmatprep.subr.mxu0 0.0
    %7542 = vmatpush1.msra.mxu0 0.0
    %7543 = vmatprep.subr.mxu0 0.0
    %7544 = vmatpush1.msra.mxu0 0.0
    %7545 = vmatprep.subr.mxu0 0.0
    %7546 = vmatpush1.msra.mxu0 0.0
    %7547 = vmatprep.subr.mxu0 0.0
    %7548 = vmatpush1.msra.mxu0 0.0
    %7549 = vmatprep.subr.mxu0 0.0
    %7550 = vmatpush1.msra.mxu0 0.0
    %7551 = vmatprep.subr.mxu0 0.0
    %7552 = vmatpush1.msra.mxu0 0.0
    %7553 = vmatprep.subr.mxu0 0.0
    %7554 = vmatpush1.msra.mxu0 0.0
    %7555 = vmatprep.subr.mxu0 0.0
    %7556 = vmatpush1.msra.mxu0 0.0
    %7557 = vmatprep.subr.mxu0 0.0
    %7558 = vmatpush1.msra.mxu0 0.0
    %7559 = vmatprep.subr.mxu0 0.0
    %7560 = vmatpush1.msra.mxu0 0.0
    %7561 = vmatprep.subr.mxu0 0.0
    %7562 = vmatpush1.msra.mxu0 0.0
    %7563 = vmatprep.subr.mxu0 0.0
    %7564 = vmatpush1.msra.mxu0 0.0
    %7565 = vmatprep.subr.mxu0 0.0
    %7566 = vmatpush1.msra.mxu0 0.0
    %7567 = vmatprep.subr.mxu0 0.0
    %7568 = vmatpush1.msra.mxu0 0.0
    %7569 = vmatprep.subr.mxu0 0.0
    %7570 = vmatpush1.msra.mxu0 0.0
    %7571 = vmatprep.subr.mxu0 0.0
    %7572 = vmatpush1.msra.mxu0 0.0
    %7573 = vmatprep.subr.mxu0 0.0
    %7574 = vmatpush1.msra.mxu0 0.0
    %7575 = vmatprep.subr.mxu0 0.0
    %7576 = vmatpush1.msra.mxu0 0.0
    %7577 = vmatprep.subr.mxu0 0.0
    %7578 = vmatpush1.msra.mxu0 0.0
    %7579 = vmatprep.subr.mxu0 0.0
    %7580 = vmatpush1.msra.mxu0 0.0
    %7581 = vmatprep.subr.mxu0 0.0
    %7582 = vmatpush1.msra.mxu0 0.0
    %7583 = vmatprep.subr.mxu0 0.0
    %7584 = vmatpush1.msra.mxu0 0.0
    %7585 = vmatprep.subr.mxu0 0.0
    %7586 = vmatpush1.msra.mxu0 0.0
    %7587 = vmatprep.subr.mxu0 0.0
    %7588 = vmatpush1.msra.mxu0 0.0
    %7589 = vmatprep.subr.mxu0 0.0
    %7590 = vmatpush1.msra.mxu0 0.0
    %7591 = vmatprep.mubr.f32.mxu0 0.0
    %7592 = vmatmul.mubr.f32.gmra.mrb[0].mxu0 %v7525
    %v7593 = vpop.f32.mrb[0].mxu0
    %v7594 = vadd.f32 0.0, %v7593
    %v7595 = vpop.f32.mrb[0].mxu0
    %7596 = vdwg.mxu0
    %s7597 = scalar_lea.vmem %s9, 32
    %v7598 = vld [vmem:[%s7597] sm:$0xff]
    %v7599 = vld [vmem:[%s7597 + $0x8] sm:$0x3f]
    %v7601 = vsel %vm5611, %v7594, 0
    %v7604 = vsel %vm5624, %v7599, 0
    %7606 = vmatprep.subr.mxu0 0.0
    %7607 = vmatpush1.msra.mxu0 %v7598
    %7608 = vmatprep.subr.mxu0 0.0
    %7609 = vmatpush1.msra.mxu0 %v7604
    %7610 = vmatprep.subr.mxu0 0.0
    %7611 = vmatpush1.msra.mxu0 0.0
    %7612 = vmatprep.subr.mxu0 0.0
    %7613 = vmatpush1.msra.mxu0 0.0
    %7614 = vmatprep.subr.mxu0 0.0
    %7615 = vmatpush1.msra.mxu0 0.0
    %7616 = vmatprep.subr.mxu0 0.0
    %7617 = vmatpush1.msra.mxu0 0.0
    %7618 = vmatprep.subr.mxu0 0.0
    %7619 = vmatpush1.msra.mxu0 0.0
    %7620 = vmatprep.subr.mxu0 0.0
    %7621 = vmatpush1.msra.mxu0 0.0
    %7622 = vmatprep.subr.mxu0 0.0
    %7623 = vmatpush1.msra.mxu0 0.0
    %7624 = vmatprep.subr.mxu0 0.0
    %7625 = vmatpush1.msra.mxu0 0.0
    %7626 = vmatprep.subr.mxu0 0.0
    %7627 = vmatpush1.msra.mxu0 0.0
    %7628 = vmatprep.subr.mxu0 0.0
    %7629 = vmatpush1.msra.mxu0 0.0
    %7630 = vmatprep.subr.mxu0 0.0
    %7631 = vmatpush1.msra.mxu0 0.0
    %7632 = vmatprep.subr.mxu0 0.0
    %7633 = vmatpush1.msra.mxu0 0.0
    %7634 = vmatprep.subr.mxu0 0.0
    %7635 = vmatpush1.msra.mxu0 0.0
    %7636 = vmatprep.subr.mxu0 0.0
    %7637 = vmatpush1.msra.mxu0 0.0
    %7638 = vmatprep.subr.mxu0 0.0
    %7639 = vmatpush1.msra.mxu0 0.0
    %7640 = vmatprep.subr.mxu0 0.0
    %7641 = vmatpush1.msra.mxu0 0.0
    %7642 = vmatprep.subr.mxu0 0.0
    %7643 = vmatpush1.msra.mxu0 0.0
    %7644 = vmatprep.subr.mxu0 0.0
    %7645 = vmatpush1.msra.mxu0 0.0
    %7646 = vmatprep.subr.mxu0 0.0
    %7647 = vmatpush1.msra.mxu0 0.0
    %7648 = vmatprep.subr.mxu0 0.0
    %7649 = vmatpush1.msra.mxu0 0.0
    %7650 = vmatprep.subr.mxu0 0.0
    %7651 = vmatpush1.msra.mxu0 0.0
    %7652 = vmatprep.subr.mxu0 0.0
    %7653 = vmatpush1.msra.mxu0 0.0
    %7654 = vmatprep.subr.mxu0 0.0
    %7655 = vmatpush1.msra.mxu0 0.0
    %7656 = vmatprep.subr.mxu0 0.0
    %7657 = vmatpush1.msra.mxu0 0.0
    %7658 = vmatprep.subr.mxu0 0.0
    %7659 = vmatpush1.msra.mxu0 0.0
    %7660 = vmatprep.subr.mxu0 0.0
    %7661 = vmatpush1.msra.mxu0 0.0
    %7662 = vmatprep.subr.mxu0 0.0
    %7663 = vmatpush1.msra.mxu0 0.0
    %7664 = vmatprep.subr.mxu0 0.0
    %7665 = vmatpush1.msra.mxu0 0.0
    %7666 = vmatprep.subr.mxu0 0.0
    %7667 = vmatpush1.msra.mxu0 0.0
    %7668 = vmatprep.subr.mxu0 0.0
    %7669 = vmatpush1.msra.mxu0 0.0
    %7670 = vmatprep.mubr.f32.mxu0 0.0
    %7671 = vmatmul.mubr.f32.gmra.mrb[0].mxu0 %v7601
    %v7672 = vpop.f32.mrb[0].mxu0
    %v7673 = vadd.f32 0.0, %v7672
    %v7674 = vpop.f32.mrb[0].mxu0
    %7675 = vdwg.mxu0
    %v7676 = vadd.f32 %v7519, %v7673
    %s7677 = scalar_lea.vmem [#allocation8], 6
    %v7678 = vld [vmem:[%s7677] sm:$0x3]
    %v7680 = vsel %vm7216, %v7678, 0
    %7682 = vmatprep.subr.mxu0 0.0
    %7683 = vmatpush1.msra.mxu0 %v7211
    %7684 = vmatprep.subr.mxu0 0.0
    %7685 = vmatpush1.msra.mxu0 %v7212
    %7686 = vmatprep.subr.mxu0 0.0
    %7687 = vmatpush1.msra.mxu0 %v7213
    %7688 = vmatprep.subr.mxu0 0.0
    %7689 = vmatpush1.msra.mxu0 %v7214
    %7690 = vmatprep.subr.mxu0 0.0
    %7691 = vmatpush1.msra.mxu0 0.0
    %7692 = vmatprep.subr.mxu0 0.0
    %7693 = vmatpush1.msra.mxu0 0.0
    %7694 = vmatprep.subr.mxu0 0.0
    %7695 = vmatpush1.msra.mxu0 0.0
    %7696 = vmatprep.subr.mxu0 0.0
    %7697 = vmatpush1.msra.mxu0 0.0
    %7698 = vmatprep.subr.mxu0 0.0
    %7699 = vmatpush1.msra.mxu0 0.0
    %7700 = vmatprep.subr.mxu0 0.0
    %7701 = vmatpush1.msra.mxu0 0.0
    %7702 = vmatprep.subr.mxu0 0.0
    %7703 = vmatpush1.msra.mxu0 0.0
    %7704 = vmatprep.subr.mxu0 0.0
    %7705 = vmatpush1.msra.mxu0 0.0
    %7706 = vmatprep.subr.mxu0 0.0
    %7707 = vmatpush1.msra.mxu0 0.0
    %7708 = vmatprep.subr.mxu0 0.0
    %7709 = vmatpush1.msra.mxu0 0.0
    %7710 = vmatprep.subr.mxu0 0.0
    %7711 = vmatpush1.msra.mxu0 0.0
    %7712 = vmatprep.subr.mxu0 0.0
    %7713 = vmatpush1.msra.mxu0 0.0
    %7714 = vmatprep.subr.mxu0 0.0
    %7715 = vmatpush1.msra.mxu0 0.0
    %7716 = vmatprep.subr.mxu0 0.0
    %7717 = vmatpush1.msra.mxu0 0.0
    %7718 = vmatprep.subr.mxu0 0.0
    %7719 = vmatpush1.msra.mxu0 0.0
    %7720 = vmatprep.subr.mxu0 0.0
    %7721 = vmatpush1.msra.mxu0 0.0
    %7722 = vmatprep.subr.mxu0 0.0
    %7723 = vmatpush1.msra.mxu0 0.0
    %7724 = vmatprep.subr.mxu0 0.0
    %7725 = vmatpush1.msra.mxu0 0.0
    %7726 = vmatprep.subr.mxu0 0.0
    %7727 = vmatpush1.msra.mxu0 0.0
    %7728 = vmatprep.subr.mxu0 0.0
    %7729 = vmatpush1.msra.mxu0 0.0
    %7730 = vmatprep.subr.mxu0 0.0
    %7731 = vmatpush1.msra.mxu0 0.0
    %7732 = vmatprep.subr.mxu0 0.0
    %7733 = vmatpush1.msra.mxu0 0.0
    %7734 = vmatprep.subr.mxu0 0.0
    %7735 = vmatpush1.msra.mxu0 0.0
    %7736 = vmatprep.subr.mxu0 0.0
    %7737 = vmatpush1.msra.mxu0 0.0
    %7738 = vmatprep.subr.mxu0 0.0
    %7739 = vmatpush1.msra.mxu0 0.0
    %7740 = vmatprep.subr.mxu0 0.0
    %7741 = vmatpush1.msra.mxu0 0.0
    %7742 = vmatprep.subr.mxu0 0.0
    %7743 = vmatpush1.msra.mxu0 0.0
    %7744 = vmatprep.subr.mxu0 0.0
    %7745 = vmatpush1.msra.mxu0 0.0
    %7746 = vmatprep.mubr.f32.mxu0 0.0
    %7747 = vmatmul.mubr.f32.gmra.mrb[0].mxu0 %v7680
    %v7748 = vpop.f32.mrb[0].mxu0
    %v7749 = vadd.f32 0.0, %v7748
    %v7750 = vpop.f32.mrb[0].mxu0
    %7751 = vdwg.mxu0
    %s7752 = scalar_lea.vmem %s9, 48
    %v7753 = vld [vmem:[%s7752] sm:$0xff]
    %v7754 = vld [vmem:[%s7752 + $0x8] sm:$0x3f]
    %v7756 = vsel %vm5611, %v7749, 0
    %v7759 = vsel %vm5624, %v7754, 0
    %7761 = vmatprep.subr.mxu0 0.0
    %7762 = vmatpush1.msra.mxu0 %v7753
    %7763 = vmatprep.subr.mxu0 0.0
    %7764 = vmatpush1.msra.mxu0 %v7759
    %7765 = vmatprep.subr.mxu0 0.0
    %7766 = vmatpush1.msra.mxu0 0.0
    %7767 = vmatprep.subr.mxu0 0.0
    %7768 = vmatpush1.msra.mxu0 0.0
    %7769 = vmatprep.subr.mxu0 0.0
    %7770 = vmatpush1.msra.mxu0 0.0
    %7771 = vmatprep.subr.mxu0 0.0
    %7772 = vmatpush1.msra.mxu0 0.0
    %7773 = vmatprep.subr.mxu0 0.0
    %7774 = vmatpush1.msra.mxu0 0.0
    %7775 = vmatprep.subr.mxu0 0.0
    %7776 = vmatpush1.msra.mxu0 0.0
    %7777 = vmatprep.subr.mxu0 0.0
    %7778 = vmatpush1.msra.mxu0 0.0
    %7779 = vmatprep.subr.mxu0 0.0
    %7780 = vmatpush1.msra.mxu0 0.0
    %7781 = vmatprep.subr.mxu0 0.0
    %7782 = vmatpush1.msra.mxu0 0.0
    %7783 = vmatprep.subr.mxu0 0.0
    %7784 = vmatpush1.msra.mxu0 0.0
    %7785 = vmatprep.subr.mxu0 0.0
    %7786 = vmatpush1.msra.mxu0 0.0
    %7787 = vmatprep.subr.mxu0 0.0
    %7788 = vmatpush1.msra.mxu0 0.0
    %7789 = vmatprep.subr.mxu0 0.0
    %7790 = vmatpush1.msra.mxu0 0.0
    %7791 = vmatprep.subr.mxu0 0.0
    %7792 = vmatpush1.msra.mxu0 0.0
    %7793 = vmatprep.subr.mxu0 0.0
    %7794 = vmatpush1.msra.mxu0 0.0
    %7795 = vmatprep.subr.mxu0 0.0
    %7796 = vmatpush1.msra.mxu0 0.0
    %7797 = vmatprep.subr.mxu0 0.0
    %7798 = vmatpush1.msra.mxu0 0.0
    %7799 = vmatprep.subr.mxu0 0.0
    %7800 = vmatpush1.msra.mxu0 0.0
    %7801 = vmatprep.subr.mxu0 0.0
    %7802 = vmatpush1.msra.mxu0 0.0
    %7803 = vmatprep.subr.mxu0 0.0
    %7804 = vmatpush1.msra.mxu0 0.0
    %7805 = vmatprep.subr.mxu0 0.0
    %7806 = vmatpush1.msra.mxu0 0.0
    %7807 = vmatprep.subr.mxu0 0.0
    %7808 = vmatpush1.msra.mxu0 0.0
    %7809 = vmatprep.subr.mxu0 0.0
    %7810 = vmatpush1.msra.mxu0 0.0
    %7811 = vmatprep.subr.mxu0 0.0
    %7812 = vmatpush1.msra.mxu0 0.0
    %7813 = vmatprep.subr.mxu0 0.0
    %7814 = vmatpush1.msra.mxu0 0.0
    %7815 = vmatprep.subr.mxu0 0.0
    %7816 = vmatpush1.msra.mxu0 0.0
    %7817 = vmatprep.subr.mxu0 0.0
    %7818 = vmatpush1.msra.mxu0 0.0
    %7819 = vmatprep.subr.mxu0 0.0
    %7820 = vmatpush1.msra.mxu0 0.0
    %7821 = vmatprep.subr.mxu0 0.0
    %7822 = vmatpush1.msra.mxu0 0.0
    %7823 = vmatprep.subr.mxu0 0.0
    %7824 = vmatpush1.msra.mxu0 0.0
    %7825 = vmatprep.mubr.f32.mxu0 0.0
    %7826 = vmatmul.mubr.f32.gmra.mrb[0].mxu0 %v7756
    %v7827 = vpop.f32.mrb[0].mxu0
    %v7828 = vadd.f32 0.0, %v7827
    %v7829 = vpop.f32.mrb[0].mxu0
    %7830 = vdwg.mxu0
    %v7831 = vadd.f32 %v7676, %v7828
    %s7832 = scalar_lea.vmem [#allocation8], 8
    %v7833 = vld [vmem:[%s7832] sm:$0x3]
    %v7835 = vsel %vm7216, %v7833, 0
    %7837 = vmatprep.subr.mxu0 0.0
    %7838 = vmatpush1.msra.mxu0 %v7211
    %7839 = vmatprep.subr.mxu0 0.0
    %7840 = vmatpush1.msra.mxu0 %v7212
    %7841 = vmatprep.subr.mxu0 0.0
    %7842 = vmatpush1.msra.mxu0 %v7213
    %7843 = vmatprep.subr.mxu0 0.0
    %7844 = vmatpush1.msra.mxu0 %v7214
    %7845 = vmatprep.subr.mxu0 0.0
    %7846 = vmatpush1.msra.mxu0 0.0
    %7847 = vmatprep.subr.mxu0 0.0
    %7848 = vmatpush1.msra.mxu0 0.0
    %7849 = vmatprep.subr.mxu0 0.0
    %7850 = vmatpush1.msra.mxu0 0.0
    %7851 = vmatprep.subr.mxu0 0.0
    %7852 = vmatpush1.msra.mxu0 0.0
    %7853 = vmatprep.subr.mxu0 0.0
    %7854 = vmatpush1.msra.mxu0 0.0
    %7855 = vmatprep.subr.mxu0 0.0
    %7856 = vmatpush1.msra.mxu0 0.0
    %7857 = vmatprep.subr.mxu0 0.0
    %7858 = vmatpush1.msra.mxu0 0.0
    %7859 = vmatprep.subr.mxu0 0.0
    %7860 = vmatpush1.msra.mxu0 0.0
    %7861 = vmatprep.subr.mxu0 0.0
    %7862 = vmatpush1.msra.mxu0 0.0
    %7863 = vmatprep.subr.mxu0 0.0
    %7864 = vmatpush1.msra.mxu0 0.0
    %7865 = vmatprep.subr.mxu0 0.0
    %7866 = vmatpush1.msra.mxu0 0.0
    %7867 = vmatprep.subr.mxu0 0.0
    %7868 = vmatpush1.msra.mxu0 0.0
    %7869 = vmatprep.subr.mxu0 0.0
    %7870 = vmatpush1.msra.mxu0 0.0
    %7871 = vmatprep.subr.mxu0 0.0
    %7872 = vmatpush1.msra.mxu0 0.0
    %7873 = vmatprep.subr.mxu0 0.0
    %7874 = vmatpush1.msra.mxu0 0.0
    %7875 = vmatprep.subr.mxu0 0.0
    %7876 = vmatpush1.msra.mxu0 0.0
    %7877 = vmatprep.subr.mxu0 0.0
    %7878 = vmatpush1.msra.mxu0 0.0
    %7879 = vmatprep.subr.mxu0 0.0
    %7880 = vmatpush1.msra.mxu0 0.0
    %7881 = vmatprep.subr.mxu0 0.0
    %7882 = vmatpush1.msra.mxu0 0.0
    %7883 = vmatprep.subr.mxu0 0.0
    %7884 = vmatpush1.msra.mxu0 0.0
    %7885 = vmatprep.subr.mxu0 0.0
    %7886 = vmatpush1.msra.mxu0 0.0
    %7887 = vmatprep.subr.mxu0 0.0
    %7888 = vmatpush1.msra.mxu0 0.0
    %7889 = vmatprep.subr.mxu0 0.0
    %7890 = vmatpush1.msra.mxu0 0.0
    %7891 = vmatprep.subr.mxu0 0.0
    %7892 = vmatpush1.msra.mxu0 0.0
    %7893 = vmatprep.subr.mxu0 0.0
    %7894 = vmatpush1.msra.mxu0 0.0
    %7895 = vmatprep.subr.mxu0 0.0
    %7896 = vmatpush1.msra.mxu0 0.0
    %7897 = vmatprep.subr.mxu0 0.0
    %7898 = vmatpush1.msra.mxu0 0.0
    %7899 = vmatprep.subr.mxu0 0.0
    %7900 = vmatpush1.msra.mxu0 0.0
    %7901 = vmatprep.mubr.f32.mxu0 0.0
    %7902 = vmatmul.mubr.f32.gmra.mrb[0].mxu0 %v7835
    %v7903 = vpop.f32.mrb[0].mxu0
    %v7904 = vadd.f32 0.0, %v7903
    %v7905 = vpop.f32.mrb[0].mxu0
    %7906 = vdwg.mxu0
    %s7907 = scalar_lea.vmem %s9, 64
    %v7908 = vld [vmem:[%s7907] sm:$0xff]
    %v7909 = vld [vmem:[%s7907 + $0x8] sm:$0x3f]
    %v7911 = vsel %vm5611, %v7904, 0
    %v7914 = vsel %vm5624, %v7909, 0
    %7916 = vmatprep.subr.mxu0 0.0
    %7917 = vmatpush1.msra.mxu0 %v7908
    %7918 = vmatprep.subr.mxu0 0.0
    %7919 = vmatpush1.msra.mxu0 %v7914
    %7920 = vmatprep.subr.mxu0 0.0
    %7921 = vmatpush1.msra.mxu0 0.0
    %7922 = vmatprep.subr.mxu0 0.0
    %7923 = vmatpush1.msra.mxu0 0.0
    %7924 = vmatprep.subr.mxu0 0.0
    %7925 = vmatpush1.msra.mxu0 0.0
    %7926 = vmatprep.subr.mxu0 0.0
    %7927 = vmatpush1.msra.mxu0 0.0
    %7928 = vmatprep.subr.mxu0 0.0
    %7929 = vmatpush1.msra.mxu0 0.0
    %7930 = vmatprep.subr.mxu0 0.0
    %7931 = vmatpush1.msra.mxu0 0.0
    %7932 = vmatprep.subr.mxu0 0.0
    %7933 = vmatpush1.msra.mxu0 0.0
    %7934 = vmatprep.subr.mxu0 0.0
    %7935 = vmatpush1.msra.mxu0 0.0
    %7936 = vmatprep.subr.mxu0 0.0
    %7937 = vmatpush1.msra.mxu0 0.0
    %7938 = vmatprep.subr.mxu0 0.0
    %7939 = vmatpush1.msra.mxu0 0.0
    %7940 = vmatprep.subr.mxu0 0.0
    %7941 = vmatpush1.msra.mxu0 0.0
    %7942 = vmatprep.subr.mxu0 0.0
    %7943 = vmatpush1.msra.mxu0 0.0
    %7944 = vmatprep.subr.mxu0 0.0
    %7945 = vmatpush1.msra.mxu0 0.0
    %7946 = vmatprep.subr.mxu0 0.0
    %7947 = vmatpush1.msra.mxu0 0.0
    %7948 = vmatprep.subr.mxu0 0.0
    %7949 = vmatpush1.msra.mxu0 0.0
    %7950 = vmatprep.subr.mxu0 0.0
    %7951 = vmatpush1.msra.mxu0 0.0
    %7952 = vmatprep.subr.mxu0 0.0
    %7953 = vmatpush1.msra.mxu0 0.0
    %7954 = vmatprep.subr.mxu0 0.0
    %7955 = vmatpush1.msra.mxu0 0.0
    %7956 = vmatprep.subr.mxu0 0.0
    %7957 = vmatpush1.msra.mxu0 0.0
    %7958 = vmatprep.subr.mxu0 0.0
    %7959 = vmatpush1.msra.mxu0 0.0
    %7960 = vmatprep.subr.mxu0 0.0
    %7961 = vmatpush1.msra.mxu0 0.0
    %7962 = vmatprep.subr.mxu0 0.0
    %7963 = vmatpush1.msra.mxu0 0.0
    %7964 = vmatprep.subr.mxu0 0.0
    %7965 = vmatpush1.msra.mxu0 0.0
    %7966 = vmatprep.subr.mxu0 0.0
    %7967 = vmatpush1.msra.mxu0 0.0
    %7968 = vmatprep.subr.mxu0 0.0
    %7969 = vmatpush1.msra.mxu0 0.0
    %7970 = vmatprep.subr.mxu0 0.0
    %7971 = vmatpush1.msra.mxu0 0.0
    %7972 = vmatprep.subr.mxu0 0.0
    %7973 = vmatpush1.msra.mxu0 0.0
    %7974 = vmatprep.subr.mxu0 0.0
    %7975 = vmatpush1.msra.mxu0 0.0
    %7976 = vmatprep.subr.mxu0 0.0
    %7977 = vmatpush1.msra.mxu0 0.0
    %7978 = vmatprep.subr.mxu0 0.0
    %7979 = vmatpush1.msra.mxu0 0.0
    %7980 = vmatprep.mubr.f32.mxu0 0.0
    %7981 = vmatmul.mubr.f32.gmra.mrb[0].mxu0 %v7911
    %v7982 = vpop.f32.mrb[0].mxu0
    %v7983 = vadd.f32 0.0, %v7982
    %v7984 = vpop.f32.mrb[0].mxu0
    %7985 = vdwg.mxu0
    %v7986 = vadd.f32 %v7831, %v7983
    %s7987 = scalar_lea.vmem [#allocation8], 10
    %v7988 = vld [vmem:[%s7987] sm:$0x3]
    %v7990 = vsel %vm7216, %v7988, 0
    %7992 = vmatprep.subr.mxu0 0.0
    %7993 = vmatpush1.msra.mxu0 %v7211
    %7994 = vmatprep.subr.mxu0 0.0
    %7995 = vmatpush1.msra.mxu0 %v7212
    %7996 = vmatprep.subr.mxu0 0.0
    %7997 = vmatpush1.msra.mxu0 %v7213
    %7998 = vmatprep.subr.mxu0 0.0
    %7999 = vmatpush1.msra.mxu0 %v7214
    %8000 = vmatprep.subr.mxu0 0.0
    %8001 = vmatpush1.msra.mxu0 0.0
    %8002 = vmatprep.subr.mxu0 0.0
    %8003 = vmatpush1.msra.mxu0 0.0
    %8004 = vmatprep.subr.mxu0 0.0
    %8005 = vmatpush1.msra.mxu0 0.0
    %8006 = vmatprep.subr.mxu0 0.0
    %8007 = vmatpush1.msra.mxu0 0.0
    %8008 = vmatprep.subr.mxu0 0.0
    %8009 = vmatpush1.msra.mxu0 0.0
    %8010 = vmatprep.subr.mxu0 0.0
    %8011 = vmatpush1.msra.mxu0 0.0
    %8012 = vmatprep.subr.mxu0 0.0
    %8013 = vmatpush1.msra.mxu0 0.0
    %8014 = vmatprep.subr.mxu0 0.0
    %8015 = vmatpush1.msra.mxu0 0.0
    %8016 = vmatprep.subr.mxu0 0.0
    %8017 = vmatpush1.msra.mxu0 0.0
    %8018 = vmatprep.subr.mxu0 0.0
    %8019 = vmatpush1.msra.mxu0 0.0
    %8020 = vmatprep.subr.mxu0 0.0
    %8021 = vmatpush1.msra.mxu0 0.0
    %8022 = vmatprep.subr.mxu0 0.0
    %8023 = vmatpush1.msra.mxu0 0.0
    %8024 = vmatprep.subr.mxu0 0.0
    %8025 = vmatpush1.msra.mxu0 0.0
    %8026 = vmatprep.subr.mxu0 0.0
    %8027 = vmatpush1.msra.mxu0 0.0
    %8028 = vmatprep.subr.mxu0 0.0
    %8029 = vmatpush1.msra.mxu0 0.0
    %8030 = vmatprep.subr.mxu0 0.0
    %8031 = vmatpush1.msra.mxu0 0.0
    %8032 = vmatprep.subr.mxu0 0.0
    %8033 = vmatpush1.msra.mxu0 0.0
    %8034 = vmatprep.subr.mxu0 0.0
    %8035 = vmatpush1.msra.mxu0 0.0
    %8036 = vmatprep.subr.mxu0 0.0
    %8037 = vmatpush1.msra.mxu0 0.0
    %8038 = vmatprep.subr.mxu0 0.0
    %8039 = vmatpush1.msra.mxu0 0.0
    %8040 = vmatprep.subr.mxu0 0.0
    %8041 = vmatpush1.msra.mxu0 0.0
    %8042 = vmatprep.subr.mxu0 0.0
    %8043 = vmatpush1.msra.mxu0 0.0
    %8044 = vmatprep.subr.mxu0 0.0
    %8045 = vmatpush1.msra.mxu0 0.0
    %8046 = vmatprep.subr.mxu0 0.0
    %8047 = vmatpush1.msra.mxu0 0.0
    %8048 = vmatprep.subr.mxu0 0.0
    %8049 = vmatpush1.msra.mxu0 0.0
    %8050 = vmatprep.subr.mxu0 0.0
    %8051 = vmatpush1.msra.mxu0 0.0
    %8052 = vmatprep.subr.mxu0 0.0
    %8053 = vmatpush1.msra.mxu0 0.0
    %8054 = vmatprep.subr.mxu0 0.0
    %8055 = vmatpush1.msra.mxu0 0.0
    %8056 = vmatprep.mubr.f32.mxu0 0.0
    %8057 = vmatmul.mubr.f32.gmra.mrb[0].mxu0 %v7990
    %v8058 = vpop.f32.mrb[0].mxu0
    %v8059 = vadd.f32 0.0, %v8058
    %v8060 = vpop.f32.mrb[0].mxu0
    %8061 = vdwg.mxu0
    %s8062 = scalar_lea.vmem %s9, 80
    %v8063 = vld [vmem:[%s8062] sm:$0xff]
    %v8064 = vld [vmem:[%s8062 + $0x8] sm:$0x3f]
    %v8066 = vsel %vm5611, %v8059, 0
    %v8069 = vsel %vm5624, %v8064, 0
    %8071 = vmatprep.subr.mxu0 0.0
    %8072 = vmatpush1.msra.mxu0 %v8063
    %8073 = vmatprep.subr.mxu0 0.0
    %8074 = vmatpush1.msra.mxu0 %v8069
    %8075 = vmatprep.subr.mxu0 0.0
    %8076 = vmatpush1.msra.mxu0 0.0
    %8077 = vmatprep.subr.mxu0 0.0
    %8078 = vmatpush1.msra.mxu0 0.0
    %8079 = vmatprep.subr.mxu0 0.0
    %8080 = vmatpush1.msra.mxu0 0.0
    %8081 = vmatprep.subr.mxu0 0.0
    %8082 = vmatpush1.msra.mxu0 0.0
    %8083 = vmatprep.subr.mxu0 0.0
    %8084 = vmatpush1.msra.mxu0 0.0
    %8085 = vmatprep.subr.mxu0 0.0
    %8086 = vmatpush1.msra.mxu0 0.0
    %8087 = vmatprep.subr.mxu0 0.0
    %8088 = vmatpush1.msra.mxu0 0.0
    %8089 = vmatprep.subr.mxu0 0.0
    %8090 = vmatpush1.msra.mxu0 0.0
    %8091 = vmatprep.subr.mxu0 0.0
    %8092 = vmatpush1.msra.mxu0 0.0
    %8093 = vmatprep.subr.mxu0 0.0
    %8094 = vmatpush1.msra.mxu0 0.0
    %8095 = vmatprep.subr.mxu0 0.0
    %8096 = vmatpush1.msra.mxu0 0.0
    %8097 = vmatprep.subr.mxu0 0.0
    %8098 = vmatpush1.msra.mxu0 0.0
    %8099 = vmatprep.subr.mxu0 0.0
    %8100 = vmatpush1.msra.mxu0 0.0
    %8101 = vmatprep.subr.mxu0 0.0
    %8102 = vmatpush1.msra.mxu0 0.0
    %8103 = vmatprep.subr.mxu0 0.0
    %8104 = vmatpush1.msra.mxu0 0.0
    %8105 = vmatprep.subr.mxu0 0.0
    %8106 = vmatpush1.msra.mxu0 0.0
    %8107 = vmatprep.subr.mxu0 0.0
    %8108 = vmatpush1.msra.mxu0 0.0
    %8109 = vmatprep.subr.mxu0 0.0
    %8110 = vmatpush1.msra.mxu0 0.0
    %8111 = vmatprep.subr.mxu0 0.0
    %8112 = vmatpush1.msra.mxu0 0.0
    %8113 = vmatprep.subr.mxu0 0.0
    %8114 = vmatpush1.msra.mxu0 0.0
    %8115 = vmatprep.subr.mxu0 0.0
    %8116 = vmatpush1.msra.mxu0 0.0
    %8117 = vmatprep.subr.mxu0 0.0
    %8118 = vmatpush1.msra.mxu0 0.0
    %8119 = vmatprep.subr.mxu0 0.0
    %8120 = vmatpush1.msra.mxu0 0.0
    %8121 = vmatprep.subr.mxu0 0.0
    %8122 = vmatpush1.msra.mxu0 0.0
    %8123 = vmatprep.subr.mxu0 0.0
    %8124 = vmatpush1.msra.mxu0 0.0
    %8125 = vmatprep.subr.mxu0 0.0
    %8126 = vmatpush1.msra.mxu0 0.0
    %8127 = vmatprep.subr.mxu0 0.0
    %8128 = vmatpush1.msra.mxu0 0.0
    %8129 = vmatprep.subr.mxu0 0.0
    %8130 = vmatpush1.msra.mxu0 0.0
    %8131 = vmatprep.subr.mxu0 0.0
    %8132 = vmatpush1.msra.mxu0 0.0
    %8133 = vmatprep.subr.mxu0 0.0
    %8134 = vmatpush1.msra.mxu0 0.0
    %8135 = vmatprep.mubr.f32.mxu0 0.0
    %8136 = vmatmul.mubr.f32.gmra.mrb[0].mxu0 %v8066
    %v8137 = vpop.f32.mrb[0].mxu0
    %v8138 = vadd.f32 0.0, %v8137
    %v8139 = vpop.f32.mrb[0].mxu0
    %8140 = vdwg.mxu0
    %v8141 = vadd.f32 %v7986, %v8138
    %s8142 = scalar_lea.vmem [#allocation8], 12
    %v8143 = vld [vmem:[%s8142] sm:$0x3]
    %v8145 = vsel %vm7216, %v8143, 0
    %8147 = vmatprep.subr.mxu0 0.0
    %8148 = vmatpush1.msra.mxu0 %v7211
    %8149 = vmatprep.subr.mxu0 0.0
    %8150 = vmatpush1.msra.mxu0 %v7212
    %8151 = vmatprep.subr.mxu0 0.0
    %8152 = vmatpush1.msra.mxu0 %v7213
    %8153 = vmatprep.subr.mxu0 0.0
    %8154 = vmatpush1.msra.mxu0 %v7214
    %8155 = vmatprep.subr.mxu0 0.0
    %8156 = vmatpush1.msra.mxu0 0.0
    %8157 = vmatprep.subr.mxu0 0.0
    %8158 = vmatpush1.msra.mxu0 0.0
    %8159 = vmatprep.subr.mxu0 0.0
    %8160 = vmatpush1.msra.mxu0 0.0
    %8161 = vmatprep.subr.mxu0 0.0
    %8162 = vmatpush1.msra.mxu0 0.0
    %8163 = vmatprep.subr.mxu0 0.0
    %8164 = vmatpush1.msra.mxu0 0.0
    %8165 = vmatprep.subr.mxu0 0.0
    %8166 = vmatpush1.msra.mxu0 0.0
    %8167 = vmatprep.subr.mxu0 0.0
    %8168 = vmatpush1.msra.mxu0 0.0
    %8169 = vmatprep.subr.mxu0 0.0
    %8170 = vmatpush1.msra.mxu0 0.0
    %8171 = vmatprep.subr.mxu0 0.0
    %8172 = vmatpush1.msra.mxu0 0.0
    %8173 = vmatprep.subr.mxu0 0.0
    %8174 = vmatpush1.msra.mxu0 0.0
    %8175 = vmatprep.subr.mxu0 0.0
    %8176 = vmatpush1.msra.mxu0 0.0
    %8177 = vmatprep.subr.mxu0 0.0
    %8178 = vmatpush1.msra.mxu0 0.0
    %8179 = vmatprep.subr.mxu0 0.0
    %8180 = vmatpush1.msra.mxu0 0.0
    %8181 = vmatprep.subr.mxu0 0.0
    %8182 = vmatpush1.msra.mxu0 0.0
    %8183 = vmatprep.subr.mxu0 0.0
    %8184 = vmatpush1.msra.mxu0 0.0
    %8185 = vmatprep.subr.mxu0 0.0
    %8186 = vmatpush1.msra.mxu0 0.0
    %8187 = vmatprep.subr.mxu0 0.0
    %8188 = vmatpush1.msra.mxu0 0.0
    %8189 = vmatprep.subr.mxu0 0.0
    %8190 = vmatpush1.msra.mxu0 0.0
    %8191 = vmatprep.subr.mxu0 0.0
    %8192 = vmatpush1.msra.mxu0 0.0
    %8193 = vmatprep.subr.mxu0 0.0
    %8194 = vmatpush1.msra.mxu0 0.0
    %8195 = vmatprep.subr.mxu0 0.0
    %8196 = vmatpush1.msra.mxu0 0.0
    %8197 = vmatprep.subr.mxu0 0.0
    %8198 = vmatpush1.msra.mxu0 0.0
    %8199 = vmatprep.subr.mxu0 0.0
    %8200 = vmatpush1.msra.mxu0 0.0
    %8201 = vmatprep.subr.mxu0 0.0
    %8202 = vmatpush1.msra.mxu0 0.0
    %8203 = vmatprep.subr.mxu0 0.0
    %8204 = vmatpush1.msra.mxu0 0.0
    %8205 = vmatprep.subr.mxu0 0.0
    %8206 = vmatpush1.msra.mxu0 0.0
    %8207 = vmatprep.subr.mxu0 0.0
    %8208 = vmatpush1.msra.mxu0 0.0
    %8209 = vmatprep.subr.mxu0 0.0
    %8210 = vmatpush1.msra.mxu0 0.0
    %8211 = vmatprep.mubr.f32.mxu0 0.0
    %8212 = vmatmul.mubr.f32.gmra.mrb[0].mxu0 %v8145
    %v8213 = vpop.f32.mrb[0].mxu0
    %v8214 = vadd.f32 0.0, %v8213
    %v8215 = vpop.f32.mrb[0].mxu0
    %8216 = vdwg.mxu0
    %s8217 = scalar_lea.vmem %s9, 96
    %v8218 = vld [vmem:[%s8217] sm:$0xff]
    %v8219 = vld [vmem:[%s8217 + $0x8] sm:$0x3f]
    %v8221 = vsel %vm5611, %v8214, 0
    %v8224 = vsel %vm5624, %v8219, 0
    %8226 = vmatprep.subr.mxu0 0.0
    %8227 = vmatpush1.msra.mxu0 %v8218
    %8228 = vmatprep.subr.mxu0 0.0
    %8229 = vmatpush1.msra.mxu0 %v8224
    %8230 = vmatprep.subr.mxu0 0.0
    %8231 = vmatpush1.msra.mxu0 0.0
    %8232 = vmatprep.subr.mxu0 0.0
    %8233 = vmatpush1.msra.mxu0 0.0
    %8234 = vmatprep.subr.mxu0 0.0
    %8235 = vmatpush1.msra.mxu0 0.0
    %8236 = vmatprep.subr.mxu0 0.0
    %8237 = vmatpush1.msra.mxu0 0.0
    %8238 = vmatprep.subr.mxu0 0.0
    %8239 = vmatpush1.msra.mxu0 0.0
    %8240 = vmatprep.subr.mxu0 0.0
    %8241 = vmatpush1.msra.mxu0 0.0
    %8242 = vmatprep.subr.mxu0 0.0
    %8243 = vmatpush1.msra.mxu0 0.0
    %8244 = vmatprep.subr.mxu0 0.0
    %8245 = vmatpush1.msra.mxu0 0.0
    %8246 = vmatprep.subr.mxu0 0.0
    %8247 = vmatpush1.msra.mxu0 0.0
    %8248 = vmatprep.subr.mxu0 0.0
    %8249 = vmatpush1.msra.mxu0 0.0
    %8250 = vmatprep.subr.mxu0 0.0
    %8251 = vmatpush1.msra.mxu0 0.0
    %8252 = vmatprep.subr.mxu0 0.0
    %8253 = vmatpush1.msra.mxu0 0.0
    %8254 = vmatprep.subr.mxu0 0.0
    %8255 = vmatpush1.msra.mxu0 0.0
    %8256 = vmatprep.subr.mxu0 0.0
    %8257 = vmatpush1.msra.mxu0 0.0
    %8258 = vmatprep.subr.mxu0 0.0
    %8259 = vmatpush1.msra.mxu0 0.0
    %8260 = vmatprep.subr.mxu0 0.0
    %8261 = vmatpush1.msra.mxu0 0.0
    %8262 = vmatprep.subr.mxu0 0.0
    %8263 = vmatpush1.msra.mxu0 0.0
    %8264 = vmatprep.subr.mxu0 0.0
    %8265 = vmatpush1.msra.mxu0 0.0
    %8266 = vmatprep.subr.mxu0 0.0
    %8267 = vmatpush1.msra.mxu0 0.0
    %8268 = vmatprep.subr.mxu0 0.0
    %8269 = vmatpush1.msra.mxu0 0.0
    %8270 = vmatprep.subr.mxu0 0.0
    %8271 = vmatpush1.msra.mxu0 0.0
    %8272 = vmatprep.subr.mxu0 0.0
    %8273 = vmatpush1.msra.mxu0 0.0
    %8274 = vmatprep.subr.mxu0 0.0
    %8275 = vmatpush1.msra.mxu0 0.0
    %8276 = vmatprep.subr.mxu0 0.0
    %8277 = vmatpush1.msra.mxu0 0.0
    %8278 = vmatprep.subr.mxu0 0.0
    %8279 = vmatpush1.msra.mxu0 0.0
    %8280 = vmatprep.subr.mxu0 0.0
    %8281 = vmatpush1.msra.mxu0 0.0
    %8282 = vmatprep.subr.mxu0 0.0
    %8283 = vmatpush1.msra.mxu0 0.0
    %8284 = vmatprep.subr.mxu0 0.0
    %8285 = vmatpush1.msra.mxu0 0.0
    %8286 = vmatprep.subr.mxu0 0.0
    %8287 = vmatpush1.msra.mxu0 0.0
    %8288 = vmatprep.subr.mxu0 0.0
    %8289 = vmatpush1.msra.mxu0 0.0
    %8290 = vmatprep.mubr.f32.mxu0 0.0
    %8291 = vmatmul.mubr.f32.gmra.mrb[0].mxu0 %v8221
    %v8292 = vpop.f32.mrb[0].mxu0
    %v8293 = vadd.f32 0.0, %v8292
    %v8294 = vpop.f32.mrb[0].mxu0
    %8295 = vdwg.mxu0
    %v8296 = vadd.f32 %v8141, %v8293
    %s8297 = scalar_lea.vmem [#allocation8], 14
    %v8298 = vld [vmem:[%s8297] sm:$0x3]
    %v8300 = vsel %vm7216, %v8298, 0
    %8302 = vmatprep.subr.mxu0 0.0
    %8303 = vmatpush1.msra.mxu0 %v7211
    %8304 = vmatprep.subr.mxu0 0.0
    %8305 = vmatpush1.msra.mxu0 %v7212
    %8306 = vmatprep.subr.mxu0 0.0
    %8307 = vmatpush1.msra.mxu0 %v7213
    %8308 = vmatprep.subr.mxu0 0.0
    %8309 = vmatpush1.msra.mxu0 %v7214
    %8310 = vmatprep.subr.mxu0 0.0
    %8311 = vmatpush1.msra.mxu0 0.0
    %8312 = vmatprep.subr.mxu0 0.0
    %8313 = vmatpush1.msra.mxu0 0.0
    %8314 = vmatprep.subr.mxu0 0.0
    %8315 = vmatpush1.msra.mxu0 0.0
    %8316 = vmatprep.subr.mxu0 0.0
    %8317 = vmatpush1.msra.mxu0 0.0
    %8318 = vmatprep.subr.mxu0 0.0
    %8319 = vmatpush1.msra.mxu0 0.0
    %8320 = vmatprep.subr.mxu0 0.0
    %8321 = vmatpush1.msra.mxu0 0.0
    %8322 = vmatprep.subr.mxu0 0.0
    %8323 = vmatpush1.msra.mxu0 0.0
    %8324 = vmatprep.subr.mxu0 0.0
    %8325 = vmatpush1.msra.mxu0 0.0
    %8326 = vmatprep.subr.mxu0 0.0
    %8327 = vmatpush1.msra.mxu0 0.0
    %8328 = vmatprep.subr.mxu0 0.0
    %8329 = vmatpush1.msra.mxu0 0.0
    %8330 = vmatprep.subr.mxu0 0.0
    %8331 = vmatpush1.msra.mxu0 0.0
    %8332 = vmatprep.subr.mxu0 0.0
    %8333 = vmatpush1.msra.mxu0 0.0
    %8334 = vmatprep.subr.mxu0 0.0
    %8335 = vmatpush1.msra.mxu0 0.0
    %8336 = vmatprep.subr.mxu0 0.0
    %8337 = vmatpush1.msra.mxu0 0.0
    %8338 = vmatprep.subr.mxu0 0.0
    %8339 = vmatpush1.msra.mxu0 0.0
    %8340 = vmatprep.subr.mxu0 0.0
    %8341 = vmatpush1.msra.mxu0 0.0
    %8342 = vmatprep.subr.mxu0 0.0
    %8343 = vmatpush1.msra.mxu0 0.0
    %8344 = vmatprep.subr.mxu0 0.0
    %8345 = vmatpush1.msra.mxu0 0.0
    %8346 = vmatprep.subr.mxu0 0.0
    %8347 = vmatpush1.msra.mxu0 0.0
    %8348 = vmatprep.subr.mxu0 0.0
    %8349 = vmatpush1.msra.mxu0 0.0
    %8350 = vmatprep.subr.mxu0 0.0
    %8351 = vmatpush1.msra.mxu0 0.0
    %8352 = vmatprep.subr.mxu0 0.0
    %8353 = vmatpush1.msra.mxu0 0.0
    %8354 = vmatprep.subr.mxu0 0.0
    %8355 = vmatpush1.msra.mxu0 0.0
    %8356 = vmatprep.subr.mxu0 0.0
    %8357 = vmatpush1.msra.mxu0 0.0
    %8358 = vmatprep.subr.mxu0 0.0
    %8359 = vmatpush1.msra.mxu0 0.0
    %8360 = vmatprep.subr.mxu0 0.0
    %8361 = vmatpush1.msra.mxu0 0.0
    %8362 = vmatprep.subr.mxu0 0.0
    %8363 = vmatpush1.msra.mxu0 0.0
    %8364 = vmatprep.subr.mxu0 0.0
    %8365 = vmatpush1.msra.mxu0 0.0
    %8366 = vmatprep.mubr.f32.mxu0 0.0
    %8367 = vmatmul.mubr.f32.gmra.mrb[0].mxu0 %v8300
    %v8368 = vpop.f32.mrb[0].mxu0
    %v8369 = vadd.f32 0.0, %v8368
    %v8370 = vpop.f32.mrb[0].mxu0
    %8371 = vdwg.mxu0
    %s8372 = scalar_lea.vmem %s9, 112
    %v8373 = vld [vmem:[%s8372] sm:$0xff]
    %v8374 = vld [vmem:[%s8372 + $0x8] sm:$0x3f]
    %v8376 = vsel %vm5611, %v8369, 0
    %v8379 = vsel %vm5624, %v8374, 0
    %8381 = vmatprep.subr.mxu0 0.0
    %8382 = vmatpush1.msra.mxu0 %v8373
    %8383 = vmatprep.subr.mxu0 0.0
    %8384 = vmatpush1.msra.mxu0 %v8379
    %8385 = vmatprep.subr.mxu0 0.0
    %8386 = vmatpush1.msra.mxu0 0.0
    %8387 = vmatprep.subr.mxu0 0.0
    %8388 = vmatpush1.msra.mxu0 0.0
    %8389 = vmatprep.subr.mxu0 0.0
    %8390 = vmatpush1.msra.mxu0 0.0
    %8391 = vmatprep.subr.mxu0 0.0
    %8392 = vmatpush1.msra.mxu0 0.0
    %8393 = vmatprep.subr.mxu0 0.0
    %8394 = vmatpush1.msra.mxu0 0.0
    %8395 = vmatprep.subr.mxu0 0.0
    %8396 = vmatpush1.msra.mxu0 0.0
    %8397 = vmatprep.subr.mxu0 0.0
    %8398 = vmatpush1.msra.mxu0 0.0
    %8399 = vmatprep.subr.mxu0 0.0
    %8400 = vmatpush1.msra.mxu0 0.0
    %8401 = vmatprep.subr.mxu0 0.0
    %8402 = vmatpush1.msra.mxu0 0.0
    %8403 = vmatprep.subr.mxu0 0.0
    %8404 = vmatpush1.msra.mxu0 0.0
    %8405 = vmatprep.subr.mxu0 0.0
    %8406 = vmatpush1.msra.mxu0 0.0
    %8407 = vmatprep.subr.mxu0 0.0
    %8408 = vmatpush1.msra.mxu0 0.0
    %8409 = vmatprep.subr.mxu0 0.0
    %8410 = vmatpush1.msra.mxu0 0.0
    %8411 = vmatprep.subr.mxu0 0.0
    %8412 = vmatpush1.msra.mxu0 0.0
    %8413 = vmatprep.subr.mxu0 0.0
    %8414 = vmatpush1.msra.mxu0 0.0
    %8415 = vmatprep.subr.mxu0 0.0
    %8416 = vmatpush1.msra.mxu0 0.0
    %8417 = vmatprep.subr.mxu0 0.0
    %8418 = vmatpush1.msra.mxu0 0.0
    %8419 = vmatprep.subr.mxu0 0.0
    %8420 = vmatpush1.msra.mxu0 0.0
    %8421 = vmatprep.subr.mxu0 0.0
    %8422 = vmatpush1.msra.mxu0 0.0
    %8423 = vmatprep.subr.mxu0 0.0
    %8424 = vmatpush1.msra.mxu0 0.0
    %8425 = vmatprep.subr.mxu0 0.0
    %8426 = vmatpush1.msra.mxu0 0.0
    %8427 = vmatprep.subr.mxu0 0.0
    %8428 = vmatpush1.msra.mxu0 0.0
    %8429 = vmatprep.subr.mxu0 0.0
    %8430 = vmatpush1.msra.mxu0 0.0
    %8431 = vmatprep.subr.mxu0 0.0
    %8432 = vmatpush1.msra.mxu0 0.0
    %8433 = vmatprep.subr.mxu0 0.0
    %8434 = vmatpush1.msra.mxu0 0.0
    %8435 = vmatprep.subr.mxu0 0.0
    %8436 = vmatpush1.msra.mxu0 0.0
    %8437 = vmatprep.subr.mxu0 0.0
    %8438 = vmatpush1.msra.mxu0 0.0
    %8439 = vmatprep.subr.mxu0 0.0
    %8440 = vmatpush1.msra.mxu0 0.0
    %8441 = vmatprep.subr.mxu0 0.0
    %8442 = vmatpush1.msra.mxu0 0.0
    %8443 = vmatprep.subr.mxu0 0.0
    %8444 = vmatpush1.msra.mxu0 0.0
    %8445 = vmatprep.mubr.f32.mxu0 0.0
    %8446 = vmatmul.mubr.f32.gmra.mrb[0].mxu0 %v8376
    %v8447 = vpop.f32.mrb[0].mxu0
    %v8448 = vadd.f32 0.0, %v8447
    %v8449 = vpop.f32.mrb[0].mxu0
    %8450 = vdwg.mxu0
    %v8451 = vadd.f32 %v8296, %v8448
    %s8452 = scalar_lea.vmem [#allocation8], 16
    %v8453 = vld [vmem:[%s8452] sm:$0x3]
    %v8455 = vsel %vm7216, %v8453, 0
    %8457 = vmatprep.subr.mxu0 0.0
    %8458 = vmatpush1.msra.mxu0 %v7211
    %8459 = vmatprep.subr.mxu0 0.0
    %8460 = vmatpush1.msra.mxu0 %v7212
    %8461 = vmatprep.subr.mxu0 0.0
    %8462 = vmatpush1.msra.mxu0 %v7213
    %8463 = vmatprep.subr.mxu0 0.0
    %8464 = vmatpush1.msra.mxu0 %v7214
    %8465 = vmatprep.subr.mxu0 0.0
    %8466 = vmatpush1.msra.mxu0 0.0
    %8467 = vmatprep.subr.mxu0 0.0
    %8468 = vmatpush1.msra.mxu0 0.0
    %8469 = vmatprep.subr.mxu0 0.0
    %8470 = vmatpush1.msra.mxu0 0.0
    %8471 = vmatprep.subr.mxu0 0.0
    %8472 = vmatpush1.msra.mxu0 0.0
    %8473 = vmatprep.subr.mxu0 0.0
    %8474 = vmatpush1.msra.mxu0 0.0
    %8475 = vmatprep.subr.mxu0 0.0
    %8476 = vmatpush1.msra.mxu0 0.0
    %8477 = vmatprep.subr.mxu0 0.0
    %8478 = vmatpush1.msra.mxu0 0.0
    %8479 = vmatprep.subr.mxu0 0.0
    %8480 = vmatpush1.msra.mxu0 0.0
    %8481 = vmatprep.subr.mxu0 0.0
    %8482 = vmatpush1.msra.mxu0 0.0
    %8483 = vmatprep.subr.mxu0 0.0
    %8484 = vmatpush1.msra.mxu0 0.0
    %8485 = vmatprep.subr.mxu0 0.0
    %8486 = vmatpush1.msra.mxu0 0.0
    %8487 = vmatprep.subr.mxu0 0.0
    %8488 = vmatpush1.msra.mxu0 0.0
    %8489 = vmatprep.subr.mxu0 0.0
    %8490 = vmatpush1.msra.mxu0 0.0
    %8491 = vmatprep.subr.mxu0 0.0
    %8492 = vmatpush1.msra.mxu0 0.0
    %8493 = vmatprep.subr.mxu0 0.0
    %8494 = vmatpush1.msra.mxu0 0.0
    %8495 = vmatprep.subr.mxu0 0.0
    %8496 = vmatpush1.msra.mxu0 0.0
    %8497 = vmatprep.subr.mxu0 0.0
    %8498 = vmatpush1.msra.mxu0 0.0
    %8499 = vmatprep.subr.mxu0 0.0
    %8500 = vmatpush1.msra.mxu0 0.0
    %8501 = vmatprep.subr.mxu0 0.0
    %8502 = vmatpush1.msra.mxu0 0.0
    %8503 = vmatprep.subr.mxu0 0.0
    %8504 = vmatpush1.msra.mxu0 0.0
    %8505 = vmatprep.subr.mxu0 0.0
    %8506 = vmatpush1.msra.mxu0 0.0
    %8507 = vmatprep.subr.mxu0 0.0
    %8508 = vmatpush1.msra.mxu0 0.0
    %8509 = vmatprep.subr.mxu0 0.0
    %8510 = vmatpush1.msra.mxu0 0.0
    %8511 = vmatprep.subr.mxu0 0.0
    %8512 = vmatpush1.msra.mxu0 0.0
    %8513 = vmatprep.subr.mxu0 0.0
    %8514 = vmatpush1.msra.mxu0 0.0
    %8515 = vmatprep.subr.mxu0 0.0
    %8516 = vmatpush1.msra.mxu0 0.0
    %8517 = vmatprep.subr.mxu0 0.0
    %8518 = vmatpush1.msra.mxu0 0.0
    %8519 = vmatprep.subr.mxu0 0.0
    %8520 = vmatpush1.msra.mxu0 0.0
    %8521 = vmatprep.mubr.f32.mxu0 0.0
    %8522 = vmatmul.mubr.f32.gmra.mrb[0].mxu0 %v8455
    %v8523 = vpop.f32.mrb[0].mxu0
    %v8524 = vadd.f32 0.0, %v8523
    %v8525 = vpop.f32.mrb[0].mxu0
    %8526 = vdwg.mxu0
    %s8527 = scalar_lea.vmem %s9, 128
    %v8528 = vld [vmem:[%s8527] sm:$0xff]
    %v8529 = vld [vmem:[%s8527 + $0x8] sm:$0x3f]
    %v8531 = vsel %vm5611, %v8524, 0
    %v8534 = vsel %vm5624, %v8529, 0
    %8536 = vmatprep.subr.mxu0 0.0
    %8537 = vmatpush1.msra.mxu0 %v8528
    %8538 = vmatprep.subr.mxu0 0.0
    %8539 = vmatpush1.msra.mxu0 %v8534
    %8540 = vmatprep.subr.mxu0 0.0
    %8541 = vmatpush1.msra.mxu0 0.0
    %8542 = vmatprep.subr.mxu0 0.0
    %8543 = vmatpush1.msra.mxu0 0.0
    %8544 = vmatprep.subr.mxu0 0.0
    %8545 = vmatpush1.msra.mxu0 0.0
    %8546 = vmatprep.subr.mxu0 0.0
    %8547 = vmatpush1.msra.mxu0 0.0
    %8548 = vmatprep.subr.mxu0 0.0
    %8549 = vmatpush1.msra.mxu0 0.0
    %8550 = vmatprep.subr.mxu0 0.0
    %8551 = vmatpush1.msra.mxu0 0.0
    %8552 = vmatprep.subr.mxu0 0.0
    %8553 = vmatpush1.msra.mxu0 0.0
    %8554 = vmatprep.subr.mxu0 0.0
    %8555 = vmatpush1.msra.mxu0 0.0
    %8556 = vmatprep.subr.mxu0 0.0
    %8557 = vmatpush1.msra.mxu0 0.0
    %8558 = vmatprep.subr.mxu0 0.0
    %8559 = vmatpush1.msra.mxu0 0.0
    %8560 = vmatprep.subr.mxu0 0.0
    %8561 = vmatpush1.msra.mxu0 0.0
    %8562 = vmatprep.subr.mxu0 0.0
    %8563 = vmatpush1.msra.mxu0 0.0
    %8564 = vmatprep.subr.mxu0 0.0
    %8565 = vmatpush1.msra.mxu0 0.0
    %8566 = vmatprep.subr.mxu0 0.0
    %8567 = vmatpush1.msra.mxu0 0.0
    %8568 = vmatprep.subr.mxu0 0.0
    %8569 = vmatpush1.msra.mxu0 0.0
    %8570 = vmatprep.subr.mxu0 0.0
    %8571 = vmatpush1.msra.mxu0 0.0
    %8572 = vmatprep.subr.mxu0 0.0
    %8573 = vmatpush1.msra.mxu0 0.0
    %8574 = vmatprep.subr.mxu0 0.0
    %8575 = vmatpush1.msra.mxu0 0.0
    %8576 = vmatprep.subr.mxu0 0.0
    %8577 = vmatpush1.msra.mxu0 0.0
    %8578 = vmatprep.subr.mxu0 0.0
    %8579 = vmatpush1.msra.mxu0 0.0
    %8580 = vmatprep.subr.mxu0 0.0
    %8581 = vmatpush1.msra.mxu0 0.0
    %8582 = vmatprep.subr.mxu0 0.0
    %8583 = vmatpush1.msra.mxu0 0.0
    %8584 = vmatprep.subr.mxu0 0.0
    %8585 = vmatpush1.msra.mxu0 0.0
    %8586 = vmatprep.subr.mxu0 0.0
    %8587 = vmatpush1.msra.mxu0 0.0
    %8588 = vmatprep.subr.mxu0 0.0
    %8589 = vmatpush1.msra.mxu0 0.0
    %8590 = vmatprep.subr.mxu0 0.0
    %8591 = vmatpush1.msra.mxu0 0.0
    %8592 = vmatprep.subr.mxu0 0.0
    %8593 = vmatpush1.msra.mxu0 0.0
    %8594 = vmatprep.subr.mxu0 0.0
    %8595 = vmatpush1.msra.mxu0 0.0
    %8596 = vmatprep.subr.mxu0 0.0
    %8597 = vmatpush1.msra.mxu0 0.0
    %8598 = vmatprep.subr.mxu0 0.0
    %8599 = vmatpush1.msra.mxu0 0.0
    %8600 = vmatprep.mubr.f32.mxu0 0.0
    %8601 = vmatmul.mubr.f32.gmra.mrb[0].mxu0 %v8531
    %v8602 = vpop.f32.mrb[0].mxu0
    %v8603 = vadd.f32 0.0, %v8602
    %v8604 = vpop.f32.mrb[0].mxu0
    %8605 = vdwg.mxu0
    %v8606 = vadd.f32 %v8451, %v8603
    %s8607 = scalar_lea.vmem [#allocation8], 18
    %v8608 = vld [vmem:[%s8607] sm:$0x3]
    %v8610 = vsel %vm7216, %v8608, 0
    %8612 = vmatprep.subr.mxu0 0.0
    %8613 = vmatpush1.msra.mxu0 %v7211
    %8614 = vmatprep.subr.mxu0 0.0
    %8615 = vmatpush1.msra.mxu0 %v7212
    %8616 = vmatprep.subr.mxu0 0.0
    %8617 = vmatpush1.msra.mxu0 %v7213
    %8618 = vmatprep.subr.mxu0 0.0
    %8619 = vmatpush1.msra.mxu0 %v7214
    %8620 = vmatprep.subr.mxu0 0.0
    %8621 = vmatpush1.msra.mxu0 0.0
    %8622 = vmatprep.subr.mxu0 0.0
    %8623 = vmatpush1.msra.mxu0 0.0
    %8624 = vmatprep.subr.mxu0 0.0
    %8625 = vmatpush1.msra.mxu0 0.0
    %8626 = vmatprep.subr.mxu0 0.0
    %8627 = vmatpush1.msra.mxu0 0.0
    %8628 = vmatprep.subr.mxu0 0.0
    %8629 = vmatpush1.msra.mxu0 0.0
    %8630 = vmatprep.subr.mxu0 0.0
    %8631 = vmatpush1.msra.mxu0 0.0
    %8632 = vmatprep.subr.mxu0 0.0
    %8633 = vmatpush1.msra.mxu0 0.0
    %8634 = vmatprep.subr.mxu0 0.0
    %8635 = vmatpush1.msra.mxu0 0.0
    %8636 = vmatprep.subr.mxu0 0.0
    %8637 = vmatpush1.msra.mxu0 0.0
    %8638 = vmatprep.subr.mxu0 0.0
    %8639 = vmatpush1.msra.mxu0 0.0
    %8640 = vmatprep.subr.mxu0 0.0
    %8641 = vmatpush1.msra.mxu0 0.0
    %8642 = vmatprep.subr.mxu0 0.0
    %8643 = vmatpush1.msra.mxu0 0.0
    %8644 = vmatprep.subr.mxu0 0.0
    %8645 = vmatpush1.msra.mxu0 0.0
    %8646 = vmatprep.subr.mxu0 0.0
    %8647 = vmatpush1.msra.mxu0 0.0
    %8648 = vmatprep.subr.mxu0 0.0
    %8649 = vmatpush1.msra.mxu0 0.0
    %8650 = vmatprep.subr.mxu0 0.0
    %8651 = vmatpush1.msra.mxu0 0.0
    %8652 = vmatprep.subr.mxu0 0.0
    %8653 = vmatpush1.msra.mxu0 0.0
    %8654 = vmatprep.subr.mxu0 0.0
    %8655 = vmatpush1.msra.mxu0 0.0
    %8656 = vmatprep.subr.mxu0 0.0
    %8657 = vmatpush1.msra.mxu0 0.0
    %8658 = vmatprep.subr.mxu0 0.0
    %8659 = vmatpush1.msra.mxu0 0.0
    %8660 = vmatprep.subr.mxu0 0.0
    %8661 = vmatpush1.msra.mxu0 0.0
    %8662 = vmatprep.subr.mxu0 0.0
    %8663 = vmatpush1.msra.mxu0 0.0
    %8664 = vmatprep.subr.mxu0 0.0
    %8665 = vmatpush1.msra.mxu0 0.0
    %8666 = vmatprep.subr.mxu0 0.0
    %8667 = vmatpush1.msra.mxu0 0.0
    %8668 = vmatprep.subr.mxu0 0.0
    %8669 = vmatpush1.msra.mxu0 0.0
    %8670 = vmatprep.subr.mxu0 0.0
    %8671 = vmatpush1.msra.mxu0 0.0
    %8672 = vmatprep.subr.mxu0 0.0
    %8673 = vmatpush1.msra.mxu0 0.0
    %8674 = vmatprep.subr.mxu0 0.0
    %8675 = vmatpush1.msra.mxu0 0.0
    %8676 = vmatprep.mubr.f32.mxu0 0.0
    %8677 = vmatmul.mubr.f32.gmra.mrb[0].mxu0 %v8610
    %v8678 = vpop.f32.mrb[0].mxu0
    %v8679 = vadd.f32 0.0, %v8678
    %v8680 = vpop.f32.mrb[0].mxu0
    %8681 = vdwg.mxu0
    %s8682 = scalar_lea.vmem %s9, 144
    %v8683 = vld [vmem:[%s8682] sm:$0xff]
    %v8684 = vld [vmem:[%s8682 + $0x8] sm:$0x3f]
    %v8686 = vsel %vm5611, %v8679, 0
    %v8689 = vsel %vm5624, %v8684, 0
    %8691 = vmatprep.subr.mxu0 0.0
    %8692 = vmatpush1.msra.mxu0 %v8683
    %8693 = vmatprep.subr.mxu0 0.0
    %8694 = vmatpush1.msra.mxu0 %v8689
    %8695 = vmatprep.subr.mxu0 0.0
    %8696 = vmatpush1.msra.mxu0 0.0
    %8697 = vmatprep.subr.mxu0 0.0
    %8698 = vmatpush1.msra.mxu0 0.0
    %8699 = vmatprep.subr.mxu0 0.0
    %8700 = vmatpush1.msra.mxu0 0.0
    %8701 = vmatprep.subr.mxu0 0.0
    %8702 = vmatpush1.msra.mxu0 0.0
    %8703 = vmatprep.subr.mxu0 0.0
    %8704 = vmatpush1.msra.mxu0 0.0
    %8705 = vmatprep.subr.mxu0 0.0
    %8706 = vmatpush1.msra.mxu0 0.0
    %8707 = vmatprep.subr.mxu0 0.0
    %8708 = vmatpush1.msra.mxu0 0.0
    %8709 = vmatprep.subr.mxu0 0.0
    %8710 = vmatpush1.msra.mxu0 0.0
    %8711 = vmatprep.subr.mxu0 0.0
    %8712 = vmatpush1.msra.mxu0 0.0
    %8713 = vmatprep.subr.mxu0 0.0
    %8714 = vmatpush1.msra.mxu0 0.0
    %8715 = vmatprep.subr.mxu0 0.0
    %8716 = vmatpush1.msra.mxu0 0.0
    %8717 = vmatprep.subr.mxu0 0.0
    %8718 = vmatpush1.msra.mxu0 0.0
    %8719 = vmatprep.subr.mxu0 0.0
    %8720 = vmatpush1.msra.mxu0 0.0
    %8721 = vmatprep.subr.mxu0 0.0
    %8722 = vmatpush1.msra.mxu0 0.0
    %8723 = vmatprep.subr.mxu0 0.0
    %8724 = vmatpush1.msra.mxu0 0.0
    %8725 = vmatprep.subr.mxu0 0.0
    %8726 = vmatpush1.msra.mxu0 0.0
    %8727 = vmatprep.subr.mxu0 0.0
    %8728 = vmatpush1.msra.mxu0 0.0
    %8729 = vmatprep.subr.mxu0 0.0
    %8730 = vmatpush1.msra.mxu0 0.0
    %8731 = vmatprep.subr.mxu0 0.0
    %8732 = vmatpush1.msra.mxu0 0.0
    %8733 = vmatprep.subr.mxu0 0.0
    %8734 = vmatpush1.msra.mxu0 0.0
    %8735 = vmatprep.subr.mxu0 0.0
    %8736 = vmatpush1.msra.mxu0 0.0
    %8737 = vmatprep.subr.mxu0 0.0
    %8738 = vmatpush1.msra.mxu0 0.0
    %8739 = vmatprep.subr.mxu0 0.0
    %8740 = vmatpush1.msra.mxu0 0.0
    %8741 = vmatprep.subr.mxu0 0.0
    %8742 = vmatpush1.msra.mxu0 0.0
    %8743 = vmatprep.subr.mxu0 0.0
    %8744 = vmatpush1.msra.mxu0 0.0
    %8745 = vmatprep.subr.mxu0 0.0
    %8746 = vmatpush1.msra.mxu0 0.0
    %8747 = vmatprep.subr.mxu0 0.0
    %8748 = vmatpush1.msra.mxu0 0.0
    %8749 = vmatprep.subr.mxu0 0.0
    %8750 = vmatpush1.msra.mxu0 0.0
    %8751 = vmatprep.subr.mxu0 0.0
    %8752 = vmatpush1.msra.mxu0 0.0
    %8753 = vmatprep.subr.mxu0 0.0
    %8754 = vmatpush1.msra.mxu0 0.0
    %8755 = vmatprep.mubr.f32.mxu0 0.0
    %8756 = vmatmul.mubr.f32.gmra.mrb[0].mxu0 %v8686
    %v8757 = vpop.f32.mrb[0].mxu0
    %v8758 = vadd.f32 0.0, %v8757
    %v8759 = vpop.f32.mrb[0].mxu0
    %8760 = vdwg.mxu0
    %v8761 = vadd.f32 %v8606, %v8758
    %s8762 = scalar_lea.vmem [#allocation8], 20
    %v8763 = vld [vmem:[%s8762] sm:$0x3]
    %v8765 = vsel %vm7216, %v8763, 0
    %8767 = vmatprep.subr.mxu0 0.0
    %8768 = vmatpush1.msra.mxu0 %v7211
    %8769 = vmatprep.subr.mxu0 0.0
    %8770 = vmatpush1.msra.mxu0 %v7212
    %8771 = vmatprep.subr.mxu0 0.0
    %8772 = vmatpush1.msra.mxu0 %v7213
    %8773 = vmatprep.subr.mxu0 0.0
    %8774 = vmatpush1.msra.mxu0 %v7214
    %8775 = vmatprep.subr.mxu0 0.0
    %8776 = vmatpush1.msra.mxu0 0.0
    %8777 = vmatprep.subr.mxu0 0.0
    %8778 = vmatpush1.msra.mxu0 0.0
    %8779 = vmatprep.subr.mxu0 0.0
    %8780 = vmatpush1.msra.mxu0 0.0
    %8781 = vmatprep.subr.mxu0 0.0
    %8782 = vmatpush1.msra.mxu0 0.0
    %8783 = vmatprep.subr.mxu0 0.0
    %8784 = vmatpush1.msra.mxu0 0.0
    %8785 = vmatprep.subr.mxu0 0.0
    %8786 = vmatpush1.msra.mxu0 0.0
    %8787 = vmatprep.subr.mxu0 0.0
    %8788 = vmatpush1.msra.mxu0 0.0
    %8789 = vmatprep.subr.mxu0 0.0
    %8790 = vmatpush1.msra.mxu0 0.0
    %8791 = vmatprep.subr.mxu0 0.0
    %8792 = vmatpush1.msra.mxu0 0.0
    %8793 = vmatprep.subr.mxu0 0.0
    %8794 = vmatpush1.msra.mxu0 0.0
    %8795 = vmatprep.subr.mxu0 0.0
    %8796 = vmatpush1.msra.mxu0 0.0
    %8797 = vmatprep.subr.mxu0 0.0
    %8798 = vmatpush1.msra.mxu0 0.0
    %8799 = vmatprep.subr.mxu0 0.0
    %8800 = vmatpush1.msra.mxu0 0.0
    %8801 = vmatprep.subr.mxu0 0.0
    %8802 = vmatpush1.msra.mxu0 0.0
    %8803 = vmatprep.subr.mxu0 0.0
    %8804 = vmatpush1.msra.mxu0 0.0
    %8805 = vmatprep.subr.mxu0 0.0
    %8806 = vmatpush1.msra.mxu0 0.0
    %8807 = vmatprep.subr.mxu0 0.0
    %8808 = vmatpush1.msra.mxu0 0.0
    %8809 = vmatprep.subr.mxu0 0.0
    %8810 = vmatpush1.msra.mxu0 0.0
    %8811 = vmatprep.subr.mxu0 0.0
    %8812 = vmatpush1.msra.mxu0 0.0
    %8813 = vmatprep.subr.mxu0 0.0
    %8814 = vmatpush1.msra.mxu0 0.0
    %8815 = vmatprep.subr.mxu0 0.0
    %8816 = vmatpush1.msra.mxu0 0.0
    %8817 = vmatprep.subr.mxu0 0.0
    %8818 = vmatpush1.msra.mxu0 0.0
    %8819 = vmatprep.subr.mxu0 0.0
    %8820 = vmatpush1.msra.mxu0 0.0
    %8821 = vmatprep.subr.mxu0 0.0
    %8822 = vmatpush1.msra.mxu0 0.0
    %8823 = vmatprep.subr.mxu0 0.0
    %8824 = vmatpush1.msra.mxu0 0.0
    %8825 = vmatprep.subr.mxu0 0.0
    %8826 = vmatpush1.msra.mxu0 0.0
    %8827 = vmatprep.subr.mxu0 0.0
    %8828 = vmatpush1.msra.mxu0 0.0
    %8829 = vmatprep.subr.mxu0 0.0
    %8830 = vmatpush1.msra.mxu0 0.0
    %8831 = vmatprep.mubr.f32.mxu0 0.0
    %8832 = vmatmul.mubr.f32.gmra.mrb[0].mxu0 %v8765
    %v8833 = vpop.f32.mrb[0].mxu0
    %v8834 = vadd.f32 0.0, %v8833
    %v8835 = vpop.f32.mrb[0].mxu0
    %8836 = vdwg.mxu0
    %s8837 = scalar_lea.vmem %s9, 160
    %v8838 = vld [vmem:[%s8837] sm:$0xff]
    %v8839 = vld [vmem:[%s8837 + $0x8] sm:$0x3f]
    %v8841 = vsel %vm5611, %v8834, 0
    %v8844 = vsel %vm5624, %v8839, 0
    %8846 = vmatprep.subr.mxu0 0.0
    %8847 = vmatpush1.msra.mxu0 %v8838
    %8848 = vmatprep.subr.mxu0 0.0
    %8849 = vmatpush1.msra.mxu0 %v8844
    %8850 = vmatprep.subr.mxu0 0.0
    %8851 = vmatpush1.msra.mxu0 0.0
    %8852 = vmatprep.subr.mxu0 0.0
    %8853 = vmatpush1.msra.mxu0 0.0
    %8854 = vmatprep.subr.mxu0 0.0
    %8855 = vmatpush1.msra.mxu0 0.0
    %8856 = vmatprep.subr.mxu0 0.0
    %8857 = vmatpush1.msra.mxu0 0.0
    %8858 = vmatprep.subr.mxu0 0.0
    %8859 = vmatpush1.msra.mxu0 0.0
    %8860 = vmatprep.subr.mxu0 0.0
    %8861 = vmatpush1.msra.mxu0 0.0
    %8862 = vmatprep.subr.mxu0 0.0
    %8863 = vmatpush1.msra.mxu0 0.0
    %8864 = vmatprep.subr.mxu0 0.0
    %8865 = vmatpush1.msra.mxu0 0.0
    %8866 = vmatprep.subr.mxu0 0.0
    %8867 = vmatpush1.msra.mxu0 0.0
    %8868 = vmatprep.subr.mxu0 0.0
    %8869 = vmatpush1.msra.mxu0 0.0
    %8870 = vmatprep.subr.mxu0 0.0
    %8871 = vmatpush1.msra.mxu0 0.0
    %8872 = vmatprep.subr.mxu0 0.0
    %8873 = vmatpush1.msra.mxu0 0.0
    %8874 = vmatprep.subr.mxu0 0.0
    %8875 = vmatpush1.msra.mxu0 0.0
    %8876 = vmatprep.subr.mxu0 0.0
    %8877 = vmatpush1.msra.mxu0 0.0
    %8878 = vmatprep.subr.mxu0 0.0
    %8879 = vmatpush1.msra.mxu0 0.0
    %8880 = vmatprep.subr.mxu0 0.0
    %8881 = vmatpush1.msra.mxu0 0.0
    %8882 = vmatprep.subr.mxu0 0.0
    %8883 = vmatpush1.msra.mxu0 0.0
    %8884 = vmatprep.subr.mxu0 0.0
    %8885 = vmatpush1.msra.mxu0 0.0
    %8886 = vmatprep.subr.mxu0 0.0
    %8887 = vmatpush1.msra.mxu0 0.0
    %8888 = vmatprep.subr.mxu0 0.0
    %8889 = vmatpush1.msra.mxu0 0.0
    %8890 = vmatprep.subr.mxu0 0.0
    %8891 = vmatpush1.msra.mxu0 0.0
    %8892 = vmatprep.subr.mxu0 0.0
    %8893 = vmatpush1.msra.mxu0 0.0
    %8894 = vmatprep.subr.mxu0 0.0
    %8895 = vmatpush1.msra.mxu0 0.0
    %8896 = vmatprep.subr.mxu0 0.0
    %8897 = vmatpush1.msra.mxu0 0.0
    %8898 = vmatprep.subr.mxu0 0.0
    %8899 = vmatpush1.msra.mxu0 0.0
    %8900 = vmatprep.subr.mxu0 0.0
    %8901 = vmatpush1.msra.mxu0 0.0
    %8902 = vmatprep.subr.mxu0 0.0
    %8903 = vmatpush1.msra.mxu0 0.0
    %8904 = vmatprep.subr.mxu0 0.0
    %8905 = vmatpush1.msra.mxu0 0.0
    %8906 = vmatprep.subr.mxu0 0.0
    %8907 = vmatpush1.msra.mxu0 0.0
    %8908 = vmatprep.subr.mxu0 0.0
    %8909 = vmatpush1.msra.mxu0 0.0
    %8910 = vmatprep.mubr.f32.mxu0 0.0
    %8911 = vmatmul.mubr.f32.gmra.mrb[0].mxu0 %v8841
    %v8912 = vpop.f32.mrb[0].mxu0
    %v8913 = vadd.f32 0.0, %v8912
    %v8914 = vpop.f32.mrb[0].mxu0
    %8915 = vdwg.mxu0
    %v8916 = vadd.f32 %v8761, %v8913
    %s8917 = scalar_lea.vmem [#allocation8], 22
    %v8918 = vld [vmem:[%s8917] sm:$0x3]
    %v8920 = vsel %vm7216, %v8918, 0
    %8922 = vmatprep.subr.mxu0 0.0
    %8923 = vmatpush1.msra.mxu0 %v7211
    %8924 = vmatprep.subr.mxu0 0.0
    %8925 = vmatpush1.msra.mxu0 %v7212
    %8926 = vmatprep.subr.mxu0 0.0
    %8927 = vmatpush1.msra.mxu0 %v7213
    %8928 = vmatprep.subr.mxu0 0.0
    %8929 = vmatpush1.msra.mxu0 %v7214
    %8930 = vmatprep.subr.mxu0 0.0
    %8931 = vmatpush1.msra.mxu0 0.0
    %8932 = vmatprep.subr.mxu0 0.0
    %8933 = vmatpush1.msra.mxu0 0.0
    %8934 = vmatprep.subr.mxu0 0.0
    %8935 = vmatpush1.msra.mxu0 0.0
    %8936 = vmatprep.subr.mxu0 0.0
    %8937 = vmatpush1.msra.mxu0 0.0
    %8938 = vmatprep.subr.mxu0 0.0
    %8939 = vmatpush1.msra.mxu0 0.0
    %8940 = vmatprep.subr.mxu0 0.0
    %8941 = vmatpush1.msra.mxu0 0.0
    %8942 = vmatprep.subr.mxu0 0.0
    %8943 = vmatpush1.msra.mxu0 0.0
    %8944 = vmatprep.subr.mxu0 0.0
    %8945 = vmatpush1.msra.mxu0 0.0
    %8946 = vmatprep.subr.mxu0 0.0
    %8947 = vmatpush1.msra.mxu0 0.0
    %8948 = vmatprep.subr.mxu0 0.0
    %8949 = vmatpush1.msra.mxu0 0.0
    %8950 = vmatprep.subr.mxu0 0.0
    %8951 = vmatpush1.msra.mxu0 0.0
    %8952 = vmatprep.subr.mxu0 0.0
    %8953 = vmatpush1.msra.mxu0 0.0
    %8954 = vmatprep.subr.mxu0 0.0
    %8955 = vmatpush1.msra.mxu0 0.0
    %8956 = vmatprep.subr.mxu0 0.0
    %8957 = vmatpush1.msra.mxu0 0.0
    %8958 = vmatprep.subr.mxu0 0.0
    %8959 = vmatpush1.msra.mxu0 0.0
    %8960 = vmatprep.subr.mxu0 0.0
    %8961 = vmatpush1.msra.mxu0 0.0
    %8962 = vmatprep.subr.mxu0 0.0
    %8963 = vmatpush1.msra.mxu0 0.0
    %8964 = vmatprep.subr.mxu0 0.0
    %8965 = vmatpush1.msra.mxu0 0.0
    %8966 = vmatprep.subr.mxu0 0.0
    %8967 = vmatpush1.msra.mxu0 0.0
    %8968 = vmatprep.subr.mxu0 0.0
    %8969 = vmatpush1.msra.mxu0 0.0
    %8970 = vmatprep.subr.mxu0 0.0
    %8971 = vmatpush1.msra.mxu0 0.0
    %8972 = vmatprep.subr.mxu0 0.0
    %8973 = vmatpush1.msra.mxu0 0.0
    %8974 = vmatprep.subr.mxu0 0.0
    %8975 = vmatpush1.msra.mxu0 0.0
    %8976 = vmatprep.subr.mxu0 0.0
    %8977 = vmatpush1.msra.mxu0 0.0
    %8978 = vmatprep.subr.mxu0 0.0
    %8979 = vmatpush1.msra.mxu0 0.0
    %8980 = vmatprep.subr.mxu0 0.0
    %8981 = vmatpush1.msra.mxu0 0.0
    %8982 = vmatprep.subr.mxu0 0.0
    %8983 = vmatpush1.msra.mxu0 0.0
    %8984 = vmatprep.subr.mxu0 0.0
    %8985 = vmatpush1.msra.mxu0 0.0
    %8986 = vmatprep.mubr.f32.mxu0 0.0
    %8987 = vmatmul.mubr.f32.gmra.mrb[0].mxu0 %v8920
    %v8988 = vpop.f32.mrb[0].mxu0
    %v8989 = vadd.f32 0.0, %v8988
    %v8990 = vpop.f32.mrb[0].mxu0
    %8991 = vdwg.mxu0
    %s8992 = scalar_lea.vmem %s9, 176
    %v8993 = vld [vmem:[%s8992] sm:$0xff]
    %v8994 = vld [vmem:[%s8992 + $0x8] sm:$0x3f]
    %v8996 = vsel %vm5611, %v8989, 0
    %v8999 = vsel %vm5624, %v8994, 0
    %9001 = vmatprep.subr.mxu0 0.0
    %9002 = vmatpush1.msra.mxu0 %v8993
    %9003 = vmatprep.subr.mxu0 0.0
    %9004 = vmatpush1.msra.mxu0 %v8999
    %9005 = vmatprep.subr.mxu0 0.0
    %9006 = vmatpush1.msra.mxu0 0.0
    %9007 = vmatprep.subr.mxu0 0.0
    %9008 = vmatpush1.msra.mxu0 0.0
    %9009 = vmatprep.subr.mxu0 0.0
    %9010 = vmatpush1.msra.mxu0 0.0
    %9011 = vmatprep.subr.mxu0 0.0
    %9012 = vmatpush1.msra.mxu0 0.0
    %9013 = vmatprep.subr.mxu0 0.0
    %9014 = vmatpush1.msra.mxu0 0.0
    %9015 = vmatprep.subr.mxu0 0.0
    %9016 = vmatpush1.msra.mxu0 0.0
    %9017 = vmatprep.subr.mxu0 0.0
    %9018 = vmatpush1.msra.mxu0 0.0
    %9019 = vmatprep.subr.mxu0 0.0
    %9020 = vmatpush1.msra.mxu0 0.0
    %9021 = vmatprep.subr.mxu0 0.0
    %9022 = vmatpush1.msra.mxu0 0.0
    %9023 = vmatprep.subr.mxu0 0.0
    %9024 = vmatpush1.msra.mxu0 0.0
    %9025 = vmatprep.subr.mxu0 0.0
    %9026 = vmatpush1.msra.mxu0 0.0
    %9027 = vmatprep.subr.mxu0 0.0
    %9028 = vmatpush1.msra.mxu0 0.0
    %9029 = vmatprep.subr.mxu0 0.0
    %9030 = vmatpush1.msra.mxu0 0.0
    %9031 = vmatprep.subr.mxu0 0.0
    %9032 = vmatpush1.msra.mxu0 0.0
    %9033 = vmatprep.subr.mxu0 0.0
    %9034 = vmatpush1.msra.mxu0 0.0
    %9035 = vmatprep.subr.mxu0 0.0
    %9036 = vmatpush1.msra.mxu0 0.0
    %9037 = vmatprep.subr.mxu0 0.0
    %9038 = vmatpush1.msra.mxu0 0.0
    %9039 = vmatprep.subr.mxu0 0.0
    %9040 = vmatpush1.msra.mxu0 0.0
    %9041 = vmatprep.subr.mxu0 0.0
    %9042 = vmatpush1.msra.mxu0 0.0
    %9043 = vmatprep.subr.mxu0 0.0
    %9044 = vmatpush1.msra.mxu0 0.0
    %9045 = vmatprep.subr.mxu0 0.0
    %9046 = vmatpush1.msra.mxu0 0.0
    %9047 = vmatprep.subr.mxu0 0.0
    %9048 = vmatpush1.msra.mxu0 0.0
    %9049 = vmatprep.subr.mxu0 0.0
    %9050 = vmatpush1.msra.mxu0 0.0
    %9051 = vmatprep.subr.mxu0 0.0
    %9052 = vmatpush1.msra.mxu0 0.0
    %9053 = vmatprep.subr.mxu0 0.0
    %9054 = vmatpush1.msra.mxu0 0.0
    %9055 = vmatprep.subr.mxu0 0.0
    %9056 = vmatpush1.msra.mxu0 0.0
    %9057 = vmatprep.subr.mxu0 0.0
    %9058 = vmatpush1.msra.mxu0 0.0
    %9059 = vmatprep.subr.mxu0 0.0
    %9060 = vmatpush1.msra.mxu0 0.0
    %9061 = vmatprep.subr.mxu0 0.0
    %9062 = vmatpush1.msra.mxu0 0.0
    %9063 = vmatprep.subr.mxu0 0.0
    %9064 = vmatpush1.msra.mxu0 0.0
    %9065 = vmatprep.mubr.f32.mxu0 0.0
    %9066 = vmatmul.mubr.f32.gmra.mrb[0].mxu0 %v8996
    %v9067 = vpop.f32.mrb[0].mxu0
    %v9068 = vadd.f32 0.0, %v9067
    %v9069 = vpop.f32.mrb[0].mxu0
    %9070 = vdwg.mxu0
    %v9071 = vadd.f32 %v8916, %v9068
    %s9072 = scalar_lea.vmem [#allocation8], 24
    %v9073 = vld [vmem:[%s9072] sm:$0x3]
    %v9075 = vsel %vm7216, %v9073, 0
    %9077 = vmatprep.subr.mxu0 0.0
    %9078 = vmatpush1.msra.mxu0 %v7211
    %9079 = vmatprep.subr.mxu0 0.0
    %9080 = vmatpush1.msra.mxu0 %v7212
    %9081 = vmatprep.subr.mxu0 0.0
    %9082 = vmatpush1.msra.mxu0 %v7213
    %9083 = vmatprep.subr.mxu0 0.0
    %9084 = vmatpush1.msra.mxu0 %v7214
    %9085 = vmatprep.subr.mxu0 0.0
    %9086 = vmatpush1.msra.mxu0 0.0
    %9087 = vmatprep.subr.mxu0 0.0
    %9088 = vmatpush1.msra.mxu0 0.0
    %9089 = vmatprep.subr.mxu0 0.0
    %9090 = vmatpush1.msra.mxu0 0.0
    %9091 = vmatprep.subr.mxu0 0.0
    %9092 = vmatpush1.msra.mxu0 0.0
    %9093 = vmatprep.subr.mxu0 0.0
    %9094 = vmatpush1.msra.mxu0 0.0
    %9095 = vmatprep.subr.mxu0 0.0
    %9096 = vmatpush1.msra.mxu0 0.0
    %9097 = vmatprep.subr.mxu0 0.0
    %9098 = vmatpush1.msra.mxu0 0.0
    %9099 = vmatprep.subr.mxu0 0.0
    %9100 = vmatpush1.msra.mxu0 0.0
    %9101 = vmatprep.subr.mxu0 0.0
    %9102 = vmatpush1.msra.mxu0 0.0
    %9103 = vmatprep.subr.mxu0 0.0
    %9104 = vmatpush1.msra.mxu0 0.0
    %9105 = vmatprep.subr.mxu0 0.0
    %9106 = vmatpush1.msra.mxu0 0.0
    %9107 = vmatprep.subr.mxu0 0.0
    %9108 = vmatpush1.msra.mxu0 0.0
    %9109 = vmatprep.subr.mxu0 0.0
    %9110 = vmatpush1.msra.mxu0 0.0
    %9111 = vmatprep.subr.mxu0 0.0
    %9112 = vmatpush1.msra.mxu0 0.0
    %9113 = vmatprep.subr.mxu0 0.0
    %9114 = vmatpush1.msra.mxu0 0.0
    %9115 = vmatprep.subr.mxu0 0.0
    %9116 = vmatpush1.msra.mxu0 0.0
    %9117 = vmatprep.subr.mxu0 0.0
    %9118 = vmatpush1.msra.mxu0 0.0
    %9119 = vmatprep.subr.mxu0 0.0
    %9120 = vmatpush1.msra.mxu0 0.0
    %9121 = vmatprep.subr.mxu0 0.0
    %9122 = vmatpush1.msra.mxu0 0.0
    %9123 = vmatprep.subr.mxu0 0.0
    %9124 = vmatpush1.msra.mxu0 0.0
    %9125 = vmatprep.subr.mxu0 0.0
    %9126 = vmatpush1.msra.mxu0 0.0
    %9127 = vmatprep.subr.mxu0 0.0
    %9128 = vmatpush1.msra.mxu0 0.0
    %9129 = vmatprep.subr.mxu0 0.0
    %9130 = vmatpush1.msra.mxu0 0.0
    %9131 = vmatprep.subr.mxu0 0.0
    %9132 = vmatpush1.msra.mxu0 0.0
    %9133 = vmatprep.subr.mxu0 0.0
    %9134 = vmatpush1.msra.mxu0 0.0
    %9135 = vmatprep.subr.mxu0 0.0
    %9136 = vmatpush1.msra.mxu0 0.0
    %9137 = vmatprep.subr.mxu0 0.0
    %9138 = vmatpush1.msra.mxu0 0.0
    %9139 = vmatprep.subr.mxu0 0.0
    %9140 = vmatpush1.msra.mxu0 0.0
    %9141 = vmatprep.mubr.f32.mxu0 0.0
    %9142 = vmatmul.mubr.f32.gmra.mrb[0].mxu0 %v9075
    %v9143 = vpop.f32.mrb[0].mxu0
    %v9144 = vadd.f32 0.0, %v9143
    %v9145 = vpop.f32.mrb[0].mxu0
    %9146 = vdwg.mxu0
    %s9147 = scalar_lea.vmem %s9, 192
    %v9148 = vld [vmem:[%s9147] sm:$0xff]
    %v9149 = vld [vmem:[%s9147 + $0x8] sm:$0x3f]
    %v9151 = vsel %vm5611, %v9144, 0
    %v9154 = vsel %vm5624, %v9149, 0
    %9156 = vmatprep.subr.mxu0 0.0
    %9157 = vmatpush1.msra.mxu0 %v9148
    %9158 = vmatprep.subr.mxu0 0.0
    %9159 = vmatpush1.msra.mxu0 %v9154
    %9160 = vmatprep.subr.mxu0 0.0
    %9161 = vmatpush1.msra.mxu0 0.0
    %9162 = vmatprep.subr.mxu0 0.0
    %9163 = vmatpush1.msra.mxu0 0.0
    %9164 = vmatprep.subr.mxu0 0.0
    %9165 = vmatpush1.msra.mxu0 0.0
    %9166 = vmatprep.subr.mxu0 0.0
    %9167 = vmatpush1.msra.mxu0 0.0
    %9168 = vmatprep.subr.mxu0 0.0
    %9169 = vmatpush1.msra.mxu0 0.0
    %9170 = vmatprep.subr.mxu0 0.0
    %9171 = vmatpush1.msra.mxu0 0.0
    %9172 = vmatprep.subr.mxu0 0.0
    %9173 = vmatpush1.msra.mxu0 0.0
    %9174 = vmatprep.subr.mxu0 0.0
    %9175 = vmatpush1.msra.mxu0 0.0
    %9176 = vmatprep.subr.mxu0 0.0
    %9177 = vmatpush1.msra.mxu0 0.0
    %9178 = vmatprep.subr.mxu0 0.0
    %9179 = vmatpush1.msra.mxu0 0.0
    %9180 = vmatprep.subr.mxu0 0.0
    %9181 = vmatpush1.msra.mxu0 0.0
    %9182 = vmatprep.subr.mxu0 0.0
    %9183 = vmatpush1.msra.mxu0 0.0
    %9184 = vmatprep.subr.mxu0 0.0
    %9185 = vmatpush1.msra.mxu0 0.0
    %9186 = vmatprep.subr.mxu0 0.0
    %9187 = vmatpush1.msra.mxu0 0.0
    %9188 = vmatprep.subr.mxu0 0.0
    %9189 = vmatpush1.msra.mxu0 0.0
    %9190 = vmatprep.subr.mxu0 0.0
    %9191 = vmatpush1.msra.mxu0 0.0
    %9192 = vmatprep.subr.mxu0 0.0
    %9193 = vmatpush1.msra.mxu0 0.0
    %9194 = vmatprep.subr.mxu0 0.0
    %9195 = vmatpush1.msra.mxu0 0.0
    %9196 = vmatprep.subr.mxu0 0.0
    %9197 = vmatpush1.msra.mxu0 0.0
    %9198 = vmatprep.subr.mxu0 0.0
    %9199 = vmatpush1.msra.mxu0 0.0
    %9200 = vmatprep.subr.mxu0 0.0
    %9201 = vmatpush1.msra.mxu0 0.0
    %9202 = vmatprep.subr.mxu0 0.0
    %9203 = vmatpush1.msra.mxu0 0.0
    %9204 = vmatprep.subr.mxu0 0.0
    %9205 = vmatpush1.msra.mxu0 0.0
    %9206 = vmatprep.subr.mxu0 0.0
    %9207 = vmatpush1.msra.mxu0 0.0
    %9208 = vmatprep.subr.mxu0 0.0
    %9209 = vmatpush1.msra.mxu0 0.0
    %9210 = vmatprep.subr.mxu0 0.0
    %9211 = vmatpush1.msra.mxu0 0.0
    %9212 = vmatprep.subr.mxu0 0.0
    %9213 = vmatpush1.msra.mxu0 0.0
    %9214 = vmatprep.subr.mxu0 0.0
    %9215 = vmatpush1.msra.mxu0 0.0
    %9216 = vmatprep.subr.mxu0 0.0
    %9217 = vmatpush1.msra.mxu0 0.0
    %9218 = vmatprep.subr.mxu0 0.0
    %9219 = vmatpush1.msra.mxu0 0.0
    %9220 = vmatprep.mubr.f32.mxu0 0.0
    %9221 = vmatmul.mubr.f32.gmra.mrb[0].mxu0 %v9151
    %v9222 = vpop.f32.mrb[0].mxu0
    %v9223 = vadd.f32 0.0, %v9222
    %v9224 = vpop.f32.mrb[0].mxu0
    %9225 = vdwg.mxu0
    %v9226 = vadd.f32 %v9071, %v9223
    %s9227 = scalar_lea.vmem [#allocation8], 26
    %v9228 = vld [vmem:[%s9227] sm:$0x3]
    %v9230 = vsel %vm7216, %v9228, 0
    %9232 = vmatprep.subr.mxu0 0.0
    %9233 = vmatpush1.msra.mxu0 %v7211
    %9234 = vmatprep.subr.mxu0 0.0
    %9235 = vmatpush1.msra.mxu0 %v7212
    %9236 = vmatprep.subr.mxu0 0.0
    %9237 = vmatpush1.msra.mxu0 %v7213
    %9238 = vmatprep.subr.mxu0 0.0
    %9239 = vmatpush1.msra.mxu0 %v7214
    %9240 = vmatprep.subr.mxu0 0.0
    %9241 = vmatpush1.msra.mxu0 0.0
    %9242 = vmatprep.subr.mxu0 0.0
    %9243 = vmatpush1.msra.mxu0 0.0
    %9244 = vmatprep.subr.mxu0 0.0
    %9245 = vmatpush1.msra.mxu0 0.0
    %9246 = vmatprep.subr.mxu0 0.0
    %9247 = vmatpush1.msra.mxu0 0.0
    %9248 = vmatprep.subr.mxu0 0.0
    %9249 = vmatpush1.msra.mxu0 0.0
    %9250 = vmatprep.subr.mxu0 0.0
    %9251 = vmatpush1.msra.mxu0 0.0
    %9252 = vmatprep.subr.mxu0 0.0
    %9253 = vmatpush1.msra.mxu0 0.0
    %9254 = vmatprep.subr.mxu0 0.0
    %9255 = vmatpush1.msra.mxu0 0.0
    %9256 = vmatprep.subr.mxu0 0.0
    %9257 = vmatpush1.msra.mxu0 0.0
    %9258 = vmatprep.subr.mxu0 0.0
    %9259 = vmatpush1.msra.mxu0 0.0
    %9260 = vmatprep.subr.mxu0 0.0
    %9261 = vmatpush1.msra.mxu0 0.0
    %9262 = vmatprep.subr.mxu0 0.0
    %9263 = vmatpush1.msra.mxu0 0.0
    %9264 = vmatprep.subr.mxu0 0.0
    %9265 = vmatpush1.msra.mxu0 0.0
    %9266 = vmatprep.subr.mxu0 0.0
    %9267 = vmatpush1.msra.mxu0 0.0
    %9268 = vmatprep.subr.mxu0 0.0
    %9269 = vmatpush1.msra.mxu0 0.0
    %9270 = vmatprep.subr.mxu0 0.0
    %9271 = vmatpush1.msra.mxu0 0.0
    %9272 = vmatprep.subr.mxu0 0.0
    %9273 = vmatpush1.msra.mxu0 0.0
    %9274 = vmatprep.subr.mxu0 0.0
    %9275 = vmatpush1.msra.mxu0 0.0
    %9276 = vmatprep.subr.mxu0 0.0
    %9277 = vmatpush1.msra.mxu0 0.0
    %9278 = vmatprep.subr.mxu0 0.0
    %9279 = vmatpush1.msra.mxu0 0.0
    %9280 = vmatprep.subr.mxu0 0.0
    %9281 = vmatpush1.msra.mxu0 0.0
    %9282 = vmatprep.subr.mxu0 0.0
    %9283 = vmatpush1.msra.mxu0 0.0
    %9284 = vmatprep.subr.mxu0 0.0
    %9285 = vmatpush1.msra.mxu0 0.0
    %9286 = vmatprep.subr.mxu0 0.0
    %9287 = vmatpush1.msra.mxu0 0.0
    %9288 = vmatprep.subr.mxu0 0.0
    %9289 = vmatpush1.msra.mxu0 0.0
    %9290 = vmatprep.subr.mxu0 0.0
    %9291 = vmatpush1.msra.mxu0 0.0
    %9292 = vmatprep.subr.mxu0 0.0
    %9293 = vmatpush1.msra.mxu0 0.0
    %9294 = vmatprep.subr.mxu0 0.0
    %9295 = vmatpush1.msra.mxu0 0.0
    %9296 = vmatprep.mubr.f32.mxu0 0.0
    %9297 = vmatmul.mubr.f32.gmra.mrb[0].mxu0 %v9230
    %v9298 = vpop.f32.mrb[0].mxu0
    %v9299 = vadd.f32 0.0, %v9298
    %v9300 = vpop.f32.mrb[0].mxu0
    %9301 = vdwg.mxu0
    %s9302 = scalar_lea.vmem %s9, 208
    %v9303 = vld [vmem:[%s9302] sm:$0xff]
    %v9304 = vld [vmem:[%s9302 + $0x8] sm:$0x3f]
    %v9306 = vsel %vm5611, %v9299, 0
    %v9309 = vsel %vm5624, %v9304, 0
    %9311 = vmatprep.subr.mxu0 0.0
    %9312 = vmatpush1.msra.mxu0 %v9303
    %9313 = vmatprep.subr.mxu0 0.0
    %9314 = vmatpush1.msra.mxu0 %v9309
    %9315 = vmatprep.subr.mxu0 0.0
    %9316 = vmatpush1.msra.mxu0 0.0
    %9317 = vmatprep.subr.mxu0 0.0
    %9318 = vmatpush1.msra.mxu0 0.0
    %9319 = vmatprep.subr.mxu0 0.0
    %9320 = vmatpush1.msra.mxu0 0.0
    %9321 = vmatprep.subr.mxu0 0.0
    %9322 = vmatpush1.msra.mxu0 0.0
    %9323 = vmatprep.subr.mxu0 0.0
    %9324 = vmatpush1.msra.mxu0 0.0
    %9325 = vmatprep.subr.mxu0 0.0
    %9326 = vmatpush1.msra.mxu0 0.0
    %9327 = vmatprep.subr.mxu0 0.0
    %9328 = vmatpush1.msra.mxu0 0.0
    %9329 = vmatprep.subr.mxu0 0.0
    %9330 = vmatpush1.msra.mxu0 0.0
    %9331 = vmatprep.subr.mxu0 0.0
    %9332 = vmatpush1.msra.mxu0 0.0
    %9333 = vmatprep.subr.mxu0 0.0
    %9334 = vmatpush1.msra.mxu0 0.0
    %9335 = vmatprep.subr.mxu0 0.0
    %9336 = vmatpush1.msra.mxu0 0.0
    %9337 = vmatprep.subr.mxu0 0.0
    %9338 = vmatpush1.msra.mxu0 0.0
    %9339 = vmatprep.subr.mxu0 0.0
    %9340 = vmatpush1.msra.mxu0 0.0
    %9341 = vmatprep.subr.mxu0 0.0
    %9342 = vmatpush1.msra.mxu0 0.0
    %9343 = vmatprep.subr.mxu0 0.0
    %9344 = vmatpush1.msra.mxu0 0.0
    %9345 = vmatprep.subr.mxu0 0.0
    %9346 = vmatpush1.msra.mxu0 0.0
    %9347 = vmatprep.subr.mxu0 0.0
    %9348 = vmatpush1.msra.mxu0 0.0
    %9349 = vmatprep.subr.mxu0 0.0
    %9350 = vmatpush1.msra.mxu0 0.0
    %9351 = vmatprep.subr.mxu0 0.0
    %9352 = vmatpush1.msra.mxu0 0.0
    %9353 = vmatprep.subr.mxu0 0.0
    %9354 = vmatpush1.msra.mxu0 0.0
    %9355 = vmatprep.subr.mxu0 0.0
    %9356 = vmatpush1.msra.mxu0 0.0
    %9357 = vmatprep.subr.mxu0 0.0
    %9358 = vmatpush1.msra.mxu0 0.0
    %9359 = vmatprep.subr.mxu0 0.0
    %9360 = vmatpush1.msra.mxu0 0.0
    %9361 = vmatprep.subr.mxu0 0.0
    %9362 = vmatpush1.msra.mxu0 0.0
    %9363 = vmatprep.subr.mxu0 0.0
    %9364 = vmatpush1.msra.mxu0 0.0
    %9365 = vmatprep.subr.mxu0 0.0
    %9366 = vmatpush1.msra.mxu0 0.0
    %9367 = vmatprep.subr.mxu0 0.0
    %9368 = vmatpush1.msra.mxu0 0.0
    %9369 = vmatprep.subr.mxu0 0.0
    %9370 = vmatpush1.msra.mxu0 0.0
    %9371 = vmatprep.subr.mxu0 0.0
    %9372 = vmatpush1.msra.mxu0 0.0
    %9373 = vmatprep.subr.mxu0 0.0
    %9374 = vmatpush1.msra.mxu0 0.0
    %9375 = vmatprep.mubr.f32.mxu0 0.0
    %9376 = vmatmul.mubr.f32.gmra.mrb[0].mxu0 %v9306
    %v9377 = vpop.f32.mrb[0].mxu0
    %v9378 = vadd.f32 0.0, %v9377
    %v9379 = vpop.f32.mrb[0].mxu0
    %9380 = vdwg.mxu0
    %v9381 = vadd.f32 %v9226, %v9378
    %s9382 = scalar_lea.vmem [#allocation8], 28
    %v9383 = vld [vmem:[%s9382] sm:$0x3]
    %v9385 = vsel %vm7216, %v9383, 0
    %9387 = vmatprep.subr.mxu0 0.0
    %9388 = vmatpush1.msra.mxu0 %v7211
    %9389 = vmatprep.subr.mxu0 0.0
    %9390 = vmatpush1.msra.mxu0 %v7212
    %9391 = vmatprep.subr.mxu0 0.0
    %9392 = vmatpush1.msra.mxu0 %v7213
    %9393 = vmatprep.subr.mxu0 0.0
    %9394 = vmatpush1.msra.mxu0 %v7214
    %9395 = vmatprep.subr.mxu0 0.0
    %9396 = vmatpush1.msra.mxu0 0.0
    %9397 = vmatprep.subr.mxu0 0.0
    %9398 = vmatpush1.msra.mxu0 0.0
    %9399 = vmatprep.subr.mxu0 0.0
    %9400 = vmatpush1.msra.mxu0 0.0
    %9401 = vmatprep.subr.mxu0 0.0
    %9402 = vmatpush1.msra.mxu0 0.0
    %9403 = vmatprep.subr.mxu0 0.0
    %9404 = vmatpush1.msra.mxu0 0.0
    %9405 = vmatprep.subr.mxu0 0.0
    %9406 = vmatpush1.msra.mxu0 0.0
    %9407 = vmatprep.subr.mxu0 0.0
    %9408 = vmatpush1.msra.mxu0 0.0
    %9409 = vmatprep.subr.mxu0 0.0
    %9410 = vmatpush1.msra.mxu0 0.0
    %9411 = vmatprep.subr.mxu0 0.0
    %9412 = vmatpush1.msra.mxu0 0.0
    %9413 = vmatprep.subr.mxu0 0.0
    %9414 = vmatpush1.msra.mxu0 0.0
    %9415 = vmatprep.subr.mxu0 0.0
    %9416 = vmatpush1.msra.mxu0 0.0
    %9417 = vmatprep.subr.mxu0 0.0
    %9418 = vmatpush1.msra.mxu0 0.0
    %9419 = vmatprep.subr.mxu0 0.0
    %9420 = vmatpush1.msra.mxu0 0.0
    %9421 = vmatprep.subr.mxu0 0.0
    %9422 = vmatpush1.msra.mxu0 0.0
    %9423 = vmatprep.subr.mxu0 0.0
    %9424 = vmatpush1.msra.mxu0 0.0
    %9425 = vmatprep.subr.mxu0 0.0
    %9426 = vmatpush1.msra.mxu0 0.0
    %9427 = vmatprep.subr.mxu0 0.0
    %9428 = vmatpush1.msra.mxu0 0.0
    %9429 = vmatprep.subr.mxu0 0.0
    %9430 = vmatpush1.msra.mxu0 0.0
    %9431 = vmatprep.subr.mxu0 0.0
    %9432 = vmatpush1.msra.mxu0 0.0
    %9433 = vmatprep.subr.mxu0 0.0
    %9434 = vmatpush1.msra.mxu0 0.0
    %9435 = vmatprep.subr.mxu0 0.0
    %9436 = vmatpush1.msra.mxu0 0.0
    %9437 = vmatprep.subr.mxu0 0.0
    %9438 = vmatpush1.msra.mxu0 0.0
    %9439 = vmatprep.subr.mxu0 0.0
    %9440 = vmatpush1.msra.mxu0 0.0
    %9441 = vmatprep.subr.mxu0 0.0
    %9442 = vmatpush1.msra.mxu0 0.0
    %9443 = vmatprep.subr.mxu0 0.0
    %9444 = vmatpush1.msra.mxu0 0.0
    %9445 = vmatprep.subr.mxu0 0.0
    %9446 = vmatpush1.msra.mxu0 0.0
    %9447 = vmatprep.subr.mxu0 0.0
    %9448 = vmatpush1.msra.mxu0 0.0
    %9449 = vmatprep.subr.mxu0 0.0
    %9450 = vmatpush1.msra.mxu0 0.0
    %9451 = vmatprep.mubr.f32.mxu0 0.0
    %9452 = vmatmul.mubr.f32.gmra.mrb[0].mxu0 %v9385
    %v9453 = vpop.f32.mrb[0].mxu0
    %v9454 = vadd.f32 0.0, %v9453
    %v9455 = vpop.f32.mrb[0].mxu0
    %9456 = vdwg.mxu0
    %s9457 = scalar_lea.vmem %s9, 224
    %v9458 = vld [vmem:[%s9457] sm:$0xff]
    %v9459 = vld [vmem:[%s9457 + $0x8] sm:$0x3f]
    %v9461 = vsel %vm5611, %v9454, 0
    %v9464 = vsel %vm5624, %v9459, 0
    %9466 = vmatprep.subr.mxu0 0.0
    %9467 = vmatpush1.msra.mxu0 %v9458
    %9468 = vmatprep.subr.mxu0 0.0
    %9469 = vmatpush1.msra.mxu0 %v9464
    %9470 = vmatprep.subr.mxu0 0.0
    %9471 = vmatpush1.msra.mxu0 0.0
    %9472 = vmatprep.subr.mxu0 0.0
    %9473 = vmatpush1.msra.mxu0 0.0
    %9474 = vmatprep.subr.mxu0 0.0
    %9475 = vmatpush1.msra.mxu0 0.0
    %9476 = vmatprep.subr.mxu0 0.0
    %9477 = vmatpush1.msra.mxu0 0.0
    %9478 = vmatprep.subr.mxu0 0.0
    %9479 = vmatpush1.msra.mxu0 0.0
    %9480 = vmatprep.subr.mxu0 0.0
    %9481 = vmatpush1.msra.mxu0 0.0
    %9482 = vmatprep.subr.mxu0 0.0
    %9483 = vmatpush1.msra.mxu0 0.0
    %9484 = vmatprep.subr.mxu0 0.0
    %9485 = vmatpush1.msra.mxu0 0.0
    %9486 = vmatprep.subr.mxu0 0.0
    %9487 = vmatpush1.msra.mxu0 0.0
    %9488 = vmatprep.subr.mxu0 0.0
    %9489 = vmatpush1.msra.mxu0 0.0
    %9490 = vmatprep.subr.mxu0 0.0
    %9491 = vmatpush1.msra.mxu0 0.0
    %9492 = vmatprep.subr.mxu0 0.0
    %9493 = vmatpush1.msra.mxu0 0.0
    %9494 = vmatprep.subr.mxu0 0.0
    %9495 = vmatpush1.msra.mxu0 0.0
    %9496 = vmatprep.subr.mxu0 0.0
    %9497 = vmatpush1.msra.mxu0 0.0
    %9498 = vmatprep.subr.mxu0 0.0
    %9499 = vmatpush1.msra.mxu0 0.0
    %9500 = vmatprep.subr.mxu0 0.0
    %9501 = vmatpush1.msra.mxu0 0.0
    %9502 = vmatprep.subr.mxu0 0.0
    %9503 = vmatpush1.msra.mxu0 0.0
    %9504 = vmatprep.subr.mxu0 0.0
    %9505 = vmatpush1.msra.mxu0 0.0
    %9506 = vmatprep.subr.mxu0 0.0
    %9507 = vmatpush1.msra.mxu0 0.0
    %9508 = vmatprep.subr.mxu0 0.0
    %9509 = vmatpush1.msra.mxu0 0.0
    %9510 = vmatprep.subr.mxu0 0.0
    %9511 = vmatpush1.msra.mxu0 0.0
    %9512 = vmatprep.subr.mxu0 0.0
    %9513 = vmatpush1.msra.mxu0 0.0
    %9514 = vmatprep.subr.mxu0 0.0
    %9515 = vmatpush1.msra.mxu0 0.0
    %9516 = vmatprep.subr.mxu0 0.0
    %9517 = vmatpush1.msra.mxu0 0.0
    %9518 = vmatprep.subr.mxu0 0.0
    %9519 = vmatpush1.msra.mxu0 0.0
    %9520 = vmatprep.subr.mxu0 0.0
    %9521 = vmatpush1.msra.mxu0 0.0
    %9522 = vmatprep.subr.mxu0 0.0
    %9523 = vmatpush1.msra.mxu0 0.0
    %9524 = vmatprep.subr.mxu0 0.0
    %9525 = vmatpush1.msra.mxu0 0.0
    %9526 = vmatprep.subr.mxu0 0.0
    %9527 = vmatpush1.msra.mxu0 0.0
    %9528 = vmatprep.subr.mxu0 0.0
    %9529 = vmatpush1.msra.mxu0 0.0
    %9530 = vmatprep.mubr.f32.mxu0 0.0
    %9531 = vmatmul.mubr.f32.gmra.mrb[0].mxu0 %v9461
    %v9532 = vpop.f32.mrb[0].mxu0
    %v9533 = vadd.f32 0.0, %v9532
    %v9534 = vpop.f32.mrb[0].mxu0
    %9535 = vdwg.mxu0
    %v9536 = vadd.f32 %v9381, %v9533
    %s9537 = scalar_lea.vmem [#allocation8], 30
    %v9538 = vld [vmem:[%s9537] sm:$0x3]
    %v9540 = vsel %vm7216, %v9538, 0
    %9542 = vmatprep.subr.mxu0 0.0
    %9543 = vmatpush1.msra.mxu0 %v7211
    %9544 = vmatprep.subr.mxu0 0.0
    %9545 = vmatpush1.msra.mxu0 %v7212
    %9546 = vmatprep.subr.mxu0 0.0
    %9547 = vmatpush1.msra.mxu0 %v7213
    %9548 = vmatprep.subr.mxu0 0.0
    %9549 = vmatpush1.msra.mxu0 %v7214
    %9550 = vmatprep.subr.mxu0 0.0
    %9551 = vmatpush1.msra.mxu0 0.0
    %9552 = vmatprep.subr.mxu0 0.0
    %9553 = vmatpush1.msra.mxu0 0.0
    %9554 = vmatprep.subr.mxu0 0.0
    %9555 = vmatpush1.msra.mxu0 0.0
    %9556 = vmatprep.subr.mxu0 0.0
    %9557 = vmatpush1.msra.mxu0 0.0
    %9558 = vmatprep.subr.mxu0 0.0
    %9559 = vmatpush1.msra.mxu0 0.0
    %9560 = vmatprep.subr.mxu0 0.0
    %9561 = vmatpush1.msra.mxu0 0.0
    %9562 = vmatprep.subr.mxu0 0.0
    %9563 = vmatpush1.msra.mxu0 0.0
    %9564 = vmatprep.subr.mxu0 0.0
    %9565 = vmatpush1.msra.mxu0 0.0
    %9566 = vmatprep.subr.mxu0 0.0
    %9567 = vmatpush1.msra.mxu0 0.0
    %9568 = vmatprep.subr.mxu0 0.0
    %9569 = vmatpush1.msra.mxu0 0.0
    %9570 = vmatprep.subr.mxu0 0.0
    %9571 = vmatpush1.msra.mxu0 0.0
    %9572 = vmatprep.subr.mxu0 0.0
    %9573 = vmatpush1.msra.mxu0 0.0
    %9574 = vmatprep.subr.mxu0 0.0
    %9575 = vmatpush1.msra.mxu0 0.0
    %9576 = vmatprep.subr.mxu0 0.0
    %9577 = vmatpush1.msra.mxu0 0.0
    %9578 = vmatprep.subr.mxu0 0.0
    %9579 = vmatpush1.msra.mxu0 0.0
    %9580 = vmatprep.subr.mxu0 0.0
    %9581 = vmatpush1.msra.mxu0 0.0
    %9582 = vmatprep.subr.mxu0 0.0
    %9583 = vmatpush1.msra.mxu0 0.0
    %9584 = vmatprep.subr.mxu0 0.0
    %9585 = vmatpush1.msra.mxu0 0.0
    %9586 = vmatprep.subr.mxu0 0.0
    %9587 = vmatpush1.msra.mxu0 0.0
    %9588 = vmatprep.subr.mxu0 0.0
    %9589 = vmatpush1.msra.mxu0 0.0
    %9590 = vmatprep.subr.mxu0 0.0
    %9591 = vmatpush1.msra.mxu0 0.0
    %9592 = vmatprep.subr.mxu0 0.0
    %9593 = vmatpush1.msra.mxu0 0.0
    %9594 = vmatprep.subr.mxu0 0.0
    %9595 = vmatpush1.msra.mxu0 0.0
    %9596 = vmatprep.subr.mxu0 0.0
    %9597 = vmatpush1.msra.mxu0 0.0
    %9598 = vmatprep.subr.mxu0 0.0
    %9599 = vmatpush1.msra.mxu0 0.0
    %9600 = vmatprep.subr.mxu0 0.0
    %9601 = vmatpush1.msra.mxu0 0.0
    %9602 = vmatprep.subr.mxu0 0.0
    %9603 = vmatpush1.msra.mxu0 0.0
    %9604 = vmatprep.subr.mxu0 0.0
    %9605 = vmatpush1.msra.mxu0 0.0
    %9606 = vmatprep.mubr.f32.mxu0 0.0
    %9607 = vmatmul.mubr.f32.gmra.mrb[0].mxu0 %v9540
    %v9608 = vpop.f32.mrb[0].mxu0
    %v9609 = vadd.f32 0.0, %v9608
    %v9610 = vpop.f32.mrb[0].mxu0
    %9611 = vdwg.mxu0
    %s9612 = scalar_lea.vmem %s9, 240
    %v9613 = vld [vmem:[%s9612] sm:$0xff]
    %v9614 = vld [vmem:[%s9612 + $0x8] sm:$0x3f]
    %v9616 = vsel %vm5611, %v9609, 0
    %v9619 = vsel %vm5624, %v9614, 0
    %9621 = vmatprep.subr.mxu0 0.0
    %9622 = vmatpush1.msra.mxu0 %v9613
    %9623 = vmatprep.subr.mxu0 0.0
    %9624 = vmatpush1.msra.mxu0 %v9619
    %9625 = vmatprep.subr.mxu0 0.0
    %9626 = vmatpush1.msra.mxu0 0.0
    %9627 = vmatprep.subr.mxu0 0.0
    %9628 = vmatpush1.msra.mxu0 0.0
    %9629 = vmatprep.subr.mxu0 0.0
    %9630 = vmatpush1.msra.mxu0 0.0
    %9631 = vmatprep.subr.mxu0 0.0
    %9632 = vmatpush1.msra.mxu0 0.0
    %9633 = vmatprep.subr.mxu0 0.0
    %9634 = vmatpush1.msra.mxu0 0.0
    %9635 = vmatprep.subr.mxu0 0.0
    %9636 = vmatpush1.msra.mxu0 0.0
    %9637 = vmatprep.subr.mxu0 0.0
    %9638 = vmatpush1.msra.mxu0 0.0
    %9639 = vmatprep.subr.mxu0 0.0
    %9640 = vmatpush1.msra.mxu0 0.0
    %9641 = vmatprep.subr.mxu0 0.0
    %9642 = vmatpush1.msra.mxu0 0.0
    %9643 = vmatprep.subr.mxu0 0.0
    %9644 = vmatpush1.msra.mxu0 0.0
    %9645 = vmatprep.subr.mxu0 0.0
    %9646 = vmatpush1.msra.mxu0 0.0
    %9647 = vmatprep.subr.mxu0 0.0
    %9648 = vmatpush1.msra.mxu0 0.0
    %9649 = vmatprep.subr.mxu0 0.0
    %9650 = vmatpush1.msra.mxu0 0.0
    %9651 = vmatprep.subr.mxu0 0.0
    %9652 = vmatpush1.msra.mxu0 0.0
    %9653 = vmatprep.subr.mxu0 0.0
    %9654 = vmatpush1.msra.mxu0 0.0
    %9655 = vmatprep.subr.mxu0 0.0
    %9656 = vmatpush1.msra.mxu0 0.0
    %9657 = vmatprep.subr.mxu0 0.0
    %9658 = vmatpush1.msra.mxu0 0.0
    %9659 = vmatprep.subr.mxu0 0.0
    %9660 = vmatpush1.msra.mxu0 0.0
    %9661 = vmatprep.subr.mxu0 0.0
    %9662 = vmatpush1.msra.mxu0 0.0
    %9663 = vmatprep.subr.mxu0 0.0
    %9664 = vmatpush1.msra.mxu0 0.0
    %9665 = vmatprep.subr.mxu0 0.0
    %9666 = vmatpush1.msra.mxu0 0.0
    %9667 = vmatprep.subr.mxu0 0.0
    %9668 = vmatpush1.msra.mxu0 0.0
    %9669 = vmatprep.subr.mxu0 0.0
    %9670 = vmatpush1.msra.mxu0 0.0
    %9671 = vmatprep.subr.mxu0 0.0
    %9672 = vmatpush1.msra.mxu0 0.0
    %9673 = vmatprep.subr.mxu0 0.0
    %9674 = vmatpush1.msra.mxu0 0.0
    %9675 = vmatprep.subr.mxu0 0.0
    %9676 = vmatpush1.msra.mxu0 0.0
    %9677 = vmatprep.subr.mxu0 0.0
    %9678 = vmatpush1.msra.mxu0 0.0
    %9679 = vmatprep.subr.mxu0 0.0
    %9680 = vmatpush1.msra.mxu0 0.0
    %9681 = vmatprep.subr.mxu0 0.0
    %9682 = vmatpush1.msra.mxu0 0.0
    %9683 = vmatprep.subr.mxu0 0.0
    %9684 = vmatpush1.msra.mxu0 0.0
    %9685 = vmatprep.mubr.f32.mxu0 0.0
    %9686 = vmatmul.mubr.f32.gmra.mrb[0].mxu0 %v9616
    %v9687 = vpop.f32.mrb[0].mxu0
    %v9688 = vadd.f32 0.0, %v9687
    %v9689 = vpop.f32.mrb[0].mxu0
    %9690 = vdwg.mxu0
    %v9691 = vadd.f32 %v9536, %v9688
    %v9692 = vld [vmem:[#allocation16] sm:$0x1]
    %v9694 = vlaneseq
    %v9695 = vshrl.u32 %v9694, 7
    %v9696 = vsub.s32 0, %v9695
    %v9697 = vrot.slane %v9692, %v9696
    %v9699 = vadd.f32 %v9691, %v9697
    %v9700 = vmax.f32 %v9699, 0.0
    %v9701 = vld [vmem:[#allocation2] sm:$0x3]
    %v9702 = vld [vmem:[#allocation17] sm:$0x7f]
    %v9703 = vld [vmem:[#allocation19] sm:$0x1]
    %v9705 = vlaneseq
    %v9706 = vshrl.u32 %v9705, 7
    %v9707 = vsub.s32 0, %v9706
    %v9708 = vrot.slane %v9703, %v9707
    %vm9710 = vcmask 56320
    %v9712 = vsel %vm9710, %v9701, 0
    %vm9714 = vcmask 1046528
    %v9716 = vsel %vm9714, %v9702, 0
    %9718 = vmatprep.subr.mxu0 0.0
    %9719 = vmatpush1.msra.mxu0 %v9716
    %9720 = vmatprep.subr.mxu0 0.0
    %9721 = vmatpush1.msra.mxu0 0.0
    %9722 = vmatprep.subr.mxu0 0.0
    %9723 = vmatpush1.msra.mxu0 0.0
    %9724 = vmatprep.subr.mxu0 0.0
    %9725 = vmatpush1.msra.mxu0 0.0
    %9726 = vmatprep.subr.mxu0 0.0
    %9727 = vmatpush1.msra.mxu0 0.0
    %9728 = vmatprep.subr.mxu0 0.0
    %9729 = vmatpush1.msra.mxu0 0.0
    %9730 = vmatprep.subr.mxu0 0.0
    %9731 = vmatpush1.msra.mxu0 0.0
    %9732 = vmatprep.subr.mxu0 0.0
    %9733 = vmatpush1.msra.mxu0 0.0
    %9734 = vmatprep.subr.mxu0 0.0
    %9735 = vmatpush1.msra.mxu0 0.0
    %9736 = vmatprep.subr.mxu0 0.0
    %9737 = vmatpush1.msra.mxu0 0.0
    %9738 = vmatprep.subr.mxu0 0.0
    %9739 = vmatpush1.msra.mxu0 0.0
    %9740 = vmatprep.subr.mxu0 0.0
    %9741 = vmatpush1.msra.mxu0 0.0
    %9742 = vmatprep.subr.mxu0 0.0
    %9743 = vmatpush1.msra.mxu0 0.0
    %9744 = vmatprep.subr.mxu0 0.0
    %9745 = vmatpush1.msra.mxu0 0.0
    %9746 = vmatprep.subr.mxu0 0.0
    %9747 = vmatpush1.msra.mxu0 0.0
    %9748 = vmatprep.subr.mxu0 0.0
    %9749 = vmatpush1.msra.mxu0 0.0
    %9750 = vmatprep.subr.mxu0 0.0
    %9751 = vmatpush1.msra.mxu0 0.0
    %9752 = vmatprep.subr.mxu0 0.0
    %9753 = vmatpush1.msra.mxu0 0.0
    %9754 = vmatprep.subr.mxu0 0.0
    %9755 = vmatpush1.msra.mxu0 0.0
    %9756 = vmatprep.subr.mxu0 0.0
    %9757 = vmatpush1.msra.mxu0 0.0
    %9758 = vmatprep.subr.mxu0 0.0
    %9759 = vmatpush1.msra.mxu0 0.0
    %9760 = vmatprep.subr.mxu0 0.0
    %9761 = vmatpush1.msra.mxu0 0.0
    %9762 = vmatprep.subr.mxu0 0.0
    %9763 = vmatpush1.msra.mxu0 0.0
    %9764 = vmatprep.subr.mxu0 0.0
    %9765 = vmatpush1.msra.mxu0 0.0
    %9766 = vmatprep.subr.mxu0 0.0
    %9767 = vmatpush1.msra.mxu0 0.0
    %9768 = vmatprep.subr.mxu0 0.0
    %9769 = vmatpush1.msra.mxu0 0.0
    %9770 = vmatprep.subr.mxu0 0.0
    %9771 = vmatpush1.msra.mxu0 0.0
    %9772 = vmatprep.subr.mxu0 0.0
    %9773 = vmatpush1.msra.mxu0 0.0
    %9774 = vmatprep.subr.mxu0 0.0
    %9775 = vmatpush1.msra.mxu0 0.0
    %9776 = vmatprep.subr.mxu0 0.0
    %9777 = vmatpush1.msra.mxu0 0.0
    %9778 = vmatprep.subr.mxu0 0.0
    %9779 = vmatpush1.msra.mxu0 0.0
    %9780 = vmatprep.subr.mxu0 0.0
    %9781 = vmatpush1.msra.mxu0 0.0
    %9782 = vmatprep.mubr.f32.mxu0 0.0
    %9783 = vmatmul.mubr.f32.gmra.mrb[0].mxu0 %v9712
    %v9784 = vpop.f32.mrb[0].mxu0
    %v9785 = vadd.f32 %v9708, %v9784
    %v9786 = vpop.f32.mrb[0].mxu0
    %9787 = vdwg.mxu0
    %v9788 = vld [vmem:[%s13] sm:$0xff]
    %v9789 = vld [vmem:[%s13 + $0x8] sm:$0xff]
    %v9790 = vld [vmem:[%s13 + $0x10] sm:$0xff]
    %v9791 = vld [vmem:[%s13 + $0x18] sm:$0xff]
    %v9792 = vld [vmem:[%s14] sm:$0xff]
    %v9793 = vld [vmem:[%s14 + $0x8] sm:$0xff]
    %v9794 = vld [vmem:[%s14 + $0x10] sm:$0xff]
    %v9795 = vld [vmem:[%s14 + $0x18] sm:$0xff]
    %v9797 = vsel %vm7216, %v9785, 0
    %9799 = vmatprep.subr.mxu0 0.0
    %9800 = vmatpush1.msra.mxu0 %v9792
    %9801 = vmatprep.subr.mxu0 0.0
    %9802 = vmatpush1.msra.mxu0 %v9793
    %9803 = vmatprep.subr.mxu0 0.0
    %9804 = vmatpush1.msra.mxu0 %v9794
    %9805 = vmatprep.subr.mxu0 0.0
    %9806 = vmatpush1.msra.mxu0 %v9795
    %9807 = vmatprep.subr.mxu0 0.0
    %9808 = vmatpush1.msra.mxu0 0.0
    %9809 = vmatprep.subr.mxu0 0.0
    %9810 = vmatpush1.msra.mxu0 0.0
    %9811 = vmatprep.subr.mxu0 0.0
    %9812 = vmatpush1.msra.mxu0 0.0
    %9813 = vmatprep.subr.mxu0 0.0
    %9814 = vmatpush1.msra.mxu0 0.0
    %9815 = vmatprep.subr.mxu0 0.0
    %9816 = vmatpush1.msra.mxu0 0.0
    %9817 = vmatprep.subr.mxu0 0.0
    %9818 = vmatpush1.msra.mxu0 0.0
    %9819 = vmatprep.subr.mxu0 0.0
    %9820 = vmatpush1.msra.mxu0 0.0
    %9821 = vmatprep.subr.mxu0 0.0
    %9822 = vmatpush1.msra.mxu0 0.0
    %9823 = vmatprep.subr.mxu0 0.0
    %9824 = vmatpush1.msra.mxu0 0.0
    %9825 = vmatprep.subr.mxu0 0.0
    %9826 = vmatpush1.msra.mxu0 0.0
    %9827 = vmatprep.subr.mxu0 0.0
    %9828 = vmatpush1.msra.mxu0 0.0
    %9829 = vmatprep.subr.mxu0 0.0
    %9830 = vmatpush1.msra.mxu0 0.0
    %9831 = vmatprep.subr.mxu0 0.0
    %9832 = vmatpush1.msra.mxu0 0.0
    %9833 = vmatprep.subr.mxu0 0.0
    %9834 = vmatpush1.msra.mxu0 0.0
    %9835 = vmatprep.subr.mxu0 0.0
    %9836 = vmatpush1.msra.mxu0 0.0
    %9837 = vmatprep.subr.mxu0 0.0
    %9838 = vmatpush1.msra.mxu0 0.0
    %9839 = vmatprep.subr.mxu0 0.0
    %9840 = vmatpush1.msra.mxu0 0.0
    %9841 = vmatprep.subr.mxu0 0.0
    %9842 = vmatpush1.msra.mxu0 0.0
    %9843 = vmatprep.subr.mxu0 0.0
    %9844 = vmatpush1.msra.mxu0 0.0
    %9845 = vmatprep.subr.mxu0 0.0
    %9846 = vmatpush1.msra.mxu0 0.0
    %9847 = vmatprep.subr.mxu0 0.0
    %9848 = vmatpush1.msra.mxu0 0.0
    %9849 = vmatprep.subr.mxu0 0.0
    %9850 = vmatpush1.msra.mxu0 0.0
    %9851 = vmatprep.subr.mxu0 0.0
    %9852 = vmatpush1.msra.mxu0 0.0
    %9853 = vmatprep.subr.mxu0 0.0
    %9854 = vmatpush1.msra.mxu0 0.0
    %9855 = vmatprep.subr.mxu0 0.0
    %9856 = vmatpush1.msra.mxu0 0.0
    %9857 = vmatprep.subr.mxu0 0.0
    %9858 = vmatpush1.msra.mxu0 0.0
    %9859 = vmatprep.subr.mxu0 0.0
    %9860 = vmatpush1.msra.mxu0 0.0
    %9861 = vmatprep.subr.mxu0 0.0
    %9862 = vmatpush1.msra.mxu0 0.0
    %9863 = vmatprep.mubr.f32.mxu0 0.0
    %9864 = vmatmul.mubr.f32.gmra.mrb[0].mxu0 %v9797
    %v9865 = vpop.f32.mrb[0].mxu0
    %v9866 = vadd.f32 0.0, %v9865
    %v9867 = vpop.f32.mrb[0].mxu0
    %9868 = vdwg.mxu0
    %v9870 = vsel %vm7216, %v9700, 0
    %9872 = vmatprep.subr.mxu0 0.0
    %9873 = vmatpush1.msra.mxu0 %v9788
    %9874 = vmatprep.subr.mxu0 0.0
    %9875 = vmatpush1.msra.mxu0 %v9789
    %9876 = vmatprep.subr.mxu0 0.0
    %9877 = vmatpush1.msra.mxu0 %v9790
    %9878 = vmatprep.subr.mxu0 0.0
    %9879 = vmatpush1.msra.mxu0 %v9791
    %9880 = vmatprep.subr.mxu0 0.0
    %9881 = vmatpush1.msra.mxu0 0.0
    %9882 = vmatprep.subr.mxu0 0.0
    %9883 = vmatpush1.msra.mxu0 0.0
    %9884 = vmatprep.subr.mxu0 0.0
    %9885 = vmatpush1.msra.mxu0 0.0
    %9886 = vmatprep.subr.mxu0 0.0
    %9887 = vmatpush1.msra.mxu0 0.0
    %9888 = vmatprep.subr.mxu0 0.0
    %9889 = vmatpush1.msra.mxu0 0.0
    %9890 = vmatprep.subr.mxu0 0.0
    %9891 = vmatpush1.msra.mxu0 0.0
    %9892 = vmatprep.subr.mxu0 0.0
    %9893 = vmatpush1.msra.mxu0 0.0
    %9894 = vmatprep.subr.mxu0 0.0
    %9895 = vmatpush1.msra.mxu0 0.0
    %9896 = vmatprep.subr.mxu0 0.0
    %9897 = vmatpush1.msra.mxu0 0.0
    %9898 = vmatprep.subr.mxu0 0.0
    %9899 = vmatpush1.msra.mxu0 0.0
    %9900 = vmatprep.subr.mxu0 0.0
    %9901 = vmatpush1.msra.mxu0 0.0
    %9902 = vmatprep.subr.mxu0 0.0
    %9903 = vmatpush1.msra.mxu0 0.0
    %9904 = vmatprep.subr.mxu0 0.0
    %9905 = vmatpush1.msra.mxu0 0.0
    %9906 = vmatprep.subr.mxu0 0.0
    %9907 = vmatpush1.msra.mxu0 0.0
    %9908 = vmatprep.subr.mxu0 0.0
    %9909 = vmatpush1.msra.mxu0 0.0
    %9910 = vmatprep.subr.mxu0 0.0
    %9911 = vmatpush1.msra.mxu0 0.0
    %9912 = vmatprep.subr.mxu0 0.0
    %9913 = vmatpush1.msra.mxu0 0.0
    %9914 = vmatprep.subr.mxu0 0.0
    %9915 = vmatpush1.msra.mxu0 0.0
    %9916 = vmatprep.subr.mxu0 0.0
    %9917 = vmatpush1.msra.mxu0 0.0
    %9918 = vmatprep.subr.mxu0 0.0
    %9919 = vmatpush1.msra.mxu0 0.0
    %9920 = vmatprep.subr.mxu0 0.0
    %9921 = vmatpush1.msra.mxu0 0.0
    %9922 = vmatprep.subr.mxu0 0.0
    %9923 = vmatpush1.msra.mxu0 0.0
    %9924 = vmatprep.subr.mxu0 0.0
    %9925 = vmatpush1.msra.mxu0 0.0
    %9926 = vmatprep.subr.mxu0 0.0
    %9927 = vmatpush1.msra.mxu0 0.0
    %9928 = vmatprep.subr.mxu0 0.0
    %9929 = vmatpush1.msra.mxu0 0.0
    %9930 = vmatprep.subr.mxu0 0.0
    %9931 = vmatpush1.msra.mxu0 0.0
    %9932 = vmatprep.subr.mxu0 0.0
    %9933 = vmatpush1.msra.mxu0 0.0
    %9934 = vmatprep.subr.mxu0 0.0
    %9935 = vmatpush1.msra.mxu0 0.0
    %9936 = vmatprep.mubr.f32.mxu0 0.0
    %9937 = vmatmul.mubr.f32.gmra.mrb[0].mxu0 %v9870
    %v9938 = vpop.f32.mrb[0].mxu0
    %v9939 = vadd.f32 %v9866, %v9938
    %v9940 = vpop.f32.mrb[0].mxu0
    %9941 = vdwg.mxu0
    %v9942 = vld [vmem:[#allocation20] sm:$0x1]
    %v9944 = vlaneseq
    %v9945 = vshrl.u32 %v9944, 7
    %v9946 = vsub.s32 0, %v9945
    %v9947 = vrot.slane %v9942, %v9946
    %v9949 = vadd.f32 %v9939, %v9947
    %vm9950 = vcmask 25600
    %9951 = vst.msk [vmem:[#allocation22] sm:$0x3] %vm9950, %v9949
    // Predicated region
    $region114: #{forward.1} parent=1 // pred_check
      _
    $region115: #{forward.1} parent=1 // pred_check_branch
      %9953 = sbr.rel (0) target = $region117
    $region116: #{forward.1} parent=1 // pred_region
      %s9955 = ssub.s32 32, 32
      %9956 = vsyncadd [#allocation4], %s9955
      %s9958 = sshll.u32 [#allocation22], 4
      %s9959 = int_to_ptr.vmem [resolvable:$true] %s9958
      %9961 = dma.vmem_to_hbm [thread:$0]  %s9959, 32, %s16, [#allocation4]
    $region117: #{forward.1} parent=1 // pred_fallthru
      _
    // Predicated region
    $region118: #{forward.1} parent=1 // pred_check
      _
    $region119: #{forward.1} parent=1 // pred_check_branch
      %9963 = sbr.rel (0) target = $region121
    $region120: #{forward.1} parent=1 // pred_region
      %9964 = dma.done [#allocation4], 32
    $region121: #{forward.1} parent=1 // pred_fallthru
      _
    %9965 = vsyncpa [#allocation3], 1
    %9966 = vsyncpa [#allocation6], 1
    %9967 = vsyncpa [#allocation9], 1
    %9968 = vsyncpa [#allocation12], 1
    %9969 = vsyncpa [#allocation15], 1
    %9970 = vsyncpa [#allocation18], 1
    %9971 = vsyncpa [#allocation21], 1
    %9972 = vsyncpa [#allocation4], 1

</llo_original>
